<compile_context>
chip_gen: v6e
topology: v6e:2x2x1
jax: 0.10.0
libtpu: 0.0.40
codegen_flags: <defaults>
</compile_context>

<pallas_src>
import numpy as np
import jax
import jax.numpy as jnp
from jax.experimental import pallas as pl
from jax.experimental.pallas import tpu as pltpu

KSIZE = 4
NECK = 5
HID = 32
B_FRAMES = 3  # conditioning frames == conv batch == LSTM sequence length

# (Cin, Cout, stride, pad, H_in, H_out) for the encoder conv stack (64x64 -> 1x1).
CONV_CFG = (
    (1, 4, 2, 1, 64, 32),
    (4, 8, 2, 1, 32, 16),
    (8, 16, 2, 1, 16, 8),
    (16, 32, 2, 1, 8, 4),
    (32, 64, 1, 0, 4, 1),
)

# Packed state / output block: (40, 128) f32.
STATE_ROWS = 40
Z_ROW = HID          # rows [32, 37): z^T (neck, B)
REW_ROW = HID + NECK  # row 37      : rewards (1, B)


def _round8(n):
    return (n + 7) // 8 * 8


# --------------------------------------------------------------------------------
# Static slab layouts (row offsets are plain Python ints known at trace time).
# --------------------------------------------------------------------------------
def _build_layouts():
    m_off, row = {}, 0
    for si, (cin, cout, s, p, hi, ho) in enumerate(CONV_CFG):
        m_off[si] = row
        row += cout * ho          # 128,128,128,128,64  (all 8-aligned)
    m_rows = row                  # 576

    c_off, row = {}, 0
    for si, (cin, cout, s, p, hi, ho) in enumerate(CONV_CFG):
        for kw in range(KSIZE):
            c_off[("csel", si, kw)] = row
            row += _round8(B_FRAMES * hi)
    for name, nrows in (("fc_w", NECK), ("w1", HID), ("w2", HID), ("w3", HID),
                        ("w_ih", 4 * HID), ("w_hh", 4 * HID),
                        ("rw1", HID), ("rw2", HID), ("rw3", 1)):
        c_off[name] = row
        row += _round8(nrows)
    c_rows = _round8(row)
    return m_off, m_rows, c_off, c_rows


_M_OFF, _M_ROWS, _C_OFF, _C_ROWS = _build_layouts()
_M_COLS = KSIZE * 128             # each kw block padded to a 128-lane stride


# --------------------------------------------------------------------------------
# Fused kernel: conv stack + FC + MLP + LSTM + reward head + buffer roll.
# --------------------------------------------------------------------------------
def _fused_kernel(frames_ref, state_ref, mslab_ref, cslab_ref, bias_ref, out_ref):
    f32, bf16 = jnp.float32, jnp.bfloat16

    def sigmoid(v):
        return 1.0 / (1.0 + jnp.exp(-v))

    # ---- Encoder conv stack.  Activation layout: rows=(ci, h), lanes=(frame, w) ----
    x = jnp.concatenate([frames_ref[b] for b in range(B_FRAMES)], axis=1)  # (64, 192) f32

    for si, (cin, cout, s, p, hi, ho) in enumerate(CONV_CFG):
        rows_in, rows_out = cin * hi, cout * ho
        lanes_in, lanes_out = B_FRAMES * hi, B_FRAMES * ho
        xb = x.astype(bf16)                                  # cast inside kernel (VPU)
        moff = _M_OFF[si]
        y = None
        for kw in range(KSIZE):
            coff = _C_OFF[("csel", si, kw)]
            csel = cslab_ref[coff:coff + lanes_in, 0:lanes_out]          # bf16 0/1 taps
            tap = jnp.dot(xb, csel, preferred_element_type=f32).astype(bf16)
            mblk = mslab_ref[moff:moff + rows_out, kw * 128:kw * 128 + rows_in]
            part = jnp.dot(mblk, tap, preferred_element_type=f32)
            y = part if y is None else y + part
        y = y + bias_ref[0:rows_out, 8 + si:9 + si]          # conv bias, f32 column
        x = jnp.maximum(y, 0.0)                              # (rows_out, lanes_out) f32

    feat = x                                                 # (64, B) f32, post-ReLU

    # ---- Encoder FC (head is column-major; weights in PyTorch (out,in) layout) ----
    fo = _C_OFF["fc_w"]
    fcw = cslab_ref[fo:fo + NECK, 0:64]
    zT = jnp.dot(fcw, feat.astype(bf16), preferred_element_type=f32) \
        + bias_ref[0:NECK, 0:1]                              # (neck, B) f32

    # ---- MLP on flatten(z) (frame-major).  NOTE: kept as 3 tiny per-frame dots
    #      summed (no lane-merging reshape); the review's single-contraction form
    #      saves ~2 MXU pushes only. ----
    wo_ = _C_OFF["w1"]
    w1 = cslab_ref[wo_:wo_ + HID, 0:B_FRAMES * NECK]
    zb = zT.astype(bf16)
    h1 = bias_ref[0:HID, 1:2]
    for b in range(B_FRAMES):
        h1 = h1 + jnp.dot(w1[:, b * NECK:(b + 1) * NECK], zb[:, b:b + 1],
                          preferred_element_type=f32)
    h1 = jnp.maximum(h1, 0.0)
    wo_ = _C_OFF["w2"]
    h2 = jnp.maximum(jnp.dot(cslab_ref[wo_:wo_ + HID, 0:HID], h1.astype(bf16),
                             preferred_element_type=f32) + bias_ref[0:HID, 2:3], 0.0)
    wo_ = _C_OFF["w3"]
    mlp = jnp.dot(cslab_ref[wo_:wo_ + HID, 0:HID], h2.astype(bf16),
                  preferred_element_type=f32) + bias_ref[0:HID, 3:4]      # (32, 1)

    # ---- Roll the conditioning-frame buffer: one lane concat, no row stores ----
    nb = jnp.concatenate([state_ref[0:HID, 1:B_FRAMES], mlp], axis=1)     # (32, B)

    # ---- LSTM: input projection hoisted out of the recurrence ----
    wo_ = _C_OFF["w_ih"]
    wih = cslab_ref[wo_:wo_ + 4 * HID, 0:HID]
    wo_ = _C_OFF["w_hh"]
    whh = cslab_ref[wo_:wo_ + 4 * HID, 0:HID]
    xproj = jnp.dot(wih, nb.astype(bf16), preferred_element_type=f32) \
        + bias_ref[0:4 * HID, 4:5]                                        # (128, B)
    h = jnp.zeros((HID, 1), f32)
    c = jnp.zeros((HID, 1), f32)
    hs = []
    for t in range(B_FRAMES):                                             # static trip count
        g = xproj[:, t:t + 1] + jnp.dot(whh, h.astype(bf16), preferred_element_type=f32)
        i_g = sigmoid(g[0:HID, :])
        f_g = sigmoid(g[HID:2 * HID, :])
        g_g = jnp.tanh(g[2 * HID:3 * HID, :])
        o_g = sigmoid(g[3 * HID:4 * HID, :])
        c = f_g * c + i_g * g_g
        h = o_g * jnp.tanh(c)
        hs.append(h)                                                      # stays in vregs
    hsm = jnp.concatenate(hs, axis=1)                                     # (32, B)

    # ---- Reward head once on the whole (32, B) block of hidden states ----
    wo_ = _C_OFF["rw1"]
    r = jnp.maximum(jnp.dot(cslab_ref[wo_:wo_ + HID, 0:HID], hsm.astype(bf16),
                            preferred_element_type=f32) + bias_ref[0:HID, 5:6], 0.0)
    wo_ = _C_OFF["rw2"]
    r = jnp.maximum(jnp.dot(cslab_ref[wo_:wo_ + HID, 0:HID], r.astype(bf16),
                            preferred_element_type=f32) + bias_ref[0:HID, 6:7], 0.0)
    wo_ = _C_OFF["rw3"]
    rew = jnp.dot(cslab_ref[wo_:wo_ + 1, 0:HID], r.astype(bf16),
                  preferred_element_type=f32) + bias_ref[0:1, 7:8]        # (1, B)

    # ---- Pack all outputs into one lane-dense (40, 128) block (aliased to state) ----
    out_ref[...] = jnp.zeros((STATE_ROWS, 128), f32)
    out_ref[0:HID, 0:B_FRAMES] = nb
    out_ref[Z_ROW:Z_ROW + NECK, 0:B_FRAMES] = zT
    out_ref[REW_ROW:REW_ROW + 1, 0:B_FRAMES] = rew


def _forward_impl(frames, state, mslab, cslab, biasblk):
    packed = pl.pallas_call(
        _fused_kernel,
        out_shape=jax.ShapeDtypeStruct((STATE_ROWS, 128), jnp.float32),
        in_specs=[pl.BlockSpec(memory_space=pltpu.MemorySpace.VMEM)] * 5,
        out_specs=pl.BlockSpec(memory_space=pltpu.MemorySpace.VMEM),
        input_output_aliases={1: 0},            # state block is updated in place
    )(frames, state, mslab, cslab, biasblk)
    z = packed[Z_ROW:Z_ROW + NECK, 0:B_FRAMES].T.reshape(-1)   # (3*neck,), frame-major
    rewards = packed[REW_ROW, 0:B_FRAMES]                      # (3,)
    return packed, rewards, z


_forward_jit = jax.jit(_forward_impl)


# --------------------------------------------------------------------------------
# Host-side parameter construction and slab packing.
# --------------------------------------------------------------------------------
def _uniform(key, shape, fan_in):
    bound = 1.0 / float(fan_in) ** 0.5
    return jax.random.uniform(key, shape, jnp.float32, -bound, bound)


def _conv_m_block(w, cin, cout, s, p, hi, ho):
    """(Cout*Ho, 4*128): conv weights folded with the kh-tap row selection & padding."""
    m = np.zeros((cout * ho, KSIZE * 128), np.float32)
    for co in range(cout):
        for oh in range(ho):
            r = co * ho + oh
            for kw in range(KSIZE):
                for kh in range(KSIZE):
                    h = s * oh + kh - p
                    if 0 <= h < hi:
                        for ci in range(cin):
                            m[r, kw * 128 + ci * hi + h] += w[co, ci, kh, kw]
    return m


def _conv_csel_matrix(s, p, wi, wo, kw):
    """(B*Wi, B*Wo) 0/1 per-frame stride-s column-tap selection (zero padding folded in)."""
    c = np.zeros((B_FRAMES * wi, B_FRAMES * wo), np.float32)
    for b in range(B_FRAMES):
        for ow in range(wo):
            w = s * ow + kw - p
            if 0 <= w < wi:
                c[b * wi + w, b * wo + ow] = 1.0
    return c


class FullModelPallas:
    """Pallas-TPU port of FullModel: a single fused kernel per forward() call."""

    def __init__(self, conditioning_frames=3, neck=5, key=None):
        assert conditioning_frames == B_FRAMES and neck == NECK, \
            "slab layout is specialised for the reference configuration (3, 5)"
        self.conditioning_frames = conditioning_frames
        self.neck = neck
        if key is None:
            key = jax.random.PRNGKey(0)
        keys = iter(jax.random.split(key, 64))

        raw = {}
        convs = []
        for (cin, cout, s, p, hi, ho) in CONV_CFG:
            fan = cin * KSIZE * KSIZE
            convs.append((_uniform(next(keys), (cout, cin, KSIZE, KSIZE), fan),
                          _uniform(next(keys), (cout,), fan)))
        raw["conv"] = convs
        raw["fc_w"] = _uniform(next(keys), (NECK, 64), 64)
        raw["fc_b"] = _uniform(next(keys), (NECK,), 64)
        raw["w1"] = _uniform(next(keys), (HID, B_FRAMES * NECK), B_FRAMES * NECK)
        raw["b1"] = _uniform(next(keys), (HID,), B_FRAMES * NECK)
        raw["w2"] = _uniform(next(keys), (HID, HID), HID)
        raw["b2"] = _uniform(next(keys), (HID,), HID)
        raw["w3"] = _uniform(next(keys), (HID, HID), HID)
        raw["b3"] = _uniform(next(keys), (HID,), HID)
        raw["w_ih"] = _uniform(next(keys), (4 * HID, HID), HID)
        raw["w_hh"] = _uniform(next(keys), (4 * HID, HID), HID)
        raw["b_ih"] = _uniform(next(keys), (4 * HID,), HID)
        raw["b_hh"] = _uniform(next(keys), (4 * HID,), HID)
        raw["rw1"] = _uniform(next(keys), (HID, HID), HID)
        raw["rb1"] = _uniform(next(keys), (HID,), HID)
        raw["rw2"] = _uniform(next(keys), (HID, HID), HID)
        raw["rb2"] = _uniform(next(keys), (HID,), HID)
        raw["rw3"] = _uniform(next(keys), (1, HID), HID)
        raw["rb3"] = _uniform(next(keys), (1,), HID)
        self.raw = raw

        # ---- conv weight slab (bf16): kh/channel-folded blocks, 128-lane kw stride ----
        mslab = np.zeros((_M_ROWS, _M_COLS), np.float32)
        for si, ((w, b), (cin, cout, s, p, hi, ho)) in enumerate(zip(convs, CONV_CFG)):
            mslab[_M_OFF[si]:_M_OFF[si] + cout * ho, :] = \
                _conv_m_block(np.asarray(w), cin, cout, s, p, hi, ho)

        # ---- selection + head-weight slab (bf16, PyTorch (out,in) layouts) ----
        cslab = np.zeros((_C_ROWS, 128), np.float32)
        for si, (cin, cout, s, p, hi, ho) in enumerate(CONV_CFG):
            for kw in range(KSIZE):
                off = _C_OFF[("csel", si, kw)]
                cslab[off:off + B_FRAMES * hi, 0:B_FRAMES * ho] = \
                    _conv_csel_matrix(s, p, hi, ho, kw)
        for name in ("fc_w", "w1", "w2", "w3", "w_ih", "w_hh", "rw1", "rw2", "rw3"):
            wmat = np.asarray(raw[name])
            off = _C_OFF[name]
            cslab[off:off + wmat.shape[0], 0:wmat.shape[1]] = wmat

        # ---- all biases in one small f32 block (added in f32 inside the kernel) ----
        biasblk = np.zeros((128, 16), np.float32)
        biasblk[0:NECK, 0] = np.asarray(raw["fc_b"])
        biasblk[0:HID, 1] = np.asarray(raw["b1"])
        biasblk[0:HID, 2] = np.asarray(raw["b2"])
        biasblk[0:HID, 3] = np.asarray(raw["b3"])
        biasblk[0:4 * HID, 4] = np.asarray(raw["b_ih"]) + np.asarray(raw["b_hh"])
        biasblk[0:HID, 5] = np.asarray(raw["rb1"])
        biasblk[0:HID, 6] = np.asarray(raw["rb2"])
        biasblk[0:1, 7] = np.asarray(raw["rb3"])
        for si, ((w, b), (cin, cout, s, p, hi, ho)) in enumerate(zip(convs, CONV_CFG)):
            biasblk[0:cout * ho, 8 + si] = np.repeat(np.asarray(b), ho)

        self.mslab = jnp.asarray(mslab, jnp.bfloat16)
        self.cslab = jnp.asarray(cslab, jnp.bfloat16)
        self.biasblk = jnp.asarray(biasblk, jnp.float32)

        # Packed recurrent state (rows 0:32 = rolling MLP-output buffer, oldest first).
        self.state = jnp.zeros((STATE_ROWS, 128), jnp.float32)
        self.count = 0

    def forward(self, x):
        x = jnp.asarray(x, jnp.float32)
        assert x.shape == (B_FRAMES, 64, 64), x.shape
        packed, rewards, z = _forward_jit(x, self.state, self.mslab, self.cslab, self.biasblk)
        self.state = packed
        self.count += 1
        # PyTorch: real rewards only once len(lstm_input_list) > conditioning_frames.
        if self.count > self.conditioning_frames:
            return rewards, z
        return jnp.zeros((self.conditioning_frames,), jnp.float32), z


# --------------------------------------------------------------------------------
# Pure-JAX (f32, plain XLA) reference of the stateful FullModel forward sequence.
# --------------------------------------------------------------------------------
def _reference_calls(raw, frames_list):
    lstm_inputs, outs = [], []
    for frames in frames_list:
        x = frames[:, None, :, :]
        for (w, b), (cin, cout, s, p, hi, ho) in zip(raw["conv"], CONV_CFG):
            x = jax.lax.conv_general_dilated(
                x, w, (s, s), [(p, p), (p, p)],
                dimension_numbers=("NCHW", "OIHW", "NCHW"))
            x = jnp.maximum(x + b[None, :, None, None], 0.0)
        z = (x.reshape(B_FRAMES, 64) @ raw["fc_w"].T + raw["fc_b"]).reshape(-1)
        h1 = jnp.maximum(raw["w1"] @ z + raw["b1"], 0.0)
        h2 = jnp.maximum(raw["w2"] @ h1 + raw["b2"], 0.0)
        mlp = raw["w3"] @ h2 + raw["b3"]
        lstm_inputs.append(mlp)
        if len(lstm_inputs) > B_FRAMES:
            lstm_inputs.pop(0)
            h = jnp.zeros((HID,), jnp.float32)
            c = jnp.zeros((HID,), jnp.float32)
            rews = []
            for xt in lstm_inputs:
                g = raw["w_ih"] @ xt + raw["w_hh"] @ h + raw["b_ih"] + raw["b_hh"]
                i_g = jax.nn.sigmoid(g[0:HID])
                f_g = jax.nn.sigmoid(g[HID:2 * HID])
                g_g = jnp.tanh(g[2 * HID:3 * HID])
                o_g = jax.nn.sigmoid(g[3 * HID:4 * HID])
                c = f_g * c + i_g * g_g
                h = o_g * jnp.tanh(c)
                r1 = jnp.maximum(raw["rw1"] @ h + raw["rb1"], 0.0)
                r2 = jnp.maximum(raw["rw2"] @ r1 + raw["rb2"], 0.0)
                rews.append(raw["rw3"] @ r2 + raw["rb3"])
            rewards = jnp.concatenate(rews)
        else:
            rewards = jnp.zeros((B_FRAMES,), jnp.float32)
        outs.append((rewards, z))
    return outs


if __name__ == "__main__":
    root = jax.random.PRNGKey(0)
    pkey, xkey = jax.random.split(root)
    model = FullModelPallas(conditioning_frames=3, neck=5, key=pkey)

    frames_list = []
    rewards = z = None
    # 4 calls so the stateful LSTM/reward branch (len > conditioning_frames) runs.
    for _ in range(4):
        xkey, sub = jax.random.split(xkey)
        frames = jax.random.normal(sub, (B_FRAMES, 64, 64), jnp.float32)
        frames_list.append(frames)
        rewards, z = model.forward(frames)
    jax.block_until_ready((rewards, z))

    assert rewards.shape == (B_FRAMES,), rewards.shape
    assert z.shape == (B_FRAMES * NECK,), z.shape

    # Numerical sanity check vs. an f32 XLA reference (bf16 MXU operands => loose atol).
    ref_rewards, ref_z = _reference_calls(model.raw, frames_list)[-1]
    np.testing.assert_allclose(np.asarray(z), np.asarray(ref_z), atol=5e-2, rtol=0)
    np.testing.assert_allclose(np.asarray(rewards), np.asarray(ref_rewards), atol=5e-2, rtol=0)

    print("KERNEL_OK")
</pallas_src>

<mosaic_0001>
module attributes {stable_mosaic.version = 11 : i64} {
  func.func @_fused_kernel(%arg0: memref<3x64x64xf32, #tpu.memory_space<vmem>>, %arg1: memref<40x128xf32, #tpu.memory_space<vmem>>, %arg2: memref<576x512xbf16, #tpu.memory_space<vmem>>, %arg3: memref<1936x128xbf16, #tpu.memory_space<vmem>>, %arg4: memref<128x16xf32, #tpu.memory_space<vmem>>, %arg5: memref<40x128xf32, #tpu.memory_space<vmem>>) attributes {dimension_semantics = [], scalar_prefetch = 0 : i64, scratch_operands = 0 : i64, tpu.core_type = #tpu.core_type<tc>} {
    %c0 = arith.constant 0 : index
    %c0_0 = arith.constant 0 : index
    %c0_1 = arith.constant 0 : index
    %0 = vector.load %arg0[%c0, %c0_0, %c0_1] : memref<3x64x64xf32, #tpu.memory_space<vmem>>, vector<1x64x64xf32>
    %1 = vector.shape_cast %0 : vector<1x64x64xf32> to vector<64x64xf32>
    %c1 = arith.constant 1 : index
    %c0_2 = arith.constant 0 : index
    %c0_3 = arith.constant 0 : index
    %2 = vector.load %arg0[%c1, %c0_2, %c0_3] : memref<3x64x64xf32, #tpu.memory_space<vmem>>, vector<1x64x64xf32>
    %3 = vector.shape_cast %2 : vector<1x64x64xf32> to vector<64x64xf32>
    %c2 = arith.constant 2 : index
    %c0_4 = arith.constant 0 : index
    %c0_5 = arith.constant 0 : index
    %4 = vector.load %arg0[%c2, %c0_4, %c0_5] : memref<3x64x64xf32, #tpu.memory_space<vmem>>, vector<1x64x64xf32>
    %5 = vector.shape_cast %4 : vector<1x64x64xf32> to vector<64x64xf32>
    %6 = tpu.concatenate %1, %3, %5 in 1 : vector<64x64xf32>, vector<64x64xf32>, vector<64x64xf32> -> vector<64x192xf32>
    %7 = arith.truncf %6 : vector<64x192xf32> to vector<64x192xbf16>
    %c0_6 = arith.constant 0 : index
    %c0_7 = arith.constant 0 : index
    %8 = vector.load %arg3[%c0_6, %c0_7] : memref<1936x128xbf16, #tpu.memory_space<vmem>>, vector<192x96xbf16>
    %cst = arith.constant dense<0.000000e+00> : vector<64x96xf32>
    %9 = tpu.matmul %7, %8, %cst {dimension_numbers = #tpu.dot_dimension_numbers<[1], [0], [0], [1], [0, 0, 1, 1], [], []>} : vector<64x192xbf16>, vector<192x96xbf16>, vector<64x96xf32> -> vector<64x96xf32>
    %10 = arith.truncf %9 : vector<64x96xf32> to vector<64x96xbf16>
    %c0_8 = arith.constant 0 : index
    %c0_9 = arith.constant 0 : index
    %11 = vector.load %arg2[%c0_8, %c0_9] : memref<576x512xbf16, #tpu.memory_space<vmem>>, vector<128x64xbf16>
    %cst_10 = arith.constant dense<0.000000e+00> : vector<128x96xf32>
    %12 = tpu.matmul %11, %10, %cst_10 {dimension_numbers = #tpu.dot_dimension_numbers<[1], [0], [0], [1], [0, 0, 1, 1], [], []>} : vector<128x64xbf16>, vector<64x96xbf16>, vector<128x96xf32> -> vector<128x96xf32>
    %c192 = arith.constant 192 : index
    %c0_11 = arith.constant 0 : index
    %13 = vector.load %arg3[%c192, %c0_11] : memref<1936x128xbf16, #tpu.memory_space<vmem>>, vector<192x96xbf16>
    %cst_12 = arith.constant dense<0.000000e+00> : vector<64x96xf32>
    %14 = tpu.matmul %7, %13, %cst_12 {dimension_numbers = #tpu.dot_dimension_numbers<[1], [0], [0], [1], [0, 0, 1, 1], [], []>} : vector<64x192xbf16>, vector<192x96xbf16>, vector<64x96xf32> -> vector<64x96xf32>
    %15 = arith.truncf %14 : vector<64x96xf32> to vector<64x96xbf16>
    %c0_13 = arith.constant 0 : index
    %c128 = arith.constant 128 : index
    %16 = vector.load %arg2[%c0_13, %c128] : memref<576x512xbf16, #tpu.memory_space<vmem>>, vector<128x64xbf16>
    %cst_14 = arith.constant dense<0.000000e+00> : vector<128x96xf32>
    %17 = tpu.matmul %16, %15, %cst_14 {dimension_numbers = #tpu.dot_dimension_numbers<[1], [0], [0], [1], [0, 0, 1, 1], [], []>} : vector<128x64xbf16>, vector<64x96xbf16>, vector<128x96xf32> -> vector<128x96xf32>
    %18 = arith.addf %12, %17 : vector<128x96xf32>
    %c384 = arith.constant 384 : index
    %c0_15 = arith.constant 0 : index
    %19 = vector.load %arg3[%c384, %c0_15] : memref<1936x128xbf16, #tpu.memory_space<vmem>>, vector<192x96xbf16>
    %cst_16 = arith.constant dense<0.000000e+00> : vector<64x96xf32>
    %20 = tpu.matmul %7, %19, %cst_16 {dimension_numbers = #tpu.dot_dimension_numbers<[1], [0], [0], [1], [0, 0, 1, 1], [], []>} : vector<64x192xbf16>, vector<192x96xbf16>, vector<64x96xf32> -> vector<64x96xf32>
    %21 = arith.truncf %20 : vector<64x96xf32> to vector<64x96xbf16>
    %c0_17 = arith.constant 0 : index
    %c256 = arith.constant 256 : index
    %22 = vector.load %arg2[%c0_17, %c256] : memref<576x512xbf16, #tpu.memory_space<vmem>>, vector<128x64xbf16>
    %cst_18 = arith.constant dense<0.000000e+00> : vector<128x96xf32>
    %23 = tpu.matmul %22, %21, %cst_18 {dimension_numbers = #tpu.dot_dimension_numbers<[1], [0], [0], [1], [0, 0, 1, 1], [], []>} : vector<128x64xbf16>, vector<64x96xbf16>, vector<128x96xf32> -> vector<128x96xf32>
    %24 = arith.addf %18, %23 : vector<128x96xf32>
    %c576 = arith.constant 576 : index
    %c0_19 = arith.constant 0 : index
    %25 = vector.load %arg3[%c576, %c0_19] : memref<1936x128xbf16, #tpu.memory_space<vmem>>, vector<192x96xbf16>
    %cst_20 = arith.constant dense<0.000000e+00> : vector<64x96xf32>
    %26 = tpu.matmul %7, %25, %cst_20 {dimension_numbers = #tpu.dot_dimension_numbers<[1], [0], [0], [1], [0, 0, 1, 1], [], []>} : vector<64x192xbf16>, vector<192x96xbf16>, vector<64x96xf32> -> vector<64x96xf32>
    %27 = arith.truncf %26 : vector<64x96xf32> to vector<64x96xbf16>
    %c0_21 = arith.constant 0 : index
    %c384_22 = arith.constant 384 : index
    %28 = vector.load %arg2[%c0_21, %c384_22] : memref<576x512xbf16, #tpu.memory_space<vmem>>, vector<128x64xbf16>
    %cst_23 = arith.constant dense<0.000000e+00> : vector<128x96xf32>
    %29 = tpu.matmul %28, %27, %cst_23 {dimension_numbers = #tpu.dot_dimension_numbers<[1], [0], [0], [1], [0, 0, 1, 1], [], []>} : vector<128x64xbf16>, vector<64x96xbf16>, vector<128x96xf32> -> vector<128x96xf32>
    %30 = arith.addf %24, %29 : vector<128x96xf32>
    %c0_24 = arith.constant 0 : index
    %c8 = arith.constant 8 : index
    %31 = vector.load %arg4[%c0_24, %c8] : memref<128x16xf32, #tpu.memory_space<vmem>>, vector<128x1xf32>
    %32 = vector.broadcast %31 : vector<128x1xf32> to vector<128x96xf32>
    %33 = arith.addf %30, %32 : vector<128x96xf32>
    %cst_25 = arith.constant 0.000000e+00 : f32
    %34 = vector.broadcast %cst_25 : f32 to vector<128x96xf32>
    %35 = arith.maximumf %33, %34 : vector<128x96xf32>
    %36 = arith.truncf %35 : vector<128x96xf32> to vector<128x96xbf16>
    %c768 = arith.constant 768 : index
    %c0_26 = arith.constant 0 : index
    %37 = vector.load %arg3[%c768, %c0_26] : memref<1936x128xbf16, #tpu.memory_space<vmem>>, vector<96x48xbf16>
    %cst_27 = arith.constant dense<0.000000e+00> : vector<128x48xf32>
    %38 = tpu.matmul %36, %37, %cst_27 {dimension_numbers = #tpu.dot_dimension_numbers<[1], [0], [0], [1], [0, 0, 1, 1], [], []>} : vector<128x96xbf16>, vector<96x48xbf16>, vector<128x48xf32> -> vector<128x48xf32>
    %39 = arith.truncf %38 : vector<128x48xf32> to vector<128x48xbf16>
    %c128_28 = arith.constant 128 : index
    %c0_29 = arith.constant 0 : index
    %40 = vector.load %arg2[%c128_28, %c0_29] : memref<576x512xbf16, #tpu.memory_space<vmem>>, vector<128x128xbf16>
    %cst_30 = arith.constant dense<0.000000e+00> : vector<128x48xf32>
    %41 = tpu.matmul %40, %39, %cst_30 {dimension_numbers = #tpu.dot_dimension_numbers<[1], [0], [0], [1], [0, 0, 1, 1], [], []>} : vector<128x128xbf16>, vector<128x48xbf16>, vector<128x48xf32> -> vector<128x48xf32>
    %c864 = arith.constant 864 : index
    %c0_31 = arith.constant 0 : index
    %42 = vector.load %arg3[%c864, %c0_31] : memref<1936x128xbf16, #tpu.memory_space<vmem>>, vector<96x48xbf16>
    %cst_32 = arith.constant dense<0.000000e+00> : vector<128x48xf32>
    %43 = tpu.matmul %36, %42, %cst_32 {dimension_numbers = #tpu.dot_dimension_numbers<[1], [0], [0], [1], [0, 0, 1, 1], [], []>} : vector<128x96xbf16>, vector<96x48xbf16>, vector<128x48xf32> -> vector<128x48xf32>
    %44 = arith.truncf %43 : vector<128x48xf32> to vector<128x48xbf16>
    %c128_33 = arith.constant 128 : index
    %c128_34 = arith.constant 128 : index
    %45 = vector.load %arg2[%c128_33, %c128_34] : memref<576x512xbf16, #tpu.memory_space<vmem>>, vector<128x128xbf16>
    %cst_35 = arith.constant dense<0.000000e+00> : vector<128x48xf32>
    %46 = tpu.matmul %45, %44, %cst_35 {dimension_numbers = #tpu.dot_dimension_numbers<[1], [0], [0], [1], [0, 0, 1, 1], [], []>} : vector<128x128xbf16>, vector<128x48xbf16>, vector<128x48xf32> -> vector<128x48xf32>
    %47 = arith.addf %41, %46 : vector<128x48xf32>
    %c960 = arith.constant 960 : index
    %c0_36 = arith.constant 0 : index
    %48 = vector.load %arg3[%c960, %c0_36] : memref<1936x128xbf16, #tpu.memory_space<vmem>>, vector<96x48xbf16>
    %cst_37 = arith.constant dense<0.000000e+00> : vector<128x48xf32>
    %49 = tpu.matmul %36, %48, %cst_37 {dimension_numbers = #tpu.dot_dimension_numbers<[1], [0], [0], [1], [0, 0, 1, 1], [], []>} : vector<128x96xbf16>, vector<96x48xbf16>, vector<128x48xf32> -> vector<128x48xf32>
    %50 = arith.truncf %49 : vector<128x48xf32> to vector<128x48xbf16>
    %c128_38 = arith.constant 128 : index
    %c256_39 = arith.constant 256 : index
    %51 = vector.load %arg2[%c128_38, %c256_39] : memref<576x512xbf16, #tpu.memory_space<vmem>>, vector<128x128xbf16>
    %cst_40 = arith.constant dense<0.000000e+00> : vector<128x48xf32>
    %52 = tpu.matmul %51, %50, %cst_40 {dimension_numbers = #tpu.dot_dimension_numbers<[1], [0], [0], [1], [0, 0, 1, 1], [], []>} : vector<128x128xbf16>, vector<128x48xbf16>, vector<128x48xf32> -> vector<128x48xf32>
    %53 = arith.addf %47, %52 : vector<128x48xf32>
    %c1056 = arith.constant 1056 : index
    %c0_41 = arith.constant 0 : index
    %54 = vector.load %arg3[%c1056, %c0_41] : memref<1936x128xbf16, #tpu.memory_space<vmem>>, vector<96x48xbf16>
    %cst_42 = arith.constant dense<0.000000e+00> : vector<128x48xf32>
    %55 = tpu.matmul %36, %54, %cst_42 {dimension_numbers = #tpu.dot_dimension_numbers<[1], [0], [0], [1], [0, 0, 1, 1], [], []>} : vector<128x96xbf16>, vector<96x48xbf16>, vector<128x48xf32> -> vector<128x48xf32>
    %56 = arith.truncf %55 : vector<128x48xf32> to vector<128x48xbf16>
    %c128_43 = arith.constant 128 : index
    %c384_44 = arith.constant 384 : index
    %57 = vector.load %arg2[%c128_43, %c384_44] : memref<576x512xbf16, #tpu.memory_space<vmem>>, vector<128x128xbf16>
    %cst_45 = arith.constant dense<0.000000e+00> : vector<128x48xf32>
    %58 = tpu.matmul %57, %56, %cst_45 {dimension_numbers = #tpu.dot_dimension_numbers<[1], [0], [0], [1], [0, 0, 1, 1], [], []>} : vector<128x128xbf16>, vector<128x48xbf16>, vector<128x48xf32> -> vector<128x48xf32>
    %59 = arith.addf %53, %58 : vector<128x48xf32>
    %c0_46 = arith.constant 0 : index
    %c9 = arith.constant 9 : index
    %60 = vector.load %arg4[%c0_46, %c9] : memref<128x16xf32, #tpu.memory_space<vmem>>, vector<128x1xf32>
    %61 = vector.broadcast %60 : vector<128x1xf32> to vector<128x48xf32>
    %62 = arith.addf %59, %61 : vector<128x48xf32>
    %cst_47 = arith.constant 0.000000e+00 : f32
    %63 = vector.broadcast %cst_47 : f32 to vector<128x48xf32>
    %64 = arith.maximumf %62, %63 : vector<128x48xf32>
    %65 = arith.truncf %64 : vector<128x48xf32> to vector<128x48xbf16>
    %c1152 = arith.constant 1152 : index
    %c0_48 = arith.constant 0 : index
    %66 = vector.load %arg3[%c1152, %c0_48] : memref<1936x128xbf16, #tpu.memory_space<vmem>>, vector<48x24xbf16>
    %cst_49 = arith.constant dense<0.000000e+00> : vector<128x24xf32>
    %67 = tpu.matmul %65, %66, %cst_49 {dimension_numbers = #tpu.dot_dimension_numbers<[1], [0], [0], [1], [0, 0, 1, 1], [], []>} : vector<128x48xbf16>, vector<48x24xbf16>, vector<128x24xf32> -> vector<128x24xf32>
    %68 = arith.truncf %67 : vector<128x24xf32> to vector<128x24xbf16>
    %c256_50 = arith.constant 256 : index
    %c0_51 = arith.constant 0 : index
    %69 = vector.load %arg2[%c256_50, %c0_51] : memref<576x512xbf16, #tpu.memory_space<vmem>>, vector<128x128xbf16>
    %cst_52 = arith.constant dense<0.000000e+00> : vector<128x24xf32>
    %70 = tpu.matmul %69, %68, %cst_52 {dimension_numbers = #tpu.dot_dimension_numbers<[1], [0], [0], [1], [0, 0, 1, 1], [], []>} : vector<128x128xbf16>, vector<128x24xbf16>, vector<128x24xf32> -> vector<128x24xf32>
    %c1200 = arith.constant 1200 : index
    %c0_53 = arith.constant 0 : index
    %71 = vector.load %arg3[%c1200, %c0_53] : memref<1936x128xbf16, #tpu.memory_space<vmem>>, vector<48x24xbf16>
    %cst_54 = arith.constant dense<0.000000e+00> : vector<128x24xf32>
    %72 = tpu.matmul %65, %71, %cst_54 {dimension_numbers = #tpu.dot_dimension_numbers<[1], [0], [0], [1], [0, 0, 1, 1], [], []>} : vector<128x48xbf16>, vector<48x24xbf16>, vector<128x24xf32> -> vector<128x24xf32>
    %73 = arith.truncf %72 : vector<128x24xf32> to vector<128x24xbf16>
    %c256_55 = arith.constant 256 : index
    %c128_56 = arith.constant 128 : index
    %74 = vector.load %arg2[%c256_55, %c128_56] : memref<576x512xbf16, #tpu.memory_space<vmem>>, vector<128x128xbf16>
    %cst_57 = arith.constant dense<0.000000e+00> : vector<128x24xf32>
    %75 = tpu.matmul %74, %73, %cst_57 {dimension_numbers = #tpu.dot_dimension_numbers<[1], [0], [0], [1], [0, 0, 1, 1], [], []>} : vector<128x128xbf16>, vector<128x24xbf16>, vector<128x24xf32> -> vector<128x24xf32>
    %76 = arith.addf %70, %75 : vector<128x24xf32>
    %c1248 = arith.constant 1248 : index
    %c0_58 = arith.constant 0 : index
    %77 = vector.load %arg3[%c1248, %c0_58] : memref<1936x128xbf16, #tpu.memory_space<vmem>>, vector<48x24xbf16>
    %cst_59 = arith.constant dense<0.000000e+00> : vector<128x24xf32>
    %78 = tpu.matmul %65, %77, %cst_59 {dimension_numbers = #tpu.dot_dimension_numbers<[1], [0], [0], [1], [0, 0, 1, 1], [], []>} : vector<128x48xbf16>, vector<48x24xbf16>, vector<128x24xf32> -> vector<128x24xf32>
    %79 = arith.truncf %78 : vector<128x24xf32> to vector<128x24xbf16>
    %c256_60 = arith.constant 256 : index
    %c256_61 = arith.constant 256 : index
    %80 = vector.load %arg2[%c256_60, %c256_61] : memref<576x512xbf16, #tpu.memory_space<vmem>>, vector<128x128xbf16>
    %cst_62 = arith.constant dense<0.000000e+00> : vector<128x24xf32>
    %81 = tpu.matmul %80, %79, %cst_62 {dimension_numbers = #tpu.dot_dimension_numbers<[1], [0], [0], [1], [0, 0, 1, 1], [], []>} : vector<128x128xbf16>, vector<128x24xbf16>, vector<128x24xf32> -> vector<128x24xf32>
    %82 = arith.addf %76, %81 : vector<128x24xf32>
    %c1296 = arith.constant 1296 : index
    %c0_63 = arith.constant 0 : index
    %83 = vector.load %arg3[%c1296, %c0_63] : memref<1936x128xbf16, #tpu.memory_space<vmem>>, vector<48x24xbf16>
    %cst_64 = arith.constant dense<0.000000e+00> : vector<128x24xf32>
    %84 = tpu.matmul %65, %83, %cst_64 {dimension_numbers = #tpu.dot_dimension_numbers<[1], [0], [0], [1], [0, 0, 1, 1], [], []>} : vector<128x48xbf16>, vector<48x24xbf16>, vector<128x24xf32> -> vector<128x24xf32>
    %85 = arith.truncf %84 : vector<128x24xf32> to vector<128x24xbf16>
    %c256_65 = arith.constant 256 : index
    %c384_66 = arith.constant 384 : index
    %86 = vector.load %arg2[%c256_65, %c384_66] : memref<576x512xbf16, #tpu.memory_space<vmem>>, vector<128x128xbf16>
    %cst_67 = arith.constant dense<0.000000e+00> : vector<128x24xf32>
    %87 = tpu.matmul %86, %85, %cst_67 {dimension_numbers = #tpu.dot_dimension_numbers<[1], [0], [0], [1], [0, 0, 1, 1], [], []>} : vector<128x128xbf16>, vector<128x24xbf16>, vector<128x24xf32> -> vector<128x24xf32>
    %88 = arith.addf %82, %87 : vector<128x24xf32>
    %c0_68 = arith.constant 0 : index
    %c10 = arith.constant 10 : index
    %89 = vector.load %arg4[%c0_68, %c10] : memref<128x16xf32, #tpu.memory_space<vmem>>, vector<128x1xf32>
    %90 = vector.broadcast %89 : vector<128x1xf32> to vector<128x24xf32>
    %91 = arith.addf %88, %90 : vector<128x24xf32>
    %cst_69 = arith.constant 0.000000e+00 : f32
    %92 = vector.broadcast %cst_69 : f32 to vector<128x24xf32>
    %93 = arith.maximumf %91, %92 : vector<128x24xf32>
    %94 = arith.truncf %93 : vector<128x24xf32> to vector<128x24xbf16>
    %c1344 = arith.constant 1344 : index
    %c0_70 = arith.constant 0 : index
    %95 = vector.load %arg3[%c1344, %c0_70] : memref<1936x128xbf16, #tpu.memory_space<vmem>>, vector<24x12xbf16>
    %cst_71 = arith.constant dense<0.000000e+00> : vector<128x12xf32>
    %96 = tpu.matmul %94, %95, %cst_71 {dimension_numbers = #tpu.dot_dimension_numbers<[1], [0], [0], [1], [0, 0, 1, 1], [], []>} : vector<128x24xbf16>, vector<24x12xbf16>, vector<128x12xf32> -> vector<128x12xf32>
    %97 = arith.truncf %96 : vector<128x12xf32> to vector<128x12xbf16>
    %c384_72 = arith.constant 384 : index
    %c0_73 = arith.constant 0 : index
    %98 = vector.load %arg2[%c384_72, %c0_73] : memref<576x512xbf16, #tpu.memory_space<vmem>>, vector<128x128xbf16>
    %cst_74 = arith.constant dense<0.000000e+00> : vector<128x12xf32>
    %99 = tpu.matmul %98, %97, %cst_74 {dimension_numbers = #tpu.dot_dimension_numbers<[1], [0], [0], [1], [0, 0, 1, 1], [], []>} : vector<128x128xbf16>, vector<128x12xbf16>, vector<128x12xf32> -> vector<128x12xf32>
    %c1368 = arith.constant 1368 : index
    %c0_75 = arith.constant 0 : index
    %100 = vector.load %arg3[%c1368, %c0_75] : memref<1936x128xbf16, #tpu.memory_space<vmem>>, vector<24x12xbf16>
    %cst_76 = arith.constant dense<0.000000e+00> : vector<128x12xf32>
    %101 = tpu.matmul %94, %100, %cst_76 {dimension_numbers = #tpu.dot_dimension_numbers<[1], [0], [0], [1], [0, 0, 1, 1], [], []>} : vector<128x24xbf16>, vector<24x12xbf16>, vector<128x12xf32> -> vector<128x12xf32>
    %102 = arith.truncf %101 : vector<128x12xf32> to vector<128x12xbf16>
    %c384_77 = arith.constant 384 : index
    %c128_78 = arith.constant 128 : index
    %103 = vector.load %arg2[%c384_77, %c128_78] : memref<576x512xbf16, #tpu.memory_space<vmem>>, vector<128x128xbf16>
    %cst_79 = arith.constant dense<0.000000e+00> : vector<128x12xf32>
    %104 = tpu.matmul %103, %102, %cst_79 {dimension_numbers = #tpu.dot_dimension_numbers<[1], [0], [0], [1], [0, 0, 1, 1], [], []>} : vector<128x128xbf16>, vector<128x12xbf16>, vector<128x12xf32> -> vector<128x12xf32>
    %105 = arith.addf %99, %104 : vector<128x12xf32>
    %c1392 = arith.constant 1392 : index
    %c0_80 = arith.constant 0 : index
    %106 = vector.load %arg3[%c1392, %c0_80] : memref<1936x128xbf16, #tpu.memory_space<vmem>>, vector<24x12xbf16>
    %cst_81 = arith.constant dense<0.000000e+00> : vector<128x12xf32>
    %107 = tpu.matmul %94, %106, %cst_81 {dimension_numbers = #tpu.dot_dimension_numbers<[1], [0], [0], [1], [0, 0, 1, 1], [], []>} : vector<128x24xbf16>, vector<24x12xbf16>, vector<128x12xf32> -> vector<128x12xf32>
    %108 = arith.truncf %107 : vector<128x12xf32> to vector<128x12xbf16>
    %c384_82 = arith.constant 384 : index
    %c256_83 = arith.constant 256 : index
    %109 = vector.load %arg2[%c384_82, %c256_83] : memref<576x512xbf16, #tpu.memory_space<vmem>>, vector<128x128xbf16>
    %cst_84 = arith.constant dense<0.000000e+00> : vector<128x12xf32>
    %110 = tpu.matmul %109, %108, %cst_84 {dimension_numbers = #tpu.dot_dimension_numbers<[1], [0], [0], [1], [0, 0, 1, 1], [], []>} : vector<128x128xbf16>, vector<128x12xbf16>, vector<128x12xf32> -> vector<128x12xf32>
    %111 = arith.addf %105, %110 : vector<128x12xf32>
    %c1416 = arith.constant 1416 : index
    %c0_85 = arith.constant 0 : index
    %112 = vector.load %arg3[%c1416, %c0_85] : memref<1936x128xbf16, #tpu.memory_space<vmem>>, vector<24x12xbf16>
    %cst_86 = arith.constant dense<0.000000e+00> : vector<128x12xf32>
    %113 = tpu.matmul %94, %112, %cst_86 {dimension_numbers = #tpu.dot_dimension_numbers<[1], [0], [0], [1], [0, 0, 1, 1], [], []>} : vector<128x24xbf16>, vector<24x12xbf16>, vector<128x12xf32> -> vector<128x12xf32>
    %114 = arith.truncf %113 : vector<128x12xf32> to vector<128x12xbf16>
    %c384_87 = arith.constant 384 : index
    %c384_88 = arith.constant 384 : index
    %115 = vector.load %arg2[%c384_87, %c384_88] : memref<576x512xbf16, #tpu.memory_space<vmem>>, vector<128x128xbf16>
    %cst_89 = arith.constant dense<0.000000e+00> : vector<128x12xf32>
    %116 = tpu.matmul %115, %114, %cst_89 {dimension_numbers = #tpu.dot_dimension_numbers<[1], [0], [0], [1], [0, 0, 1, 1], [], []>} : vector<128x128xbf16>, vector<128x12xbf16>, vector<128x12xf32> -> vector<128x12xf32>
    %117 = arith.addf %111, %116 : vector<128x12xf32>
    %c0_90 = arith.constant 0 : index
    %c11 = arith.constant 11 : index
    %118 = vector.load %arg4[%c0_90, %c11] : memref<128x16xf32, #tpu.memory_space<vmem>>, vector<128x1xf32>
    %119 = vector.broadcast %118 : vector<128x1xf32> to vector<128x12xf32>
    %120 = arith.addf %117, %119 : vector<128x12xf32>
    %cst_91 = arith.constant 0.000000e+00 : f32
    %121 = vector.broadcast %cst_91 : f32 to vector<128x12xf32>
    %122 = arith.maximumf %120, %121 : vector<128x12xf32>
    %123 = arith.truncf %122 : vector<128x12xf32> to vector<128x12xbf16>
    %c1440 = arith.constant 1440 : index
    %c0_92 = arith.constant 0 : index
    %124 = vector.load %arg3[%c1440, %c0_92] : memref<1936x128xbf16, #tpu.memory_space<vmem>>, vector<12x3xbf16>
    %cst_93 = arith.constant dense<0.000000e+00> : vector<128x3xf32>
    %125 = tpu.matmul %123, %124, %cst_93 {dimension_numbers = #tpu.dot_dimension_numbers<[1], [0], [0], [1], [0, 0, 1, 1], [], []>} : vector<128x12xbf16>, vector<12x3xbf16>, vector<128x3xf32> -> vector<128x3xf32>
    %126 = arith.truncf %125 : vector<128x3xf32> to vector<128x3xbf16>
    %c512 = arith.constant 512 : index
    %c0_94 = arith.constant 0 : index
    %127 = vector.load %arg2[%c512, %c0_94] : memref<576x512xbf16, #tpu.memory_space<vmem>>, vector<64x128xbf16>
    %cst_95 = arith.constant dense<0.000000e+00> : vector<64x3xf32>
    %128 = tpu.matmul %127, %126, %cst_95 {dimension_numbers = #tpu.dot_dimension_numbers<[1], [0], [0], [1], [0, 0, 1, 1], [], []>} : vector<64x128xbf16>, vector<128x3xbf16>, vector<64x3xf32> -> vector<64x3xf32>
    %c1456 = arith.constant 1456 : index
    %c0_96 = arith.constant 0 : index
    %129 = vector.load %arg3[%c1456, %c0_96] : memref<1936x128xbf16, #tpu.memory_space<vmem>>, vector<12x3xbf16>
    %cst_97 = arith.constant dense<0.000000e+00> : vector<128x3xf32>
    %130 = tpu.matmul %123, %129, %cst_97 {dimension_numbers = #tpu.dot_dimension_numbers<[1], [0], [0], [1], [0, 0, 1, 1], [], []>} : vector<128x12xbf16>, vector<12x3xbf16>, vector<128x3xf32> -> vector<128x3xf32>
    %131 = arith.truncf %130 : vector<128x3xf32> to vector<128x3xbf16>
    %c512_98 = arith.constant 512 : index
    %c128_99 = arith.constant 128 : index
    %132 = vector.load %arg2[%c512_98, %c128_99] : memref<576x512xbf16, #tpu.memory_space<vmem>>, vector<64x128xbf16>
    %cst_100 = arith.constant dense<0.000000e+00> : vector<64x3xf32>
    %133 = tpu.matmul %132, %131, %cst_100 {dimension_numbers = #tpu.dot_dimension_numbers<[1], [0], [0], [1], [0, 0, 1, 1], [], []>} : vector<64x128xbf16>, vector<128x3xbf16>, vector<64x3xf32> -> vector<64x3xf32>
    %134 = arith.addf %128, %133 : vector<64x3xf32>
    %c1472 = arith.constant 1472 : index
    %c0_101 = arith.constant 0 : index
    %135 = vector.load %arg3[%c1472, %c0_101] : memref<1936x128xbf16, #tpu.memory_space<vmem>>, vector<12x3xbf16>
    %cst_102 = arith.constant dense<0.000000e+00> : vector<128x3xf32>
    %136 = tpu.matmul %123, %135, %cst_102 {dimension_numbers = #tpu.dot_dimension_numbers<[1], [0], [0], [1], [0, 0, 1, 1], [], []>} : vector<128x12xbf16>, vector<12x3xbf16>, vector<128x3xf32> -> vector<128x3xf32>
    %137 = arith.truncf %136 : vector<128x3xf32> to vector<128x3xbf16>
    %c512_103 = arith.constant 512 : index
    %c256_104 = arith.constant 256 : index
    %138 = vector.load %arg2[%c512_103, %c256_104] : memref<576x512xbf16, #tpu.memory_space<vmem>>, vector<64x128xbf16>
    %cst_105 = arith.constant dense<0.000000e+00> : vector<64x3xf32>
    %139 = tpu.matmul %138, %137, %cst_105 {dimension_numbers = #tpu.dot_dimension_numbers<[1], [0], [0], [1], [0, 0, 1, 1], [], []>} : vector<64x128xbf16>, vector<128x3xbf16>, vector<64x3xf32> -> vector<64x3xf32>
    %140 = arith.addf %134, %139 : vector<64x3xf32>
    %c1488 = arith.constant 1488 : index
    %c0_106 = arith.constant 0 : index
    %141 = vector.load %arg3[%c1488, %c0_106] : memref<1936x128xbf16, #tpu.memory_space<vmem>>, vector<12x3xbf16>
    %cst_107 = arith.constant dense<0.000000e+00> : vector<128x3xf32>
    %142 = tpu.matmul %123, %141, %cst_107 {dimension_numbers = #tpu.dot_dimension_numbers<[1], [0], [0], [1], [0, 0, 1, 1], [], []>} : vector<128x12xbf16>, vector<12x3xbf16>, vector<128x3xf32> -> vector<128x3xf32>
    %143 = arith.truncf %142 : vector<128x3xf32> to vector<128x3xbf16>
    %c512_108 = arith.constant 512 : index
    %c384_109 = arith.constant 384 : index
    %144 = vector.load %arg2[%c512_108, %c384_109] : memref<576x512xbf16, #tpu.memory_space<vmem>>, vector<64x128xbf16>
    %cst_110 = arith.constant dense<0.000000e+00> : vector<64x3xf32>
    %145 = tpu.matmul %144, %143, %cst_110 {dimension_numbers = #tpu.dot_dimension_numbers<[1], [0], [0], [1], [0, 0, 1, 1], [], []>} : vector<64x128xbf16>, vector<128x3xbf16>, vector<64x3xf32> -> vector<64x3xf32>
    %146 = arith.addf %140, %145 : vector<64x3xf32>
    %c0_111 = arith.constant 0 : index
    %c12 = arith.constant 12 : index
    %147 = vector.load %arg4[%c0_111, %c12] : memref<128x16xf32, #tpu.memory_space<vmem>>, vector<64x1xf32>
    %148 = vector.broadcast %147 : vector<64x1xf32> to vector<64x3xf32>
    %149 = arith.addf %146, %148 : vector<64x3xf32>
    %cst_112 = arith.constant 0.000000e+00 : f32
    %150 = vector.broadcast %cst_112 : f32 to vector<64x3xf32>
    %151 = arith.maximumf %149, %150 : vector<64x3xf32>
    %c1504 = arith.constant 1504 : index
    %c0_113 = arith.constant 0 : index
    %152 = vector.load %arg3[%c1504, %c0_113] : memref<1936x128xbf16, #tpu.memory_space<vmem>>, vector<5x64xbf16>
    %153 = arith.truncf %151 : vector<64x3xf32> to vector<64x3xbf16>
    %cst_114 = arith.constant dense<0.000000e+00> : vector<5x3xf32>
    %154 = tpu.matmul %152, %153, %cst_114 {dimension_numbers = #tpu.dot_dimension_numbers<[1], [0], [0], [1], [0, 0, 1, 1], [], []>} : vector<5x64xbf16>, vector<64x3xbf16>, vector<5x3xf32> -> vector<5x3xf32>
    %c0_115 = arith.constant 0 : index
    %c0_116 = arith.constant 0 : index
    %155 = vector.load %arg4[%c0_115, %c0_116] : memref<128x16xf32, #tpu.memory_space<vmem>>, vector<5x1xf32>
    %156 = vector.broadcast %155 : vector<5x1xf32> to vector<5x3xf32>
    %157 = arith.addf %154, %156 : vector<5x3xf32>
    %c1512 = arith.constant 1512 : index
    %c0_117 = arith.constant 0 : index
    %158 = vector.load %arg3[%c1512, %c0_117] : memref<1936x128xbf16, #tpu.memory_space<vmem>>, vector<32x15xbf16>
    %159 = arith.truncf %157 : vector<5x3xf32> to vector<5x3xbf16>
    %c0_118 = arith.constant 0 : index
    %c1_119 = arith.constant 1 : index
    %160 = vector.load %arg4[%c0_118, %c1_119] : memref<128x16xf32, #tpu.memory_space<vmem>>, vector<32x1xf32>
    %161 = vector.extract_strided_slice %158 {offsets = [0, 0], sizes = [32, 5], strides = [1, 1]} : vector<32x15xbf16> to vector<32x5xbf16>
    %162 = vector.extract_strided_slice %159 {offsets = [0, 0], sizes = [5, 1], strides = [1, 1]} : vector<5x3xbf16> to vector<5x1xbf16>
    %cst_120 = arith.constant dense<0.000000e+00> : vector<32x1xf32>
    %163 = tpu.matmul %161, %162, %cst_120 {dimension_numbers = #tpu.dot_dimension_numbers<[1], [0], [0], [1], [0, 0, 1, 1], [], []>} : vector<32x5xbf16>, vector<5x1xbf16>, vector<32x1xf32> -> vector<32x1xf32>
    %164 = arith.addf %160, %163 : vector<32x1xf32>
    %165 = vector.extract_strided_slice %158 {offsets = [0, 5], sizes = [32, 5], strides = [1, 1]} : vector<32x15xbf16> to vector<32x5xbf16>
    %166 = vector.extract_strided_slice %159 {offsets = [0, 1], sizes = [5, 1], strides = [1, 1]} : vector<5x3xbf16> to vector<5x1xbf16>
    %cst_121 = arith.constant dense<0.000000e+00> : vector<32x1xf32>
    %167 = tpu.matmul %165, %166, %cst_121 {dimension_numbers = #tpu.dot_dimension_numbers<[1], [0], [0], [1], [0, 0, 1, 1], [], []>} : vector<32x5xbf16>, vector<5x1xbf16>, vector<32x1xf32> -> vector<32x1xf32>
    %168 = arith.addf %164, %167 : vector<32x1xf32>
    %169 = vector.extract_strided_slice %158 {offsets = [0, 10], sizes = [32, 5], strides = [1, 1]} : vector<32x15xbf16> to vector<32x5xbf16>
    %170 = vector.extract_strided_slice %159 {offsets = [0, 2], sizes = [5, 1], strides = [1, 1]} : vector<5x3xbf16> to vector<5x1xbf16>
    %cst_122 = arith.constant dense<0.000000e+00> : vector<32x1xf32>
    %171 = tpu.matmul %169, %170, %cst_122 {dimension_numbers = #tpu.dot_dimension_numbers<[1], [0], [0], [1], [0, 0, 1, 1], [], []>} : vector<32x5xbf16>, vector<5x1xbf16>, vector<32x1xf32> -> vector<32x1xf32>
    %172 = arith.addf %168, %171 : vector<32x1xf32>
    %cst_123 = arith.constant 0.000000e+00 : f32
    %173 = vector.broadcast %cst_123 : f32 to vector<32x1xf32>
    %174 = arith.maximumf %172, %173 : vector<32x1xf32>
    %c1544 = arith.constant 1544 : index
    %c0_124 = arith.constant 0 : index
    %175 = vector.load %arg3[%c1544, %c0_124] : memref<1936x128xbf16, #tpu.memory_space<vmem>>, vector<32x32xbf16>
    %176 = arith.truncf %174 : vector<32x1xf32> to vector<32x1xbf16>
    %cst_125 = arith.constant dense<0.000000e+00> : vector<32x1xf32>
    %177 = tpu.matmul %175, %176, %cst_125 {dimension_numbers = #tpu.dot_dimension_numbers<[1], [0], [0], [1], [0, 0, 1, 1], [], []>} : vector<32x32xbf16>, vector<32x1xbf16>, vector<32x1xf32> -> vector<32x1xf32>
    %c0_126 = arith.constant 0 : index
    %c2_127 = arith.constant 2 : index
    %178 = vector.load %arg4[%c0_126, %c2_127] : memref<128x16xf32, #tpu.memory_space<vmem>>, vector<32x1xf32>
    %179 = arith.addf %177, %178 : vector<32x1xf32>
    %cst_128 = arith.constant 0.000000e+00 : f32
    %180 = vector.broadcast %cst_128 : f32 to vector<32x1xf32>
    %181 = arith.maximumf %179, %180 : vector<32x1xf32>
    %c1576 = arith.constant 1576 : index
    %c0_129 = arith.constant 0 : index
    %182 = vector.load %arg3[%c1576, %c0_129] : memref<1936x128xbf16, #tpu.memory_space<vmem>>, vector<32x32xbf16>
    %183 = arith.truncf %181 : vector<32x1xf32> to vector<32x1xbf16>
    %cst_130 = arith.constant dense<0.000000e+00> : vector<32x1xf32>
    %184 = tpu.matmul %182, %183, %cst_130 {dimension_numbers = #tpu.dot_dimension_numbers<[1], [0], [0], [1], [0, 0, 1, 1], [], []>} : vector<32x32xbf16>, vector<32x1xbf16>, vector<32x1xf32> -> vector<32x1xf32>
    %c0_131 = arith.constant 0 : index
    %c3 = arith.constant 3 : index
    %185 = vector.load %arg4[%c0_131, %c3] : memref<128x16xf32, #tpu.memory_space<vmem>>, vector<32x1xf32>
    %186 = arith.addf %184, %185 : vector<32x1xf32>
    %c0_132 = arith.constant 0 : index
    %c1_133 = arith.constant 1 : index
    %187 = vector.load %arg1[%c0_132, %c1_133] : memref<40x128xf32, #tpu.memory_space<vmem>>, vector<32x2xf32>
    %188 = tpu.concatenate %187, %186 in 1 : vector<32x2xf32>, vector<32x1xf32> -> vector<32x3xf32>
    %c1608 = arith.constant 1608 : index
    %c0_134 = arith.constant 0 : index
    %189 = vector.load %arg3[%c1608, %c0_134] : memref<1936x128xbf16, #tpu.memory_space<vmem>>, vector<128x32xbf16>
    %c1736 = arith.constant 1736 : index
    %c0_135 = arith.constant 0 : index
    %190 = vector.load %arg3[%c1736, %c0_135] : memref<1936x128xbf16, #tpu.memory_space<vmem>>, vector<128x32xbf16>
    %191 = arith.truncf %188 : vector<32x3xf32> to vector<32x3xbf16>
    %cst_136 = arith.constant dense<0.000000e+00> : vector<128x3xf32>
    %192 = tpu.matmul %189, %191, %cst_136 {dimension_numbers = #tpu.dot_dimension_numbers<[1], [0], [0], [1], [0, 0, 1, 1], [], []>} : vector<128x32xbf16>, vector<32x3xbf16>, vector<128x3xf32> -> vector<128x3xf32>
    %c0_137 = arith.constant 0 : index
    %c4 = arith.constant 4 : index
    %193 = vector.load %arg4[%c0_137, %c4] : memref<128x16xf32, #tpu.memory_space<vmem>>, vector<128x1xf32>
    %194 = vector.broadcast %193 : vector<128x1xf32> to vector<128x3xf32>
    %195 = arith.addf %192, %194 : vector<128x3xf32>
    %cst_138 = arith.constant 0.000000e+00 : f32
    %196 = vector.broadcast %cst_138 : f32 to vector<32x1xf32>
    %cst_139 = arith.constant 0.000000e+00 : f32
    %197 = vector.broadcast %cst_139 : f32 to vector<32x1xf32>
    %198 = vector.extract_strided_slice %195 {offsets = [0, 0], sizes = [128, 1], strides = [1, 1]} : vector<128x3xf32> to vector<128x1xf32>
    %199 = arith.truncf %196 : vector<32x1xf32> to vector<32x1xbf16>
    %cst_140 = arith.constant dense<0.000000e+00> : vector<128x1xf32>
    %200 = tpu.matmul %190, %199, %cst_140 {dimension_numbers = #tpu.dot_dimension_numbers<[1], [0], [0], [1], [0, 0, 1, 1], [], []>} : vector<128x32xbf16>, vector<32x1xbf16>, vector<128x1xf32> -> vector<128x1xf32>
    %201 = arith.addf %198, %200 : vector<128x1xf32>
    %202 = vector.extract_strided_slice %201 {offsets = [0, 0], sizes = [32, 1], strides = [1, 1]} : vector<128x1xf32> to vector<32x1xf32>
    %cst_141 = arith.constant 0.000000e+00 : f32
    %203 = vector.broadcast %cst_141 : f32 to vector<32x1xf32>
    %204 = arith.subf %203, %202 : vector<32x1xf32>
    %205 = math.exp %204 : vector<32x1xf32>
    %cst_142 = arith.constant 1.000000e+00 : f32
    %206 = vector.broadcast %cst_142 : f32 to vector<32x1xf32>
    %207 = arith.addf %206, %205 : vector<32x1xf32>
    %cst_143 = arith.constant 1.000000e+00 : f32
    %208 = vector.broadcast %cst_143 : f32 to vector<32x1xf32>
    %209 = arith.divf %208, %207 : vector<32x1xf32>
    %210 = vector.extract_strided_slice %201 {offsets = [32, 0], sizes = [32, 1], strides = [1, 1]} : vector<128x1xf32> to vector<32x1xf32>
    %cst_144 = arith.constant 0.000000e+00 : f32
    %211 = vector.broadcast %cst_144 : f32 to vector<32x1xf32>
    %212 = arith.subf %211, %210 : vector<32x1xf32>
    %213 = math.exp %212 : vector<32x1xf32>
    %cst_145 = arith.constant 1.000000e+00 : f32
    %214 = vector.broadcast %cst_145 : f32 to vector<32x1xf32>
    %215 = arith.addf %214, %213 : vector<32x1xf32>
    %cst_146 = arith.constant 1.000000e+00 : f32
    %216 = vector.broadcast %cst_146 : f32 to vector<32x1xf32>
    %217 = arith.divf %216, %215 : vector<32x1xf32>
    %218 = vector.extract_strided_slice %201 {offsets = [64, 0], sizes = [32, 1], strides = [1, 1]} : vector<128x1xf32> to vector<32x1xf32>
    %219 = math.tanh %218 : vector<32x1xf32>
    %220 = vector.extract_strided_slice %201 {offsets = [96, 0], sizes = [32, 1], strides = [1, 1]} : vector<128x1xf32> to vector<32x1xf32>
    %cst_147 = arith.constant 0.000000e+00 : f32
    %221 = vector.broadcast %cst_147 : f32 to vector<32x1xf32>
    %222 = arith.subf %221, %220 : vector<32x1xf32>
    %223 = math.exp %222 : vector<32x1xf32>
    %cst_148 = arith.constant 1.000000e+00 : f32
    %224 = vector.broadcast %cst_148 : f32 to vector<32x1xf32>
    %225 = arith.addf %224, %223 : vector<32x1xf32>
    %cst_149 = arith.constant 1.000000e+00 : f32
    %226 = vector.broadcast %cst_149 : f32 to vector<32x1xf32>
    %227 = arith.divf %226, %225 : vector<32x1xf32>
    %228 = arith.mulf %217, %197 : vector<32x1xf32>
    %229 = arith.mulf %209, %219 : vector<32x1xf32>
    %230 = arith.addf %228, %229 : vector<32x1xf32>
    %231 = math.tanh %230 : vector<32x1xf32>
    %232 = arith.mulf %227, %231 : vector<32x1xf32>
    %233 = vector.extract_strided_slice %195 {offsets = [0, 1], sizes = [128, 1], strides = [1, 1]} : vector<128x3xf32> to vector<128x1xf32>
    %234 = arith.truncf %232 : vector<32x1xf32> to vector<32x1xbf16>
    %cst_150 = arith.constant dense<0.000000e+00> : vector<128x1xf32>
    %235 = tpu.matmul %190, %234, %cst_150 {dimension_numbers = #tpu.dot_dimension_numbers<[1], [0], [0], [1], [0, 0, 1, 1], [], []>} : vector<128x32xbf16>, vector<32x1xbf16>, vector<128x1xf32> -> vector<128x1xf32>
    %236 = arith.addf %233, %235 : vector<128x1xf32>
    %237 = vector.extract_strided_slice %236 {offsets = [0, 0], sizes = [32, 1], strides = [1, 1]} : vector<128x1xf32> to vector<32x1xf32>
    %cst_151 = arith.constant 0.000000e+00 : f32
    %238 = vector.broadcast %cst_151 : f32 to vector<32x1xf32>
    %239 = arith.subf %238, %237 : vector<32x1xf32>
    %240 = math.exp %239 : vector<32x1xf32>
    %cst_152 = arith.constant 1.000000e+00 : f32
    %241 = vector.broadcast %cst_152 : f32 to vector<32x1xf32>
    %242 = arith.addf %241, %240 : vector<32x1xf32>
    %cst_153 = arith.constant 1.000000e+00 : f32
    %243 = vector.broadcast %cst_153 : f32 to vector<32x1xf32>
    %244 = arith.divf %243, %242 : vector<32x1xf32>
    %245 = vector.extract_strided_slice %236 {offsets = [32, 0], sizes = [32, 1], strides = [1, 1]} : vector<128x1xf32> to vector<32x1xf32>
    %cst_154 = arith.constant 0.000000e+00 : f32
    %246 = vector.broadcast %cst_154 : f32 to vector<32x1xf32>
    %247 = arith.subf %246, %245 : vector<32x1xf32>
    %248 = math.exp %247 : vector<32x1xf32>
    %cst_155 = arith.constant 1.000000e+00 : f32
    %249 = vector.broadcast %cst_155 : f32 to vector<32x1xf32>
    %250 = arith.addf %249, %248 : vector<32x1xf32>
    %cst_156 = arith.constant 1.000000e+00 : f32
    %251 = vector.broadcast %cst_156 : f32 to vector<32x1xf32>
    %252 = arith.divf %251, %250 : vector<32x1xf32>
    %253 = vector.extract_strided_slice %236 {offsets = [64, 0], sizes = [32, 1], strides = [1, 1]} : vector<128x1xf32> to vector<32x1xf32>
    %254 = math.tanh %253 : vector<32x1xf32>
    %255 = vector.extract_strided_slice %236 {offsets = [96, 0], sizes = [32, 1], strides = [1, 1]} : vector<128x1xf32> to vector<32x1xf32>
    %cst_157 = arith.constant 0.000000e+00 : f32
    %256 = vector.broadcast %cst_157 : f32 to vector<32x1xf32>
    %257 = arith.subf %256, %255 : vector<32x1xf32>
    %258 = math.exp %257 : vector<32x1xf32>
    %cst_158 = arith.constant 1.000000e+00 : f32
    %259 = vector.broadcast %cst_158 : f32 to vector<32x1xf32>
    %260 = arith.addf %259, %258 : vector<32x1xf32>
    %cst_159 = arith.constant 1.000000e+00 : f32
    %261 = vector.broadcast %cst_159 : f32 to vector<32x1xf32>
    %262 = arith.divf %261, %260 : vector<32x1xf32>
    %263 = arith.mulf %252, %230 : vector<32x1xf32>
    %264 = arith.mulf %244, %254 : vector<32x1xf32>
    %265 = arith.addf %263, %264 : vector<32x1xf32>
    %266 = math.tanh %265 : vector<32x1xf32>
    %267 = arith.mulf %262, %266 : vector<32x1xf32>
    %268 = vector.extract_strided_slice %195 {offsets = [0, 2], sizes = [128, 1], strides = [1, 1]} : vector<128x3xf32> to vector<128x1xf32>
    %269 = arith.truncf %267 : vector<32x1xf32> to vector<32x1xbf16>
    %cst_160 = arith.constant dense<0.000000e+00> : vector<128x1xf32>
    %270 = tpu.matmul %190, %269, %cst_160 {dimension_numbers = #tpu.dot_dimension_numbers<[1], [0], [0], [1], [0, 0, 1, 1], [], []>} : vector<128x32xbf16>, vector<32x1xbf16>, vector<128x1xf32> -> vector<128x1xf32>
    %271 = arith.addf %268, %270 : vector<128x1xf32>
    %272 = vector.extract_strided_slice %271 {offsets = [0, 0], sizes = [32, 1], strides = [1, 1]} : vector<128x1xf32> to vector<32x1xf32>
    %cst_161 = arith.constant 0.000000e+00 : f32
    %273 = vector.broadcast %cst_161 : f32 to vector<32x1xf32>
    %274 = arith.subf %273, %272 : vector<32x1xf32>
    %275 = math.exp %274 : vector<32x1xf32>
    %cst_162 = arith.constant 1.000000e+00 : f32
    %276 = vector.broadcast %cst_162 : f32 to vector<32x1xf32>
    %277 = arith.addf %276, %275 : vector<32x1xf32>
    %cst_163 = arith.constant 1.000000e+00 : f32
    %278 = vector.broadcast %cst_163 : f32 to vector<32x1xf32>
    %279 = arith.divf %278, %277 : vector<32x1xf32>
    %280 = vector.extract_strided_slice %271 {offsets = [32, 0], sizes = [32, 1], strides = [1, 1]} : vector<128x1xf32> to vector<32x1xf32>
    %cst_164 = arith.constant 0.000000e+00 : f32
    %281 = vector.broadcast %cst_164 : f32 to vector<32x1xf32>
    %282 = arith.subf %281, %280 : vector<32x1xf32>
    %283 = math.exp %282 : vector<32x1xf32>
    %cst_165 = arith.constant 1.000000e+00 : f32
    %284 = vector.broadcast %cst_165 : f32 to vector<32x1xf32>
    %285 = arith.addf %284, %283 : vector<32x1xf32>
    %cst_166 = arith.constant 1.000000e+00 : f32
    %286 = vector.broadcast %cst_166 : f32 to vector<32x1xf32>
    %287 = arith.divf %286, %285 : vector<32x1xf32>
    %288 = vector.extract_strided_slice %271 {offsets = [64, 0], sizes = [32, 1], strides = [1, 1]} : vector<128x1xf32> to vector<32x1xf32>
    %289 = math.tanh %288 : vector<32x1xf32>
    %290 = vector.extract_strided_slice %271 {offsets = [96, 0], sizes = [32, 1], strides = [1, 1]} : vector<128x1xf32> to vector<32x1xf32>
    %cst_167 = arith.constant 0.000000e+00 : f32
    %291 = vector.broadcast %cst_167 : f32 to vector<32x1xf32>
    %292 = arith.subf %291, %290 : vector<32x1xf32>
    %293 = math.exp %292 : vector<32x1xf32>
    %cst_168 = arith.constant 1.000000e+00 : f32
    %294 = vector.broadcast %cst_168 : f32 to vector<32x1xf32>
    %295 = arith.addf %294, %293 : vector<32x1xf32>
    %cst_169 = arith.constant 1.000000e+00 : f32
    %296 = vector.broadcast %cst_169 : f32 to vector<32x1xf32>
    %297 = arith.divf %296, %295 : vector<32x1xf32>
    %298 = arith.mulf %287, %265 : vector<32x1xf32>
    %299 = arith.mulf %279, %289 : vector<32x1xf32>
    %300 = arith.addf %298, %299 : vector<32x1xf32>
    %301 = math.tanh %300 : vector<32x1xf32>
    %302 = arith.mulf %297, %301 : vector<32x1xf32>
    %303 = tpu.concatenate %232, %267, %302 in 1 : vector<32x1xf32>, vector<32x1xf32>, vector<32x1xf32> -> vector<32x3xf32>
    %c1864 = arith.constant 1864 : index
    %c0_170 = arith.constant 0 : index
    %304 = vector.load %arg3[%c1864, %c0_170] : memref<1936x128xbf16, #tpu.memory_space<vmem>>, vector<32x32xbf16>
    %305 = arith.truncf %303 : vector<32x3xf32> to vector<32x3xbf16>
    %cst_171 = arith.constant dense<0.000000e+00> : vector<32x3xf32>
    %306 = tpu.matmul %304, %305, %cst_171 {dimension_numbers = #tpu.dot_dimension_numbers<[1], [0], [0], [1], [0, 0, 1, 1], [], []>} : vector<32x32xbf16>, vector<32x3xbf16>, vector<32x3xf32> -> vector<32x3xf32>
    %c0_172 = arith.constant 0 : index
    %c5 = arith.constant 5 : index
    %307 = vector.load %arg4[%c0_172, %c5] : memref<128x16xf32, #tpu.memory_space<vmem>>, vector<32x1xf32>
    %308 = vector.broadcast %307 : vector<32x1xf32> to vector<32x3xf32>
    %309 = arith.addf %306, %308 : vector<32x3xf32>
    %cst_173 = arith.constant 0.000000e+00 : f32
    %310 = vector.broadcast %cst_173 : f32 to vector<32x3xf32>
    %311 = arith.maximumf %309, %310 : vector<32x3xf32>
    %c1896 = arith.constant 1896 : index
    %c0_174 = arith.constant 0 : index
    %312 = vector.load %arg3[%c1896, %c0_174] : memref<1936x128xbf16, #tpu.memory_space<vmem>>, vector<32x32xbf16>
    %313 = arith.truncf %311 : vector<32x3xf32> to vector<32x3xbf16>
    %cst_175 = arith.constant dense<0.000000e+00> : vector<32x3xf32>
    %314 = tpu.matmul %312, %313, %cst_175 {dimension_numbers = #tpu.dot_dimension_numbers<[1], [0], [0], [1], [0, 0, 1, 1], [], []>} : vector<32x32xbf16>, vector<32x3xbf16>, vector<32x3xf32> -> vector<32x3xf32>
    %c0_176 = arith.constant 0 : index
    %c6 = arith.constant 6 : index
    %315 = vector.load %arg4[%c0_176, %c6] : memref<128x16xf32, #tpu.memory_space<vmem>>, vector<32x1xf32>
    %316 = vector.broadcast %315 : vector<32x1xf32> to vector<32x3xf32>
    %317 = arith.addf %314, %316 : vector<32x3xf32>
    %cst_177 = arith.constant 0.000000e+00 : f32
    %318 = vector.broadcast %cst_177 : f32 to vector<32x3xf32>
    %319 = arith.maximumf %317, %318 : vector<32x3xf32>
    %c1928 = arith.constant 1928 : index
    %c0_178 = arith.constant 0 : index
    %320 = vector.load %arg3[%c1928, %c0_178] : memref<1936x128xbf16, #tpu.memory_space<vmem>>, vector<1x32xbf16>
    %321 = arith.truncf %319 : vector<32x3xf32> to vector<32x3xbf16>
    %cst_179 = arith.constant dense<0.000000e+00> : vector<1x3xf32>
    %322 = tpu.matmul %320, %321, %cst_179 {dimension_numbers = #tpu.dot_dimension_numbers<[1], [0], [0], [1], [0, 0, 1, 1], [], []>} : vector<1x32xbf16>, vector<32x3xbf16>, vector<1x3xf32> -> vector<1x3xf32>
    %c0_180 = arith.constant 0 : index
    %c7 = arith.constant 7 : index
    %323 = vector.load %arg4[%c0_180, %c7] : memref<128x16xf32, #tpu.memory_space<vmem>>, vector<1x1xf32>
    %324 = vector.broadcast %323 : vector<1x1xf32> to vector<1x3xf32>
    %325 = arith.addf %322, %324 : vector<1x3xf32>
    %cst_181 = arith.constant 0.000000e+00 : f32
    %326 = vector.broadcast %cst_181 : f32 to vector<40x128xf32>
    %c0_182 = arith.constant 0 : index
    %c0_183 = arith.constant 0 : index
    %327 = vector.load %arg5[%c0_182, %c0_183] : memref<40x128xf32, #tpu.memory_space<vmem>>, vector<40x128xf32>
    tpu.vector_store %arg5[%c0_182, %c0_183], %326 {strides = array<i32>} : memref<40x128xf32, #tpu.memory_space<vmem>>, vector<40x128xf32>,
    %c0_184 = arith.constant 0 : index
    %c0_185 = arith.constant 0 : index
    %328 = vector.load %arg5[%c0_184, %c0_185] : memref<40x128xf32, #tpu.memory_space<vmem>>, vector<32x3xf32>
    tpu.vector_store %arg5[%c0_184, %c0_185], %188 {strides = array<i32>} : memref<40x128xf32, #tpu.memory_space<vmem>>, vector<32x3xf32>,
    %c32 = arith.constant 32 : index
    %c0_186 = arith.constant 0 : index
    %329 = vector.load %arg5[%c32, %c0_186] : memref<40x128xf32, #tpu.memory_space<vmem>>, vector<5x3xf32>
    tpu.vector_store %arg5[%c32, %c0_186], %157 {strides = array<i32>} : memref<40x128xf32, #tpu.memory_space<vmem>>, vector<5x3xf32>,
    %c37 = arith.constant 37 : index
    %c0_187 = arith.constant 0 : index
    %330 = vector.load %arg5[%c37, %c0_187] : memref<40x128xf32, #tpu.memory_space<vmem>>, vector<1x3xf32>
    tpu.vector_store %arg5[%c37, %c0_187], %325 {strides = array<i32>} : memref<40x128xf32, #tpu.memory_space<vmem>>, vector<1x3xf32>,
    return
  }
}

</mosaic_0001>

<llo_original>
// kernel: _forward_impl.1
$region0: #{_forward_impl.1}
  #allocation0 [shape = 'u32[]', space=smem, size = 0x4, offset = 0x4, fixed_abs, tag = 'smem constant byte address 0x4 - core index']
  #allocation1 [shape = 'u32[144,128]{1,0:T(1,128)}', space=vmem, size = 0x12000, scoped, tag = 'internal scratch']
  %s0 = inlined_call_operand.hbm [shape: f32[3,64,64], index: 0, kind: input, shape index: {}]
  %s1 = inlined_call_operand.vmem [shape: f32[40,128], index: 1, kind: input, shape index: {}, may-alias: {1,5}]
  %s2 = inlined_call_operand.hbm [shape: bf16[576,512], index: 2, kind: input, shape index: {}]
  %s3 = inlined_call_operand.hbm [shape: bf16[1936,128], index: 3, kind: input, shape index: {}]
  %s4 = inlined_call_operand.vmem [shape: f32[128,16], index: 4, kind: input, shape index: {}]
  %s5 = inlined_call_operand.vmem [shape: f32[40,128], index: 5, kind: output, shape index: {}, may-alias: {1,5}]
  %s6 = sld [smem:[#allocation0]]
  $region42: #{_forward_impl.1} parent=0
    _
  %s8 = ssub.s32 1, %s6
  %s9 = scalar_select 0, %s8, %s6
  $region1: #{_forward_impl.1} parent=0
    #allocation2 [shape = 'u8[98304]{0}', space=vmem, size = 0x18000, scoped, tag = 'input window, operand 0, single buffered']
    #allocation3 [shape = 's32[1]{0}', space=sflag, size = 0x4, scoped, tag = 'scoped memory for _forward_impl.1']
    #allocation4 [shape = 'u8[589824]{0}', space=vmem, size = 0x90000, scoped, tag = 'input window, operand 2, single buffered']
    #allocation5 [shape = 's32[1]{0}', space=sflag, size = 0x4, scoped, tag = 'scoped memory for _forward_impl.1']
    #allocation6 [shape = 'u8[495616]{0}', space=vmem, size = 0x79000, scoped, tag = 'input window, operand 3, single buffered']
    %10 = vsyncpa [#allocation3], 0
    %11 = vsyncpa [#allocation5], 0
    // Predicated region
    $region2: #{_forward_impl.1} parent=1 // pred_check
      _
    $region3: #{_forward_impl.1} parent=1 // pred_check_branch
      %13 = sbr.rel (0) target = $region5
    $region4: #{_forward_impl.1} parent=1 // pred_region
      %s15 = ssub.s32 3072, 3072
      %16 = vsyncadd [#allocation3], %s15
      %s17 = sshll.u32 [#allocation2], 4
      %s18 = int_to_ptr.vmem [resolvable:$true] %s17
      %23 = dma.hbm_to_vmem [thread:$0]  %s0, 3072, %s18, [#allocation3], 128, 128, 8
    $region5: #{_forward_impl.1} parent=1 // pred_fallthru
      _
    // Predicated region
    $region6: #{_forward_impl.1} parent=1 // pred_check
      _
    $region7: #{_forward_impl.1} parent=1 // pred_check_branch
      %25 = sbr.rel (0) target = $region9
    $region8: #{_forward_impl.1} parent=1 // pred_region
      _
    $region9: #{_forward_impl.1} parent=1 // pred_fallthru
      _
    // Predicated region
    $region10: #{_forward_impl.1} parent=1 // pred_check
      _
    $region11: #{_forward_impl.1} parent=1 // pred_check_branch
      %27 = sbr.rel (0) target = $region13
    $region12: #{_forward_impl.1} parent=1 // pred_region
      %s29 = ssub.s32 18432, 18432
      %30 = vsyncadd [#allocation5], %s29
      %s31 = sshll.u32 [#allocation4], 4
      %s32 = int_to_ptr.vmem [resolvable:$true] %s31
      %37 = dma.hbm_to_vmem [thread:$0]  %s2, 18432, %s32, [#allocation5], 256, 256, 16
    $region13: #{_forward_impl.1} parent=1 // pred_fallthru
      _
    // Predicated region
    $region14: #{_forward_impl.1} parent=1 // pred_check
      _
    $region15: #{_forward_impl.1} parent=1 // pred_check_branch
      %39 = sbr.rel (0) target = $region17
    $region16: #{_forward_impl.1} parent=1 // pred_region
      %s41 = ssub.s32 15488, 15488
      %42 = vsyncadd [#allocation5], %s41
      %s43 = sshll.u32 [#allocation6], 4
      %s44 = int_to_ptr.vmem [resolvable:$true] %s43
      %49 = dma.hbm_to_vmem [thread:$0]  %s3, 15488, %s44, [#allocation5], 64, 64, 4
    $region17: #{_forward_impl.1} parent=1 // pred_fallthru
      _
    // Predicated region
    $region18: #{_forward_impl.1} parent=1 // pred_check
      _
    $region19: #{_forward_impl.1} parent=1 // pred_check_branch
      %51 = sbr.rel (0) target = $region21
    $region20: #{_forward_impl.1} parent=1 // pred_region
      _
    $region21: #{_forward_impl.1} parent=1 // pred_fallthru
      _
    // Predicated region
    $region22: #{_forward_impl.1} parent=1 // pred_check
      _
    $region23: #{_forward_impl.1} parent=1 // pred_check_branch
      %53 = sbr.rel (0) target = $region25
    $region24: #{_forward_impl.1} parent=1 // pred_region
      %54 = dma.done [#allocation3], 3072
    $region25: #{_forward_impl.1} parent=1 // pred_fallthru
      _
    // Predicated region
    $region26: #{_forward_impl.1} parent=1 // pred_check
      _
    $region27: #{_forward_impl.1} parent=1 // pred_check_branch
      %56 = sbr.rel (0) target = $region29
    $region28: #{_forward_impl.1} parent=1 // pred_region
      %57 = dma.done [#allocation5], 18432
    $region29: #{_forward_impl.1} parent=1 // pred_fallthru
      _
    // Predicated region
    $region30: #{_forward_impl.1} parent=1 // pred_check
      _
    $region31: #{_forward_impl.1} parent=1 // pred_check_branch
      %59 = sbr.rel (0) target = $region33
    $region32: #{_forward_impl.1} parent=1 // pred_region
      %60 = dma.done [#allocation5], 15488
    $region33: #{_forward_impl.1} parent=1 // pred_fallthru
      _
    %v62 = vld [vmem:[#allocation2] sm:$0xff]
    %v63 = vld [vmem:[#allocation2 + $0x8] sm:$0xff]
    %v64 = vld [vmem:[#allocation2 + $0x10] sm:$0xff]
    %v65 = vld [vmem:[#allocation2 + $0x18] sm:$0xff]
    %v66 = vld [vmem:[#allocation2 + $0x20] sm:$0xff]
    %v67 = vld [vmem:[#allocation2 + $0x28] sm:$0xff]
    %v68 = vld [vmem:[#allocation2 + $0x30] sm:$0xff]
    %v69 = vld [vmem:[#allocation2 + $0x38] sm:$0xff]
    %s70 = scalar_lea.vmem [#allocation2], 64
    %v71 = vld [vmem:[%s70] sm:$0xff]
    %v72 = vld [vmem:[%s70 + $0x8] sm:$0xff]
    %v73 = vld [vmem:[%s70 + $0x10] sm:$0xff]
    %v74 = vld [vmem:[%s70 + $0x18] sm:$0xff]
    %v75 = vld [vmem:[%s70 + $0x20] sm:$0xff]
    %v76 = vld [vmem:[%s70 + $0x28] sm:$0xff]
    %v77 = vld [vmem:[%s70 + $0x30] sm:$0xff]
    %v78 = vld [vmem:[%s70 + $0x38] sm:$0xff]
    %s79 = scalar_lea.vmem [#allocation2], 128
    %v80 = vld [vmem:[%s79] sm:$0xff]
    %v81 = vld [vmem:[%s79 + $0x8] sm:$0xff]
    %v82 = vld [vmem:[%s79 + $0x10] sm:$0xff]
    %v83 = vld [vmem:[%s79 + $0x18] sm:$0xff]
    %v84 = vld [vmem:[%s79 + $0x20] sm:$0xff]
    %v85 = vld [vmem:[%s79 + $0x28] sm:$0xff]
    %v86 = vld [vmem:[%s79 + $0x30] sm:$0xff]
    %v87 = vld [vmem:[%s79 + $0x38] sm:$0xff]
    %96 = vrot.lane.b32.xlu0 %v71, 64
    %v97 = vpop.permute.xlu0 %96
    %98 = vrot.lane.b32.xlu0 %v72, 64
    %v99 = vpop.permute.xlu0 %98
    %100 = vrot.lane.b32.xlu0 %v73, 64
    %v101 = vpop.permute.xlu0 %100
    %102 = vrot.lane.b32.xlu0 %v74, 64
    %v103 = vpop.permute.xlu0 %102
    %104 = vrot.lane.b32.xlu0 %v75, 64
    %v105 = vpop.permute.xlu0 %104
    %106 = vrot.lane.b32.xlu0 %v76, 64
    %v107 = vpop.permute.xlu0 %106
    %108 = vrot.lane.b32.xlu0 %v77, 64
    %v109 = vpop.permute.xlu0 %108
    %110 = vrot.lane.b32.xlu0 %v78, 64
    %v111 = vpop.permute.xlu0 %110
    %vm120 = vcmask 523264
    %v121 = vsel %vm120, %v62, %v97
    %v122 = vsel %vm120, %v63, %v99
    %v123 = vsel %vm120, %v64, %v101
    %v124 = vsel %vm120, %v65, %v103
    %v125 = vsel %vm120, %v66, %v105
    %v126 = vsel %vm120, %v67, %v107
    %v127 = vsel %vm120, %v68, %v109
    %v128 = vsel %vm120, %v69, %v111
    %v129 = vpack.c.bf16 %v122, %v121
    %v130 = vpack.c.bf16 %v81, %v80
    %v131 = vpack.c.bf16 %v124, %v123
    %v132 = vpack.c.bf16 %v83, %v82
    %v133 = vpack.c.bf16 %v126, %v125
    %v134 = vpack.c.bf16 %v85, %v84
    %v135 = vpack.c.bf16 %v128, %v127
    %v136 = vpack.c.bf16 %v87, %v86
    %v137 = vld [vmem:[#allocation6] sm:$0xf]
    %v138 = vld [vmem:[#allocation6 + $0x4] sm:$0xf]
    %v139 = vld [vmem:[#allocation6 + $0x8] sm:$0xf]
    %v140 = vld [vmem:[#allocation6 + $0xc] sm:$0xf]
    %v141 = vld [vmem:[#allocation6 + $0x10] sm:$0xf]
    %v142 = vld [vmem:[#allocation6 + $0x14] sm:$0xf]
    %v143 = vld [vmem:[#allocation6 + $0x18] sm:$0xf]
    %v144 = vld [vmem:[#allocation6 + $0x1c] sm:$0xf]
    %v145 = vld [vmem:[#allocation6 + $0x20] sm:$0xf]
    %v146 = vld [vmem:[#allocation6 + $0x24] sm:$0xf]
    %v147 = vld [vmem:[#allocation6 + $0x28] sm:$0xf]
    %v148 = vld [vmem:[#allocation6 + $0x2c] sm:$0xf]
    %v149 = vld [vmem:[#allocation6 + $0x30] sm:$0xf]
    %v150 = vld [vmem:[#allocation6 + $0x34] sm:$0xf]
    %v151 = vld [vmem:[#allocation6 + $0x38] sm:$0xf]
    %v152 = vld [vmem:[#allocation6 + $0x3c] sm:$0xf]
    %v153 = vld [vmem:[#allocation6 + $0x40] sm:$0xf]
    %v154 = vld [vmem:[#allocation6 + $0x44] sm:$0xf]
    %v155 = vld [vmem:[#allocation6 + $0x48] sm:$0xf]
    %v156 = vld [vmem:[#allocation6 + $0x4c] sm:$0xf]
    %v157 = vld [vmem:[#allocation6 + $0x50] sm:$0xf]
    %v158 = vld [vmem:[#allocation6 + $0x54] sm:$0xf]
    %v159 = vld [vmem:[#allocation6 + $0x58] sm:$0xf]
    %v160 = vld [vmem:[#allocation6 + $0x5c] sm:$0xf]
    %v185 = vunpack.c.l.b16 %v137
    %v186 = vunpack.c.l.b16 %v138
    %v187 = vunpack.c.l.b16 %v139
    %v188 = vunpack.c.l.b16 %v140
    %v189 = vunpack.c.l.b16 %v141
    %v190 = vunpack.c.l.b16 %v142
    %v191 = vunpack.c.l.b16 %v143
    %v192 = vunpack.c.l.b16 %v144
    %v193 = vunpack.c.l.b16 %v145
    %v194 = vunpack.c.l.b16 %v146
    %v195 = vunpack.c.l.b16 %v147
    %v196 = vunpack.c.l.b16 %v148
    %v197 = vunpack.c.l.b16 %v149
    %v198 = vunpack.c.l.b16 %v150
    %v199 = vunpack.c.l.b16 %v151
    %v200 = vunpack.c.l.b16 %v152
    %v201 = vunpack.c.l.b16 %v153
    %v202 = vunpack.c.l.b16 %v154
    %v203 = vunpack.c.l.b16 %v155
    %v204 = vunpack.c.l.b16 %v156
    %v205 = vunpack.c.l.b16 %v157
    %v206 = vunpack.c.l.b16 %v158
    %v207 = vunpack.c.l.b16 %v159
    %v208 = vunpack.c.l.b16 %v160
    %v209 = vpack.c.b16 %v186, %v185
    %v210 = vpack.c.b16 %v188, %v187
    %v211 = vpack.c.b16 %v190, %v189
    %v212 = vpack.c.b16 %v192, %v191
    %v213 = vpack.c.b16 %v194, %v193
    %v214 = vpack.c.b16 %v196, %v195
    %v215 = vpack.c.b16 %v198, %v197
    %v216 = vpack.c.b16 %v200, %v199
    %v217 = vpack.c.b16 %v202, %v201
    %v218 = vpack.c.b16 %v204, %v203
    %v219 = vpack.c.b16 %v206, %v205
    %v220 = vpack.c.b16 %v208, %v207
    %v234 = vsel %vm120, %v130, 0
    %v237 = vsel %vm120, %v132, 0
    %v240 = vsel %vm120, %v134, 0
    %v243 = vsel %vm120, %v136, 0
    %245 = vmatprep.subr.bf16.mxu0 0
    %246 = vmatpush1.bf16.msra.mxu0 %v216
    %247 = vmatprep.subr.bf16.mxu0 0
    %248 = vmatpush1.bf16.msra.mxu0 %v215
    %249 = vmatprep.subr.bf16.mxu0 0
    %250 = vmatpush1.bf16.msra.mxu0 %v214
    %251 = vmatprep.subr.bf16.mxu0 0
    %252 = vmatpush1.bf16.msra.mxu0 %v213
    %253 = vmatprep.subr.bf16.mxu0 0
    %254 = vmatpush1.bf16.msra.mxu0 %v212
    %255 = vmatprep.subr.bf16.mxu0 0
    %256 = vmatpush1.bf16.msra.mxu0 %v211
    %257 = vmatprep.subr.bf16.mxu0 0
    %258 = vmatpush1.bf16.msra.mxu0 %v210
    %259 = vmatprep.subr.bf16.mxu0 0
    %260 = vmatpush1.bf16.msra.mxu0 %v209
    %261 = vmatprep.subr.bf16.mxu0 0
    %262 = vmatpush2.bf16.msra.mxu0 0
    %263 = vmatprep.subr.bf16.mxu0 0
    %264 = vmatpush2.bf16.msra.mxu0 0
    %265 = vmatprep.subr.bf16.mxu0 0
    %266 = vmatpush2.bf16.msra.mxu0 0
    %267 = vmatprep.subr.bf16.mxu0 0
    %268 = vmatpush2.bf16.msra.mxu0 0
    %269 = vmatprep.subr.bf16.mxu0 0
    %270 = vmatpush2.bf16.msra.mxu0 %v220
    %271 = vmatprep.subr.bf16.mxu0 0
    %272 = vmatpush2.bf16.msra.mxu0 %v219
    %273 = vmatprep.subr.bf16.mxu0 0
    %274 = vmatpush2.bf16.msra.mxu0 %v218
    %275 = vmatprep.subr.bf16.mxu0 0
    %276 = vmatpush2.bf16.msra.mxu0 %v217
    %277 = vmatprep.mubr.bf16.mxu0 %v234
    %278 = vmatmul.mubr.bf16.gmra.mxu0 %v129
    %v279 = vpop.f32.mrf.mxu0
    %v280 = vadd.f32 0.0, %v279
    %v281 = vpop.f32.mrf.mxu0
    %v282 = vpop.f32.mrf.mxu0
    %v283 = vadd.f32 0.0, %v282
    %v284 = vpop.f32.mrf.mxu0
    %285 = vmatprep.mubr.bf16.mxu0 %v237
    %286 = vmatmul.mubr.bf16.gmra.mxu0 %v131
    %v287 = vpop.f32.mrf.mxu0
    %v288 = vadd.f32 0.0, %v287
    %v289 = vpop.f32.mrf.mxu0
    %v290 = vpop.f32.mrf.mxu0
    %v291 = vadd.f32 0.0, %v290
    %v292 = vpop.f32.mrf.mxu0
    %293 = vmatprep.mubr.bf16.mxu0 %v240
    %294 = vmatmul.mubr.bf16.gmra.mxu0 %v133
    %v295 = vpop.f32.mrf.mxu0
    %v296 = vadd.f32 0.0, %v295
    %v297 = vpop.f32.mrf.mxu0
    %v298 = vpop.f32.mrf.mxu0
    %v299 = vadd.f32 0.0, %v298
    %v300 = vpop.f32.mrf.mxu0
    %301 = vmatprep.mubr.bf16.mxu0 %v243
    %302 = vmatmul.mubr.bf16.gmra.mxu0 %v135
    %v303 = vpop.f32.mrf.mxu0
    %v304 = vadd.f32 0.0, %v303
    %v305 = vpop.f32.mrf.mxu0
    %v306 = vpop.f32.mrf.mxu0
    %v307 = vadd.f32 0.0, %v306
    %v308 = vpop.f32.mrf.mxu0
    %309 = vdwg.mxu0
    %v310 = vpack.c.bf16 %v283, %v280
    %v311 = vpack.c.bf16 %v291, %v288
    %v312 = vpack.c.bf16 %v299, %v296
    %v313 = vpack.c.bf16 %v307, %v304
    %v314 = vld [vmem:[#allocation4] sm:$0xf]
    %v315 = vld [vmem:[#allocation4 + $0x10] sm:$0xf]
    %v316 = vld [vmem:[#allocation4 + $0x20] sm:$0xf]
    %v317 = vld [vmem:[#allocation4 + $0x30] sm:$0xf]
    %v318 = vld [vmem:[#allocation4 + $0x40] sm:$0xf]
    %v319 = vld [vmem:[#allocation4 + $0x50] sm:$0xf]
    %v320 = vld [vmem:[#allocation4 + $0x60] sm:$0xf]
    %v321 = vld [vmem:[#allocation4 + $0x70] sm:$0xf]
    %v322 = vld [vmem:[#allocation4 + $0x80] sm:$0xf]
    %v323 = vld [vmem:[#allocation4 + $0x90] sm:$0xf]
    %v324 = vld [vmem:[#allocation4 + $0xa0] sm:$0xf]
    %v325 = vld [vmem:[#allocation4 + $0xb0] sm:$0xf]
    %v326 = vld [vmem:[#allocation4 + $0xc0] sm:$0xf]
    %v327 = vld [vmem:[#allocation4 + $0xd0] sm:$0xf]
    %v328 = vld [vmem:[#allocation4 + $0xe0] sm:$0xf]
    %v329 = vld [vmem:[#allocation4 + $0xf0] sm:$0xf]
    %v330 = vld [vmem:[#allocation6 + $0x60] sm:$0xf]
    %v331 = vld [vmem:[#allocation6 + $0x64] sm:$0xf]
    %v332 = vld [vmem:[#allocation6 + $0x68] sm:$0xf]
    %v333 = vld [vmem:[#allocation6 + $0x6c] sm:$0xf]
    %v334 = vld [vmem:[#allocation6 + $0x70] sm:$0xf]
    %v335 = vld [vmem:[#allocation6 + $0x74] sm:$0xf]
    %v336 = vld [vmem:[#allocation6 + $0x78] sm:$0xf]
    %v337 = vld [vmem:[#allocation6 + $0x7c] sm:$0xf]
    %v338 = vld [vmem:[#allocation6 + $0x80] sm:$0xf]
    %v339 = vld [vmem:[#allocation6 + $0x84] sm:$0xf]
    %v340 = vld [vmem:[#allocation6 + $0x88] sm:$0xf]
    %v341 = vld [vmem:[#allocation6 + $0x8c] sm:$0xf]
    %v342 = vld [vmem:[#allocation6 + $0x90] sm:$0xf]
    %v343 = vld [vmem:[#allocation6 + $0x94] sm:$0xf]
    %v344 = vld [vmem:[#allocation6 + $0x98] sm:$0xf]
    %v345 = vld [vmem:[#allocation6 + $0x9c] sm:$0xf]
    %v346 = vld [vmem:[#allocation6 + $0xa0] sm:$0xf]
    %v347 = vld [vmem:[#allocation6 + $0xa4] sm:$0xf]
    %v348 = vld [vmem:[#allocation6 + $0xa8] sm:$0xf]
    %v349 = vld [vmem:[#allocation6 + $0xac] sm:$0xf]
    %v350 = vld [vmem:[#allocation6 + $0xb0] sm:$0xf]
    %v351 = vld [vmem:[#allocation6 + $0xb4] sm:$0xf]
    %v352 = vld [vmem:[#allocation6 + $0xb8] sm:$0xf]
    %v353 = vld [vmem:[#allocation6 + $0xbc] sm:$0xf]
    %v378 = vunpack.c.l.b16 %v330
    %v379 = vunpack.c.l.b16 %v331
    %v380 = vunpack.c.l.b16 %v332
    %v381 = vunpack.c.l.b16 %v333
    %v382 = vunpack.c.l.b16 %v334
    %v383 = vunpack.c.l.b16 %v335
    %v384 = vunpack.c.l.b16 %v336
    %v385 = vunpack.c.l.b16 %v337
    %v386 = vunpack.c.l.b16 %v338
    %v387 = vunpack.c.l.b16 %v339
    %v388 = vunpack.c.l.b16 %v340
    %v389 = vunpack.c.l.b16 %v341
    %v390 = vunpack.c.l.b16 %v342
    %v391 = vunpack.c.l.b16 %v343
    %v392 = vunpack.c.l.b16 %v344
    %v393 = vunpack.c.l.b16 %v345
    %v394 = vunpack.c.l.b16 %v346
    %v395 = vunpack.c.l.b16 %v347
    %v396 = vunpack.c.l.b16 %v348
    %v397 = vunpack.c.l.b16 %v349
    %v398 = vunpack.c.l.b16 %v350
    %v399 = vunpack.c.l.b16 %v351
    %v400 = vunpack.c.l.b16 %v352
    %v401 = vunpack.c.l.b16 %v353
    %v402 = vpack.c.b16 %v379, %v378
    %v403 = vpack.c.b16 %v381, %v380
    %v404 = vpack.c.b16 %v383, %v382
    %v405 = vpack.c.b16 %v385, %v384
    %v406 = vpack.c.b16 %v387, %v386
    %v407 = vpack.c.b16 %v389, %v388
    %v408 = vpack.c.b16 %v391, %v390
    %v409 = vpack.c.b16 %v393, %v392
    %v410 = vpack.c.b16 %v395, %v394
    %v411 = vpack.c.b16 %v397, %v396
    %v412 = vpack.c.b16 %v399, %v398
    %v413 = vpack.c.b16 %v401, %v400
    %426 = vmatprep.subr.bf16.mxu0 0
    %427 = vmatpush1.bf16.msra.mxu0 %v409
    %428 = vmatprep.subr.bf16.mxu0 0
    %429 = vmatpush1.bf16.msra.mxu0 %v408
    %430 = vmatprep.subr.bf16.mxu0 0
    %431 = vmatpush1.bf16.msra.mxu0 %v407
    %432 = vmatprep.subr.bf16.mxu0 0
    %433 = vmatpush1.bf16.msra.mxu0 %v406
    %434 = vmatprep.subr.bf16.mxu0 0
    %435 = vmatpush1.bf16.msra.mxu0 %v405
    %436 = vmatprep.subr.bf16.mxu0 0
    %437 = vmatpush1.bf16.msra.mxu0 %v404
    %438 = vmatprep.subr.bf16.mxu0 0
    %439 = vmatpush1.bf16.msra.mxu0 %v403
    %440 = vmatprep.subr.bf16.mxu0 0
    %441 = vmatpush1.bf16.msra.mxu0 %v402
    %442 = vmatprep.subr.bf16.mxu0 0
    %443 = vmatpush2.bf16.msra.mxu0 0
    %444 = vmatprep.subr.bf16.mxu0 0
    %445 = vmatpush2.bf16.msra.mxu0 0
    %446 = vmatprep.subr.bf16.mxu0 0
    %447 = vmatpush2.bf16.msra.mxu0 0
    %448 = vmatprep.subr.bf16.mxu0 0
    %449 = vmatpush2.bf16.msra.mxu0 0
    %450 = vmatprep.subr.bf16.mxu0 0
    %451 = vmatpush2.bf16.msra.mxu0 %v413
    %452 = vmatprep.subr.bf16.mxu0 0
    %453 = vmatpush2.bf16.msra.mxu0 %v412
    %454 = vmatprep.subr.bf16.mxu0 0
    %455 = vmatpush2.bf16.msra.mxu0 %v411
    %456 = vmatprep.subr.bf16.mxu0 0
    %457 = vmatpush2.bf16.msra.mxu0 %v410
    %458 = vmatprep.mubr.bf16.mxu0 %v234
    %459 = vmatmul.mubr.bf16.gmra.mxu0 %v129
    %v460 = vpop.f32.mrf.mxu0
    %v461 = vadd.f32 0.0, %v460
    %v462 = vpop.f32.mrf.mxu0
    %v463 = vpop.f32.mrf.mxu0
    %v464 = vadd.f32 0.0, %v463
    %v465 = vpop.f32.mrf.mxu0
    %466 = vmatprep.mubr.bf16.mxu0 %v237
    %467 = vmatmul.mubr.bf16.gmra.mxu0 %v131
    %v468 = vpop.f32.mrf.mxu0
    %v469 = vadd.f32 0.0, %v468
    %v470 = vpop.f32.mrf.mxu0
    %v471 = vpop.f32.mrf.mxu0
    %v472 = vadd.f32 0.0, %v471
    %v473 = vpop.f32.mrf.mxu0
    %474 = vmatprep.mubr.bf16.mxu0 %v240
    %475 = vmatmul.mubr.bf16.gmra.mxu0 %v133
    %v476 = vpop.f32.mrf.mxu0
    %v477 = vadd.f32 0.0, %v476
    %v478 = vpop.f32.mrf.mxu0
    %v479 = vpop.f32.mrf.mxu0
    %v480 = vadd.f32 0.0, %v479
    %v481 = vpop.f32.mrf.mxu0
    %482 = vmatprep.mubr.bf16.mxu0 %v243
    %483 = vmatmul.mubr.bf16.gmra.mxu0 %v135
    %v484 = vpop.f32.mrf.mxu0
    %v485 = vadd.f32 0.0, %v484
    %v486 = vpop.f32.mrf.mxu0
    %v487 = vpop.f32.mrf.mxu0
    %v488 = vadd.f32 0.0, %v487
    %v489 = vpop.f32.mrf.mxu0
    %490 = vdwg.mxu0
    %v491 = vpack.c.bf16 %v464, %v461
    %v492 = vpack.c.bf16 %v472, %v469
    %v493 = vpack.c.bf16 %v480, %v477
    %v494 = vpack.c.bf16 %v488, %v485
    %v495 = vld [vmem:[#allocation4 + $0x4] sm:$0xf]
    %v496 = vld [vmem:[#allocation4 + $0x14] sm:$0xf]
    %v497 = vld [vmem:[#allocation4 + $0x24] sm:$0xf]
    %v498 = vld [vmem:[#allocation4 + $0x34] sm:$0xf]
    %v499 = vld [vmem:[#allocation4 + $0x44] sm:$0xf]
    %v500 = vld [vmem:[#allocation4 + $0x54] sm:$0xf]
    %v501 = vld [vmem:[#allocation4 + $0x64] sm:$0xf]
    %v502 = vld [vmem:[#allocation4 + $0x74] sm:$0xf]
    %v503 = vld [vmem:[#allocation4 + $0x84] sm:$0xf]
    %v504 = vld [vmem:[#allocation4 + $0x94] sm:$0xf]
    %v505 = vld [vmem:[#allocation4 + $0xa4] sm:$0xf]
    %v506 = vld [vmem:[#allocation4 + $0xb4] sm:$0xf]
    %v507 = vld [vmem:[#allocation4 + $0xc4] sm:$0xf]
    %v508 = vld [vmem:[#allocation4 + $0xd4] sm:$0xf]
    %v509 = vld [vmem:[#allocation4 + $0xe4] sm:$0xf]
    %v510 = vld [vmem:[#allocation4 + $0xf4] sm:$0xf]
    %v527 = vunpack.c.l.b16 %v495
    %v528 = vunpack.c.l.b16 %v496
    %v529 = vunpack.c.l.b16 %v497
    %v530 = vunpack.c.l.b16 %v498
    %v531 = vunpack.c.l.b16 %v499
    %v532 = vunpack.c.l.b16 %v500
    %v533 = vunpack.c.l.b16 %v501
    %v534 = vunpack.c.l.b16 %v502
    %v535 = vunpack.c.l.b16 %v503
    %v536 = vunpack.c.l.b16 %v504
    %v537 = vunpack.c.l.b16 %v505
    %v538 = vunpack.c.l.b16 %v506
    %v539 = vunpack.c.l.b16 %v507
    %v540 = vunpack.c.l.b16 %v508
    %v541 = vunpack.c.l.b16 %v509
    %v542 = vunpack.c.l.b16 %v510
    %v543 = vpack.c.b16 %v528, %v527
    %v544 = vpack.c.b16 %v530, %v529
    %v545 = vpack.c.b16 %v532, %v531
    %v546 = vpack.c.b16 %v534, %v533
    %v547 = vpack.c.b16 %v536, %v535
    %v548 = vpack.c.b16 %v538, %v537
    %v549 = vpack.c.b16 %v540, %v539
    %v550 = vpack.c.b16 %v542, %v541
    %v552 = vsel %vm120, %v543, 0
    %v555 = vsel %vm120, %v544, 0
    %v558 = vsel %vm120, %v545, 0
    %v561 = vsel %vm120, %v546, 0
    %v564 = vsel %vm120, %v547, 0
    %v567 = vsel %vm120, %v548, 0
    %v570 = vsel %vm120, %v549, 0
    %v573 = vsel %vm120, %v550, 0
    %575 = vmatprep.subr.bf16.mxu0 0
    %576 = vmatpush1.bf16.msra.mxu0 0
    %577 = vmatprep.subr.bf16.mxu0 0
    %578 = vmatpush1.bf16.msra.mxu0 0
    %579 = vmatprep.subr.bf16.mxu0 0
    %580 = vmatpush1.bf16.msra.mxu0 0
    %581 = vmatprep.subr.bf16.mxu0 0
    %582 = vmatpush1.bf16.msra.mxu0 0
    %583 = vmatprep.subr.bf16.mxu0 0
    %584 = vmatpush1.bf16.msra.mxu0 %v494
    %585 = vmatprep.subr.bf16.mxu0 0
    %586 = vmatpush1.bf16.msra.mxu0 %v493
    %587 = vmatprep.subr.bf16.mxu0 0
    %588 = vmatpush1.bf16.msra.mxu0 %v492
    %589 = vmatprep.subr.bf16.mxu0 0
    %590 = vmatpush1.bf16.msra.mxu0 %v491
    %591 = vmatprep.subr.bf16.mxu0 0
    %592 = vmatpush2.bf16.msra.mxu0 0
    %593 = vmatprep.subr.bf16.mxu0 0
    %594 = vmatpush2.bf16.msra.mxu0 0
    %595 = vmatprep.subr.bf16.mxu0 0
    %596 = vmatpush2.bf16.msra.mxu0 0
    %597 = vmatprep.subr.bf16.mxu0 0
    %598 = vmatpush2.bf16.msra.mxu0 0
    %599 = vmatprep.subr.bf16.mxu0 0
    %600 = vmatpush2.bf16.msra.mxu0 0
    %601 = vmatprep.subr.bf16.mxu0 0
    %602 = vmatpush2.bf16.msra.mxu0 0
    %603 = vmatprep.subr.bf16.mxu0 0
    %604 = vmatpush2.bf16.msra.mxu0 0
    %605 = vmatprep.subr.bf16.mxu0 0
    %606 = vmatpush2.bf16.msra.mxu0 0
    %607 = vmatprep.mubr.bf16.mxu0 0
    %608 = vmatmul.mubr.bf16.gmra.mxu0 %v552
    %v609 = vpop.f32.mrf.mxu0
    %v610 = vadd.f32 0.0, %v609
    %v611 = vpop.f32.mrf.mxu0
    %v612 = vpop.f32.mrf.mxu0
    %v613 = vadd.f32 0.0, %v612
    %v614 = vpop.f32.mrf.mxu0
    %615 = vmatprep.mubr.bf16.mxu0 0
    %616 = vmatmul.mubr.bf16.gmra.mxu0 %v555
    %v617 = vpop.f32.mrf.mxu0
    %v618 = vadd.f32 0.0, %v617
    %v619 = vpop.f32.mrf.mxu0
    %v620 = vpop.f32.mrf.mxu0
    %v621 = vadd.f32 0.0, %v620
    %v622 = vpop.f32.mrf.mxu0
    %623 = vmatprep.mubr.bf16.mxu0 0
    %624 = vmatmul.mubr.bf16.gmra.mxu0 %v558
    %v625 = vpop.f32.mrf.mxu0
    %v626 = vadd.f32 0.0, %v625
    %v627 = vpop.f32.mrf.mxu0
    %v628 = vpop.f32.mrf.mxu0
    %v629 = vadd.f32 0.0, %v628
    %v630 = vpop.f32.mrf.mxu0
    %631 = vmatprep.mubr.bf16.mxu0 0
    %632 = vmatmul.mubr.bf16.gmra.mxu0 %v561
    %v633 = vpop.f32.mrf.mxu0
    %v634 = vadd.f32 0.0, %v633
    %v635 = vpop.f32.mrf.mxu0
    %v636 = vpop.f32.mrf.mxu0
    %v637 = vadd.f32 0.0, %v636
    %v638 = vpop.f32.mrf.mxu0
    %639 = vmatprep.mubr.bf16.mxu0 0
    %640 = vmatmul.mubr.bf16.gmra.mxu0 %v564
    %v641 = vpop.f32.mrf.mxu0
    %v642 = vadd.f32 0.0, %v641
    %v643 = vpop.f32.mrf.mxu0
    %v644 = vpop.f32.mrf.mxu0
    %v645 = vadd.f32 0.0, %v644
    %v646 = vpop.f32.mrf.mxu0
    %647 = vmatprep.mubr.bf16.mxu0 0
    %648 = vmatmul.mubr.bf16.gmra.mxu0 %v567
    %v649 = vpop.f32.mrf.mxu0
    %v650 = vadd.f32 0.0, %v649
    %v651 = vpop.f32.mrf.mxu0
    %v652 = vpop.f32.mrf.mxu0
    %v653 = vadd.f32 0.0, %v652
    %v654 = vpop.f32.mrf.mxu0
    %655 = vmatprep.mubr.bf16.mxu0 0
    %656 = vmatmul.mubr.bf16.gmra.mxu0 %v570
    %v657 = vpop.f32.mrf.mxu0
    %v658 = vadd.f32 0.0, %v657
    %v659 = vpop.f32.mrf.mxu0
    %v660 = vpop.f32.mrf.mxu0
    %v661 = vadd.f32 0.0, %v660
    %v662 = vpop.f32.mrf.mxu0
    %663 = vmatprep.mubr.bf16.mxu0 0
    %664 = vmatmul.mubr.bf16.gmra.mxu0 %v573
    %v665 = vpop.f32.mrf.mxu0
    %v666 = vadd.f32 0.0, %v665
    %v667 = vpop.f32.mrf.mxu0
    %v668 = vpop.f32.mrf.mxu0
    %v669 = vadd.f32 0.0, %v668
    %v670 = vpop.f32.mrf.mxu0
    %671 = vdwg.mxu0
    %v688 = vunpack.c.l.b16 %v314
    %v689 = vunpack.c.l.b16 %v315
    %v690 = vunpack.c.l.b16 %v316
    %v691 = vunpack.c.l.b16 %v317
    %v692 = vunpack.c.l.b16 %v318
    %v693 = vunpack.c.l.b16 %v319
    %v694 = vunpack.c.l.b16 %v320
    %v695 = vunpack.c.l.b16 %v321
    %v696 = vunpack.c.l.b16 %v322
    %v697 = vunpack.c.l.b16 %v323
    %v698 = vunpack.c.l.b16 %v324
    %v699 = vunpack.c.l.b16 %v325
    %v700 = vunpack.c.l.b16 %v326
    %v701 = vunpack.c.l.b16 %v327
    %v702 = vunpack.c.l.b16 %v328
    %v703 = vunpack.c.l.b16 %v329
    %v704 = vpack.c.b16 %v689, %v688
    %v705 = vpack.c.b16 %v691, %v690
    %v706 = vpack.c.b16 %v693, %v692
    %v707 = vpack.c.b16 %v695, %v694
    %v708 = vpack.c.b16 %v697, %v696
    %v709 = vpack.c.b16 %v699, %v698
    %v710 = vpack.c.b16 %v701, %v700
    %v711 = vpack.c.b16 %v703, %v702
    %v713 = vsel %vm120, %v704, 0
    %v716 = vsel %vm120, %v705, 0
    %v719 = vsel %vm120, %v706, 0
    %v722 = vsel %vm120, %v707, 0
    %v725 = vsel %vm120, %v708, 0
    %v728 = vsel %vm120, %v709, 0
    %v731 = vsel %vm120, %v710, 0
    %v734 = vsel %vm120, %v711, 0
    %736 = vmatprep.subr.bf16.mxu0 0
    %737 = vmatpush1.bf16.msra.mxu0 0
    %738 = vmatprep.subr.bf16.mxu0 0
    %739 = vmatpush1.bf16.msra.mxu0 0
    %740 = vmatprep.subr.bf16.mxu0 0
    %741 = vmatpush1.bf16.msra.mxu0 0
    %742 = vmatprep.subr.bf16.mxu0 0
    %743 = vmatpush1.bf16.msra.mxu0 0
    %744 = vmatprep.subr.bf16.mxu0 0
    %745 = vmatpush1.bf16.msra.mxu0 %v313
    %746 = vmatprep.subr.bf16.mxu0 0
    %747 = vmatpush1.bf16.msra.mxu0 %v312
    %748 = vmatprep.subr.bf16.mxu0 0
    %749 = vmatpush1.bf16.msra.mxu0 %v311
    %750 = vmatprep.subr.bf16.mxu0 0
    %751 = vmatpush1.bf16.msra.mxu0 %v310
    %752 = vmatprep.subr.bf16.mxu0 0
    %753 = vmatpush2.bf16.msra.mxu0 0
    %754 = vmatprep.subr.bf16.mxu0 0
    %755 = vmatpush2.bf16.msra.mxu0 0
    %756 = vmatprep.subr.bf16.mxu0 0
    %757 = vmatpush2.bf16.msra.mxu0 0
    %758 = vmatprep.subr.bf16.mxu0 0
    %759 = vmatpush2.bf16.msra.mxu0 0
    %760 = vmatprep.subr.bf16.mxu0 0
    %761 = vmatpush2.bf16.msra.mxu0 0
    %762 = vmatprep.subr.bf16.mxu0 0
    %763 = vmatpush2.bf16.msra.mxu0 0
    %764 = vmatprep.subr.bf16.mxu0 0
    %765 = vmatpush2.bf16.msra.mxu0 0
    %766 = vmatprep.subr.bf16.mxu0 0
    %767 = vmatpush2.bf16.msra.mxu0 0
    %768 = vmatprep.mubr.bf16.mxu0 0
    %769 = vmatmul.mubr.bf16.gmra.mxu0 %v713
    %v770 = vpop.f32.mrf.mxu0
    %v771 = vadd.f32 %v610, %v770
    %v772 = vpop.f32.mrf.mxu0
    %v773 = vpop.f32.mrf.mxu0
    %v774 = vadd.f32 %v613, %v773
    %v775 = vpop.f32.mrf.mxu0
    %776 = vmatprep.mubr.bf16.mxu0 0
    %777 = vmatmul.mubr.bf16.gmra.mxu0 %v716
    %v778 = vpop.f32.mrf.mxu0
    %v779 = vadd.f32 %v618, %v778
    %v780 = vpop.f32.mrf.mxu0
    %v781 = vpop.f32.mrf.mxu0
    %v782 = vadd.f32 %v621, %v781
    %v783 = vpop.f32.mrf.mxu0
    %784 = vmatprep.mubr.bf16.mxu0 0
    %785 = vmatmul.mubr.bf16.gmra.mxu0 %v719
    %v786 = vpop.f32.mrf.mxu0
    %v787 = vadd.f32 %v626, %v786
    %v788 = vpop.f32.mrf.mxu0
    %v789 = vpop.f32.mrf.mxu0
    %v790 = vadd.f32 %v629, %v789
    %v791 = vpop.f32.mrf.mxu0
    %792 = vmatprep.mubr.bf16.mxu0 0
    %793 = vmatmul.mubr.bf16.gmra.mxu0 %v722
    %v794 = vpop.f32.mrf.mxu0
    %v795 = vadd.f32 %v634, %v794
    %v796 = vpop.f32.mrf.mxu0
    %v797 = vpop.f32.mrf.mxu0
    %v798 = vadd.f32 %v637, %v797
    %v799 = vpop.f32.mrf.mxu0
    %800 = vmatprep.mubr.bf16.mxu0 0
    %801 = vmatmul.mubr.bf16.gmra.mxu0 %v725
    %v802 = vpop.f32.mrf.mxu0
    %v803 = vadd.f32 %v642, %v802
    %v804 = vpop.f32.mrf.mxu0
    %v805 = vpop.f32.mrf.mxu0
    %v806 = vadd.f32 %v645, %v805
    %v807 = vpop.f32.mrf.mxu0
    %808 = vmatprep.mubr.bf16.mxu0 0
    %809 = vmatmul.mubr.bf16.gmra.mxu0 %v728
    %v810 = vpop.f32.mrf.mxu0
    %v811 = vadd.f32 %v650, %v810
    %v812 = vpop.f32.mrf.mxu0
    %v813 = vpop.f32.mrf.mxu0
    %v814 = vadd.f32 %v653, %v813
    %v815 = vpop.f32.mrf.mxu0
    %816 = vmatprep.mubr.bf16.mxu0 0
    %817 = vmatmul.mubr.bf16.gmra.mxu0 %v731
    %v818 = vpop.f32.mrf.mxu0
    %v819 = vadd.f32 %v658, %v818
    %v820 = vpop.f32.mrf.mxu0
    %v821 = vpop.f32.mrf.mxu0
    %v822 = vadd.f32 %v661, %v821
    %v823 = vpop.f32.mrf.mxu0
    %824 = vmatprep.mubr.bf16.mxu0 0
    %825 = vmatmul.mubr.bf16.gmra.mxu0 %v734
    %v826 = vpop.f32.mrf.mxu0
    %v827 = vadd.f32 %v666, %v826
    %v828 = vpop.f32.mrf.mxu0
    %v829 = vpop.f32.mrf.mxu0
    %v830 = vadd.f32 %v669, %v829
    %v831 = vpop.f32.mrf.mxu0
    %832 = vdwg.mxu0
    %v833 = vld [vmem:[#allocation6 + $0xc0] sm:$0xf]
    %v834 = vld [vmem:[#allocation6 + $0xc4] sm:$0xf]
    %v835 = vld [vmem:[#allocation6 + $0xc8] sm:$0xf]
    %v836 = vld [vmem:[#allocation6 + $0xcc] sm:$0xf]
    %v837 = vld [vmem:[#allocation6 + $0xd0] sm:$0xf]
    %v838 = vld [vmem:[#allocation6 + $0xd4] sm:$0xf]
    %v839 = vld [vmem:[#allocation6 + $0xd8] sm:$0xf]
    %v840 = vld [vmem:[#allocation6 + $0xdc] sm:$0xf]
    %v841 = vld [vmem:[#allocation6 + $0xe0] sm:$0xf]
    %v842 = vld [vmem:[#allocation6 + $0xe4] sm:$0xf]
    %v843 = vld [vmem:[#allocation6 + $0xe8] sm:$0xf]
    %v844 = vld [vmem:[#allocation6 + $0xec] sm:$0xf]
    %v845 = vld [vmem:[#allocation6 + $0xf0] sm:$0xf]
    %v846 = vld [vmem:[#allocation6 + $0xf4] sm:$0xf]
    %v847 = vld [vmem:[#allocation6 + $0xf8] sm:$0xf]
    %v848 = vld [vmem:[#allocation6 + $0xfc] sm:$0xf]
    %v849 = vld [vmem:[#allocation6 + $0x100] sm:$0xf]
    %v850 = vld [vmem:[#allocation6 + $0x104] sm:$0xf]
    %v851 = vld [vmem:[#allocation6 + $0x108] sm:$0xf]
    %v852 = vld [vmem:[#allocation6 + $0x10c] sm:$0xf]
    %v853 = vld [vmem:[#allocation6 + $0x110] sm:$0xf]
    %v854 = vld [vmem:[#allocation6 + $0x114] sm:$0xf]
    %v855 = vld [vmem:[#allocation6 + $0x118] sm:$0xf]
    %v856 = vld [vmem:[#allocation6 + $0x11c] sm:$0xf]
    %v881 = vunpack.c.l.b16 %v833
    %v882 = vunpack.c.l.b16 %v834
    %v883 = vunpack.c.l.b16 %v835
    %v884 = vunpack.c.l.b16 %v836
    %v885 = vunpack.c.l.b16 %v837
    %v886 = vunpack.c.l.b16 %v838
    %v887 = vunpack.c.l.b16 %v839
    %v888 = vunpack.c.l.b16 %v840
    %v889 = vunpack.c.l.b16 %v841
    %v890 = vunpack.c.l.b16 %v842
    %v891 = vunpack.c.l.b16 %v843
    %v892 = vunpack.c.l.b16 %v844
    %v893 = vunpack.c.l.b16 %v845
    %v894 = vunpack.c.l.b16 %v846
    %v895 = vunpack.c.l.b16 %v847
    %v896 = vunpack.c.l.b16 %v848
    %v897 = vunpack.c.l.b16 %v849
    %v898 = vunpack.c.l.b16 %v850
    %v899 = vunpack.c.l.b16 %v851
    %v900 = vunpack.c.l.b16 %v852
    %v901 = vunpack.c.l.b16 %v853
    %v902 = vunpack.c.l.b16 %v854
    %v903 = vunpack.c.l.b16 %v855
    %v904 = vunpack.c.l.b16 %v856
    %v905 = vpack.c.b16 %v882, %v881
    %v906 = vpack.c.b16 %v884, %v883
    %v907 = vpack.c.b16 %v886, %v885
    %v908 = vpack.c.b16 %v888, %v887
    %v909 = vpack.c.b16 %v890, %v889
    %v910 = vpack.c.b16 %v892, %v891
    %v911 = vpack.c.b16 %v894, %v893
    %v912 = vpack.c.b16 %v896, %v895
    %v913 = vpack.c.b16 %v898, %v897
    %v914 = vpack.c.b16 %v900, %v899
    %v915 = vpack.c.b16 %v902, %v901
    %v916 = vpack.c.b16 %v904, %v903
    %929 = vmatprep.subr.bf16.mxu0 0
    %930 = vmatpush1.bf16.msra.mxu0 %v912
    %931 = vmatprep.subr.bf16.mxu0 0
    %932 = vmatpush1.bf16.msra.mxu0 %v911
    %933 = vmatprep.subr.bf16.mxu0 0
    %934 = vmatpush1.bf16.msra.mxu0 %v910
    %935 = vmatprep.subr.bf16.mxu0 0
    %936 = vmatpush1.bf16.msra.mxu0 %v909
    %937 = vmatprep.subr.bf16.mxu0 0
    %938 = vmatpush1.bf16.msra.mxu0 %v908
    %939 = vmatprep.subr.bf16.mxu0 0
    %940 = vmatpush1.bf16.msra.mxu0 %v907
    %941 = vmatprep.subr.bf16.mxu0 0
    %942 = vmatpush1.bf16.msra.mxu0 %v906
    %943 = vmatprep.subr.bf16.mxu0 0
    %944 = vmatpush1.bf16.msra.mxu0 %v905
    %945 = vmatprep.subr.bf16.mxu0 0
    %946 = vmatpush2.bf16.msra.mxu0 0
    %947 = vmatprep.subr.bf16.mxu0 0
    %948 = vmatpush2.bf16.msra.mxu0 0
    %949 = vmatprep.subr.bf16.mxu0 0
    %950 = vmatpush2.bf16.msra.mxu0 0
    %951 = vmatprep.subr.bf16.mxu0 0
    %952 = vmatpush2.bf16.msra.mxu0 0
    %953 = vmatprep.subr.bf16.mxu0 0
    %954 = vmatpush2.bf16.msra.mxu0 %v916
    %955 = vmatprep.subr.bf16.mxu0 0
    %956 = vmatpush2.bf16.msra.mxu0 %v915
    %957 = vmatprep.subr.bf16.mxu0 0
    %958 = vmatpush2.bf16.msra.mxu0 %v914
    %959 = vmatprep.subr.bf16.mxu0 0
    %960 = vmatpush2.bf16.msra.mxu0 %v913
    %961 = vmatprep.mubr.bf16.mxu0 %v234
    %962 = vmatmul.mubr.bf16.gmra.mxu0 %v129
    %v963 = vpop.f32.mrf.mxu0
    %v964 = vadd.f32 0.0, %v963
    %v965 = vpop.f32.mrf.mxu0
    %v966 = vpop.f32.mrf.mxu0
    %v967 = vadd.f32 0.0, %v966
    %v968 = vpop.f32.mrf.mxu0
    %969 = vmatprep.mubr.bf16.mxu0 %v237
    %970 = vmatmul.mubr.bf16.gmra.mxu0 %v131
    %v971 = vpop.f32.mrf.mxu0
    %v972 = vadd.f32 0.0, %v971
    %v973 = vpop.f32.mrf.mxu0
    %v974 = vpop.f32.mrf.mxu0
    %v975 = vadd.f32 0.0, %v974
    %v976 = vpop.f32.mrf.mxu0
    %977 = vmatprep.mubr.bf16.mxu0 %v240
    %978 = vmatmul.mubr.bf16.gmra.mxu0 %v133
    %v979 = vpop.f32.mrf.mxu0
    %v980 = vadd.f32 0.0, %v979
    %v981 = vpop.f32.mrf.mxu0
    %v982 = vpop.f32.mrf.mxu0
    %v983 = vadd.f32 0.0, %v982
    %v984 = vpop.f32.mrf.mxu0
    %985 = vmatprep.mubr.bf16.mxu0 %v243
    %986 = vmatmul.mubr.bf16.gmra.mxu0 %v135
    %v987 = vpop.f32.mrf.mxu0
    %v988 = vadd.f32 0.0, %v987
    %v989 = vpop.f32.mrf.mxu0
    %v990 = vpop.f32.mrf.mxu0
    %v991 = vadd.f32 0.0, %v990
    %v992 = vpop.f32.mrf.mxu0
    %993 = vdwg.mxu0
    %v994 = vpack.c.bf16 %v967, %v964
    %v995 = vpack.c.bf16 %v975, %v972
    %v996 = vpack.c.bf16 %v983, %v980
    %v997 = vpack.c.bf16 %v991, %v988
    %v998 = vld [vmem:[#allocation4 + $0x8] sm:$0xf]
    %v999 = vld [vmem:[#allocation4 + $0x18] sm:$0xf]
    %v1000 = vld [vmem:[#allocation4 + $0x28] sm:$0xf]
    %v1001 = vld [vmem:[#allocation4 + $0x38] sm:$0xf]
    %v1002 = vld [vmem:[#allocation4 + $0x48] sm:$0xf]
    %v1003 = vld [vmem:[#allocation4 + $0x58] sm:$0xf]
    %v1004 = vld [vmem:[#allocation4 + $0x68] sm:$0xf]
    %v1005 = vld [vmem:[#allocation4 + $0x78] sm:$0xf]
    %v1006 = vld [vmem:[#allocation4 + $0x88] sm:$0xf]
    %v1007 = vld [vmem:[#allocation4 + $0x98] sm:$0xf]
    %v1008 = vld [vmem:[#allocation4 + $0xa8] sm:$0xf]
    %v1009 = vld [vmem:[#allocation4 + $0xb8] sm:$0xf]
    %v1010 = vld [vmem:[#allocation4 + $0xc8] sm:$0xf]
    %v1011 = vld [vmem:[#allocation4 + $0xd8] sm:$0xf]
    %v1012 = vld [vmem:[#allocation4 + $0xe8] sm:$0xf]
    %v1013 = vld [vmem:[#allocation4 + $0xf8] sm:$0xf]
    %v1030 = vunpack.c.l.b16 %v998
    %v1031 = vunpack.c.l.b16 %v999
    %v1032 = vunpack.c.l.b16 %v1000
    %v1033 = vunpack.c.l.b16 %v1001
    %v1034 = vunpack.c.l.b16 %v1002
    %v1035 = vunpack.c.l.b16 %v1003
    %v1036 = vunpack.c.l.b16 %v1004
    %v1037 = vunpack.c.l.b16 %v1005
    %v1038 = vunpack.c.l.b16 %v1006
    %v1039 = vunpack.c.l.b16 %v1007
    %v1040 = vunpack.c.l.b16 %v1008
    %v1041 = vunpack.c.l.b16 %v1009
    %v1042 = vunpack.c.l.b16 %v1010
    %v1043 = vunpack.c.l.b16 %v1011
    %v1044 = vunpack.c.l.b16 %v1012
    %v1045 = vunpack.c.l.b16 %v1013
    %v1046 = vpack.c.b16 %v1031, %v1030
    %v1047 = vpack.c.b16 %v1033, %v1032
    %v1048 = vpack.c.b16 %v1035, %v1034
    %v1049 = vpack.c.b16 %v1037, %v1036
    %v1050 = vpack.c.b16 %v1039, %v1038
    %v1051 = vpack.c.b16 %v1041, %v1040
    %v1052 = vpack.c.b16 %v1043, %v1042
    %v1053 = vpack.c.b16 %v1045, %v1044
    %v1055 = vsel %vm120, %v1046, 0
    %v1058 = vsel %vm120, %v1047, 0
    %v1061 = vsel %vm120, %v1048, 0
    %v1064 = vsel %vm120, %v1049, 0
    %v1067 = vsel %vm120, %v1050, 0
    %v1070 = vsel %vm120, %v1051, 0
    %v1073 = vsel %vm120, %v1052, 0
    %v1076 = vsel %vm120, %v1053, 0
    %1078 = vmatprep.subr.bf16.mxu0 0
    %1079 = vmatpush1.bf16.msra.mxu0 0
    %1080 = vmatprep.subr.bf16.mxu0 0
    %1081 = vmatpush1.bf16.msra.mxu0 0
    %1082 = vmatprep.subr.bf16.mxu0 0
    %1083 = vmatpush1.bf16.msra.mxu0 0
    %1084 = vmatprep.subr.bf16.mxu0 0
    %1085 = vmatpush1.bf16.msra.mxu0 0
    %1086 = vmatprep.subr.bf16.mxu0 0
    %1087 = vmatpush1.bf16.msra.mxu0 %v997
    %1088 = vmatprep.subr.bf16.mxu0 0
    %1089 = vmatpush1.bf16.msra.mxu0 %v996
    %1090 = vmatprep.subr.bf16.mxu0 0
    %1091 = vmatpush1.bf16.msra.mxu0 %v995
    %1092 = vmatprep.subr.bf16.mxu0 0
    %1093 = vmatpush1.bf16.msra.mxu0 %v994
    %1094 = vmatprep.subr.bf16.mxu0 0
    %1095 = vmatpush2.bf16.msra.mxu0 0
    %1096 = vmatprep.subr.bf16.mxu0 0
    %1097 = vmatpush2.bf16.msra.mxu0 0
    %1098 = vmatprep.subr.bf16.mxu0 0
    %1099 = vmatpush2.bf16.msra.mxu0 0
    %1100 = vmatprep.subr.bf16.mxu0 0
    %1101 = vmatpush2.bf16.msra.mxu0 0
    %1102 = vmatprep.subr.bf16.mxu0 0
    %1103 = vmatpush2.bf16.msra.mxu0 0
    %1104 = vmatprep.subr.bf16.mxu0 0
    %1105 = vmatpush2.bf16.msra.mxu0 0
    %1106 = vmatprep.subr.bf16.mxu0 0
    %1107 = vmatpush2.bf16.msra.mxu0 0
    %1108 = vmatprep.subr.bf16.mxu0 0
    %1109 = vmatpush2.bf16.msra.mxu0 0
    %1110 = vmatprep.mubr.bf16.mxu0 0
    %1111 = vmatmul.mubr.bf16.gmra.mxu0 %v1055
    %v1112 = vpop.f32.mrf.mxu0
    %v1113 = vadd.f32 0.0, %v1112
    %v1114 = vpop.f32.mrf.mxu0
    %v1115 = vpop.f32.mrf.mxu0
    %v1116 = vadd.f32 0.0, %v1115
    %v1117 = vpop.f32.mrf.mxu0
    %1118 = vmatprep.mubr.bf16.mxu0 0
    %1119 = vmatmul.mubr.bf16.gmra.mxu0 %v1058
    %v1120 = vpop.f32.mrf.mxu0
    %v1121 = vadd.f32 0.0, %v1120
    %v1122 = vpop.f32.mrf.mxu0
    %v1123 = vpop.f32.mrf.mxu0
    %v1124 = vadd.f32 0.0, %v1123
    %v1125 = vpop.f32.mrf.mxu0
    %1126 = vmatprep.mubr.bf16.mxu0 0
    %1127 = vmatmul.mubr.bf16.gmra.mxu0 %v1061
    %v1128 = vpop.f32.mrf.mxu0
    %v1129 = vadd.f32 0.0, %v1128
    %v1130 = vpop.f32.mrf.mxu0
    %v1131 = vpop.f32.mrf.mxu0
    %v1132 = vadd.f32 0.0, %v1131
    %v1133 = vpop.f32.mrf.mxu0
    %1134 = vmatprep.mubr.bf16.mxu0 0
    %1135 = vmatmul.mubr.bf16.gmra.mxu0 %v1064
    %v1136 = vpop.f32.mrf.mxu0
    %v1137 = vadd.f32 0.0, %v1136
    %v1138 = vpop.f32.mrf.mxu0
    %v1139 = vpop.f32.mrf.mxu0
    %v1140 = vadd.f32 0.0, %v1139
    %v1141 = vpop.f32.mrf.mxu0
    %1142 = vmatprep.mubr.bf16.mxu0 0
    %1143 = vmatmul.mubr.bf16.gmra.mxu0 %v1067
    %v1144 = vpop.f32.mrf.mxu0
    %v1145 = vadd.f32 0.0, %v1144
    %v1146 = vpop.f32.mrf.mxu0
    %v1147 = vpop.f32.mrf.mxu0
    %v1148 = vadd.f32 0.0, %v1147
    %v1149 = vpop.f32.mrf.mxu0
    %1150 = vmatprep.mubr.bf16.mxu0 0
    %1151 = vmatmul.mubr.bf16.gmra.mxu0 %v1070
    %v1152 = vpop.f32.mrf.mxu0
    %v1153 = vadd.f32 0.0, %v1152
    %v1154 = vpop.f32.mrf.mxu0
    %v1155 = vpop.f32.mrf.mxu0
    %v1156 = vadd.f32 0.0, %v1155
    %v1157 = vpop.f32.mrf.mxu0
    %1158 = vmatprep.mubr.bf16.mxu0 0
    %1159 = vmatmul.mubr.bf16.gmra.mxu0 %v1073
    %v1160 = vpop.f32.mrf.mxu0
    %v1161 = vadd.f32 0.0, %v1160
    %v1162 = vpop.f32.mrf.mxu0
    %v1163 = vpop.f32.mrf.mxu0
    %v1164 = vadd.f32 0.0, %v1163
    %v1165 = vpop.f32.mrf.mxu0
    %1166 = vmatprep.mubr.bf16.mxu0 0
    %1167 = vmatmul.mubr.bf16.gmra.mxu0 %v1076
    %v1168 = vpop.f32.mrf.mxu0
    %v1169 = vadd.f32 0.0, %v1168
    %v1170 = vpop.f32.mrf.mxu0
    %v1171 = vpop.f32.mrf.mxu0
    %v1172 = vadd.f32 0.0, %v1171
    %v1173 = vpop.f32.mrf.mxu0
    %1174 = vdwg.mxu0
    %v1175 = vadd.f32 %v771, %v1113
    %v1176 = vadd.f32 %v774, %v1116
    %v1177 = vadd.f32 %v779, %v1121
    %v1178 = vadd.f32 %v782, %v1124
    %v1179 = vadd.f32 %v787, %v1129
    %v1180 = vadd.f32 %v790, %v1132
    %v1181 = vadd.f32 %v795, %v1137
    %v1182 = vadd.f32 %v798, %v1140
    %v1183 = vadd.f32 %v803, %v1145
    %v1184 = vadd.f32 %v806, %v1148
    %v1185 = vadd.f32 %v811, %v1153
    %v1186 = vadd.f32 %v814, %v1156
    %v1187 = vadd.f32 %v819, %v1161
    %v1188 = vadd.f32 %v822, %v1164
    %v1189 = vadd.f32 %v827, %v1169
    %v1190 = vadd.f32 %v830, %v1172
    %v1191 = vld [vmem:[#allocation6 + $0x120] sm:$0xf]
    %v1192 = vld [vmem:[#allocation6 + $0x124] sm:$0xf]
    %v1193 = vld [vmem:[#allocation6 + $0x128] sm:$0xf]
    %v1194 = vld [vmem:[#allocation6 + $0x12c] sm:$0xf]
    %v1195 = vld [vmem:[#allocation6 + $0x130] sm:$0xf]
    %v1196 = vld [vmem:[#allocation6 + $0x134] sm:$0xf]
    %v1197 = vld [vmem:[#allocation6 + $0x138] sm:$0xf]
    %v1198 = vld [vmem:[#allocation6 + $0x13c] sm:$0xf]
    %v1199 = vld [vmem:[#allocation6 + $0x140] sm:$0xf]
    %v1200 = vld [vmem:[#allocation6 + $0x144] sm:$0xf]
    %v1201 = vld [vmem:[#allocation6 + $0x148] sm:$0xf]
    %v1202 = vld [vmem:[#allocation6 + $0x14c] sm:$0xf]
    %v1203 = vld [vmem:[#allocation6 + $0x150] sm:$0xf]
    %v1204 = vld [vmem:[#allocation6 + $0x154] sm:$0xf]
    %v1205 = vld [vmem:[#allocation6 + $0x158] sm:$0xf]
    %v1206 = vld [vmem:[#allocation6 + $0x15c] sm:$0xf]
    %v1207 = vld [vmem:[#allocation6 + $0x160] sm:$0xf]
    %v1208 = vld [vmem:[#allocation6 + $0x164] sm:$0xf]
    %v1209 = vld [vmem:[#allocation6 + $0x168] sm:$0xf]
    %v1210 = vld [vmem:[#allocation6 + $0x16c] sm:$0xf]
    %v1211 = vld [vmem:[#allocation6 + $0x170] sm:$0xf]
    %v1212 = vld [vmem:[#allocation6 + $0x174] sm:$0xf]
    %v1213 = vld [vmem:[#allocation6 + $0x178] sm:$0xf]
    %v1214 = vld [vmem:[#allocation6 + $0x17c] sm:$0xf]
    %v1239 = vunpack.c.l.b16 %v1191
    %v1240 = vunpack.c.l.b16 %v1192
    %v1241 = vunpack.c.l.b16 %v1193
    %v1242 = vunpack.c.l.b16 %v1194
    %v1243 = vunpack.c.l.b16 %v1195
    %v1244 = vunpack.c.l.b16 %v1196
    %v1245 = vunpack.c.l.b16 %v1197
    %v1246 = vunpack.c.l.b16 %v1198
    %v1247 = vunpack.c.l.b16 %v1199
    %v1248 = vunpack.c.l.b16 %v1200
    %v1249 = vunpack.c.l.b16 %v1201
    %v1250 = vunpack.c.l.b16 %v1202
    %v1251 = vunpack.c.l.b16 %v1203
    %v1252 = vunpack.c.l.b16 %v1204
    %v1253 = vunpack.c.l.b16 %v1205
    %v1254 = vunpack.c.l.b16 %v1206
    %v1255 = vunpack.c.l.b16 %v1207
    %v1256 = vunpack.c.l.b16 %v1208
    %v1257 = vunpack.c.l.b16 %v1209
    %v1258 = vunpack.c.l.b16 %v1210
    %v1259 = vunpack.c.l.b16 %v1211
    %v1260 = vunpack.c.l.b16 %v1212
    %v1261 = vunpack.c.l.b16 %v1213
    %v1262 = vunpack.c.l.b16 %v1214
    %v1263 = vpack.c.b16 %v1240, %v1239
    %v1264 = vpack.c.b16 %v1242, %v1241
    %v1265 = vpack.c.b16 %v1244, %v1243
    %v1266 = vpack.c.b16 %v1246, %v1245
    %v1267 = vpack.c.b16 %v1248, %v1247
    %v1268 = vpack.c.b16 %v1250, %v1249
    %v1269 = vpack.c.b16 %v1252, %v1251
    %v1270 = vpack.c.b16 %v1254, %v1253
    %v1271 = vpack.c.b16 %v1256, %v1255
    %v1272 = vpack.c.b16 %v1258, %v1257
    %v1273 = vpack.c.b16 %v1260, %v1259
    %v1274 = vpack.c.b16 %v1262, %v1261
    %1287 = vmatprep.subr.bf16.mxu0 0
    %1288 = vmatpush1.bf16.msra.mxu0 %v1270
    %1289 = vmatprep.subr.bf16.mxu0 0
    %1290 = vmatpush1.bf16.msra.mxu0 %v1269
    %1291 = vmatprep.subr.bf16.mxu0 0
    %1292 = vmatpush1.bf16.msra.mxu0 %v1268
    %1293 = vmatprep.subr.bf16.mxu0 0
    %1294 = vmatpush1.bf16.msra.mxu0 %v1267
    %1295 = vmatprep.subr.bf16.mxu0 0
    %1296 = vmatpush1.bf16.msra.mxu0 %v1266
    %1297 = vmatprep.subr.bf16.mxu0 0
    %1298 = vmatpush1.bf16.msra.mxu0 %v1265
    %1299 = vmatprep.subr.bf16.mxu0 0
    %1300 = vmatpush1.bf16.msra.mxu0 %v1264
    %1301 = vmatprep.subr.bf16.mxu0 0
    %1302 = vmatpush1.bf16.msra.mxu0 %v1263
    %1303 = vmatprep.subr.bf16.mxu0 0
    %1304 = vmatpush2.bf16.msra.mxu0 0
    %1305 = vmatprep.subr.bf16.mxu0 0
    %1306 = vmatpush2.bf16.msra.mxu0 0
    %1307 = vmatprep.subr.bf16.mxu0 0
    %1308 = vmatpush2.bf16.msra.mxu0 0
    %1309 = vmatprep.subr.bf16.mxu0 0
    %1310 = vmatpush2.bf16.msra.mxu0 0
    %1311 = vmatprep.subr.bf16.mxu0 0
    %1312 = vmatpush2.bf16.msra.mxu0 %v1274
    %1313 = vmatprep.subr.bf16.mxu0 0
    %1314 = vmatpush2.bf16.msra.mxu0 %v1273
    %1315 = vmatprep.subr.bf16.mxu0 0
    %1316 = vmatpush2.bf16.msra.mxu0 %v1272
    %1317 = vmatprep.subr.bf16.mxu0 0
    %1318 = vmatpush2.bf16.msra.mxu0 %v1271
    %1319 = vmatprep.mubr.bf16.mxu0 %v234
    %1320 = vmatmul.mubr.bf16.gmra.mxu0 %v129
    %v1321 = vpop.f32.mrf.mxu0
    %v1322 = vadd.f32 0.0, %v1321
    %v1323 = vpop.f32.mrf.mxu0
    %v1324 = vpop.f32.mrf.mxu0
    %v1325 = vadd.f32 0.0, %v1324
    %v1326 = vpop.f32.mrf.mxu0
    %1327 = vmatprep.mubr.bf16.mxu0 %v237
    %1328 = vmatmul.mubr.bf16.gmra.mxu0 %v131
    %v1329 = vpop.f32.mrf.mxu0
    %v1330 = vadd.f32 0.0, %v1329
    %v1331 = vpop.f32.mrf.mxu0
    %v1332 = vpop.f32.mrf.mxu0
    %v1333 = vadd.f32 0.0, %v1332
    %v1334 = vpop.f32.mrf.mxu0
    %1335 = vmatprep.mubr.bf16.mxu0 %v240
    %1336 = vmatmul.mubr.bf16.gmra.mxu0 %v133
    %v1337 = vpop.f32.mrf.mxu0
    %v1338 = vadd.f32 0.0, %v1337
    %v1339 = vpop.f32.mrf.mxu0
    %v1340 = vpop.f32.mrf.mxu0
    %v1341 = vadd.f32 0.0, %v1340
    %v1342 = vpop.f32.mrf.mxu0
    %1343 = vmatprep.mubr.bf16.mxu0 %v243
    %1344 = vmatmul.mubr.bf16.gmra.mxu0 %v135
    %v1345 = vpop.f32.mrf.mxu0
    %v1346 = vadd.f32 0.0, %v1345
    %v1347 = vpop.f32.mrf.mxu0
    %v1348 = vpop.f32.mrf.mxu0
    %v1349 = vadd.f32 0.0, %v1348
    %v1350 = vpop.f32.mrf.mxu0
    %1351 = vdwg.mxu0
    %v1352 = vpack.c.bf16 %v1325, %v1322
    %v1353 = vpack.c.bf16 %v1333, %v1330
    %v1354 = vpack.c.bf16 %v1341, %v1338
    %v1355 = vpack.c.bf16 %v1349, %v1346
    %v1356 = vld [vmem:[#allocation4 + $0xc] sm:$0xf]
    %v1357 = vld [vmem:[#allocation4 + $0x1c] sm:$0xf]
    %v1358 = vld [vmem:[#allocation4 + $0x2c] sm:$0xf]
    %v1359 = vld [vmem:[#allocation4 + $0x3c] sm:$0xf]
    %v1360 = vld [vmem:[#allocation4 + $0x4c] sm:$0xf]
    %v1361 = vld [vmem:[#allocation4 + $0x5c] sm:$0xf]
    %v1362 = vld [vmem:[#allocation4 + $0x6c] sm:$0xf]
    %v1363 = vld [vmem:[#allocation4 + $0x7c] sm:$0xf]
    %v1364 = vld [vmem:[#allocation4 + $0x8c] sm:$0xf]
    %v1365 = vld [vmem:[#allocation4 + $0x9c] sm:$0xf]
    %v1366 = vld [vmem:[#allocation4 + $0xac] sm:$0xf]
    %v1367 = vld [vmem:[#allocation4 + $0xbc] sm:$0xf]
    %v1368 = vld [vmem:[#allocation4 + $0xcc] sm:$0xf]
    %v1369 = vld [vmem:[#allocation4 + $0xdc] sm:$0xf]
    %v1370 = vld [vmem:[#allocation4 + $0xec] sm:$0xf]
    %v1371 = vld [vmem:[#allocation4 + $0xfc] sm:$0xf]
    %v1388 = vunpack.c.l.b16 %v1356
    %v1389 = vunpack.c.l.b16 %v1357
    %v1390 = vunpack.c.l.b16 %v1358
    %v1391 = vunpack.c.l.b16 %v1359
    %v1392 = vunpack.c.l.b16 %v1360
    %v1393 = vunpack.c.l.b16 %v1361
    %v1394 = vunpack.c.l.b16 %v1362
    %v1395 = vunpack.c.l.b16 %v1363
    %v1396 = vunpack.c.l.b16 %v1364
    %v1397 = vunpack.c.l.b16 %v1365
    %v1398 = vunpack.c.l.b16 %v1366
    %v1399 = vunpack.c.l.b16 %v1367
    %v1400 = vunpack.c.l.b16 %v1368
    %v1401 = vunpack.c.l.b16 %v1369
    %v1402 = vunpack.c.l.b16 %v1370
    %v1403 = vunpack.c.l.b16 %v1371
    %v1404 = vpack.c.b16 %v1389, %v1388
    %v1405 = vpack.c.b16 %v1391, %v1390
    %v1406 = vpack.c.b16 %v1393, %v1392
    %v1407 = vpack.c.b16 %v1395, %v1394
    %v1408 = vpack.c.b16 %v1397, %v1396
    %v1409 = vpack.c.b16 %v1399, %v1398
    %v1410 = vpack.c.b16 %v1401, %v1400
    %v1411 = vpack.c.b16 %v1403, %v1402
    %v1413 = vsel %vm120, %v1404, 0
    %v1416 = vsel %vm120, %v1405, 0
    %v1419 = vsel %vm120, %v1406, 0
    %v1422 = vsel %vm120, %v1407, 0
    %v1425 = vsel %vm120, %v1408, 0
    %v1428 = vsel %vm120, %v1409, 0
    %v1431 = vsel %vm120, %v1410, 0
    %v1434 = vsel %vm120, %v1411, 0
    %1436 = vmatprep.subr.bf16.mxu0 0
    %1437 = vmatpush1.bf16.msra.mxu0 0
    %1438 = vmatprep.subr.bf16.mxu0 0
    %1439 = vmatpush1.bf16.msra.mxu0 0
    %1440 = vmatprep.subr.bf16.mxu0 0
    %1441 = vmatpush1.bf16.msra.mxu0 0
    %1442 = vmatprep.subr.bf16.mxu0 0
    %1443 = vmatpush1.bf16.msra.mxu0 0
    %1444 = vmatprep.subr.bf16.mxu0 0
    %1445 = vmatpush1.bf16.msra.mxu0 %v1355
    %1446 = vmatprep.subr.bf16.mxu0 0
    %1447 = vmatpush1.bf16.msra.mxu0 %v1354
    %1448 = vmatprep.subr.bf16.mxu0 0
    %1449 = vmatpush1.bf16.msra.mxu0 %v1353
    %1450 = vmatprep.subr.bf16.mxu0 0
    %1451 = vmatpush1.bf16.msra.mxu0 %v1352
    %1452 = vmatprep.subr.bf16.mxu0 0
    %1453 = vmatpush2.bf16.msra.mxu0 0
    %1454 = vmatprep.subr.bf16.mxu0 0
    %1455 = vmatpush2.bf16.msra.mxu0 0
    %1456 = vmatprep.subr.bf16.mxu0 0
    %1457 = vmatpush2.bf16.msra.mxu0 0
    %1458 = vmatprep.subr.bf16.mxu0 0
    %1459 = vmatpush2.bf16.msra.mxu0 0
    %1460 = vmatprep.subr.bf16.mxu0 0
    %1461 = vmatpush2.bf16.msra.mxu0 0
    %1462 = vmatprep.subr.bf16.mxu0 0
    %1463 = vmatpush2.bf16.msra.mxu0 0
    %1464 = vmatprep.subr.bf16.mxu0 0
    %1465 = vmatpush2.bf16.msra.mxu0 0
    %1466 = vmatprep.subr.bf16.mxu0 0
    %1467 = vmatpush2.bf16.msra.mxu0 0
    %1468 = vmatprep.mubr.bf16.mxu0 0
    %1469 = vmatmul.mubr.bf16.gmra.mxu0 %v1413
    %v1470 = vpop.f32.mrf.mxu0
    %v1471 = vadd.f32 0.0, %v1470
    %v1472 = vpop.f32.mrf.mxu0
    %v1473 = vpop.f32.mrf.mxu0
    %v1474 = vadd.f32 0.0, %v1473
    %v1475 = vpop.f32.mrf.mxu0
    %1476 = vmatprep.mubr.bf16.mxu0 0
    %1477 = vmatmul.mubr.bf16.gmra.mxu0 %v1416
    %v1478 = vpop.f32.mrf.mxu0
    %v1479 = vadd.f32 0.0, %v1478
    %v1480 = vpop.f32.mrf.mxu0
    %v1481 = vpop.f32.mrf.mxu0
    %v1482 = vadd.f32 0.0, %v1481
    %v1483 = vpop.f32.mrf.mxu0
    %1484 = vmatprep.mubr.bf16.mxu0 0
    %1485 = vmatmul.mubr.bf16.gmra.mxu0 %v1419
    %v1486 = vpop.f32.mrf.mxu0
    %v1487 = vadd.f32 0.0, %v1486
    %v1488 = vpop.f32.mrf.mxu0
    %v1489 = vpop.f32.mrf.mxu0
    %v1490 = vadd.f32 0.0, %v1489
    %v1491 = vpop.f32.mrf.mxu0
    %1492 = vmatprep.mubr.bf16.mxu0 0
    %1493 = vmatmul.mubr.bf16.gmra.mxu0 %v1422
    %v1494 = vpop.f32.mrf.mxu0
    %v1495 = vadd.f32 0.0, %v1494
    %v1496 = vpop.f32.mrf.mxu0
    %v1497 = vpop.f32.mrf.mxu0
    %v1498 = vadd.f32 0.0, %v1497
    %v1499 = vpop.f32.mrf.mxu0
    %1500 = vmatprep.mubr.bf16.mxu0 0
    %1501 = vmatmul.mubr.bf16.gmra.mxu0 %v1425
    %v1502 = vpop.f32.mrf.mxu0
    %v1503 = vadd.f32 0.0, %v1502
    %v1504 = vpop.f32.mrf.mxu0
    %v1505 = vpop.f32.mrf.mxu0
    %v1506 = vadd.f32 0.0, %v1505
    %v1507 = vpop.f32.mrf.mxu0
    %1508 = vmatprep.mubr.bf16.mxu0 0
    %1509 = vmatmul.mubr.bf16.gmra.mxu0 %v1428
    %v1510 = vpop.f32.mrf.mxu0
    %v1511 = vadd.f32 0.0, %v1510
    %v1512 = vpop.f32.mrf.mxu0
    %v1513 = vpop.f32.mrf.mxu0
    %v1514 = vadd.f32 0.0, %v1513
    %v1515 = vpop.f32.mrf.mxu0
    %1516 = vmatprep.mubr.bf16.mxu0 0
    %1517 = vmatmul.mubr.bf16.gmra.mxu0 %v1431
    %v1518 = vpop.f32.mrf.mxu0
    %v1519 = vadd.f32 0.0, %v1518
    %v1520 = vpop.f32.mrf.mxu0
    %v1521 = vpop.f32.mrf.mxu0
    %v1522 = vadd.f32 0.0, %v1521
    %v1523 = vpop.f32.mrf.mxu0
    %1524 = vmatprep.mubr.bf16.mxu0 0
    %1525 = vmatmul.mubr.bf16.gmra.mxu0 %v1434
    %v1526 = vpop.f32.mrf.mxu0
    %v1527 = vadd.f32 0.0, %v1526
    %v1528 = vpop.f32.mrf.mxu0
    %v1529 = vpop.f32.mrf.mxu0
    %v1530 = vadd.f32 0.0, %v1529
    %v1531 = vpop.f32.mrf.mxu0
    %1532 = vdwg.mxu0
    %v1533 = vadd.f32 %v1175, %v1471
    %v1534 = vadd.f32 %v1176, %v1474
    %v1535 = vadd.f32 %v1177, %v1479
    %v1536 = vadd.f32 %v1178, %v1482
    %v1537 = vadd.f32 %v1179, %v1487
    %v1538 = vadd.f32 %v1180, %v1490
    %v1539 = vadd.f32 %v1181, %v1495
    %v1540 = vadd.f32 %v1182, %v1498
    %v1541 = vadd.f32 %v1183, %v1503
    %v1542 = vadd.f32 %v1184, %v1506
    %v1543 = vadd.f32 %v1185, %v1511
    %v1544 = vadd.f32 %v1186, %v1514
    %v1545 = vadd.f32 %v1187, %v1519
    %v1546 = vadd.f32 %v1188, %v1522
    %v1547 = vadd.f32 %v1189, %v1527
    %v1548 = vadd.f32 %v1190, %v1530
    %v1549 = vld [vmem:[%s4] sm:$0xff]
    %v1550 = vld [vmem:[%s4 + $0x8] sm:$0xff]
    %v1551 = vld [vmem:[%s4 + $0x10] sm:$0xff]
    %v1552 = vld [vmem:[%s4 + $0x18] sm:$0xff]
    %v1553 = vld [vmem:[%s4 + $0x20] sm:$0xff]
    %v1554 = vld [vmem:[%s4 + $0x28] sm:$0xff]
    %v1555 = vld [vmem:[%s4 + $0x30] sm:$0xff]
    %v1556 = vld [vmem:[%s4 + $0x38] sm:$0xff]
    %v1557 = vld [vmem:[%s4 + $0x40] sm:$0xff]
    %v1558 = vld [vmem:[%s4 + $0x48] sm:$0xff]
    %v1559 = vld [vmem:[%s4 + $0x50] sm:$0xff]
    %v1560 = vld [vmem:[%s4 + $0x58] sm:$0xff]
    %v1561 = vld [vmem:[%s4 + $0x60] sm:$0xff]
    %v1562 = vld [vmem:[%s4 + $0x68] sm:$0xff]
    %v1563 = vld [vmem:[%s4 + $0x70] sm:$0xff]
    %v1564 = vld [vmem:[%s4 + $0x78] sm:$0xff]
    %1566 = vset.pattern.permute.xlu0 8
    %1567 = vperm.xlu0 %1566, %v1549
    %v1568 = vpop.permute.xlu0 %1567
    %1571 = vset.pattern.permute.xlu0 8
    %1572 = vperm.xlu0 %1571, %v1550
    %v1573 = vpop.permute.xlu0 %1572
    %1576 = vset.pattern.permute.xlu0 8
    %1577 = vperm.xlu0 %1576, %v1551
    %v1578 = vpop.permute.xlu0 %1577
    %1581 = vset.pattern.permute.xlu0 8
    %1582 = vperm.xlu0 %1581, %v1552
    %v1583 = vpop.permute.xlu0 %1582
    %1586 = vset.pattern.permute.xlu0 8
    %1587 = vperm.xlu0 %1586, %v1553
    %v1588 = vpop.permute.xlu0 %1587
    %1591 = vset.pattern.permute.xlu0 8
    %1592 = vperm.xlu0 %1591, %v1554
    %v1593 = vpop.permute.xlu0 %1592
    %1596 = vset.pattern.permute.xlu0 8
    %1597 = vperm.xlu0 %1596, %v1555
    %v1598 = vpop.permute.xlu0 %1597
    %1601 = vset.pattern.permute.xlu0 8
    %1602 = vperm.xlu0 %1601, %v1556
    %v1603 = vpop.permute.xlu0 %1602
    %1606 = vset.pattern.permute.xlu0 8
    %1607 = vperm.xlu0 %1606, %v1557
    %v1608 = vpop.permute.xlu0 %1607
    %1611 = vset.pattern.permute.xlu0 8
    %1612 = vperm.xlu0 %1611, %v1558
    %v1613 = vpop.permute.xlu0 %1612
    %1616 = vset.pattern.permute.xlu0 8
    %1617 = vperm.xlu0 %1616, %v1559
    %v1618 = vpop.permute.xlu0 %1617
    %1621 = vset.pattern.permute.xlu0 8
    %1622 = vperm.xlu0 %1621, %v1560
    %v1623 = vpop.permute.xlu0 %1622
    %1626 = vset.pattern.permute.xlu0 8
    %1627 = vperm.xlu0 %1626, %v1561
    %v1628 = vpop.permute.xlu0 %1627
    %1631 = vset.pattern.permute.xlu0 8
    %1632 = vperm.xlu0 %1631, %v1562
    %v1633 = vpop.permute.xlu0 %1632
    %1636 = vset.pattern.permute.xlu0 8
    %1637 = vperm.xlu0 %1636, %v1563
    %v1638 = vpop.permute.xlu0 %1637
    %1641 = vset.pattern.permute.xlu0 8
    %1642 = vperm.xlu0 %1641, %v1564
    %v1643 = vpop.permute.xlu0 %1642
    %v1645 = vadd.f32 %v1533, %v1568
    %v1646 = vadd.f32 %v1534, %v1573
    %v1647 = vadd.f32 %v1535, %v1578
    %v1648 = vadd.f32 %v1536, %v1583
    %v1649 = vadd.f32 %v1537, %v1588
    %v1650 = vadd.f32 %v1538, %v1593
    %v1651 = vadd.f32 %v1539, %v1598
    %v1652 = vadd.f32 %v1540, %v1603
    %v1653 = vadd.f32 %v1541, %v1608
    %v1654 = vadd.f32 %v1542, %v1613
    %v1655 = vadd.f32 %v1543, %v1618
    %v1656 = vadd.f32 %v1544, %v1623
    %v1657 = vadd.f32 %v1545, %v1628
    %v1658 = vadd.f32 %v1546, %v1633
    %v1659 = vadd.f32 %v1547, %v1638
    %v1660 = vadd.f32 %v1548, %v1643
    %v1661 = vmax.f32 %v1645, 0.0
    %v1662 = vmax.f32 %v1646, 0.0
    %v1663 = vmax.f32 %v1647, 0.0
    %v1664 = vmax.f32 %v1648, 0.0
    %v1665 = vmax.f32 %v1649, 0.0
    %v1666 = vmax.f32 %v1650, 0.0
    %v1667 = vmax.f32 %v1651, 0.0
    %v1668 = vmax.f32 %v1652, 0.0
    %v1669 = vmax.f32 %v1653, 0.0
    %v1670 = vmax.f32 %v1654, 0.0
    %v1671 = vmax.f32 %v1655, 0.0
    %v1672 = vmax.f32 %v1656, 0.0
    %v1673 = vmax.f32 %v1657, 0.0
    %v1674 = vmax.f32 %v1658, 0.0
    %v1675 = vmax.f32 %v1659, 0.0
    %v1676 = vmax.f32 %v1660, 0.0
    %v1677 = vpack.c.bf16 %v1662, %v1661
    %v1678 = vpack.c.bf16 %v1664, %v1663
    %v1679 = vpack.c.bf16 %v1666, %v1665
    %v1680 = vpack.c.bf16 %v1668, %v1667
    %v1681 = vpack.c.bf16 %v1670, %v1669
    %v1682 = vpack.c.bf16 %v1672, %v1671
    %v1683 = vpack.c.bf16 %v1674, %v1673
    %v1684 = vpack.c.bf16 %v1676, %v1675
    %v1685 = vld [vmem:[#allocation6 + $0x180] sm:$0xf]
    %v1686 = vld [vmem:[#allocation6 + $0x184] sm:$0xf]
    %v1687 = vld [vmem:[#allocation6 + $0x188] sm:$0xf]
    %v1688 = vld [vmem:[#allocation6 + $0x18c] sm:$0xf]
    %v1689 = vld [vmem:[#allocation6 + $0x190] sm:$0xf]
    %v1690 = vld [vmem:[#allocation6 + $0x194] sm:$0xf]
    %v1691 = vld [vmem:[#allocation6 + $0x198] sm:$0xf]
    %v1692 = vld [vmem:[#allocation6 + $0x19c] sm:$0xf]
    %v1693 = vld [vmem:[#allocation6 + $0x1a0] sm:$0xf]
    %v1694 = vld [vmem:[#allocation6 + $0x1a4] sm:$0xf]
    %v1695 = vld [vmem:[#allocation6 + $0x1a8] sm:$0xf]
    %v1696 = vld [vmem:[#allocation6 + $0x1ac] sm:$0xf]
    %v1709 = vunpack.c.l.b16 %v1685
    %v1710 = vunpack.c.l.b16 %v1686
    %v1711 = vunpack.c.l.b16 %v1687
    %v1712 = vunpack.c.l.b16 %v1688
    %v1713 = vunpack.c.l.b16 %v1689
    %v1714 = vunpack.c.l.b16 %v1690
    %v1715 = vunpack.c.l.b16 %v1691
    %v1716 = vunpack.c.l.b16 %v1692
    %v1717 = vunpack.c.l.b16 %v1693
    %v1718 = vunpack.c.l.b16 %v1694
    %v1719 = vunpack.c.l.b16 %v1695
    %v1720 = vunpack.c.l.b16 %v1696
    %v1721 = vpack.c.b16 %v1710, %v1709
    %v1722 = vpack.c.b16 %v1712, %v1711
    %v1723 = vpack.c.b16 %v1714, %v1713
    %v1724 = vpack.c.b16 %v1716, %v1715
    %v1725 = vpack.c.b16 %v1718, %v1717
    %v1726 = vpack.c.b16 %v1720, %v1719
    %vm1733 = vcmask 785408
    %v1735 = vsel %vm1733, %v1677, 0
    %v1738 = vsel %vm1733, %v1678, 0
    %v1741 = vsel %vm1733, %v1679, 0
    %v1744 = vsel %vm1733, %v1680, 0
    %v1747 = vsel %vm1733, %v1681, 0
    %v1750 = vsel %vm1733, %v1682, 0
    %v1753 = vsel %vm1733, %v1683, 0
    %v1756 = vsel %vm1733, %v1684, 0
    %1758 = vmatprep.subr.bf16.mxu0 0
    %1759 = vmatpush1.bf16.msra.mxu0 0
    %1760 = vmatprep.subr.bf16.mxu0 0
    %1761 = vmatpush1.bf16.msra.mxu0 0
    %1762 = vmatprep.subr.bf16.mxu0 0
    %1763 = vmatpush1.bf16.msra.mxu0 %v1726
    %1764 = vmatprep.subr.bf16.mxu0 0
    %1765 = vmatpush1.bf16.msra.mxu0 %v1725
    %1766 = vmatprep.subr.bf16.mxu0 0
    %1767 = vmatpush1.bf16.msra.mxu0 %v1724
    %1768 = vmatprep.subr.bf16.mxu0 0
    %1769 = vmatpush1.bf16.msra.mxu0 %v1723
    %1770 = vmatprep.subr.bf16.mxu0 0
    %1771 = vmatpush1.bf16.msra.mxu0 %v1722
    %1772 = vmatprep.subr.bf16.mxu0 0
    %1773 = vmatpush1.bf16.msra.mxu0 %v1721
    %1774 = vmatprep.subr.bf16.mxu0 0
    %1775 = vmatpush2.bf16.msra.mxu0 0
    %1776 = vmatprep.subr.bf16.mxu0 0
    %1777 = vmatpush2.bf16.msra.mxu0 0
    %1778 = vmatprep.subr.bf16.mxu0 0
    %1779 = vmatpush2.bf16.msra.mxu0 0
    %1780 = vmatprep.subr.bf16.mxu0 0
    %1781 = vmatpush2.bf16.msra.mxu0 0
    %1782 = vmatprep.subr.bf16.mxu0 0
    %1783 = vmatpush2.bf16.msra.mxu0 0
    %1784 = vmatprep.subr.bf16.mxu0 0
    %1785 = vmatpush2.bf16.msra.mxu0 0
    %1786 = vmatprep.subr.bf16.mxu0 0
    %1787 = vmatpush2.bf16.msra.mxu0 0
    %1788 = vmatprep.subr.bf16.mxu0 0
    %1789 = vmatpush2.bf16.msra.mxu0 0
    %1790 = vmatprep.mubr.bf16.mxu0 0
    %1791 = vmatmul.mubr.bf16.gmra.mxu0 %v1735
    %v1792 = vpop.f32.mrf.mxu0
    %v1793 = vadd.f32 0.0, %v1792
    %v1794 = vpop.f32.mrf.mxu0
    %v1795 = vpop.f32.mrf.mxu0
    %v1796 = vadd.f32 0.0, %v1795
    %v1797 = vpop.f32.mrf.mxu0
    %1798 = vmatprep.mubr.bf16.mxu0 0
    %1799 = vmatmul.mubr.bf16.gmra.mxu0 %v1738
    %v1800 = vpop.f32.mrf.mxu0
    %v1801 = vadd.f32 0.0, %v1800
    %v1802 = vpop.f32.mrf.mxu0
    %v1803 = vpop.f32.mrf.mxu0
    %v1804 = vadd.f32 0.0, %v1803
    %v1805 = vpop.f32.mrf.mxu0
    %1806 = vmatprep.mubr.bf16.mxu0 0
    %1807 = vmatmul.mubr.bf16.gmra.mxu0 %v1741
    %v1808 = vpop.f32.mrf.mxu0
    %v1809 = vadd.f32 0.0, %v1808
    %v1810 = vpop.f32.mrf.mxu0
    %v1811 = vpop.f32.mrf.mxu0
    %v1812 = vadd.f32 0.0, %v1811
    %v1813 = vpop.f32.mrf.mxu0
    %1814 = vmatprep.mubr.bf16.mxu0 0
    %1815 = vmatmul.mubr.bf16.gmra.mxu0 %v1744
    %v1816 = vpop.f32.mrf.mxu0
    %v1817 = vadd.f32 0.0, %v1816
    %v1818 = vpop.f32.mrf.mxu0
    %v1819 = vpop.f32.mrf.mxu0
    %v1820 = vadd.f32 0.0, %v1819
    %v1821 = vpop.f32.mrf.mxu0
    %1822 = vmatprep.mubr.bf16.mxu0 0
    %1823 = vmatmul.mubr.bf16.gmra.mxu0 %v1747
    %v1824 = vpop.f32.mrf.mxu0
    %v1825 = vadd.f32 0.0, %v1824
    %v1826 = vpop.f32.mrf.mxu0
    %v1827 = vpop.f32.mrf.mxu0
    %v1828 = vadd.f32 0.0, %v1827
    %v1829 = vpop.f32.mrf.mxu0
    %1830 = vmatprep.mubr.bf16.mxu0 0
    %1831 = vmatmul.mubr.bf16.gmra.mxu0 %v1750
    %v1832 = vpop.f32.mrf.mxu0
    %v1833 = vadd.f32 0.0, %v1832
    %v1834 = vpop.f32.mrf.mxu0
    %v1835 = vpop.f32.mrf.mxu0
    %v1836 = vadd.f32 0.0, %v1835
    %v1837 = vpop.f32.mrf.mxu0
    %1838 = vmatprep.mubr.bf16.mxu0 0
    %1839 = vmatmul.mubr.bf16.gmra.mxu0 %v1753
    %v1840 = vpop.f32.mrf.mxu0
    %v1841 = vadd.f32 0.0, %v1840
    %v1842 = vpop.f32.mrf.mxu0
    %v1843 = vpop.f32.mrf.mxu0
    %v1844 = vadd.f32 0.0, %v1843
    %v1845 = vpop.f32.mrf.mxu0
    %1846 = vmatprep.mubr.bf16.mxu0 0
    %1847 = vmatmul.mubr.bf16.gmra.mxu0 %v1756
    %v1848 = vpop.f32.mrf.mxu0
    %v1849 = vadd.f32 0.0, %v1848
    %v1850 = vpop.f32.mrf.mxu0
    %v1851 = vpop.f32.mrf.mxu0
    %v1852 = vadd.f32 0.0, %v1851
    %v1853 = vpop.f32.mrf.mxu0
    %1854 = vdwg.mxu0
    %v1855 = vpack.c.bf16 %v1796, %v1793
    %v1856 = vpack.c.bf16 %v1804, %v1801
    %v1857 = vpack.c.bf16 %v1812, %v1809
    %v1858 = vpack.c.bf16 %v1820, %v1817
    %v1859 = vpack.c.bf16 %v1828, %v1825
    %v1860 = vpack.c.bf16 %v1836, %v1833
    %v1861 = vpack.c.bf16 %v1844, %v1841
    %v1862 = vpack.c.bf16 %v1852, %v1849
    %v1863 = vld [vmem:[#allocation4 + $0x100] sm:$0xf]
    %v1864 = vld [vmem:[#allocation4 + $0x110] sm:$0xf]
    %v1865 = vld [vmem:[#allocation4 + $0x120] sm:$0xf]
    %v1866 = vld [vmem:[#allocation4 + $0x130] sm:$0xf]
    %v1867 = vld [vmem:[#allocation4 + $0x140] sm:$0xf]
    %v1868 = vld [vmem:[#allocation4 + $0x150] sm:$0xf]
    %v1869 = vld [vmem:[#allocation4 + $0x160] sm:$0xf]
    %v1870 = vld [vmem:[#allocation4 + $0x170] sm:$0xf]
    %v1871 = vld [vmem:[#allocation4 + $0x180] sm:$0xf]
    %v1872 = vld [vmem:[#allocation4 + $0x190] sm:$0xf]
    %v1873 = vld [vmem:[#allocation4 + $0x1a0] sm:$0xf]
    %v1874 = vld [vmem:[#allocation4 + $0x1b0] sm:$0xf]
    %v1875 = vld [vmem:[#allocation4 + $0x1c0] sm:$0xf]
    %v1876 = vld [vmem:[#allocation4 + $0x1d0] sm:$0xf]
    %v1877 = vld [vmem:[#allocation4 + $0x1e0] sm:$0xf]
    %v1878 = vld [vmem:[#allocation4 + $0x1f0] sm:$0xf]
    %v1879 = vld [vmem:[#allocation6 + $0x1b0] sm:$0xf]
    %v1880 = vld [vmem:[#allocation6 + $0x1b4] sm:$0xf]
    %v1881 = vld [vmem:[#allocation6 + $0x1b8] sm:$0xf]
    %v1882 = vld [vmem:[#allocation6 + $0x1bc] sm:$0xf]
    %v1883 = vld [vmem:[#allocation6 + $0x1c0] sm:$0xf]
    %v1884 = vld [vmem:[#allocation6 + $0x1c4] sm:$0xf]
    %v1885 = vld [vmem:[#allocation6 + $0x1c8] sm:$0xf]
    %v1886 = vld [vmem:[#allocation6 + $0x1cc] sm:$0xf]
    %v1887 = vld [vmem:[#allocation6 + $0x1d0] sm:$0xf]
    %v1888 = vld [vmem:[#allocation6 + $0x1d4] sm:$0xf]
    %v1889 = vld [vmem:[#allocation6 + $0x1d8] sm:$0xf]
    %v1890 = vld [vmem:[#allocation6 + $0x1dc] sm:$0xf]
    %v1903 = vunpack.c.l.b16 %v1879
    %v1904 = vunpack.c.l.b16 %v1880
    %v1905 = vunpack.c.l.b16 %v1881
    %v1906 = vunpack.c.l.b16 %v1882
    %v1907 = vunpack.c.l.b16 %v1883
    %v1908 = vunpack.c.l.b16 %v1884
    %v1909 = vunpack.c.l.b16 %v1885
    %v1910 = vunpack.c.l.b16 %v1886
    %v1911 = vunpack.c.l.b16 %v1887
    %v1912 = vunpack.c.l.b16 %v1888
    %v1913 = vunpack.c.l.b16 %v1889
    %v1914 = vunpack.c.l.b16 %v1890
    %v1915 = vpack.c.b16 %v1904, %v1903
    %v1916 = vpack.c.b16 %v1906, %v1905
    %v1917 = vpack.c.b16 %v1908, %v1907
    %v1918 = vpack.c.b16 %v1910, %v1909
    %v1919 = vpack.c.b16 %v1912, %v1911
    %v1920 = vpack.c.b16 %v1914, %v1913
    %1927 = vmatprep.subr.bf16.mxu0 0
    %1928 = vmatpush1.bf16.msra.mxu0 0
    %1929 = vmatprep.subr.bf16.mxu0 0
    %1930 = vmatpush1.bf16.msra.mxu0 0
    %1931 = vmatprep.subr.bf16.mxu0 0
    %1932 = vmatpush1.bf16.msra.mxu0 %v1920
    %1933 = vmatprep.subr.bf16.mxu0 0
    %1934 = vmatpush1.bf16.msra.mxu0 %v1919
    %1935 = vmatprep.subr.bf16.mxu0 0
    %1936 = vmatpush1.bf16.msra.mxu0 %v1918
    %1937 = vmatprep.subr.bf16.mxu0 0
    %1938 = vmatpush1.bf16.msra.mxu0 %v1917
    %1939 = vmatprep.subr.bf16.mxu0 0
    %1940 = vmatpush1.bf16.msra.mxu0 %v1916
    %1941 = vmatprep.subr.bf16.mxu0 0
    %1942 = vmatpush1.bf16.msra.mxu0 %v1915
    %1943 = vmatprep.subr.bf16.mxu0 0
    %1944 = vmatpush2.bf16.msra.mxu0 0
    %1945 = vmatprep.subr.bf16.mxu0 0
    %1946 = vmatpush2.bf16.msra.mxu0 0
    %1947 = vmatprep.subr.bf16.mxu0 0
    %1948 = vmatpush2.bf16.msra.mxu0 0
    %1949 = vmatprep.subr.bf16.mxu0 0
    %1950 = vmatpush2.bf16.msra.mxu0 0
    %1951 = vmatprep.subr.bf16.mxu0 0
    %1952 = vmatpush2.bf16.msra.mxu0 0
    %1953 = vmatprep.subr.bf16.mxu0 0
    %1954 = vmatpush2.bf16.msra.mxu0 0
    %1955 = vmatprep.subr.bf16.mxu0 0
    %1956 = vmatpush2.bf16.msra.mxu0 0
    %1957 = vmatprep.subr.bf16.mxu0 0
    %1958 = vmatpush2.bf16.msra.mxu0 0
    %1959 = vmatprep.mubr.bf16.mxu0 0
    %1960 = vmatmul.mubr.bf16.gmra.mxu0 %v1735
    %v1961 = vpop.f32.mrf.mxu0
    %v1962 = vadd.f32 0.0, %v1961
    %v1963 = vpop.f32.mrf.mxu0
    %v1964 = vpop.f32.mrf.mxu0
    %v1965 = vadd.f32 0.0, %v1964
    %v1966 = vpop.f32.mrf.mxu0
    %1967 = vmatprep.mubr.bf16.mxu0 0
    %1968 = vmatmul.mubr.bf16.gmra.mxu0 %v1738
    %v1969 = vpop.f32.mrf.mxu0
    %v1970 = vadd.f32 0.0, %v1969
    %v1971 = vpop.f32.mrf.mxu0
    %v1972 = vpop.f32.mrf.mxu0
    %v1973 = vadd.f32 0.0, %v1972
    %v1974 = vpop.f32.mrf.mxu0
    %1975 = vmatprep.mubr.bf16.mxu0 0
    %1976 = vmatmul.mubr.bf16.gmra.mxu0 %v1741
    %v1977 = vpop.f32.mrf.mxu0
    %v1978 = vadd.f32 0.0, %v1977
    %v1979 = vpop.f32.mrf.mxu0
    %v1980 = vpop.f32.mrf.mxu0
    %v1981 = vadd.f32 0.0, %v1980
    %v1982 = vpop.f32.mrf.mxu0
    %1983 = vmatprep.mubr.bf16.mxu0 0
    %1984 = vmatmul.mubr.bf16.gmra.mxu0 %v1744
    %v1985 = vpop.f32.mrf.mxu0
    %v1986 = vadd.f32 0.0, %v1985
    %v1987 = vpop.f32.mrf.mxu0
    %v1988 = vpop.f32.mrf.mxu0
    %v1989 = vadd.f32 0.0, %v1988
    %v1990 = vpop.f32.mrf.mxu0
    %1991 = vmatprep.mubr.bf16.mxu0 0
    %1992 = vmatmul.mubr.bf16.gmra.mxu0 %v1747
    %v1993 = vpop.f32.mrf.mxu0
    %v1994 = vadd.f32 0.0, %v1993
    %v1995 = vpop.f32.mrf.mxu0
    %v1996 = vpop.f32.mrf.mxu0
    %v1997 = vadd.f32 0.0, %v1996
    %v1998 = vpop.f32.mrf.mxu0
    %1999 = vmatprep.mubr.bf16.mxu0 0
    %2000 = vmatmul.mubr.bf16.gmra.mxu0 %v1750
    %v2001 = vpop.f32.mrf.mxu0
    %v2002 = vadd.f32 0.0, %v2001
    %v2003 = vpop.f32.mrf.mxu0
    %v2004 = vpop.f32.mrf.mxu0
    %v2005 = vadd.f32 0.0, %v2004
    %v2006 = vpop.f32.mrf.mxu0
    %2007 = vmatprep.mubr.bf16.mxu0 0
    %2008 = vmatmul.mubr.bf16.gmra.mxu0 %v1753
    %v2009 = vpop.f32.mrf.mxu0
    %v2010 = vadd.f32 0.0, %v2009
    %v2011 = vpop.f32.mrf.mxu0
    %v2012 = vpop.f32.mrf.mxu0
    %v2013 = vadd.f32 0.0, %v2012
    %v2014 = vpop.f32.mrf.mxu0
    %2015 = vmatprep.mubr.bf16.mxu0 0
    %2016 = vmatmul.mubr.bf16.gmra.mxu0 %v1756
    %v2017 = vpop.f32.mrf.mxu0
    %v2018 = vadd.f32 0.0, %v2017
    %v2019 = vpop.f32.mrf.mxu0
    %v2020 = vpop.f32.mrf.mxu0
    %v2021 = vadd.f32 0.0, %v2020
    %v2022 = vpop.f32.mrf.mxu0
    %2023 = vdwg.mxu0
    %v2024 = vpack.c.bf16 %v1965, %v1962
    %v2025 = vpack.c.bf16 %v1973, %v1970
    %v2026 = vpack.c.bf16 %v1981, %v1978
    %v2027 = vpack.c.bf16 %v1989, %v1986
    %v2028 = vpack.c.bf16 %v1997, %v1994
    %v2029 = vpack.c.bf16 %v2005, %v2002
    %v2030 = vpack.c.bf16 %v2013, %v2010
    %v2031 = vpack.c.bf16 %v2021, %v2018
    %v2032 = vld [vmem:[#allocation4 + $0x104] sm:$0xf]
    %v2033 = vld [vmem:[#allocation4 + $0x114] sm:$0xf]
    %v2034 = vld [vmem:[#allocation4 + $0x124] sm:$0xf]
    %v2035 = vld [vmem:[#allocation4 + $0x134] sm:$0xf]
    %v2036 = vld [vmem:[#allocation4 + $0x144] sm:$0xf]
    %v2037 = vld [vmem:[#allocation4 + $0x154] sm:$0xf]
    %v2038 = vld [vmem:[#allocation4 + $0x164] sm:$0xf]
    %v2039 = vld [vmem:[#allocation4 + $0x174] sm:$0xf]
    %v2040 = vld [vmem:[#allocation4 + $0x184] sm:$0xf]
    %v2041 = vld [vmem:[#allocation4 + $0x194] sm:$0xf]
    %v2042 = vld [vmem:[#allocation4 + $0x1a4] sm:$0xf]
    %v2043 = vld [vmem:[#allocation4 + $0x1b4] sm:$0xf]
    %v2044 = vld [vmem:[#allocation4 + $0x1c4] sm:$0xf]
    %v2045 = vld [vmem:[#allocation4 + $0x1d4] sm:$0xf]
    %v2046 = vld [vmem:[#allocation4 + $0x1e4] sm:$0xf]
    %v2047 = vld [vmem:[#allocation4 + $0x1f4] sm:$0xf]
    %v2064 = vunpack.c.l.b16 %v2032
    %v2065 = vunpack.c.l.b16 %v2033
    %v2066 = vunpack.c.l.b16 %v2034
    %v2067 = vunpack.c.l.b16 %v2035
    %v2068 = vunpack.c.l.b16 %v2036
    %v2069 = vunpack.c.l.b16 %v2037
    %v2070 = vunpack.c.l.b16 %v2038
    %v2071 = vunpack.c.l.b16 %v2039
    %v2072 = vunpack.c.l.b16 %v2040
    %v2073 = vunpack.c.l.b16 %v2041
    %v2074 = vunpack.c.l.b16 %v2042
    %v2075 = vunpack.c.l.b16 %v2043
    %v2076 = vunpack.c.l.b16 %v2044
    %v2077 = vunpack.c.l.b16 %v2045
    %v2078 = vunpack.c.l.b16 %v2046
    %v2079 = vunpack.c.l.b16 %v2047
    %v2080 = vpack.c.b16 %v2065, %v2064
    %v2081 = vpack.c.b16 %v2067, %v2066
    %v2082 = vpack.c.b16 %v2069, %v2068
    %v2083 = vpack.c.b16 %v2071, %v2070
    %v2084 = vpack.c.b16 %v2073, %v2072
    %v2085 = vpack.c.b16 %v2075, %v2074
    %v2086 = vpack.c.b16 %v2077, %v2076
    %v2087 = vpack.c.b16 %v2079, %v2078
    %2096 = vmatprep.subr.bf16.mxu0 0
    %2097 = vmatpush1.bf16.msra.mxu0 %v2031
    %2098 = vmatprep.subr.bf16.mxu0 0
    %2099 = vmatpush1.bf16.msra.mxu0 %v2030
    %2100 = vmatprep.subr.bf16.mxu0 0
    %2101 = vmatpush1.bf16.msra.mxu0 %v2029
    %2102 = vmatprep.subr.bf16.mxu0 0
    %2103 = vmatpush1.bf16.msra.mxu0 %v2028
    %2104 = vmatprep.subr.bf16.mxu0 0
    %2105 = vmatpush1.bf16.msra.mxu0 %v2027
    %2106 = vmatprep.subr.bf16.mxu0 0
    %2107 = vmatpush1.bf16.msra.mxu0 %v2026
    %2108 = vmatprep.subr.bf16.mxu0 0
    %2109 = vmatpush1.bf16.msra.mxu0 %v2025
    %2110 = vmatprep.subr.bf16.mxu0 0
    %2111 = vmatpush1.bf16.msra.mxu0 %v2024
    %2112 = vmatprep.subr.bf16.mxu0 0
    %2113 = vmatpush2.bf16.msra.mxu0 0
    %2114 = vmatprep.subr.bf16.mxu0 0
    %2115 = vmatpush2.bf16.msra.mxu0 0
    %2116 = vmatprep.subr.bf16.mxu0 0
    %2117 = vmatpush2.bf16.msra.mxu0 0
    %2118 = vmatprep.subr.bf16.mxu0 0
    %2119 = vmatpush2.bf16.msra.mxu0 0
    %2120 = vmatprep.subr.bf16.mxu0 0
    %2121 = vmatpush2.bf16.msra.mxu0 0
    %2122 = vmatprep.subr.bf16.mxu0 0
    %2123 = vmatpush2.bf16.msra.mxu0 0
    %2124 = vmatprep.subr.bf16.mxu0 0
    %2125 = vmatpush2.bf16.msra.mxu0 0
    %2126 = vmatprep.subr.bf16.mxu0 0
    %2127 = vmatpush2.bf16.msra.mxu0 0
    %2128 = vmatprep.mubr.bf16.mxu0 0
    %2129 = vmatmul.mubr.bf16.gmra.mxu0 %v2080
    %v2130 = vpop.f32.mrf.mxu0
    %v2131 = vadd.f32 0.0, %v2130
    %v2132 = vpop.f32.mrf.mxu0
    %v2133 = vpop.f32.mrf.mxu0
    %v2134 = vadd.f32 0.0, %v2133
    %v2135 = vpop.f32.mrf.mxu0
    %2136 = vmatprep.mubr.bf16.mxu0 0
    %2137 = vmatmul.mubr.bf16.gmra.mxu0 %v2081
    %v2138 = vpop.f32.mrf.mxu0
    %v2139 = vadd.f32 0.0, %v2138
    %v2140 = vpop.f32.mrf.mxu0
    %v2141 = vpop.f32.mrf.mxu0
    %v2142 = vadd.f32 0.0, %v2141
    %v2143 = vpop.f32.mrf.mxu0
    %2144 = vmatprep.mubr.bf16.mxu0 0
    %2145 = vmatmul.mubr.bf16.gmra.mxu0 %v2082
    %v2146 = vpop.f32.mrf.mxu0
    %v2147 = vadd.f32 0.0, %v2146
    %v2148 = vpop.f32.mrf.mxu0
    %v2149 = vpop.f32.mrf.mxu0
    %v2150 = vadd.f32 0.0, %v2149
    %v2151 = vpop.f32.mrf.mxu0
    %2152 = vmatprep.mubr.bf16.mxu0 0
    %2153 = vmatmul.mubr.bf16.gmra.mxu0 %v2083
    %v2154 = vpop.f32.mrf.mxu0
    %v2155 = vadd.f32 0.0, %v2154
    %v2156 = vpop.f32.mrf.mxu0
    %v2157 = vpop.f32.mrf.mxu0
    %v2158 = vadd.f32 0.0, %v2157
    %v2159 = vpop.f32.mrf.mxu0
    %2160 = vmatprep.mubr.bf16.mxu0 0
    %2161 = vmatmul.mubr.bf16.gmra.mxu0 %v2084
    %v2162 = vpop.f32.mrf.mxu0
    %v2163 = vadd.f32 0.0, %v2162
    %v2164 = vpop.f32.mrf.mxu0
    %v2165 = vpop.f32.mrf.mxu0
    %v2166 = vadd.f32 0.0, %v2165
    %v2167 = vpop.f32.mrf.mxu0
    %2168 = vmatprep.mubr.bf16.mxu0 0
    %2169 = vmatmul.mubr.bf16.gmra.mxu0 %v2085
    %v2170 = vpop.f32.mrf.mxu0
    %v2171 = vadd.f32 0.0, %v2170
    %v2172 = vpop.f32.mrf.mxu0
    %v2173 = vpop.f32.mrf.mxu0
    %v2174 = vadd.f32 0.0, %v2173
    %v2175 = vpop.f32.mrf.mxu0
    %2176 = vmatprep.mubr.bf16.mxu0 0
    %2177 = vmatmul.mubr.bf16.gmra.mxu0 %v2086
    %v2178 = vpop.f32.mrf.mxu0
    %v2179 = vadd.f32 0.0, %v2178
    %v2180 = vpop.f32.mrf.mxu0
    %v2181 = vpop.f32.mrf.mxu0
    %v2182 = vadd.f32 0.0, %v2181
    %v2183 = vpop.f32.mrf.mxu0
    %2184 = vmatprep.mubr.bf16.mxu0 0
    %2185 = vmatmul.mubr.bf16.gmra.mxu0 %v2087
    %v2186 = vpop.f32.mrf.mxu0
    %v2187 = vadd.f32 0.0, %v2186
    %v2188 = vpop.f32.mrf.mxu0
    %v2189 = vpop.f32.mrf.mxu0
    %v2190 = vadd.f32 0.0, %v2189
    %v2191 = vpop.f32.mrf.mxu0
    %2192 = vdwg.mxu0
    %v2209 = vunpack.c.l.b16 %v1863
    %v2210 = vunpack.c.l.b16 %v1864
    %v2211 = vunpack.c.l.b16 %v1865
    %v2212 = vunpack.c.l.b16 %v1866
    %v2213 = vunpack.c.l.b16 %v1867
    %v2214 = vunpack.c.l.b16 %v1868
    %v2215 = vunpack.c.l.b16 %v1869
    %v2216 = vunpack.c.l.b16 %v1870
    %v2217 = vunpack.c.l.b16 %v1871
    %v2218 = vunpack.c.l.b16 %v1872
    %v2219 = vunpack.c.l.b16 %v1873
    %v2220 = vunpack.c.l.b16 %v1874
    %v2221 = vunpack.c.l.b16 %v1875
    %v2222 = vunpack.c.l.b16 %v1876
    %v2223 = vunpack.c.l.b16 %v1877
    %v2224 = vunpack.c.l.b16 %v1878
    %v2225 = vpack.c.b16 %v2210, %v2209
    %v2226 = vpack.c.b16 %v2212, %v2211
    %v2227 = vpack.c.b16 %v2214, %v2213
    %v2228 = vpack.c.b16 %v2216, %v2215
    %v2229 = vpack.c.b16 %v2218, %v2217
    %v2230 = vpack.c.b16 %v2220, %v2219
    %v2231 = vpack.c.b16 %v2222, %v2221
    %v2232 = vpack.c.b16 %v2224, %v2223
    %2241 = vmatprep.subr.bf16.mxu0 0
    %2242 = vmatpush1.bf16.msra.mxu0 %v1862
    %2243 = vmatprep.subr.bf16.mxu0 0
    %2244 = vmatpush1.bf16.msra.mxu0 %v1861
    %2245 = vmatprep.subr.bf16.mxu0 0
    %2246 = vmatpush1.bf16.msra.mxu0 %v1860
    %2247 = vmatprep.subr.bf16.mxu0 0
    %2248 = vmatpush1.bf16.msra.mxu0 %v1859
    %2249 = vmatprep.subr.bf16.mxu0 0
    %2250 = vmatpush1.bf16.msra.mxu0 %v1858
    %2251 = vmatprep.subr.bf16.mxu0 0
    %2252 = vmatpush1.bf16.msra.mxu0 %v1857
    %2253 = vmatprep.subr.bf16.mxu0 0
    %2254 = vmatpush1.bf16.msra.mxu0 %v1856
    %2255 = vmatprep.subr.bf16.mxu0 0
    %2256 = vmatpush1.bf16.msra.mxu0 %v1855
    %2257 = vmatprep.subr.bf16.mxu0 0
    %2258 = vmatpush2.bf16.msra.mxu0 0
    %2259 = vmatprep.subr.bf16.mxu0 0
    %2260 = vmatpush2.bf16.msra.mxu0 0
    %2261 = vmatprep.subr.bf16.mxu0 0
    %2262 = vmatpush2.bf16.msra.mxu0 0
    %2263 = vmatprep.subr.bf16.mxu0 0
    %2264 = vmatpush2.bf16.msra.mxu0 0
    %2265 = vmatprep.subr.bf16.mxu0 0
    %2266 = vmatpush2.bf16.msra.mxu0 0
    %2267 = vmatprep.subr.bf16.mxu0 0
    %2268 = vmatpush2.bf16.msra.mxu0 0
    %2269 = vmatprep.subr.bf16.mxu0 0
    %2270 = vmatpush2.bf16.msra.mxu0 0
    %2271 = vmatprep.subr.bf16.mxu0 0
    %2272 = vmatpush2.bf16.msra.mxu0 0
    %2273 = vmatprep.mubr.bf16.mxu0 0
    %2274 = vmatmul.mubr.bf16.gmra.mxu0 %v2225
    %v2275 = vpop.f32.mrf.mxu0
    %v2276 = vadd.f32 %v2131, %v2275
    %v2277 = vpop.f32.mrf.mxu0
    %v2278 = vpop.f32.mrf.mxu0
    %v2279 = vadd.f32 %v2134, %v2278
    %v2280 = vpop.f32.mrf.mxu0
    %2281 = vmatprep.mubr.bf16.mxu0 0
    %2282 = vmatmul.mubr.bf16.gmra.mxu0 %v2226
    %v2283 = vpop.f32.mrf.mxu0
    %v2284 = vadd.f32 %v2139, %v2283
    %v2285 = vpop.f32.mrf.mxu0
    %v2286 = vpop.f32.mrf.mxu0
    %v2287 = vadd.f32 %v2142, %v2286
    %v2288 = vpop.f32.mrf.mxu0
    %2289 = vmatprep.mubr.bf16.mxu0 0
    %2290 = vmatmul.mubr.bf16.gmra.mxu0 %v2227
    %v2291 = vpop.f32.mrf.mxu0
    %v2292 = vadd.f32 %v2147, %v2291
    %v2293 = vpop.f32.mrf.mxu0
    %v2294 = vpop.f32.mrf.mxu0
    %v2295 = vadd.f32 %v2150, %v2294
    %v2296 = vpop.f32.mrf.mxu0
    %2297 = vmatprep.mubr.bf16.mxu0 0
    %2298 = vmatmul.mubr.bf16.gmra.mxu0 %v2228
    %v2299 = vpop.f32.mrf.mxu0
    %v2300 = vadd.f32 %v2155, %v2299
    %v2301 = vpop.f32.mrf.mxu0
    %v2302 = vpop.f32.mrf.mxu0
    %v2303 = vadd.f32 %v2158, %v2302
    %v2304 = vpop.f32.mrf.mxu0
    %2305 = vmatprep.mubr.bf16.mxu0 0
    %2306 = vmatmul.mubr.bf16.gmra.mxu0 %v2229
    %v2307 = vpop.f32.mrf.mxu0
    %v2308 = vadd.f32 %v2163, %v2307
    %v2309 = vpop.f32.mrf.mxu0
    %v2310 = vpop.f32.mrf.mxu0
    %v2311 = vadd.f32 %v2166, %v2310
    %v2312 = vpop.f32.mrf.mxu0
    %2313 = vmatprep.mubr.bf16.mxu0 0
    %2314 = vmatmul.mubr.bf16.gmra.mxu0 %v2230
    %v2315 = vpop.f32.mrf.mxu0
    %v2316 = vadd.f32 %v2171, %v2315
    %v2317 = vpop.f32.mrf.mxu0
    %v2318 = vpop.f32.mrf.mxu0
    %v2319 = vadd.f32 %v2174, %v2318
    %v2320 = vpop.f32.mrf.mxu0
    %2321 = vmatprep.mubr.bf16.mxu0 0
    %2322 = vmatmul.mubr.bf16.gmra.mxu0 %v2231
    %v2323 = vpop.f32.mrf.mxu0
    %v2324 = vadd.f32 %v2179, %v2323
    %v2325 = vpop.f32.mrf.mxu0
    %v2326 = vpop.f32.mrf.mxu0
    %v2327 = vadd.f32 %v2182, %v2326
    %v2328 = vpop.f32.mrf.mxu0
    %2329 = vmatprep.mubr.bf16.mxu0 0
    %2330 = vmatmul.mubr.bf16.gmra.mxu0 %v2232
    %v2331 = vpop.f32.mrf.mxu0
    %v2332 = vadd.f32 %v2187, %v2331
    %v2333 = vpop.f32.mrf.mxu0
    %v2334 = vpop.f32.mrf.mxu0
    %v2335 = vadd.f32 %v2190, %v2334
    %v2336 = vpop.f32.mrf.mxu0
    %2337 = vdwg.mxu0
    %v2338 = vld [vmem:[#allocation6 + $0x1e0] sm:$0xf]
    %v2339 = vld [vmem:[#allocation6 + $0x1e4] sm:$0xf]
    %v2340 = vld [vmem:[#allocation6 + $0x1e8] sm:$0xf]
    %v2341 = vld [vmem:[#allocation6 + $0x1ec] sm:$0xf]
    %v2342 = vld [vmem:[#allocation6 + $0x1f0] sm:$0xf]
    %v2343 = vld [vmem:[#allocation6 + $0x1f4] sm:$0xf]
    %v2344 = vld [vmem:[#allocation6 + $0x1f8] sm:$0xf]
    %v2345 = vld [vmem:[#allocation6 + $0x1fc] sm:$0xf]
    %v2346 = vld [vmem:[#allocation6 + $0x200] sm:$0xf]
    %v2347 = vld [vmem:[#allocation6 + $0x204] sm:$0xf]
    %v2348 = vld [vmem:[#allocation6 + $0x208] sm:$0xf]
    %v2349 = vld [vmem:[#allocation6 + $0x20c] sm:$0xf]
    %v2362 = vunpack.c.l.b16 %v2338
    %v2363 = vunpack.c.l.b16 %v2339
    %v2364 = vunpack.c.l.b16 %v2340
    %v2365 = vunpack.c.l.b16 %v2341
    %v2366 = vunpack.c.l.b16 %v2342
    %v2367 = vunpack.c.l.b16 %v2343
    %v2368 = vunpack.c.l.b16 %v2344
    %v2369 = vunpack.c.l.b16 %v2345
    %v2370 = vunpack.c.l.b16 %v2346
    %v2371 = vunpack.c.l.b16 %v2347
    %v2372 = vunpack.c.l.b16 %v2348
    %v2373 = vunpack.c.l.b16 %v2349
    %v2374 = vpack.c.b16 %v2363, %v2362
    %v2375 = vpack.c.b16 %v2365, %v2364
    %v2376 = vpack.c.b16 %v2367, %v2366
    %v2377 = vpack.c.b16 %v2369, %v2368
    %v2378 = vpack.c.b16 %v2371, %v2370
    %v2379 = vpack.c.b16 %v2373, %v2372
    %2386 = vmatprep.subr.bf16.mxu0 0
    %2387 = vmatpush1.bf16.msra.mxu0 0
    %2388 = vmatprep.subr.bf16.mxu0 0
    %2389 = vmatpush1.bf16.msra.mxu0 0
    %2390 = vmatprep.subr.bf16.mxu0 0
    %2391 = vmatpush1.bf16.msra.mxu0 %v2379
    %2392 = vmatprep.subr.bf16.mxu0 0
    %2393 = vmatpush1.bf16.msra.mxu0 %v2378
    %2394 = vmatprep.subr.bf16.mxu0 0
    %2395 = vmatpush1.bf16.msra.mxu0 %v2377
    %2396 = vmatprep.subr.bf16.mxu0 0
    %2397 = vmatpush1.bf16.msra.mxu0 %v2376
    %2398 = vmatprep.subr.bf16.mxu0 0
    %2399 = vmatpush1.bf16.msra.mxu0 %v2375
    %2400 = vmatprep.subr.bf16.mxu0 0
    %2401 = vmatpush1.bf16.msra.mxu0 %v2374
    %2402 = vmatprep.subr.bf16.mxu0 0
    %2403 = vmatpush2.bf16.msra.mxu0 0
    %2404 = vmatprep.subr.bf16.mxu0 0
    %2405 = vmatpush2.bf16.msra.mxu0 0
    %2406 = vmatprep.subr.bf16.mxu0 0
    %2407 = vmatpush2.bf16.msra.mxu0 0
    %2408 = vmatprep.subr.bf16.mxu0 0
    %2409 = vmatpush2.bf16.msra.mxu0 0
    %2410 = vmatprep.subr.bf16.mxu0 0
    %2411 = vmatpush2.bf16.msra.mxu0 0
    %2412 = vmatprep.subr.bf16.mxu0 0
    %2413 = vmatpush2.bf16.msra.mxu0 0
    %2414 = vmatprep.subr.bf16.mxu0 0
    %2415 = vmatpush2.bf16.msra.mxu0 0
    %2416 = vmatprep.subr.bf16.mxu0 0
    %2417 = vmatpush2.bf16.msra.mxu0 0
    %2418 = vmatprep.mubr.bf16.mxu0 0
    %2419 = vmatmul.mubr.bf16.gmra.mxu0 %v1735
    %v2420 = vpop.f32.mrf.mxu0
    %v2421 = vadd.f32 0.0, %v2420
    %v2422 = vpop.f32.mrf.mxu0
    %v2423 = vpop.f32.mrf.mxu0
    %v2424 = vadd.f32 0.0, %v2423
    %v2425 = vpop.f32.mrf.mxu0
    %2426 = vmatprep.mubr.bf16.mxu0 0
    %2427 = vmatmul.mubr.bf16.gmra.mxu0 %v1738
    %v2428 = vpop.f32.mrf.mxu0
    %v2429 = vadd.f32 0.0, %v2428
    %v2430 = vpop.f32.mrf.mxu0
    %v2431 = vpop.f32.mrf.mxu0
    %v2432 = vadd.f32 0.0, %v2431
    %v2433 = vpop.f32.mrf.mxu0
    %2434 = vmatprep.mubr.bf16.mxu0 0
    %2435 = vmatmul.mubr.bf16.gmra.mxu0 %v1741
    %v2436 = vpop.f32.mrf.mxu0
    %v2437 = vadd.f32 0.0, %v2436
    %v2438 = vpop.f32.mrf.mxu0
    %v2439 = vpop.f32.mrf.mxu0
    %v2440 = vadd.f32 0.0, %v2439
    %v2441 = vpop.f32.mrf.mxu0
    %2442 = vmatprep.mubr.bf16.mxu0 0
    %2443 = vmatmul.mubr.bf16.gmra.mxu0 %v1744
    %v2444 = vpop.f32.mrf.mxu0
    %v2445 = vadd.f32 0.0, %v2444
    %v2446 = vpop.f32.mrf.mxu0
    %v2447 = vpop.f32.mrf.mxu0
    %v2448 = vadd.f32 0.0, %v2447
    %v2449 = vpop.f32.mrf.mxu0
    %2450 = vmatprep.mubr.bf16.mxu0 0
    %2451 = vmatmul.mubr.bf16.gmra.mxu0 %v1747
    %v2452 = vpop.f32.mrf.mxu0
    %v2453 = vadd.f32 0.0, %v2452
    %v2454 = vpop.f32.mrf.mxu0
    %v2455 = vpop.f32.mrf.mxu0
    %v2456 = vadd.f32 0.0, %v2455
    %v2457 = vpop.f32.mrf.mxu0
    %2458 = vmatprep.mubr.bf16.mxu0 0
    %2459 = vmatmul.mubr.bf16.gmra.mxu0 %v1750
    %v2460 = vpop.f32.mrf.mxu0
    %v2461 = vadd.f32 0.0, %v2460
    %v2462 = vpop.f32.mrf.mxu0
    %v2463 = vpop.f32.mrf.mxu0
    %v2464 = vadd.f32 0.0, %v2463
    %v2465 = vpop.f32.mrf.mxu0
    %2466 = vmatprep.mubr.bf16.mxu0 0
    %2467 = vmatmul.mubr.bf16.gmra.mxu0 %v1753
    %v2468 = vpop.f32.mrf.mxu0
    %v2469 = vadd.f32 0.0, %v2468
    %v2470 = vpop.f32.mrf.mxu0
    %v2471 = vpop.f32.mrf.mxu0
    %v2472 = vadd.f32 0.0, %v2471
    %v2473 = vpop.f32.mrf.mxu0
    %2474 = vmatprep.mubr.bf16.mxu0 0
    %2475 = vmatmul.mubr.bf16.gmra.mxu0 %v1756
    %v2476 = vpop.f32.mrf.mxu0
    %v2477 = vadd.f32 0.0, %v2476
    %v2478 = vpop.f32.mrf.mxu0
    %v2479 = vpop.f32.mrf.mxu0
    %v2480 = vadd.f32 0.0, %v2479
    %v2481 = vpop.f32.mrf.mxu0
    %2482 = vdwg.mxu0
    %v2483 = vpack.c.bf16 %v2424, %v2421
    %v2484 = vpack.c.bf16 %v2432, %v2429
    %v2485 = vpack.c.bf16 %v2440, %v2437
    %v2486 = vpack.c.bf16 %v2448, %v2445
    %v2487 = vpack.c.bf16 %v2456, %v2453
    %v2488 = vpack.c.bf16 %v2464, %v2461
    %v2489 = vpack.c.bf16 %v2472, %v2469
    %v2490 = vpack.c.bf16 %v2480, %v2477
    %v2491 = vld [vmem:[#allocation4 + $0x108] sm:$0xf]
    %v2492 = vld [vmem:[#allocation4 + $0x118] sm:$0xf]
    %v2493 = vld [vmem:[#allocation4 + $0x128] sm:$0xf]
    %v2494 = vld [vmem:[#allocation4 + $0x138] sm:$0xf]
    %v2495 = vld [vmem:[#allocation4 + $0x148] sm:$0xf]
    %v2496 = vld [vmem:[#allocation4 + $0x158] sm:$0xf]
    %v2497 = vld [vmem:[#allocation4 + $0x168] sm:$0xf]
    %v2498 = vld [vmem:[#allocation4 + $0x178] sm:$0xf]
    %v2499 = vld [vmem:[#allocation4 + $0x188] sm:$0xf]
    %v2500 = vld [vmem:[#allocation4 + $0x198] sm:$0xf]
    %v2501 = vld [vmem:[#allocation4 + $0x1a8] sm:$0xf]
    %v2502 = vld [vmem:[#allocation4 + $0x1b8] sm:$0xf]
    %v2503 = vld [vmem:[#allocation4 + $0x1c8] sm:$0xf]
    %v2504 = vld [vmem:[#allocation4 + $0x1d8] sm:$0xf]
    %v2505 = vld [vmem:[#allocation4 + $0x1e8] sm:$0xf]
    %v2506 = vld [vmem:[#allocation4 + $0x1f8] sm:$0xf]
    %v2523 = vunpack.c.l.b16 %v2491
    %v2524 = vunpack.c.l.b16 %v2492
    %v2525 = vunpack.c.l.b16 %v2493
    %v2526 = vunpack.c.l.b16 %v2494
    %v2527 = vunpack.c.l.b16 %v2495
    %v2528 = vunpack.c.l.b16 %v2496
    %v2529 = vunpack.c.l.b16 %v2497
    %v2530 = vunpack.c.l.b16 %v2498
    %v2531 = vunpack.c.l.b16 %v2499
    %v2532 = vunpack.c.l.b16 %v2500
    %v2533 = vunpack.c.l.b16 %v2501
    %v2534 = vunpack.c.l.b16 %v2502
    %v2535 = vunpack.c.l.b16 %v2503
    %v2536 = vunpack.c.l.b16 %v2504
    %v2537 = vunpack.c.l.b16 %v2505
    %v2538 = vunpack.c.l.b16 %v2506
    %v2539 = vpack.c.b16 %v2524, %v2523
    %v2540 = vpack.c.b16 %v2526, %v2525
    %v2541 = vpack.c.b16 %v2528, %v2527
    %v2542 = vpack.c.b16 %v2530, %v2529
    %v2543 = vpack.c.b16 %v2532, %v2531
    %v2544 = vpack.c.b16 %v2534, %v2533
    %v2545 = vpack.c.b16 %v2536, %v2535
    %v2546 = vpack.c.b16 %v2538, %v2537
    %2555 = vmatprep.subr.bf16.mxu0 0
    %2556 = vmatpush1.bf16.msra.mxu0 %v2490
    %2557 = vmatprep.subr.bf16.mxu0 0
    %2558 = vmatpush1.bf16.msra.mxu0 %v2489
    %2559 = vmatprep.subr.bf16.mxu0 0
    %2560 = vmatpush1.bf16.msra.mxu0 %v2488
    %2561 = vmatprep.subr.bf16.mxu0 0
    %2562 = vmatpush1.bf16.msra.mxu0 %v2487
    %2563 = vmatprep.subr.bf16.mxu0 0
    %2564 = vmatpush1.bf16.msra.mxu0 %v2486
    %2565 = vmatprep.subr.bf16.mxu0 0
    %2566 = vmatpush1.bf16.msra.mxu0 %v2485
    %2567 = vmatprep.subr.bf16.mxu0 0
    %2568 = vmatpush1.bf16.msra.mxu0 %v2484
    %2569 = vmatprep.subr.bf16.mxu0 0
    %2570 = vmatpush1.bf16.msra.mxu0 %v2483
    %2571 = vmatprep.subr.bf16.mxu0 0
    %2572 = vmatpush2.bf16.msra.mxu0 0
    %2573 = vmatprep.subr.bf16.mxu0 0
    %2574 = vmatpush2.bf16.msra.mxu0 0
    %2575 = vmatprep.subr.bf16.mxu0 0
    %2576 = vmatpush2.bf16.msra.mxu0 0
    %2577 = vmatprep.subr.bf16.mxu0 0
    %2578 = vmatpush2.bf16.msra.mxu0 0
    %2579 = vmatprep.subr.bf16.mxu0 0
    %2580 = vmatpush2.bf16.msra.mxu0 0
    %2581 = vmatprep.subr.bf16.mxu0 0
    %2582 = vmatpush2.bf16.msra.mxu0 0
    %2583 = vmatprep.subr.bf16.mxu0 0
    %2584 = vmatpush2.bf16.msra.mxu0 0
    %2585 = vmatprep.subr.bf16.mxu0 0
    %2586 = vmatpush2.bf16.msra.mxu0 0
    %2587 = vmatprep.mubr.bf16.mxu0 0
    %2588 = vmatmul.mubr.bf16.gmra.mxu0 %v2539
    %v2589 = vpop.f32.mrf.mxu0
    %v2590 = vadd.f32 0.0, %v2589
    %v2591 = vpop.f32.mrf.mxu0
    %v2592 = vpop.f32.mrf.mxu0
    %v2593 = vadd.f32 0.0, %v2592
    %v2594 = vpop.f32.mrf.mxu0
    %2595 = vmatprep.mubr.bf16.mxu0 0
    %2596 = vmatmul.mubr.bf16.gmra.mxu0 %v2540
    %v2597 = vpop.f32.mrf.mxu0
    %v2598 = vadd.f32 0.0, %v2597
    %v2599 = vpop.f32.mrf.mxu0
    %v2600 = vpop.f32.mrf.mxu0
    %v2601 = vadd.f32 0.0, %v2600
    %v2602 = vpop.f32.mrf.mxu0
    %2603 = vmatprep.mubr.bf16.mxu0 0
    %2604 = vmatmul.mubr.bf16.gmra.mxu0 %v2541
    %v2605 = vpop.f32.mrf.mxu0
    %v2606 = vadd.f32 0.0, %v2605
    %v2607 = vpop.f32.mrf.mxu0
    %v2608 = vpop.f32.mrf.mxu0
    %v2609 = vadd.f32 0.0, %v2608
    %v2610 = vpop.f32.mrf.mxu0
    %2611 = vmatprep.mubr.bf16.mxu0 0
    %2612 = vmatmul.mubr.bf16.gmra.mxu0 %v2542
    %v2613 = vpop.f32.mrf.mxu0
    %v2614 = vadd.f32 0.0, %v2613
    %v2615 = vpop.f32.mrf.mxu0
    %v2616 = vpop.f32.mrf.mxu0
    %v2617 = vadd.f32 0.0, %v2616
    %v2618 = vpop.f32.mrf.mxu0
    %2619 = vmatprep.mubr.bf16.mxu0 0
    %2620 = vmatmul.mubr.bf16.gmra.mxu0 %v2543
    %v2621 = vpop.f32.mrf.mxu0
    %v2622 = vadd.f32 0.0, %v2621
    %v2623 = vpop.f32.mrf.mxu0
    %v2624 = vpop.f32.mrf.mxu0
    %v2625 = vadd.f32 0.0, %v2624
    %v2626 = vpop.f32.mrf.mxu0
    %2627 = vmatprep.mubr.bf16.mxu0 0
    %2628 = vmatmul.mubr.bf16.gmra.mxu0 %v2544
    %v2629 = vpop.f32.mrf.mxu0
    %v2630 = vadd.f32 0.0, %v2629
    %v2631 = vpop.f32.mrf.mxu0
    %v2632 = vpop.f32.mrf.mxu0
    %v2633 = vadd.f32 0.0, %v2632
    %v2634 = vpop.f32.mrf.mxu0
    %2635 = vmatprep.mubr.bf16.mxu0 0
    %2636 = vmatmul.mubr.bf16.gmra.mxu0 %v2545
    %v2637 = vpop.f32.mrf.mxu0
    %v2638 = vadd.f32 0.0, %v2637
    %v2639 = vpop.f32.mrf.mxu0
    %v2640 = vpop.f32.mrf.mxu0
    %v2641 = vadd.f32 0.0, %v2640
    %v2642 = vpop.f32.mrf.mxu0
    %2643 = vmatprep.mubr.bf16.mxu0 0
    %2644 = vmatmul.mubr.bf16.gmra.mxu0 %v2546
    %v2645 = vpop.f32.mrf.mxu0
    %v2646 = vadd.f32 0.0, %v2645
    %v2647 = vpop.f32.mrf.mxu0
    %v2648 = vpop.f32.mrf.mxu0
    %v2649 = vadd.f32 0.0, %v2648
    %v2650 = vpop.f32.mrf.mxu0
    %2651 = vdwg.mxu0
    %v2652 = vadd.f32 %v2276, %v2590
    %v2653 = vadd.f32 %v2279, %v2593
    %v2654 = vadd.f32 %v2284, %v2598
    %v2655 = vadd.f32 %v2287, %v2601
    %v2656 = vadd.f32 %v2292, %v2606
    %v2657 = vadd.f32 %v2295, %v2609
    %v2658 = vadd.f32 %v2300, %v2614
    %v2659 = vadd.f32 %v2303, %v2617
    %v2660 = vadd.f32 %v2308, %v2622
    %v2661 = vadd.f32 %v2311, %v2625
    %v2662 = vadd.f32 %v2316, %v2630
    %v2663 = vadd.f32 %v2319, %v2633
    %v2664 = vadd.f32 %v2324, %v2638
    %v2665 = vadd.f32 %v2327, %v2641
    %v2666 = vadd.f32 %v2332, %v2646
    %v2667 = vadd.f32 %v2335, %v2649
    %v2668 = vld [vmem:[#allocation6 + $0x210] sm:$0xf]
    %v2669 = vld [vmem:[#allocation6 + $0x214] sm:$0xf]
    %v2670 = vld [vmem:[#allocation6 + $0x218] sm:$0xf]
    %v2671 = vld [vmem:[#allocation6 + $0x21c] sm:$0xf]
    %v2672 = vld [vmem:[#allocation6 + $0x220] sm:$0xf]
    %v2673 = vld [vmem:[#allocation6 + $0x224] sm:$0xf]
    %v2674 = vld [vmem:[#allocation6 + $0x228] sm:$0xf]
    %v2675 = vld [vmem:[#allocation6 + $0x22c] sm:$0xf]
    %v2676 = vld [vmem:[#allocation6 + $0x230] sm:$0xf]
    %v2677 = vld [vmem:[#allocation6 + $0x234] sm:$0xf]
    %v2678 = vld [vmem:[#allocation6 + $0x238] sm:$0xf]
    %v2679 = vld [vmem:[#allocation6 + $0x23c] sm:$0xf]
    %v2692 = vunpack.c.l.b16 %v2668
    %v2693 = vunpack.c.l.b16 %v2669
    %v2694 = vunpack.c.l.b16 %v2670
    %v2695 = vunpack.c.l.b16 %v2671
    %v2696 = vunpack.c.l.b16 %v2672
    %v2697 = vunpack.c.l.b16 %v2673
    %v2698 = vunpack.c.l.b16 %v2674
    %v2699 = vunpack.c.l.b16 %v2675
    %v2700 = vunpack.c.l.b16 %v2676
    %v2701 = vunpack.c.l.b16 %v2677
    %v2702 = vunpack.c.l.b16 %v2678
    %v2703 = vunpack.c.l.b16 %v2679
    %v2704 = vpack.c.b16 %v2693, %v2692
    %v2705 = vpack.c.b16 %v2695, %v2694
    %v2706 = vpack.c.b16 %v2697, %v2696
    %v2707 = vpack.c.b16 %v2699, %v2698
    %v2708 = vpack.c.b16 %v2701, %v2700
    %v2709 = vpack.c.b16 %v2703, %v2702
    %2716 = vmatprep.subr.bf16.mxu0 0
    %2717 = vmatpush1.bf16.msra.mxu0 0
    %2718 = vmatprep.subr.bf16.mxu0 0
    %2719 = vmatpush1.bf16.msra.mxu0 0
    %2720 = vmatprep.subr.bf16.mxu0 0
    %2721 = vmatpush1.bf16.msra.mxu0 %v2709
    %2722 = vmatprep.subr.bf16.mxu0 0
    %2723 = vmatpush1.bf16.msra.mxu0 %v2708
    %2724 = vmatprep.subr.bf16.mxu0 0
    %2725 = vmatpush1.bf16.msra.mxu0 %v2707
    %2726 = vmatprep.subr.bf16.mxu0 0
    %2727 = vmatpush1.bf16.msra.mxu0 %v2706
    %2728 = vmatprep.subr.bf16.mxu0 0
    %2729 = vmatpush1.bf16.msra.mxu0 %v2705
    %2730 = vmatprep.subr.bf16.mxu0 0
    %2731 = vmatpush1.bf16.msra.mxu0 %v2704
    %2732 = vmatprep.subr.bf16.mxu0 0
    %2733 = vmatpush2.bf16.msra.mxu0 0
    %2734 = vmatprep.subr.bf16.mxu0 0
    %2735 = vmatpush2.bf16.msra.mxu0 0
    %2736 = vmatprep.subr.bf16.mxu0 0
    %2737 = vmatpush2.bf16.msra.mxu0 0
    %2738 = vmatprep.subr.bf16.mxu0 0
    %2739 = vmatpush2.bf16.msra.mxu0 0
    %2740 = vmatprep.subr.bf16.mxu0 0
    %2741 = vmatpush2.bf16.msra.mxu0 0
    %2742 = vmatprep.subr.bf16.mxu0 0
    %2743 = vmatpush2.bf16.msra.mxu0 0
    %2744 = vmatprep.subr.bf16.mxu0 0
    %2745 = vmatpush2.bf16.msra.mxu0 0
    %2746 = vmatprep.subr.bf16.mxu0 0
    %2747 = vmatpush2.bf16.msra.mxu0 0
    %2748 = vmatprep.mubr.bf16.mxu0 0
    %2749 = vmatmul.mubr.bf16.gmra.mxu0 %v1735
    %v2750 = vpop.f32.mrf.mxu0
    %v2751 = vadd.f32 0.0, %v2750
    %v2752 = vpop.f32.mrf.mxu0
    %v2753 = vpop.f32.mrf.mxu0
    %v2754 = vadd.f32 0.0, %v2753
    %v2755 = vpop.f32.mrf.mxu0
    %2756 = vmatprep.mubr.bf16.mxu0 0
    %2757 = vmatmul.mubr.bf16.gmra.mxu0 %v1738
    %v2758 = vpop.f32.mrf.mxu0
    %v2759 = vadd.f32 0.0, %v2758
    %v2760 = vpop.f32.mrf.mxu0
    %v2761 = vpop.f32.mrf.mxu0
    %v2762 = vadd.f32 0.0, %v2761
    %v2763 = vpop.f32.mrf.mxu0
    %2764 = vmatprep.mubr.bf16.mxu0 0
    %2765 = vmatmul.mubr.bf16.gmra.mxu0 %v1741
    %v2766 = vpop.f32.mrf.mxu0
    %v2767 = vadd.f32 0.0, %v2766
    %v2768 = vpop.f32.mrf.mxu0
    %v2769 = vpop.f32.mrf.mxu0
    %v2770 = vadd.f32 0.0, %v2769
    %v2771 = vpop.f32.mrf.mxu0
    %2772 = vmatprep.mubr.bf16.mxu0 0
    %2773 = vmatmul.mubr.bf16.gmra.mxu0 %v1744
    %v2774 = vpop.f32.mrf.mxu0
    %v2775 = vadd.f32 0.0, %v2774
    %v2776 = vpop.f32.mrf.mxu0
    %v2777 = vpop.f32.mrf.mxu0
    %v2778 = vadd.f32 0.0, %v2777
    %v2779 = vpop.f32.mrf.mxu0
    %2780 = vmatprep.mubr.bf16.mxu0 0
    %2781 = vmatmul.mubr.bf16.gmra.mxu0 %v1747
    %v2782 = vpop.f32.mrf.mxu0
    %v2783 = vadd.f32 0.0, %v2782
    %v2784 = vpop.f32.mrf.mxu0
    %v2785 = vpop.f32.mrf.mxu0
    %v2786 = vadd.f32 0.0, %v2785
    %v2787 = vpop.f32.mrf.mxu0
    %2788 = vmatprep.mubr.bf16.mxu0 0
    %2789 = vmatmul.mubr.bf16.gmra.mxu0 %v1750
    %v2790 = vpop.f32.mrf.mxu0
    %v2791 = vadd.f32 0.0, %v2790
    %v2792 = vpop.f32.mrf.mxu0
    %v2793 = vpop.f32.mrf.mxu0
    %v2794 = vadd.f32 0.0, %v2793
    %v2795 = vpop.f32.mrf.mxu0
    %2796 = vmatprep.mubr.bf16.mxu0 0
    %2797 = vmatmul.mubr.bf16.gmra.mxu0 %v1753
    %v2798 = vpop.f32.mrf.mxu0
    %v2799 = vadd.f32 0.0, %v2798
    %v2800 = vpop.f32.mrf.mxu0
    %v2801 = vpop.f32.mrf.mxu0
    %v2802 = vadd.f32 0.0, %v2801
    %v2803 = vpop.f32.mrf.mxu0
    %2804 = vmatprep.mubr.bf16.mxu0 0
    %2805 = vmatmul.mubr.bf16.gmra.mxu0 %v1756
    %v2806 = vpop.f32.mrf.mxu0
    %v2807 = vadd.f32 0.0, %v2806
    %v2808 = vpop.f32.mrf.mxu0
    %v2809 = vpop.f32.mrf.mxu0
    %v2810 = vadd.f32 0.0, %v2809
    %v2811 = vpop.f32.mrf.mxu0
    %2812 = vdwg.mxu0
    %v2813 = vpack.c.bf16 %v2754, %v2751
    %v2814 = vpack.c.bf16 %v2762, %v2759
    %v2815 = vpack.c.bf16 %v2770, %v2767
    %v2816 = vpack.c.bf16 %v2778, %v2775
    %v2817 = vpack.c.bf16 %v2786, %v2783
    %v2818 = vpack.c.bf16 %v2794, %v2791
    %v2819 = vpack.c.bf16 %v2802, %v2799
    %v2820 = vpack.c.bf16 %v2810, %v2807
    %v2821 = vld [vmem:[#allocation4 + $0x10c] sm:$0xf]
    %v2822 = vld [vmem:[#allocation4 + $0x11c] sm:$0xf]
    %v2823 = vld [vmem:[#allocation4 + $0x12c] sm:$0xf]
    %v2824 = vld [vmem:[#allocation4 + $0x13c] sm:$0xf]
    %v2825 = vld [vmem:[#allocation4 + $0x14c] sm:$0xf]
    %v2826 = vld [vmem:[#allocation4 + $0x15c] sm:$0xf]
    %v2827 = vld [vmem:[#allocation4 + $0x16c] sm:$0xf]
    %v2828 = vld [vmem:[#allocation4 + $0x17c] sm:$0xf]
    %v2829 = vld [vmem:[#allocation4 + $0x18c] sm:$0xf]
    %v2830 = vld [vmem:[#allocation4 + $0x19c] sm:$0xf]
    %v2831 = vld [vmem:[#allocation4 + $0x1ac] sm:$0xf]
    %v2832 = vld [vmem:[#allocation4 + $0x1bc] sm:$0xf]
    %v2833 = vld [vmem:[#allocation4 + $0x1cc] sm:$0xf]
    %v2834 = vld [vmem:[#allocation4 + $0x1dc] sm:$0xf]
    %v2835 = vld [vmem:[#allocation4 + $0x1ec] sm:$0xf]
    %v2836 = vld [vmem:[#allocation4 + $0x1fc] sm:$0xf]
    %v2853 = vunpack.c.l.b16 %v2821
    %v2854 = vunpack.c.l.b16 %v2822
    %v2855 = vunpack.c.l.b16 %v2823
    %v2856 = vunpack.c.l.b16 %v2824
    %v2857 = vunpack.c.l.b16 %v2825
    %v2858 = vunpack.c.l.b16 %v2826
    %v2859 = vunpack.c.l.b16 %v2827
    %v2860 = vunpack.c.l.b16 %v2828
    %v2861 = vunpack.c.l.b16 %v2829
    %v2862 = vunpack.c.l.b16 %v2830
    %v2863 = vunpack.c.l.b16 %v2831
    %v2864 = vunpack.c.l.b16 %v2832
    %v2865 = vunpack.c.l.b16 %v2833
    %v2866 = vunpack.c.l.b16 %v2834
    %v2867 = vunpack.c.l.b16 %v2835
    %v2868 = vunpack.c.l.b16 %v2836
    %v2869 = vpack.c.b16 %v2854, %v2853
    %v2870 = vpack.c.b16 %v2856, %v2855
    %v2871 = vpack.c.b16 %v2858, %v2857
    %v2872 = vpack.c.b16 %v2860, %v2859
    %v2873 = vpack.c.b16 %v2862, %v2861
    %v2874 = vpack.c.b16 %v2864, %v2863
    %v2875 = vpack.c.b16 %v2866, %v2865
    %v2876 = vpack.c.b16 %v2868, %v2867
    %2885 = vmatprep.subr.bf16.mxu0 0
    %2886 = vmatpush1.bf16.msra.mxu0 %v2820
    %2887 = vmatprep.subr.bf16.mxu0 0
    %2888 = vmatpush1.bf16.msra.mxu0 %v2819
    %2889 = vmatprep.subr.bf16.mxu0 0
    %2890 = vmatpush1.bf16.msra.mxu0 %v2818
    %2891 = vmatprep.subr.bf16.mxu0 0
    %2892 = vmatpush1.bf16.msra.mxu0 %v2817
    %2893 = vmatprep.subr.bf16.mxu0 0
    %2894 = vmatpush1.bf16.msra.mxu0 %v2816
    %2895 = vmatprep.subr.bf16.mxu0 0
    %2896 = vmatpush1.bf16.msra.mxu0 %v2815
    %2897 = vmatprep.subr.bf16.mxu0 0
    %2898 = vmatpush1.bf16.msra.mxu0 %v2814
    %2899 = vmatprep.subr.bf16.mxu0 0
    %2900 = vmatpush1.bf16.msra.mxu0 %v2813
    %2901 = vmatprep.subr.bf16.mxu0 0
    %2902 = vmatpush2.bf16.msra.mxu0 0
    %2903 = vmatprep.subr.bf16.mxu0 0
    %2904 = vmatpush2.bf16.msra.mxu0 0
    %2905 = vmatprep.subr.bf16.mxu0 0
    %2906 = vmatpush2.bf16.msra.mxu0 0
    %2907 = vmatprep.subr.bf16.mxu0 0
    %2908 = vmatpush2.bf16.msra.mxu0 0
    %2909 = vmatprep.subr.bf16.mxu0 0
    %2910 = vmatpush2.bf16.msra.mxu0 0
    %2911 = vmatprep.subr.bf16.mxu0 0
    %2912 = vmatpush2.bf16.msra.mxu0 0
    %2913 = vmatprep.subr.bf16.mxu0 0
    %2914 = vmatpush2.bf16.msra.mxu0 0
    %2915 = vmatprep.subr.bf16.mxu0 0
    %2916 = vmatpush2.bf16.msra.mxu0 0
    %2917 = vmatprep.mubr.bf16.mxu0 0
    %2918 = vmatmul.mubr.bf16.gmra.mxu0 %v2869
    %v2919 = vpop.f32.mrf.mxu0
    %v2920 = vadd.f32 0.0, %v2919
    %v2921 = vpop.f32.mrf.mxu0
    %v2922 = vpop.f32.mrf.mxu0
    %v2923 = vadd.f32 0.0, %v2922
    %v2924 = vpop.f32.mrf.mxu0
    %2925 = vmatprep.mubr.bf16.mxu0 0
    %2926 = vmatmul.mubr.bf16.gmra.mxu0 %v2870
    %v2927 = vpop.f32.mrf.mxu0
    %v2928 = vadd.f32 0.0, %v2927
    %v2929 = vpop.f32.mrf.mxu0
    %v2930 = vpop.f32.mrf.mxu0
    %v2931 = vadd.f32 0.0, %v2930
    %v2932 = vpop.f32.mrf.mxu0
    %2933 = vmatprep.mubr.bf16.mxu0 0
    %2934 = vmatmul.mubr.bf16.gmra.mxu0 %v2871
    %v2935 = vpop.f32.mrf.mxu0
    %v2936 = vadd.f32 0.0, %v2935
    %v2937 = vpop.f32.mrf.mxu0
    %v2938 = vpop.f32.mrf.mxu0
    %v2939 = vadd.f32 0.0, %v2938
    %v2940 = vpop.f32.mrf.mxu0
    %2941 = vmatprep.mubr.bf16.mxu0 0
    %2942 = vmatmul.mubr.bf16.gmra.mxu0 %v2872
    %v2943 = vpop.f32.mrf.mxu0
    %v2944 = vadd.f32 0.0, %v2943
    %v2945 = vpop.f32.mrf.mxu0
    %v2946 = vpop.f32.mrf.mxu0
    %v2947 = vadd.f32 0.0, %v2946
    %v2948 = vpop.f32.mrf.mxu0
    %2949 = vmatprep.mubr.bf16.mxu0 0
    %2950 = vmatmul.mubr.bf16.gmra.mxu0 %v2873
    %v2951 = vpop.f32.mrf.mxu0
    %v2952 = vadd.f32 0.0, %v2951
    %v2953 = vpop.f32.mrf.mxu0
    %v2954 = vpop.f32.mrf.mxu0
    %v2955 = vadd.f32 0.0, %v2954
    %v2956 = vpop.f32.mrf.mxu0
    %2957 = vmatprep.mubr.bf16.mxu0 0
    %2958 = vmatmul.mubr.bf16.gmra.mxu0 %v2874
    %v2959 = vpop.f32.mrf.mxu0
    %v2960 = vadd.f32 0.0, %v2959
    %v2961 = vpop.f32.mrf.mxu0
    %v2962 = vpop.f32.mrf.mxu0
    %v2963 = vadd.f32 0.0, %v2962
    %v2964 = vpop.f32.mrf.mxu0
    %2965 = vmatprep.mubr.bf16.mxu0 0
    %2966 = vmatmul.mubr.bf16.gmra.mxu0 %v2875
    %v2967 = vpop.f32.mrf.mxu0
    %v2968 = vadd.f32 0.0, %v2967
    %v2969 = vpop.f32.mrf.mxu0
    %v2970 = vpop.f32.mrf.mxu0
    %v2971 = vadd.f32 0.0, %v2970
    %v2972 = vpop.f32.mrf.mxu0
    %2973 = vmatprep.mubr.bf16.mxu0 0
    %2974 = vmatmul.mubr.bf16.gmra.mxu0 %v2876
    %v2975 = vpop.f32.mrf.mxu0
    %v2976 = vadd.f32 0.0, %v2975
    %v2977 = vpop.f32.mrf.mxu0
    %v2978 = vpop.f32.mrf.mxu0
    %v2979 = vadd.f32 0.0, %v2978
    %v2980 = vpop.f32.mrf.mxu0
    %2981 = vdwg.mxu0
    %v2982 = vadd.f32 %v2652, %v2920
    %v2983 = vadd.f32 %v2653, %v2923
    %v2984 = vadd.f32 %v2654, %v2928
    %v2985 = vadd.f32 %v2655, %v2931
    %v2986 = vadd.f32 %v2656, %v2936
    %v2987 = vadd.f32 %v2657, %v2939
    %v2988 = vadd.f32 %v2658, %v2944
    %v2989 = vadd.f32 %v2659, %v2947
    %v2990 = vadd.f32 %v2660, %v2952
    %v2991 = vadd.f32 %v2661, %v2955
    %v2992 = vadd.f32 %v2662, %v2960
    %v2993 = vadd.f32 %v2663, %v2963
    %v2994 = vadd.f32 %v2664, %v2968
    %v2995 = vadd.f32 %v2665, %v2971
    %v2996 = vadd.f32 %v2666, %v2976
    %v2997 = vadd.f32 %v2667, %v2979
    %2998 = vset.pattern.permute.xlu0 9
    %2999 = vperm.xlu0 %2998, %v1549
    %v3000 = vpop.permute.xlu0 %2999
    %3002 = vset.pattern.permute.xlu0 9
    %3003 = vperm.xlu0 %3002, %v1550
    %v3004 = vpop.permute.xlu0 %3003
    %3006 = vset.pattern.permute.xlu0 9
    %3007 = vperm.xlu0 %3006, %v1551
    %v3008 = vpop.permute.xlu0 %3007
    %3010 = vset.pattern.permute.xlu0 9
    %3011 = vperm.xlu0 %3010, %v1552
    %v3012 = vpop.permute.xlu0 %3011
    %3014 = vset.pattern.permute.xlu0 9
    %3015 = vperm.xlu0 %3014, %v1553
    %v3016 = vpop.permute.xlu0 %3015
    %3018 = vset.pattern.permute.xlu0 9
    %3019 = vperm.xlu0 %3018, %v1554
    %v3020 = vpop.permute.xlu0 %3019
    %3022 = vset.pattern.permute.xlu0 9
    %3023 = vperm.xlu0 %3022, %v1555
    %v3024 = vpop.permute.xlu0 %3023
    %3026 = vset.pattern.permute.xlu0 9
    %3027 = vperm.xlu0 %3026, %v1556
    %v3028 = vpop.permute.xlu0 %3027
    %3030 = vset.pattern.permute.xlu0 9
    %3031 = vperm.xlu0 %3030, %v1557
    %v3032 = vpop.permute.xlu0 %3031
    %3034 = vset.pattern.permute.xlu0 9
    %3035 = vperm.xlu0 %3034, %v1558
    %v3036 = vpop.permute.xlu0 %3035
    %3038 = vset.pattern.permute.xlu0 9
    %3039 = vperm.xlu0 %3038, %v1559
    %v3040 = vpop.permute.xlu0 %3039
    %3042 = vset.pattern.permute.xlu0 9
    %3043 = vperm.xlu0 %3042, %v1560
    %v3044 = vpop.permute.xlu0 %3043
    %3046 = vset.pattern.permute.xlu0 9
    %3047 = vperm.xlu0 %3046, %v1561
    %v3048 = vpop.permute.xlu0 %3047
    %3050 = vset.pattern.permute.xlu0 9
    %3051 = vperm.xlu0 %3050, %v1562
    %v3052 = vpop.permute.xlu0 %3051
    %3054 = vset.pattern.permute.xlu0 9
    %3055 = vperm.xlu0 %3054, %v1563
    %v3056 = vpop.permute.xlu0 %3055
    %3058 = vset.pattern.permute.xlu0 9
    %3059 = vperm.xlu0 %3058, %v1564
    %v3060 = vpop.permute.xlu0 %3059
    %v3062 = vadd.f32 %v2982, %v3000
    %v3063 = vadd.f32 %v2983, %v3004
    %v3064 = vadd.f32 %v2984, %v3008
    %v3065 = vadd.f32 %v2985, %v3012
    %v3066 = vadd.f32 %v2986, %v3016
    %v3067 = vadd.f32 %v2987, %v3020
    %v3068 = vadd.f32 %v2988, %v3024
    %v3069 = vadd.f32 %v2989, %v3028
    %v3070 = vadd.f32 %v2990, %v3032
    %v3071 = vadd.f32 %v2991, %v3036
    %v3072 = vadd.f32 %v2992, %v3040
    %v3073 = vadd.f32 %v2993, %v3044
    %v3074 = vadd.f32 %v2994, %v3048
    %v3075 = vadd.f32 %v2995, %v3052
    %v3076 = vadd.f32 %v2996, %v3056
    %v3077 = vadd.f32 %v2997, %v3060
    %v3078 = vmax.f32 %v3062, 0.0
    %v3079 = vmax.f32 %v3063, 0.0
    %v3080 = vmax.f32 %v3064, 0.0
    %v3081 = vmax.f32 %v3065, 0.0
    %v3082 = vmax.f32 %v3066, 0.0
    %v3083 = vmax.f32 %v3067, 0.0
    %v3084 = vmax.f32 %v3068, 0.0
    %v3085 = vmax.f32 %v3069, 0.0
    %v3086 = vmax.f32 %v3070, 0.0
    %v3087 = vmax.f32 %v3071, 0.0
    %v3088 = vmax.f32 %v3072, 0.0
    %v3089 = vmax.f32 %v3073, 0.0
    %v3090 = vmax.f32 %v3074, 0.0
    %v3091 = vmax.f32 %v3075, 0.0
    %v3092 = vmax.f32 %v3076, 0.0
    %v3093 = vmax.f32 %v3077, 0.0
    %v3094 = vpack.c.bf16 %v3079, %v3078
    %v3095 = vpack.c.bf16 %v3081, %v3080
    %v3096 = vpack.c.bf16 %v3083, %v3082
    %v3097 = vpack.c.bf16 %v3085, %v3084
    %v3098 = vpack.c.bf16 %v3087, %v3086
    %v3099 = vpack.c.bf16 %v3089, %v3088
    %v3100 = vpack.c.bf16 %v3091, %v3090
    %v3101 = vpack.c.bf16 %v3093, %v3092
    %v3102 = vld [vmem:[#allocation6 + $0x240] sm:$0xf]
    %v3103 = vld [vmem:[#allocation6 + $0x244] sm:$0xf]
    %v3104 = vld [vmem:[#allocation6 + $0x248] sm:$0xf]
    %v3105 = vld [vmem:[#allocation6 + $0x24c] sm:$0xf]
    %v3106 = vld [vmem:[#allocation6 + $0x250] sm:$0xf]
    %v3107 = vld [vmem:[#allocation6 + $0x254] sm:$0xf]
    %v3114 = vunpack.c.l.b16 %v3102
    %v3115 = vunpack.c.l.b16 %v3103
    %v3116 = vunpack.c.l.b16 %v3104
    %v3117 = vunpack.c.l.b16 %v3105
    %v3118 = vunpack.c.l.b16 %v3106
    %v3119 = vunpack.c.l.b16 %v3107
    %v3120 = vpack.c.b16 %v3115, %v3114
    %v3121 = vpack.c.b16 %v3117, %v3116
    %v3122 = vpack.c.b16 %v3119, %v3118
    %vm3126 = vcmask 392192
    %v3128 = vsel %vm3126, %v3094, 0
    %v3131 = vsel %vm3126, %v3095, 0
    %v3134 = vsel %vm3126, %v3096, 0
    %v3137 = vsel %vm3126, %v3097, 0
    %v3140 = vsel %vm3126, %v3098, 0
    %v3143 = vsel %vm3126, %v3099, 0
    %v3146 = vsel %vm3126, %v3100, 0
    %v3149 = vsel %vm3126, %v3101, 0
    %3151 = vmatprep.subr.bf16.mxu0 0
    %3152 = vmatpush1.bf16.msra.mxu0 0
    %3153 = vmatprep.subr.bf16.mxu0 0
    %3154 = vmatpush1.bf16.msra.mxu0 0
    %3155 = vmatprep.subr.bf16.mxu0 0
    %3156 = vmatpush1.bf16.msra.mxu0 0
    %3157 = vmatprep.subr.bf16.mxu0 0
    %3158 = vmatpush1.bf16.msra.mxu0 0
    %3159 = vmatprep.subr.bf16.mxu0 0
    %3160 = vmatpush1.bf16.msra.mxu0 0
    %3161 = vmatprep.subr.bf16.mxu0 0
    %3162 = vmatpush1.bf16.msra.mxu0 %v3122
    %3163 = vmatprep.subr.bf16.mxu0 0
    %3164 = vmatpush1.bf16.msra.mxu0 %v3121
    %3165 = vmatprep.subr.bf16.mxu0 0
    %3166 = vmatpush1.bf16.msra.mxu0 %v3120
    %3167 = vmatprep.subr.bf16.mxu0 0
    %3168 = vmatpush2.bf16.msra.mxu0 0
    %3169 = vmatprep.subr.bf16.mxu0 0
    %3170 = vmatpush2.bf16.msra.mxu0 0
    %3171 = vmatprep.subr.bf16.mxu0 0
    %3172 = vmatpush2.bf16.msra.mxu0 0
    %3173 = vmatprep.subr.bf16.mxu0 0
    %3174 = vmatpush2.bf16.msra.mxu0 0
    %3175 = vmatprep.subr.bf16.mxu0 0
    %3176 = vmatpush2.bf16.msra.mxu0 0
    %3177 = vmatprep.subr.bf16.mxu0 0
    %3178 = vmatpush2.bf16.msra.mxu0 0
    %3179 = vmatprep.subr.bf16.mxu0 0
    %3180 = vmatpush2.bf16.msra.mxu0 0
    %3181 = vmatprep.subr.bf16.mxu0 0
    %3182 = vmatpush2.bf16.msra.mxu0 0
    %3183 = vmatprep.mubr.bf16.mxu0 0
    %3184 = vmatmul.mubr.bf16.gmra.mxu0 %v3128
    %v3185 = vpop.f32.mrf.mxu0
    %v3186 = vadd.f32 0.0, %v3185
    %v3187 = vpop.f32.mrf.mxu0
    %v3188 = vpop.f32.mrf.mxu0
    %v3189 = vadd.f32 0.0, %v3188
    %v3190 = vpop.f32.mrf.mxu0
    %3191 = vmatprep.mubr.bf16.mxu0 0
    %3192 = vmatmul.mubr.bf16.gmra.mxu0 %v3131
    %v3193 = vpop.f32.mrf.mxu0
    %v3194 = vadd.f32 0.0, %v3193
    %v3195 = vpop.f32.mrf.mxu0
    %v3196 = vpop.f32.mrf.mxu0
    %v3197 = vadd.f32 0.0, %v3196
    %v3198 = vpop.f32.mrf.mxu0
    %3199 = vmatprep.mubr.bf16.mxu0 0
    %3200 = vmatmul.mubr.bf16.gmra.mxu0 %v3134
    %v3201 = vpop.f32.mrf.mxu0
    %v3202 = vadd.f32 0.0, %v3201
    %v3203 = vpop.f32.mrf.mxu0
    %v3204 = vpop.f32.mrf.mxu0
    %v3205 = vadd.f32 0.0, %v3204
    %v3206 = vpop.f32.mrf.mxu0
    %3207 = vmatprep.mubr.bf16.mxu0 0
    %3208 = vmatmul.mubr.bf16.gmra.mxu0 %v3137
    %v3209 = vpop.f32.mrf.mxu0
    %v3210 = vadd.f32 0.0, %v3209
    %v3211 = vpop.f32.mrf.mxu0
    %v3212 = vpop.f32.mrf.mxu0
    %v3213 = vadd.f32 0.0, %v3212
    %v3214 = vpop.f32.mrf.mxu0
    %3215 = vmatprep.mubr.bf16.mxu0 0
    %3216 = vmatmul.mubr.bf16.gmra.mxu0 %v3140
    %v3217 = vpop.f32.mrf.mxu0
    %v3218 = vadd.f32 0.0, %v3217
    %v3219 = vpop.f32.mrf.mxu0
    %v3220 = vpop.f32.mrf.mxu0
    %v3221 = vadd.f32 0.0, %v3220
    %v3222 = vpop.f32.mrf.mxu0
    %3223 = vmatprep.mubr.bf16.mxu0 0
    %3224 = vmatmul.mubr.bf16.gmra.mxu0 %v3143
    %v3225 = vpop.f32.mrf.mxu0
    %v3226 = vadd.f32 0.0, %v3225
    %v3227 = vpop.f32.mrf.mxu0
    %v3228 = vpop.f32.mrf.mxu0
    %v3229 = vadd.f32 0.0, %v3228
    %v3230 = vpop.f32.mrf.mxu0
    %3231 = vmatprep.mubr.bf16.mxu0 0
    %3232 = vmatmul.mubr.bf16.gmra.mxu0 %v3146
    %v3233 = vpop.f32.mrf.mxu0
    %v3234 = vadd.f32 0.0, %v3233
    %v3235 = vpop.f32.mrf.mxu0
    %v3236 = vpop.f32.mrf.mxu0
    %v3237 = vadd.f32 0.0, %v3236
    %v3238 = vpop.f32.mrf.mxu0
    %3239 = vmatprep.mubr.bf16.mxu0 0
    %3240 = vmatmul.mubr.bf16.gmra.mxu0 %v3149
    %v3241 = vpop.f32.mrf.mxu0
    %v3242 = vadd.f32 0.0, %v3241
    %v3243 = vpop.f32.mrf.mxu0
    %v3244 = vpop.f32.mrf.mxu0
    %v3245 = vadd.f32 0.0, %v3244
    %v3246 = vpop.f32.mrf.mxu0
    %3247 = vdwg.mxu0
    %v3248 = vpack.c.bf16 %v3189, %v3186
    %v3249 = vpack.c.bf16 %v3197, %v3194
    %v3250 = vpack.c.bf16 %v3205, %v3202
    %v3251 = vpack.c.bf16 %v3213, %v3210
    %v3252 = vpack.c.bf16 %v3221, %v3218
    %v3253 = vpack.c.bf16 %v3229, %v3226
    %v3254 = vpack.c.bf16 %v3237, %v3234
    %v3255 = vpack.c.bf16 %v3245, %v3242
    %v3256 = vld [vmem:[#allocation4 + $0x200] sm:$0xf]
    %v3257 = vld [vmem:[#allocation4 + $0x210] sm:$0xf]
    %v3258 = vld [vmem:[#allocation4 + $0x220] sm:$0xf]
    %v3259 = vld [vmem:[#allocation4 + $0x230] sm:$0xf]
    %v3260 = vld [vmem:[#allocation4 + $0x240] sm:$0xf]
    %v3261 = vld [vmem:[#allocation4 + $0x250] sm:$0xf]
    %v3262 = vld [vmem:[#allocation4 + $0x260] sm:$0xf]
    %v3263 = vld [vmem:[#allocation4 + $0x270] sm:$0xf]
    %v3264 = vld [vmem:[#allocation4 + $0x280] sm:$0xf]
    %v3265 = vld [vmem:[#allocation4 + $0x290] sm:$0xf]
    %v3266 = vld [vmem:[#allocation4 + $0x2a0] sm:$0xf]
    %v3267 = vld [vmem:[#allocation4 + $0x2b0] sm:$0xf]
    %v3268 = vld [vmem:[#allocation4 + $0x2c0] sm:$0xf]
    %v3269 = vld [vmem:[#allocation4 + $0x2d0] sm:$0xf]
    %v3270 = vld [vmem:[#allocation4 + $0x2e0] sm:$0xf]
    %v3271 = vld [vmem:[#allocation4 + $0x2f0] sm:$0xf]
    %v3272 = vld [vmem:[#allocation6 + $0x258] sm:$0xf]
    %v3273 = vld [vmem:[#allocation6 + $0x25c] sm:$0xf]
    %v3274 = vld [vmem:[#allocation6 + $0x260] sm:$0xf]
    %v3275 = vld [vmem:[#allocation6 + $0x264] sm:$0xf]
    %v3276 = vld [vmem:[#allocation6 + $0x268] sm:$0xf]
    %v3277 = vld [vmem:[#allocation6 + $0x26c] sm:$0xf]
    %v3284 = vunpack.c.l.b16 %v3272
    %v3285 = vunpack.c.l.b16 %v3273
    %v3286 = vunpack.c.l.b16 %v3274
    %v3287 = vunpack.c.l.b16 %v3275
    %v3288 = vunpack.c.l.b16 %v3276
    %v3289 = vunpack.c.l.b16 %v3277
    %v3290 = vpack.c.b16 %v3285, %v3284
    %v3291 = vpack.c.b16 %v3287, %v3286
    %v3292 = vpack.c.b16 %v3289, %v3288
    %3296 = vmatprep.subr.bf16.mxu0 0
    %3297 = vmatpush1.bf16.msra.mxu0 0
    %3298 = vmatprep.subr.bf16.mxu0 0
    %3299 = vmatpush1.bf16.msra.mxu0 0
    %3300 = vmatprep.subr.bf16.mxu0 0
    %3301 = vmatpush1.bf16.msra.mxu0 0
    %3302 = vmatprep.subr.bf16.mxu0 0
    %3303 = vmatpush1.bf16.msra.mxu0 0
    %3304 = vmatprep.subr.bf16.mxu0 0
    %3305 = vmatpush1.bf16.msra.mxu0 0
    %3306 = vmatprep.subr.bf16.mxu0 0
    %3307 = vmatpush1.bf16.msra.mxu0 %v3292
    %3308 = vmatprep.subr.bf16.mxu0 0
    %3309 = vmatpush1.bf16.msra.mxu0 %v3291
    %3310 = vmatprep.subr.bf16.mxu0 0
    %3311 = vmatpush1.bf16.msra.mxu0 %v3290
    %3312 = vmatprep.subr.bf16.mxu0 0
    %3313 = vmatpush2.bf16.msra.mxu0 0
    %3314 = vmatprep.subr.bf16.mxu0 0
    %3315 = vmatpush2.bf16.msra.mxu0 0
    %3316 = vmatprep.subr.bf16.mxu0 0
    %3317 = vmatpush2.bf16.msra.mxu0 0
    %3318 = vmatprep.subr.bf16.mxu0 0
    %3319 = vmatpush2.bf16.msra.mxu0 0
    %3320 = vmatprep.subr.bf16.mxu0 0
    %3321 = vmatpush2.bf16.msra.mxu0 0
    %3322 = vmatprep.subr.bf16.mxu0 0
    %3323 = vmatpush2.bf16.msra.mxu0 0
    %3324 = vmatprep.subr.bf16.mxu0 0
    %3325 = vmatpush2.bf16.msra.mxu0 0
    %3326 = vmatprep.subr.bf16.mxu0 0
    %3327 = vmatpush2.bf16.msra.mxu0 0
    %3328 = vmatprep.mubr.bf16.mxu0 0
    %3329 = vmatmul.mubr.bf16.gmra.mxu0 %v3128
    %v3330 = vpop.f32.mrf.mxu0
    %v3331 = vadd.f32 0.0, %v3330
    %v3332 = vpop.f32.mrf.mxu0
    %v3333 = vpop.f32.mrf.mxu0
    %v3334 = vadd.f32 0.0, %v3333
    %v3335 = vpop.f32.mrf.mxu0
    %3336 = vmatprep.mubr.bf16.mxu0 0
    %3337 = vmatmul.mubr.bf16.gmra.mxu0 %v3131
    %v3338 = vpop.f32.mrf.mxu0
    %v3339 = vadd.f32 0.0, %v3338
    %v3340 = vpop.f32.mrf.mxu0
    %v3341 = vpop.f32.mrf.mxu0
    %v3342 = vadd.f32 0.0, %v3341
    %v3343 = vpop.f32.mrf.mxu0
    %3344 = vmatprep.mubr.bf16.mxu0 0
    %3345 = vmatmul.mubr.bf16.gmra.mxu0 %v3134
    %v3346 = vpop.f32.mrf.mxu0
    %v3347 = vadd.f32 0.0, %v3346
    %v3348 = vpop.f32.mrf.mxu0
    %v3349 = vpop.f32.mrf.mxu0
    %v3350 = vadd.f32 0.0, %v3349
    %v3351 = vpop.f32.mrf.mxu0
    %3352 = vmatprep.mubr.bf16.mxu0 0
    %3353 = vmatmul.mubr.bf16.gmra.mxu0 %v3137
    %v3354 = vpop.f32.mrf.mxu0
    %v3355 = vadd.f32 0.0, %v3354
    %v3356 = vpop.f32.mrf.mxu0
    %v3357 = vpop.f32.mrf.mxu0
    %v3358 = vadd.f32 0.0, %v3357
    %v3359 = vpop.f32.mrf.mxu0
    %3360 = vmatprep.mubr.bf16.mxu0 0
    %3361 = vmatmul.mubr.bf16.gmra.mxu0 %v3140
    %v3362 = vpop.f32.mrf.mxu0
    %v3363 = vadd.f32 0.0, %v3362
    %v3364 = vpop.f32.mrf.mxu0
    %v3365 = vpop.f32.mrf.mxu0
    %v3366 = vadd.f32 0.0, %v3365
    %v3367 = vpop.f32.mrf.mxu0
    %3368 = vmatprep.mubr.bf16.mxu0 0
    %3369 = vmatmul.mubr.bf16.gmra.mxu0 %v3143
    %v3370 = vpop.f32.mrf.mxu0
    %v3371 = vadd.f32 0.0, %v3370
    %v3372 = vpop.f32.mrf.mxu0
    %v3373 = vpop.f32.mrf.mxu0
    %v3374 = vadd.f32 0.0, %v3373
    %v3375 = vpop.f32.mrf.mxu0
    %3376 = vmatprep.mubr.bf16.mxu0 0
    %3377 = vmatmul.mubr.bf16.gmra.mxu0 %v3146
    %v3378 = vpop.f32.mrf.mxu0
    %v3379 = vadd.f32 0.0, %v3378
    %v3380 = vpop.f32.mrf.mxu0
    %v3381 = vpop.f32.mrf.mxu0
    %v3382 = vadd.f32 0.0, %v3381
    %v3383 = vpop.f32.mrf.mxu0
    %3384 = vmatprep.mubr.bf16.mxu0 0
    %3385 = vmatmul.mubr.bf16.gmra.mxu0 %v3149
    %v3386 = vpop.f32.mrf.mxu0
    %v3387 = vadd.f32 0.0, %v3386
    %v3388 = vpop.f32.mrf.mxu0
    %v3389 = vpop.f32.mrf.mxu0
    %v3390 = vadd.f32 0.0, %v3389
    %v3391 = vpop.f32.mrf.mxu0
    %3392 = vdwg.mxu0
    %v3393 = vpack.c.bf16 %v3334, %v3331
    %v3394 = vpack.c.bf16 %v3342, %v3339
    %v3395 = vpack.c.bf16 %v3350, %v3347
    %v3396 = vpack.c.bf16 %v3358, %v3355
    %v3397 = vpack.c.bf16 %v3366, %v3363
    %v3398 = vpack.c.bf16 %v3374, %v3371
    %v3399 = vpack.c.bf16 %v3382, %v3379
    %v3400 = vpack.c.bf16 %v3390, %v3387
    %v3401 = vld [vmem:[#allocation4 + $0x204] sm:$0xf]
    %v3402 = vld [vmem:[#allocation4 + $0x214] sm:$0xf]
    %v3403 = vld [vmem:[#allocation4 + $0x224] sm:$0xf]
    %v3404 = vld [vmem:[#allocation4 + $0x234] sm:$0xf]
    %v3405 = vld [vmem:[#allocation4 + $0x244] sm:$0xf]
    %v3406 = vld [vmem:[#allocation4 + $0x254] sm:$0xf]
    %v3407 = vld [vmem:[#allocation4 + $0x264] sm:$0xf]
    %v3408 = vld [vmem:[#allocation4 + $0x274] sm:$0xf]
    %v3409 = vld [vmem:[#allocation4 + $0x284] sm:$0xf]
    %v3410 = vld [vmem:[#allocation4 + $0x294] sm:$0xf]
    %v3411 = vld [vmem:[#allocation4 + $0x2a4] sm:$0xf]
    %v3412 = vld [vmem:[#allocation4 + $0x2b4] sm:$0xf]
    %v3413 = vld [vmem:[#allocation4 + $0x2c4] sm:$0xf]
    %v3414 = vld [vmem:[#allocation4 + $0x2d4] sm:$0xf]
    %v3415 = vld [vmem:[#allocation4 + $0x2e4] sm:$0xf]
    %v3416 = vld [vmem:[#allocation4 + $0x2f4] sm:$0xf]
    %v3433 = vunpack.c.l.b16 %v3401
    %v3434 = vunpack.c.l.b16 %v3402
    %v3435 = vunpack.c.l.b16 %v3403
    %v3436 = vunpack.c.l.b16 %v3404
    %v3437 = vunpack.c.l.b16 %v3405
    %v3438 = vunpack.c.l.b16 %v3406
    %v3439 = vunpack.c.l.b16 %v3407
    %v3440 = vunpack.c.l.b16 %v3408
    %v3441 = vunpack.c.l.b16 %v3409
    %v3442 = vunpack.c.l.b16 %v3410
    %v3443 = vunpack.c.l.b16 %v3411
    %v3444 = vunpack.c.l.b16 %v3412
    %v3445 = vunpack.c.l.b16 %v3413
    %v3446 = vunpack.c.l.b16 %v3414
    %v3447 = vunpack.c.l.b16 %v3415
    %v3448 = vunpack.c.l.b16 %v3416
    %v3449 = vpack.c.b16 %v3434, %v3433
    %v3450 = vpack.c.b16 %v3436, %v3435
    %v3451 = vpack.c.b16 %v3438, %v3437
    %v3452 = vpack.c.b16 %v3440, %v3439
    %v3453 = vpack.c.b16 %v3442, %v3441
    %v3454 = vpack.c.b16 %v3444, %v3443
    %v3455 = vpack.c.b16 %v3446, %v3445
    %v3456 = vpack.c.b16 %v3448, %v3447
    %3465 = vmatprep.subr.bf16.mxu0 0
    %3466 = vmatpush1.bf16.msra.mxu0 %v3400
    %3467 = vmatprep.subr.bf16.mxu0 0
    %3468 = vmatpush1.bf16.msra.mxu0 %v3399
    %3469 = vmatprep.subr.bf16.mxu0 0
    %3470 = vmatpush1.bf16.msra.mxu0 %v3398
    %3471 = vmatprep.subr.bf16.mxu0 0
    %3472 = vmatpush1.bf16.msra.mxu0 %v3397
    %3473 = vmatprep.subr.bf16.mxu0 0
    %3474 = vmatpush1.bf16.msra.mxu0 %v3396
    %3475 = vmatprep.subr.bf16.mxu0 0
    %3476 = vmatpush1.bf16.msra.mxu0 %v3395
    %3477 = vmatprep.subr.bf16.mxu0 0
    %3478 = vmatpush1.bf16.msra.mxu0 %v3394
    %3479 = vmatprep.subr.bf16.mxu0 0
    %3480 = vmatpush1.bf16.msra.mxu0 %v3393
    %3481 = vmatprep.subr.bf16.mxu0 0
    %3482 = vmatpush2.bf16.msra.mxu0 0
    %3483 = vmatprep.subr.bf16.mxu0 0
    %3484 = vmatpush2.bf16.msra.mxu0 0
    %3485 = vmatprep.subr.bf16.mxu0 0
    %3486 = vmatpush2.bf16.msra.mxu0 0
    %3487 = vmatprep.subr.bf16.mxu0 0
    %3488 = vmatpush2.bf16.msra.mxu0 0
    %3489 = vmatprep.subr.bf16.mxu0 0
    %3490 = vmatpush2.bf16.msra.mxu0 0
    %3491 = vmatprep.subr.bf16.mxu0 0
    %3492 = vmatpush2.bf16.msra.mxu0 0
    %3493 = vmatprep.subr.bf16.mxu0 0
    %3494 = vmatpush2.bf16.msra.mxu0 0
    %3495 = vmatprep.subr.bf16.mxu0 0
    %3496 = vmatpush2.bf16.msra.mxu0 0
    %3497 = vmatprep.mubr.bf16.mxu0 0
    %3498 = vmatmul.mubr.bf16.gmra.mxu0 %v3449
    %v3499 = vpop.f32.mrf.mxu0
    %v3500 = vadd.f32 0.0, %v3499
    %v3501 = vpop.f32.mrf.mxu0
    %v3502 = vpop.f32.mrf.mxu0
    %v3503 = vadd.f32 0.0, %v3502
    %v3504 = vpop.f32.mrf.mxu0
    %3505 = vmatprep.mubr.bf16.mxu0 0
    %3506 = vmatmul.mubr.bf16.gmra.mxu0 %v3450
    %v3507 = vpop.f32.mrf.mxu0
    %v3508 = vadd.f32 0.0, %v3507
    %v3509 = vpop.f32.mrf.mxu0
    %v3510 = vpop.f32.mrf.mxu0
    %v3511 = vadd.f32 0.0, %v3510
    %v3512 = vpop.f32.mrf.mxu0
    %3513 = vmatprep.mubr.bf16.mxu0 0
    %3514 = vmatmul.mubr.bf16.gmra.mxu0 %v3451
    %v3515 = vpop.f32.mrf.mxu0
    %v3516 = vadd.f32 0.0, %v3515
    %v3517 = vpop.f32.mrf.mxu0
    %v3518 = vpop.f32.mrf.mxu0
    %v3519 = vadd.f32 0.0, %v3518
    %v3520 = vpop.f32.mrf.mxu0
    %3521 = vmatprep.mubr.bf16.mxu0 0
    %3522 = vmatmul.mubr.bf16.gmra.mxu0 %v3452
    %v3523 = vpop.f32.mrf.mxu0
    %v3524 = vadd.f32 0.0, %v3523
    %v3525 = vpop.f32.mrf.mxu0
    %v3526 = vpop.f32.mrf.mxu0
    %v3527 = vadd.f32 0.0, %v3526
    %v3528 = vpop.f32.mrf.mxu0
    %3529 = vmatprep.mubr.bf16.mxu0 0
    %3530 = vmatmul.mubr.bf16.gmra.mxu0 %v3453
    %v3531 = vpop.f32.mrf.mxu0
    %v3532 = vadd.f32 0.0, %v3531
    %v3533 = vpop.f32.mrf.mxu0
    %v3534 = vpop.f32.mrf.mxu0
    %v3535 = vadd.f32 0.0, %v3534
    %v3536 = vpop.f32.mrf.mxu0
    %3537 = vmatprep.mubr.bf16.mxu0 0
    %3538 = vmatmul.mubr.bf16.gmra.mxu0 %v3454
    %v3539 = vpop.f32.mrf.mxu0
    %v3540 = vadd.f32 0.0, %v3539
    %v3541 = vpop.f32.mrf.mxu0
    %v3542 = vpop.f32.mrf.mxu0
    %v3543 = vadd.f32 0.0, %v3542
    %v3544 = vpop.f32.mrf.mxu0
    %3545 = vmatprep.mubr.bf16.mxu0 0
    %3546 = vmatmul.mubr.bf16.gmra.mxu0 %v3455
    %v3547 = vpop.f32.mrf.mxu0
    %v3548 = vadd.f32 0.0, %v3547
    %v3549 = vpop.f32.mrf.mxu0
    %v3550 = vpop.f32.mrf.mxu0
    %v3551 = vadd.f32 0.0, %v3550
    %v3552 = vpop.f32.mrf.mxu0
    %3553 = vmatprep.mubr.bf16.mxu0 0
    %3554 = vmatmul.mubr.bf16.gmra.mxu0 %v3456
    %v3555 = vpop.f32.mrf.mxu0
    %v3556 = vadd.f32 0.0, %v3555
    %v3557 = vpop.f32.mrf.mxu0
    %v3558 = vpop.f32.mrf.mxu0
    %v3559 = vadd.f32 0.0, %v3558
    %v3560 = vpop.f32.mrf.mxu0
    %3561 = vdwg.mxu0
    %v3578 = vunpack.c.l.b16 %v3256
    %v3579 = vunpack.c.l.b16 %v3257
    %v3580 = vunpack.c.l.b16 %v3258
    %v3581 = vunpack.c.l.b16 %v3259
    %v3582 = vunpack.c.l.b16 %v3260
    %v3583 = vunpack.c.l.b16 %v3261
    %v3584 = vunpack.c.l.b16 %v3262
    %v3585 = vunpack.c.l.b16 %v3263
    %v3586 = vunpack.c.l.b16 %v3264
    %v3587 = vunpack.c.l.b16 %v3265
    %v3588 = vunpack.c.l.b16 %v3266
    %v3589 = vunpack.c.l.b16 %v3267
    %v3590 = vunpack.c.l.b16 %v3268
    %v3591 = vunpack.c.l.b16 %v3269
    %v3592 = vunpack.c.l.b16 %v3270
    %v3593 = vunpack.c.l.b16 %v3271
    %v3594 = vpack.c.b16 %v3579, %v3578
    %v3595 = vpack.c.b16 %v3581, %v3580
    %v3596 = vpack.c.b16 %v3583, %v3582
    %v3597 = vpack.c.b16 %v3585, %v3584
    %v3598 = vpack.c.b16 %v3587, %v3586
    %v3599 = vpack.c.b16 %v3589, %v3588
    %v3600 = vpack.c.b16 %v3591, %v3590
    %v3601 = vpack.c.b16 %v3593, %v3592
    %3610 = vmatprep.subr.bf16.mxu0 0
    %3611 = vmatpush1.bf16.msra.mxu0 %v3255
    %3612 = vmatprep.subr.bf16.mxu0 0
    %3613 = vmatpush1.bf16.msra.mxu0 %v3254
    %3614 = vmatprep.subr.bf16.mxu0 0
    %3615 = vmatpush1.bf16.msra.mxu0 %v3253
    %3616 = vmatprep.subr.bf16.mxu0 0
    %3617 = vmatpush1.bf16.msra.mxu0 %v3252
    %3618 = vmatprep.subr.bf16.mxu0 0
    %3619 = vmatpush1.bf16.msra.mxu0 %v3251
    %3620 = vmatprep.subr.bf16.mxu0 0
    %3621 = vmatpush1.bf16.msra.mxu0 %v3250
    %3622 = vmatprep.subr.bf16.mxu0 0
    %3623 = vmatpush1.bf16.msra.mxu0 %v3249
    %3624 = vmatprep.subr.bf16.mxu0 0
    %3625 = vmatpush1.bf16.msra.mxu0 %v3248
    %3626 = vmatprep.subr.bf16.mxu0 0
    %3627 = vmatpush2.bf16.msra.mxu0 0
    %3628 = vmatprep.subr.bf16.mxu0 0
    %3629 = vmatpush2.bf16.msra.mxu0 0
    %3630 = vmatprep.subr.bf16.mxu0 0
    %3631 = vmatpush2.bf16.msra.mxu0 0
    %3632 = vmatprep.subr.bf16.mxu0 0
    %3633 = vmatpush2.bf16.msra.mxu0 0
    %3634 = vmatprep.subr.bf16.mxu0 0
    %3635 = vmatpush2.bf16.msra.mxu0 0
    %3636 = vmatprep.subr.bf16.mxu0 0
    %3637 = vmatpush2.bf16.msra.mxu0 0
    %3638 = vmatprep.subr.bf16.mxu0 0
    %3639 = vmatpush2.bf16.msra.mxu0 0
    %3640 = vmatprep.subr.bf16.mxu0 0
    %3641 = vmatpush2.bf16.msra.mxu0 0
    %3642 = vmatprep.mubr.bf16.mxu0 0
    %3643 = vmatmul.mubr.bf16.gmra.mxu0 %v3594
    %v3644 = vpop.f32.mrf.mxu0
    %v3645 = vadd.f32 %v3500, %v3644
    %v3646 = vpop.f32.mrf.mxu0
    %v3647 = vpop.f32.mrf.mxu0
    %v3648 = vadd.f32 %v3503, %v3647
    %v3649 = vpop.f32.mrf.mxu0
    %3650 = vmatprep.mubr.bf16.mxu0 0
    %3651 = vmatmul.mubr.bf16.gmra.mxu0 %v3595
    %v3652 = vpop.f32.mrf.mxu0
    %v3653 = vadd.f32 %v3508, %v3652
    %v3654 = vpop.f32.mrf.mxu0
    %v3655 = vpop.f32.mrf.mxu0
    %v3656 = vadd.f32 %v3511, %v3655
    %v3657 = vpop.f32.mrf.mxu0
    %3658 = vmatprep.mubr.bf16.mxu0 0
    %3659 = vmatmul.mubr.bf16.gmra.mxu0 %v3596
    %v3660 = vpop.f32.mrf.mxu0
    %v3661 = vadd.f32 %v3516, %v3660
    %v3662 = vpop.f32.mrf.mxu0
    %v3663 = vpop.f32.mrf.mxu0
    %v3664 = vadd.f32 %v3519, %v3663
    %v3665 = vpop.f32.mrf.mxu0
    %3666 = vmatprep.mubr.bf16.mxu0 0
    %3667 = vmatmul.mubr.bf16.gmra.mxu0 %v3597
    %v3668 = vpop.f32.mrf.mxu0
    %v3669 = vadd.f32 %v3524, %v3668
    %v3670 = vpop.f32.mrf.mxu0
    %v3671 = vpop.f32.mrf.mxu0
    %v3672 = vadd.f32 %v3527, %v3671
    %v3673 = vpop.f32.mrf.mxu0
    %3674 = vmatprep.mubr.bf16.mxu0 0
    %3675 = vmatmul.mubr.bf16.gmra.mxu0 %v3598
    %v3676 = vpop.f32.mrf.mxu0
    %v3677 = vadd.f32 %v3532, %v3676
    %v3678 = vpop.f32.mrf.mxu0
    %v3679 = vpop.f32.mrf.mxu0
    %v3680 = vadd.f32 %v3535, %v3679
    %v3681 = vpop.f32.mrf.mxu0
    %3682 = vmatprep.mubr.bf16.mxu0 0
    %3683 = vmatmul.mubr.bf16.gmra.mxu0 %v3599
    %v3684 = vpop.f32.mrf.mxu0
    %v3685 = vadd.f32 %v3540, %v3684
    %v3686 = vpop.f32.mrf.mxu0
    %v3687 = vpop.f32.mrf.mxu0
    %v3688 = vadd.f32 %v3543, %v3687
    %v3689 = vpop.f32.mrf.mxu0
    %3690 = vmatprep.mubr.bf16.mxu0 0
    %3691 = vmatmul.mubr.bf16.gmra.mxu0 %v3600
    %v3692 = vpop.f32.mrf.mxu0
    %v3693 = vadd.f32 %v3548, %v3692
    %v3694 = vpop.f32.mrf.mxu0
    %v3695 = vpop.f32.mrf.mxu0
    %v3696 = vadd.f32 %v3551, %v3695
    %v3697 = vpop.f32.mrf.mxu0
    %3698 = vmatprep.mubr.bf16.mxu0 0
    %3699 = vmatmul.mubr.bf16.gmra.mxu0 %v3601
    %v3700 = vpop.f32.mrf.mxu0
    %v3701 = vadd.f32 %v3556, %v3700
    %v3702 = vpop.f32.mrf.mxu0
    %v3703 = vpop.f32.mrf.mxu0
    %v3704 = vadd.f32 %v3559, %v3703
    %v3705 = vpop.f32.mrf.mxu0
    %3706 = vdwg.mxu0
    %v3707 = vld [vmem:[#allocation6 + $0x270] sm:$0xf]
    %v3708 = vld [vmem:[#allocation6 + $0x274] sm:$0xf]
    %v3709 = vld [vmem:[#allocation6 + $0x278] sm:$0xf]
    %v3710 = vld [vmem:[#allocation6 + $0x27c] sm:$0xf]
    %v3711 = vld [vmem:[#allocation6 + $0x280] sm:$0xf]
    %v3712 = vld [vmem:[#allocation6 + $0x284] sm:$0xf]
    %v3719 = vunpack.c.l.b16 %v3707
    %v3720 = vunpack.c.l.b16 %v3708
    %v3721 = vunpack.c.l.b16 %v3709
    %v3722 = vunpack.c.l.b16 %v3710
    %v3723 = vunpack.c.l.b16 %v3711
    %v3724 = vunpack.c.l.b16 %v3712
    %v3725 = vpack.c.b16 %v3720, %v3719
    %v3726 = vpack.c.b16 %v3722, %v3721
    %v3727 = vpack.c.b16 %v3724, %v3723
    %3731 = vmatprep.subr.bf16.mxu0 0
    %3732 = vmatpush1.bf16.msra.mxu0 0
    %3733 = vmatprep.subr.bf16.mxu0 0
    %3734 = vmatpush1.bf16.msra.mxu0 0
    %3735 = vmatprep.subr.bf16.mxu0 0
    %3736 = vmatpush1.bf16.msra.mxu0 0
    %3737 = vmatprep.subr.bf16.mxu0 0
    %3738 = vmatpush1.bf16.msra.mxu0 0
    %3739 = vmatprep.subr.bf16.mxu0 0
    %3740 = vmatpush1.bf16.msra.mxu0 0
    %3741 = vmatprep.subr.bf16.mxu0 0
    %3742 = vmatpush1.bf16.msra.mxu0 %v3727
    %3743 = vmatprep.subr.bf16.mxu0 0
    %3744 = vmatpush1.bf16.msra.mxu0 %v3726
    %3745 = vmatprep.subr.bf16.mxu0 0
    %3746 = vmatpush1.bf16.msra.mxu0 %v3725
    %3747 = vmatprep.subr.bf16.mxu0 0
    %3748 = vmatpush2.bf16.msra.mxu0 0
    %3749 = vmatprep.subr.bf16.mxu0 0
    %3750 = vmatpush2.bf16.msra.mxu0 0
    %3751 = vmatprep.subr.bf16.mxu0 0
    %3752 = vmatpush2.bf16.msra.mxu0 0
    %3753 = vmatprep.subr.bf16.mxu0 0
    %3754 = vmatpush2.bf16.msra.mxu0 0
    %3755 = vmatprep.subr.bf16.mxu0 0
    %3756 = vmatpush2.bf16.msra.mxu0 0
    %3757 = vmatprep.subr.bf16.mxu0 0
    %3758 = vmatpush2.bf16.msra.mxu0 0
    %3759 = vmatprep.subr.bf16.mxu0 0
    %3760 = vmatpush2.bf16.msra.mxu0 0
    %3761 = vmatprep.subr.bf16.mxu0 0
    %3762 = vmatpush2.bf16.msra.mxu0 0
    %3763 = vmatprep.mubr.bf16.mxu0 0
    %3764 = vmatmul.mubr.bf16.gmra.mxu0 %v3128
    %v3765 = vpop.f32.mrf.mxu0
    %v3766 = vadd.f32 0.0, %v3765
    %v3767 = vpop.f32.mrf.mxu0
    %v3768 = vpop.f32.mrf.mxu0
    %v3769 = vadd.f32 0.0, %v3768
    %v3770 = vpop.f32.mrf.mxu0
    %3771 = vmatprep.mubr.bf16.mxu0 0
    %3772 = vmatmul.mubr.bf16.gmra.mxu0 %v3131
    %v3773 = vpop.f32.mrf.mxu0
    %v3774 = vadd.f32 0.0, %v3773
    %v3775 = vpop.f32.mrf.mxu0
    %v3776 = vpop.f32.mrf.mxu0
    %v3777 = vadd.f32 0.0, %v3776
    %v3778 = vpop.f32.mrf.mxu0
    %3779 = vmatprep.mubr.bf16.mxu0 0
    %3780 = vmatmul.mubr.bf16.gmra.mxu0 %v3134
    %v3781 = vpop.f32.mrf.mxu0
    %v3782 = vadd.f32 0.0, %v3781
    %v3783 = vpop.f32.mrf.mxu0
    %v3784 = vpop.f32.mrf.mxu0
    %v3785 = vadd.f32 0.0, %v3784
    %v3786 = vpop.f32.mrf.mxu0
    %3787 = vmatprep.mubr.bf16.mxu0 0
    %3788 = vmatmul.mubr.bf16.gmra.mxu0 %v3137
    %v3789 = vpop.f32.mrf.mxu0
    %v3790 = vadd.f32 0.0, %v3789
    %v3791 = vpop.f32.mrf.mxu0
    %v3792 = vpop.f32.mrf.mxu0
    %v3793 = vadd.f32 0.0, %v3792
    %v3794 = vpop.f32.mrf.mxu0
    %3795 = vmatprep.mubr.bf16.mxu0 0
    %3796 = vmatmul.mubr.bf16.gmra.mxu0 %v3140
    %v3797 = vpop.f32.mrf.mxu0
    %v3798 = vadd.f32 0.0, %v3797
    %v3799 = vpop.f32.mrf.mxu0
    %v3800 = vpop.f32.mrf.mxu0
    %v3801 = vadd.f32 0.0, %v3800
    %v3802 = vpop.f32.mrf.mxu0
    %3803 = vmatprep.mubr.bf16.mxu0 0
    %3804 = vmatmul.mubr.bf16.gmra.mxu0 %v3143
    %v3805 = vpop.f32.mrf.mxu0
    %v3806 = vadd.f32 0.0, %v3805
    %v3807 = vpop.f32.mrf.mxu0
    %v3808 = vpop.f32.mrf.mxu0
    %v3809 = vadd.f32 0.0, %v3808
    %v3810 = vpop.f32.mrf.mxu0
    %3811 = vmatprep.mubr.bf16.mxu0 0
    %3812 = vmatmul.mubr.bf16.gmra.mxu0 %v3146
    %v3813 = vpop.f32.mrf.mxu0
    %v3814 = vadd.f32 0.0, %v3813
    %v3815 = vpop.f32.mrf.mxu0
    %v3816 = vpop.f32.mrf.mxu0
    %v3817 = vadd.f32 0.0, %v3816
    %v3818 = vpop.f32.mrf.mxu0
    %3819 = vmatprep.mubr.bf16.mxu0 0
    %3820 = vmatmul.mubr.bf16.gmra.mxu0 %v3149
    %v3821 = vpop.f32.mrf.mxu0
    %v3822 = vadd.f32 0.0, %v3821
    %v3823 = vpop.f32.mrf.mxu0
    %v3824 = vpop.f32.mrf.mxu0
    %v3825 = vadd.f32 0.0, %v3824
    %v3826 = vpop.f32.mrf.mxu0
    %3827 = vdwg.mxu0
    %v3828 = vpack.c.bf16 %v3769, %v3766
    %v3829 = vpack.c.bf16 %v3777, %v3774
    %v3830 = vpack.c.bf16 %v3785, %v3782
    %v3831 = vpack.c.bf16 %v3793, %v3790
    %v3832 = vpack.c.bf16 %v3801, %v3798
    %v3833 = vpack.c.bf16 %v3809, %v3806
    %v3834 = vpack.c.bf16 %v3817, %v3814
    %v3835 = vpack.c.bf16 %v3825, %v3822
    %v3836 = vld [vmem:[#allocation4 + $0x208] sm:$0xf]
    %v3837 = vld [vmem:[#allocation4 + $0x218] sm:$0xf]
    %v3838 = vld [vmem:[#allocation4 + $0x228] sm:$0xf]
    %v3839 = vld [vmem:[#allocation4 + $0x238] sm:$0xf]
    %v3840 = vld [vmem:[#allocation4 + $0x248] sm:$0xf]
    %v3841 = vld [vmem:[#allocation4 + $0x258] sm:$0xf]
    %v3842 = vld [vmem:[#allocation4 + $0x268] sm:$0xf]
    %v3843 = vld [vmem:[#allocation4 + $0x278] sm:$0xf]
    %v3844 = vld [vmem:[#allocation4 + $0x288] sm:$0xf]
    %v3845 = vld [vmem:[#allocation4 + $0x298] sm:$0xf]
    %v3846 = vld [vmem:[#allocation4 + $0x2a8] sm:$0xf]
    %v3847 = vld [vmem:[#allocation4 + $0x2b8] sm:$0xf]
    %v3848 = vld [vmem:[#allocation4 + $0x2c8] sm:$0xf]
    %v3849 = vld [vmem:[#allocation4 + $0x2d8] sm:$0xf]
    %v3850 = vld [vmem:[#allocation4 + $0x2e8] sm:$0xf]
    %v3851 = vld [vmem:[#allocation4 + $0x2f8] sm:$0xf]
    %v3868 = vunpack.c.l.b16 %v3836
    %v3869 = vunpack.c.l.b16 %v3837
    %v3870 = vunpack.c.l.b16 %v3838
    %v3871 = vunpack.c.l.b16 %v3839
    %v3872 = vunpack.c.l.b16 %v3840
    %v3873 = vunpack.c.l.b16 %v3841
    %v3874 = vunpack.c.l.b16 %v3842
    %v3875 = vunpack.c.l.b16 %v3843
    %v3876 = vunpack.c.l.b16 %v3844
    %v3877 = vunpack.c.l.b16 %v3845
    %v3878 = vunpack.c.l.b16 %v3846
    %v3879 = vunpack.c.l.b16 %v3847
    %v3880 = vunpack.c.l.b16 %v3848
    %v3881 = vunpack.c.l.b16 %v3849
    %v3882 = vunpack.c.l.b16 %v3850
    %v3883 = vunpack.c.l.b16 %v3851
    %v3884 = vpack.c.b16 %v3869, %v3868
    %v3885 = vpack.c.b16 %v3871, %v3870
    %v3886 = vpack.c.b16 %v3873, %v3872
    %v3887 = vpack.c.b16 %v3875, %v3874
    %v3888 = vpack.c.b16 %v3877, %v3876
    %v3889 = vpack.c.b16 %v3879, %v3878
    %v3890 = vpack.c.b16 %v3881, %v3880
    %v3891 = vpack.c.b16 %v3883, %v3882
    %3900 = vmatprep.subr.bf16.mxu0 0
    %3901 = vmatpush1.bf16.msra.mxu0 %v3835
    %3902 = vmatprep.subr.bf16.mxu0 0
    %3903 = vmatpush1.bf16.msra.mxu0 %v3834
    %3904 = vmatprep.subr.bf16.mxu0 0
    %3905 = vmatpush1.bf16.msra.mxu0 %v3833
    %3906 = vmatprep.subr.bf16.mxu0 0
    %3907 = vmatpush1.bf16.msra.mxu0 %v3832
    %3908 = vmatprep.subr.bf16.mxu0 0
    %3909 = vmatpush1.bf16.msra.mxu0 %v3831
    %3910 = vmatprep.subr.bf16.mxu0 0
    %3911 = vmatpush1.bf16.msra.mxu0 %v3830
    %3912 = vmatprep.subr.bf16.mxu0 0
    %3913 = vmatpush1.bf16.msra.mxu0 %v3829
    %3914 = vmatprep.subr.bf16.mxu0 0
    %3915 = vmatpush1.bf16.msra.mxu0 %v3828
    %3916 = vmatprep.subr.bf16.mxu0 0
    %3917 = vmatpush2.bf16.msra.mxu0 0
    %3918 = vmatprep.subr.bf16.mxu0 0
    %3919 = vmatpush2.bf16.msra.mxu0 0
    %3920 = vmatprep.subr.bf16.mxu0 0
    %3921 = vmatpush2.bf16.msra.mxu0 0
    %3922 = vmatprep.subr.bf16.mxu0 0
    %3923 = vmatpush2.bf16.msra.mxu0 0
    %3924 = vmatprep.subr.bf16.mxu0 0
    %3925 = vmatpush2.bf16.msra.mxu0 0
    %3926 = vmatprep.subr.bf16.mxu0 0
    %3927 = vmatpush2.bf16.msra.mxu0 0
    %3928 = vmatprep.subr.bf16.mxu0 0
    %3929 = vmatpush2.bf16.msra.mxu0 0
    %3930 = vmatprep.subr.bf16.mxu0 0
    %3931 = vmatpush2.bf16.msra.mxu0 0
    %3932 = vmatprep.mubr.bf16.mxu0 0
    %3933 = vmatmul.mubr.bf16.gmra.mxu0 %v3884
    %v3934 = vpop.f32.mrf.mxu0
    %v3935 = vadd.f32 0.0, %v3934
    %v3936 = vpop.f32.mrf.mxu0
    %v3937 = vpop.f32.mrf.mxu0
    %v3938 = vadd.f32 0.0, %v3937
    %v3939 = vpop.f32.mrf.mxu0
    %3940 = vmatprep.mubr.bf16.mxu0 0
    %3941 = vmatmul.mubr.bf16.gmra.mxu0 %v3885
    %v3942 = vpop.f32.mrf.mxu0
    %v3943 = vadd.f32 0.0, %v3942
    %v3944 = vpop.f32.mrf.mxu0
    %v3945 = vpop.f32.mrf.mxu0
    %v3946 = vadd.f32 0.0, %v3945
    %v3947 = vpop.f32.mrf.mxu0
    %3948 = vmatprep.mubr.bf16.mxu0 0
    %3949 = vmatmul.mubr.bf16.gmra.mxu0 %v3886
    %v3950 = vpop.f32.mrf.mxu0
    %v3951 = vadd.f32 0.0, %v3950
    %v3952 = vpop.f32.mrf.mxu0
    %v3953 = vpop.f32.mrf.mxu0
    %v3954 = vadd.f32 0.0, %v3953
    %v3955 = vpop.f32.mrf.mxu0
    %3956 = vmatprep.mubr.bf16.mxu0 0
    %3957 = vmatmul.mubr.bf16.gmra.mxu0 %v3887
    %v3958 = vpop.f32.mrf.mxu0
    %v3959 = vadd.f32 0.0, %v3958
    %v3960 = vpop.f32.mrf.mxu0
    %v3961 = vpop.f32.mrf.mxu0
    %v3962 = vadd.f32 0.0, %v3961
    %v3963 = vpop.f32.mrf.mxu0
    %3964 = vmatprep.mubr.bf16.mxu0 0
    %3965 = vmatmul.mubr.bf16.gmra.mxu0 %v3888
    %v3966 = vpop.f32.mrf.mxu0
    %v3967 = vadd.f32 0.0, %v3966
    %v3968 = vpop.f32.mrf.mxu0
    %v3969 = vpop.f32.mrf.mxu0
    %v3970 = vadd.f32 0.0, %v3969
    %v3971 = vpop.f32.mrf.mxu0
    %3972 = vmatprep.mubr.bf16.mxu0 0
    %3973 = vmatmul.mubr.bf16.gmra.mxu0 %v3889
    %v3974 = vpop.f32.mrf.mxu0
    %v3975 = vadd.f32 0.0, %v3974
    %v3976 = vpop.f32.mrf.mxu0
    %v3977 = vpop.f32.mrf.mxu0
    %v3978 = vadd.f32 0.0, %v3977
    %v3979 = vpop.f32.mrf.mxu0
    %3980 = vmatprep.mubr.bf16.mxu0 0
    %3981 = vmatmul.mubr.bf16.gmra.mxu0 %v3890
    %v3982 = vpop.f32.mrf.mxu0
    %v3983 = vadd.f32 0.0, %v3982
    %v3984 = vpop.f32.mrf.mxu0
    %v3985 = vpop.f32.mrf.mxu0
    %v3986 = vadd.f32 0.0, %v3985
    %v3987 = vpop.f32.mrf.mxu0
    %3988 = vmatprep.mubr.bf16.mxu0 0
    %3989 = vmatmul.mubr.bf16.gmra.mxu0 %v3891
    %v3990 = vpop.f32.mrf.mxu0
    %v3991 = vadd.f32 0.0, %v3990
    %v3992 = vpop.f32.mrf.mxu0
    %v3993 = vpop.f32.mrf.mxu0
    %v3994 = vadd.f32 0.0, %v3993
    %v3995 = vpop.f32.mrf.mxu0
    %3996 = vdwg.mxu0
    %v3997 = vadd.f32 %v3645, %v3935
    %v3998 = vadd.f32 %v3648, %v3938
    %v3999 = vadd.f32 %v3653, %v3943
    %v4000 = vadd.f32 %v3656, %v3946
    %v4001 = vadd.f32 %v3661, %v3951
    %v4002 = vadd.f32 %v3664, %v3954
    %v4003 = vadd.f32 %v3669, %v3959
    %v4004 = vadd.f32 %v3672, %v3962
    %v4005 = vadd.f32 %v3677, %v3967
    %v4006 = vadd.f32 %v3680, %v3970
    %v4007 = vadd.f32 %v3685, %v3975
    %v4008 = vadd.f32 %v3688, %v3978
    %v4009 = vadd.f32 %v3693, %v3983
    %v4010 = vadd.f32 %v3696, %v3986
    %v4011 = vadd.f32 %v3701, %v3991
    %v4012 = vadd.f32 %v3704, %v3994
    %v4013 = vld [vmem:[#allocation6 + $0x288] sm:$0xf]
    %v4014 = vld [vmem:[#allocation6 + $0x28c] sm:$0xf]
    %v4015 = vld [vmem:[#allocation6 + $0x290] sm:$0xf]
    %v4016 = vld [vmem:[#allocation6 + $0x294] sm:$0xf]
    %v4017 = vld [vmem:[#allocation6 + $0x298] sm:$0xf]
    %v4018 = vld [vmem:[#allocation6 + $0x29c] sm:$0xf]
    %v4025 = vunpack.c.l.b16 %v4013
    %v4026 = vunpack.c.l.b16 %v4014
    %v4027 = vunpack.c.l.b16 %v4015
    %v4028 = vunpack.c.l.b16 %v4016
    %v4029 = vunpack.c.l.b16 %v4017
    %v4030 = vunpack.c.l.b16 %v4018
    %v4031 = vpack.c.b16 %v4026, %v4025
    %v4032 = vpack.c.b16 %v4028, %v4027
    %v4033 = vpack.c.b16 %v4030, %v4029
    %4037 = vmatprep.subr.bf16.mxu0 0
    %4038 = vmatpush1.bf16.msra.mxu0 0
    %4039 = vmatprep.subr.bf16.mxu0 0
    %4040 = vmatpush1.bf16.msra.mxu0 0
    %4041 = vmatprep.subr.bf16.mxu0 0
    %4042 = vmatpush1.bf16.msra.mxu0 0
    %4043 = vmatprep.subr.bf16.mxu0 0
    %4044 = vmatpush1.bf16.msra.mxu0 0
    %4045 = vmatprep.subr.bf16.mxu0 0
    %4046 = vmatpush1.bf16.msra.mxu0 0
    %4047 = vmatprep.subr.bf16.mxu0 0
    %4048 = vmatpush1.bf16.msra.mxu0 %v4033
    %4049 = vmatprep.subr.bf16.mxu0 0
    %4050 = vmatpush1.bf16.msra.mxu0 %v4032
    %4051 = vmatprep.subr.bf16.mxu0 0
    %4052 = vmatpush1.bf16.msra.mxu0 %v4031
    %4053 = vmatprep.subr.bf16.mxu0 0
    %4054 = vmatpush2.bf16.msra.mxu0 0
    %4055 = vmatprep.subr.bf16.mxu0 0
    %4056 = vmatpush2.bf16.msra.mxu0 0
    %4057 = vmatprep.subr.bf16.mxu0 0
    %4058 = vmatpush2.bf16.msra.mxu0 0
    %4059 = vmatprep.subr.bf16.mxu0 0
    %4060 = vmatpush2.bf16.msra.mxu0 0
    %4061 = vmatprep.subr.bf16.mxu0 0
    %4062 = vmatpush2.bf16.msra.mxu0 0
    %4063 = vmatprep.subr.bf16.mxu0 0
    %4064 = vmatpush2.bf16.msra.mxu0 0
    %4065 = vmatprep.subr.bf16.mxu0 0
    %4066 = vmatpush2.bf16.msra.mxu0 0
    %4067 = vmatprep.subr.bf16.mxu0 0
    %4068 = vmatpush2.bf16.msra.mxu0 0
    %4069 = vmatprep.mubr.bf16.mxu0 0
    %4070 = vmatmul.mubr.bf16.gmra.mxu0 %v3128
    %v4071 = vpop.f32.mrf.mxu0
    %v4072 = vadd.f32 0.0, %v4071
    %v4073 = vpop.f32.mrf.mxu0
    %v4074 = vpop.f32.mrf.mxu0
    %v4075 = vadd.f32 0.0, %v4074
    %v4076 = vpop.f32.mrf.mxu0
    %4077 = vmatprep.mubr.bf16.mxu0 0
    %4078 = vmatmul.mubr.bf16.gmra.mxu0 %v3131
    %v4079 = vpop.f32.mrf.mxu0
    %v4080 = vadd.f32 0.0, %v4079
    %v4081 = vpop.f32.mrf.mxu0
    %v4082 = vpop.f32.mrf.mxu0
    %v4083 = vadd.f32 0.0, %v4082
    %v4084 = vpop.f32.mrf.mxu0
    %4085 = vmatprep.mubr.bf16.mxu0 0
    %4086 = vmatmul.mubr.bf16.gmra.mxu0 %v3134
    %v4087 = vpop.f32.mrf.mxu0
    %v4088 = vadd.f32 0.0, %v4087
    %v4089 = vpop.f32.mrf.mxu0
    %v4090 = vpop.f32.mrf.mxu0
    %v4091 = vadd.f32 0.0, %v4090
    %v4092 = vpop.f32.mrf.mxu0
    %4093 = vmatprep.mubr.bf16.mxu0 0
    %4094 = vmatmul.mubr.bf16.gmra.mxu0 %v3137
    %v4095 = vpop.f32.mrf.mxu0
    %v4096 = vadd.f32 0.0, %v4095
    %v4097 = vpop.f32.mrf.mxu0
    %v4098 = vpop.f32.mrf.mxu0
    %v4099 = vadd.f32 0.0, %v4098
    %v4100 = vpop.f32.mrf.mxu0
    %4101 = vmatprep.mubr.bf16.mxu0 0
    %4102 = vmatmul.mubr.bf16.gmra.mxu0 %v3140
    %v4103 = vpop.f32.mrf.mxu0
    %v4104 = vadd.f32 0.0, %v4103
    %v4105 = vpop.f32.mrf.mxu0
    %v4106 = vpop.f32.mrf.mxu0
    %v4107 = vadd.f32 0.0, %v4106
    %v4108 = vpop.f32.mrf.mxu0
    %4109 = vmatprep.mubr.bf16.mxu0 0
    %4110 = vmatmul.mubr.bf16.gmra.mxu0 %v3143
    %v4111 = vpop.f32.mrf.mxu0
    %v4112 = vadd.f32 0.0, %v4111
    %v4113 = vpop.f32.mrf.mxu0
    %v4114 = vpop.f32.mrf.mxu0
    %v4115 = vadd.f32 0.0, %v4114
    %v4116 = vpop.f32.mrf.mxu0
    %4117 = vmatprep.mubr.bf16.mxu0 0
    %4118 = vmatmul.mubr.bf16.gmra.mxu0 %v3146
    %v4119 = vpop.f32.mrf.mxu0
    %v4120 = vadd.f32 0.0, %v4119
    %v4121 = vpop.f32.mrf.mxu0
    %v4122 = vpop.f32.mrf.mxu0
    %v4123 = vadd.f32 0.0, %v4122
    %v4124 = vpop.f32.mrf.mxu0
    %4125 = vmatprep.mubr.bf16.mxu0 0
    %4126 = vmatmul.mubr.bf16.gmra.mxu0 %v3149
    %v4127 = vpop.f32.mrf.mxu0
    %v4128 = vadd.f32 0.0, %v4127
    %v4129 = vpop.f32.mrf.mxu0
    %v4130 = vpop.f32.mrf.mxu0
    %v4131 = vadd.f32 0.0, %v4130
    %v4132 = vpop.f32.mrf.mxu0
    %4133 = vdwg.mxu0
    %v4134 = vpack.c.bf16 %v4075, %v4072
    %v4135 = vpack.c.bf16 %v4083, %v4080
    %v4136 = vpack.c.bf16 %v4091, %v4088
    %v4137 = vpack.c.bf16 %v4099, %v4096
    %v4138 = vpack.c.bf16 %v4107, %v4104
    %v4139 = vpack.c.bf16 %v4115, %v4112
    %v4140 = vpack.c.bf16 %v4123, %v4120
    %v4141 = vpack.c.bf16 %v4131, %v4128
    %v4142 = vld [vmem:[#allocation4 + $0x20c] sm:$0xf]
    %v4143 = vld [vmem:[#allocation4 + $0x21c] sm:$0xf]
    %v4144 = vld [vmem:[#allocation4 + $0x22c] sm:$0xf]
    %v4145 = vld [vmem:[#allocation4 + $0x23c] sm:$0xf]
    %v4146 = vld [vmem:[#allocation4 + $0x24c] sm:$0xf]
    %v4147 = vld [vmem:[#allocation4 + $0x25c] sm:$0xf]
    %v4148 = vld [vmem:[#allocation4 + $0x26c] sm:$0xf]
    %v4149 = vld [vmem:[#allocation4 + $0x27c] sm:$0xf]
    %v4150 = vld [vmem:[#allocation4 + $0x28c] sm:$0xf]
    %v4151 = vld [vmem:[#allocation4 + $0x29c] sm:$0xf]
    %v4152 = vld [vmem:[#allocation4 + $0x2ac] sm:$0xf]
    %v4153 = vld [vmem:[#allocation4 + $0x2bc] sm:$0xf]
    %v4154 = vld [vmem:[#allocation4 + $0x2cc] sm:$0xf]
    %v4155 = vld [vmem:[#allocation4 + $0x2dc] sm:$0xf]
    %v4156 = vld [vmem:[#allocation4 + $0x2ec] sm:$0xf]
    %v4157 = vld [vmem:[#allocation4 + $0x2fc] sm:$0xf]
    %v4174 = vunpack.c.l.b16 %v4142
    %v4175 = vunpack.c.l.b16 %v4143
    %v4176 = vunpack.c.l.b16 %v4144
    %v4177 = vunpack.c.l.b16 %v4145
    %v4178 = vunpack.c.l.b16 %v4146
    %v4179 = vunpack.c.l.b16 %v4147
    %v4180 = vunpack.c.l.b16 %v4148
    %v4181 = vunpack.c.l.b16 %v4149
    %v4182 = vunpack.c.l.b16 %v4150
    %v4183 = vunpack.c.l.b16 %v4151
    %v4184 = vunpack.c.l.b16 %v4152
    %v4185 = vunpack.c.l.b16 %v4153
    %v4186 = vunpack.c.l.b16 %v4154
    %v4187 = vunpack.c.l.b16 %v4155
    %v4188 = vunpack.c.l.b16 %v4156
    %v4189 = vunpack.c.l.b16 %v4157
    %v4190 = vpack.c.b16 %v4175, %v4174
    %v4191 = vpack.c.b16 %v4177, %v4176
    %v4192 = vpack.c.b16 %v4179, %v4178
    %v4193 = vpack.c.b16 %v4181, %v4180
    %v4194 = vpack.c.b16 %v4183, %v4182
    %v4195 = vpack.c.b16 %v4185, %v4184
    %v4196 = vpack.c.b16 %v4187, %v4186
    %v4197 = vpack.c.b16 %v4189, %v4188
    %4206 = vmatprep.subr.bf16.mxu0 0
    %4207 = vmatpush1.bf16.msra.mxu0 %v4141
    %4208 = vmatprep.subr.bf16.mxu0 0
    %4209 = vmatpush1.bf16.msra.mxu0 %v4140
    %4210 = vmatprep.subr.bf16.mxu0 0
    %4211 = vmatpush1.bf16.msra.mxu0 %v4139
    %4212 = vmatprep.subr.bf16.mxu0 0
    %4213 = vmatpush1.bf16.msra.mxu0 %v4138
    %4214 = vmatprep.subr.bf16.mxu0 0
    %4215 = vmatpush1.bf16.msra.mxu0 %v4137
    %4216 = vmatprep.subr.bf16.mxu0 0
    %4217 = vmatpush1.bf16.msra.mxu0 %v4136
    %4218 = vmatprep.subr.bf16.mxu0 0
    %4219 = vmatpush1.bf16.msra.mxu0 %v4135
    %4220 = vmatprep.subr.bf16.mxu0 0
    %4221 = vmatpush1.bf16.msra.mxu0 %v4134
    %4222 = vmatprep.subr.bf16.mxu0 0
    %4223 = vmatpush2.bf16.msra.mxu0 0
    %4224 = vmatprep.subr.bf16.mxu0 0
    %4225 = vmatpush2.bf16.msra.mxu0 0
    %4226 = vmatprep.subr.bf16.mxu0 0
    %4227 = vmatpush2.bf16.msra.mxu0 0
    %4228 = vmatprep.subr.bf16.mxu0 0
    %4229 = vmatpush2.bf16.msra.mxu0 0
    %4230 = vmatprep.subr.bf16.mxu0 0
    %4231 = vmatpush2.bf16.msra.mxu0 0
    %4232 = vmatprep.subr.bf16.mxu0 0
    %4233 = vmatpush2.bf16.msra.mxu0 0
    %4234 = vmatprep.subr.bf16.mxu0 0
    %4235 = vmatpush2.bf16.msra.mxu0 0
    %4236 = vmatprep.subr.bf16.mxu0 0
    %4237 = vmatpush2.bf16.msra.mxu0 0
    %4238 = vmatprep.mubr.bf16.mxu0 0
    %4239 = vmatmul.mubr.bf16.gmra.mxu0 %v4190
    %v4240 = vpop.f32.mrf.mxu0
    %v4241 = vadd.f32 0.0, %v4240
    %v4242 = vpop.f32.mrf.mxu0
    %v4243 = vpop.f32.mrf.mxu0
    %v4244 = vadd.f32 0.0, %v4243
    %v4245 = vpop.f32.mrf.mxu0
    %4246 = vmatprep.mubr.bf16.mxu0 0
    %4247 = vmatmul.mubr.bf16.gmra.mxu0 %v4191
    %v4248 = vpop.f32.mrf.mxu0
    %v4249 = vadd.f32 0.0, %v4248
    %v4250 = vpop.f32.mrf.mxu0
    %v4251 = vpop.f32.mrf.mxu0
    %v4252 = vadd.f32 0.0, %v4251
    %v4253 = vpop.f32.mrf.mxu0
    %4254 = vmatprep.mubr.bf16.mxu0 0
    %4255 = vmatmul.mubr.bf16.gmra.mxu0 %v4192
    %v4256 = vpop.f32.mrf.mxu0
    %v4257 = vadd.f32 0.0, %v4256
    %v4258 = vpop.f32.mrf.mxu0
    %v4259 = vpop.f32.mrf.mxu0
    %v4260 = vadd.f32 0.0, %v4259
    %v4261 = vpop.f32.mrf.mxu0
    %4262 = vmatprep.mubr.bf16.mxu0 0
    %4263 = vmatmul.mubr.bf16.gmra.mxu0 %v4193
    %v4264 = vpop.f32.mrf.mxu0
    %v4265 = vadd.f32 0.0, %v4264
    %v4266 = vpop.f32.mrf.mxu0
    %v4267 = vpop.f32.mrf.mxu0
    %v4268 = vadd.f32 0.0, %v4267
    %v4269 = vpop.f32.mrf.mxu0
    %4270 = vmatprep.mubr.bf16.mxu0 0
    %4271 = vmatmul.mubr.bf16.gmra.mxu0 %v4194
    %v4272 = vpop.f32.mrf.mxu0
    %v4273 = vadd.f32 0.0, %v4272
    %v4274 = vpop.f32.mrf.mxu0
    %v4275 = vpop.f32.mrf.mxu0
    %v4276 = vadd.f32 0.0, %v4275
    %v4277 = vpop.f32.mrf.mxu0
    %4278 = vmatprep.mubr.bf16.mxu0 0
    %4279 = vmatmul.mubr.bf16.gmra.mxu0 %v4195
    %v4280 = vpop.f32.mrf.mxu0
    %v4281 = vadd.f32 0.0, %v4280
    %v4282 = vpop.f32.mrf.mxu0
    %v4283 = vpop.f32.mrf.mxu0
    %v4284 = vadd.f32 0.0, %v4283
    %v4285 = vpop.f32.mrf.mxu0
    %4286 = vmatprep.mubr.bf16.mxu0 0
    %4287 = vmatmul.mubr.bf16.gmra.mxu0 %v4196
    %v4288 = vpop.f32.mrf.mxu0
    %v4289 = vadd.f32 0.0, %v4288
    %v4290 = vpop.f32.mrf.mxu0
    %v4291 = vpop.f32.mrf.mxu0
    %v4292 = vadd.f32 0.0, %v4291
    %v4293 = vpop.f32.mrf.mxu0
    %4294 = vmatprep.mubr.bf16.mxu0 0
    %4295 = vmatmul.mubr.bf16.gmra.mxu0 %v4197
    %v4296 = vpop.f32.mrf.mxu0
    %v4297 = vadd.f32 0.0, %v4296
    %v4298 = vpop.f32.mrf.mxu0
    %v4299 = vpop.f32.mrf.mxu0
    %v4300 = vadd.f32 0.0, %v4299
    %v4301 = vpop.f32.mrf.mxu0
    %4302 = vdwg.mxu0
    %v4303 = vadd.f32 %v3997, %v4241
    %v4304 = vadd.f32 %v3998, %v4244
    %v4305 = vadd.f32 %v3999, %v4249
    %v4306 = vadd.f32 %v4000, %v4252
    %v4307 = vadd.f32 %v4001, %v4257
    %v4308 = vadd.f32 %v4002, %v4260
    %v4309 = vadd.f32 %v4003, %v4265
    %v4310 = vadd.f32 %v4004, %v4268
    %v4311 = vadd.f32 %v4005, %v4273
    %v4312 = vadd.f32 %v4006, %v4276
    %v4313 = vadd.f32 %v4007, %v4281
    %v4314 = vadd.f32 %v4008, %v4284
    %v4315 = vadd.f32 %v4009, %v4289
    %v4316 = vadd.f32 %v4010, %v4292
    %v4317 = vadd.f32 %v4011, %v4297
    %v4318 = vadd.f32 %v4012, %v4300
    %4319 = vset.pattern.permute.xlu0 10
    %4320 = vperm.xlu0 %4319, %v1549
    %v4321 = vpop.permute.xlu0 %4320
    %4323 = vset.pattern.permute.xlu0 10
    %4324 = vperm.xlu0 %4323, %v1550
    %v4325 = vpop.permute.xlu0 %4324
    %4327 = vset.pattern.permute.xlu0 10
    %4328 = vperm.xlu0 %4327, %v1551
    %v4329 = vpop.permute.xlu0 %4328
    %4331 = vset.pattern.permute.xlu0 10
    %4332 = vperm.xlu0 %4331, %v1552
    %v4333 = vpop.permute.xlu0 %4332
    %4335 = vset.pattern.permute.xlu0 10
    %4336 = vperm.xlu0 %4335, %v1553
    %v4337 = vpop.permute.xlu0 %4336
    %4339 = vset.pattern.permute.xlu0 10
    %4340 = vperm.xlu0 %4339, %v1554
    %v4341 = vpop.permute.xlu0 %4340
    %4343 = vset.pattern.permute.xlu0 10
    %4344 = vperm.xlu0 %4343, %v1555
    %v4345 = vpop.permute.xlu0 %4344
    %4347 = vset.pattern.permute.xlu0 10
    %4348 = vperm.xlu0 %4347, %v1556
    %v4349 = vpop.permute.xlu0 %4348
    %4351 = vset.pattern.permute.xlu0 10
    %4352 = vperm.xlu0 %4351, %v1557
    %v4353 = vpop.permute.xlu0 %4352
    %4355 = vset.pattern.permute.xlu0 10
    %4356 = vperm.xlu0 %4355, %v1558
    %v4357 = vpop.permute.xlu0 %4356
    %4359 = vset.pattern.permute.xlu0 10
    %4360 = vperm.xlu0 %4359, %v1559
    %v4361 = vpop.permute.xlu0 %4360
    %4363 = vset.pattern.permute.xlu0 10
    %4364 = vperm.xlu0 %4363, %v1560
    %v4365 = vpop.permute.xlu0 %4364
    %4367 = vset.pattern.permute.xlu0 10
    %4368 = vperm.xlu0 %4367, %v1561
    %v4369 = vpop.permute.xlu0 %4368
    %4371 = vset.pattern.permute.xlu0 10
    %4372 = vperm.xlu0 %4371, %v1562
    %v4373 = vpop.permute.xlu0 %4372
    %4375 = vset.pattern.permute.xlu0 10
    %4376 = vperm.xlu0 %4375, %v1563
    %v4377 = vpop.permute.xlu0 %4376
    %4379 = vset.pattern.permute.xlu0 10
    %4380 = vperm.xlu0 %4379, %v1564
    %v4381 = vpop.permute.xlu0 %4380
    %v4383 = vadd.f32 %v4303, %v4321
    %v4384 = vadd.f32 %v4304, %v4325
    %v4385 = vadd.f32 %v4305, %v4329
    %v4386 = vadd.f32 %v4306, %v4333
    %v4387 = vadd.f32 %v4307, %v4337
    %v4388 = vadd.f32 %v4308, %v4341
    %v4389 = vadd.f32 %v4309, %v4345
    %v4390 = vadd.f32 %v4310, %v4349
    %v4391 = vadd.f32 %v4311, %v4353
    %v4392 = vadd.f32 %v4312, %v4357
    %v4393 = vadd.f32 %v4313, %v4361
    %v4394 = vadd.f32 %v4314, %v4365
    %v4395 = vadd.f32 %v4315, %v4369
    %v4396 = vadd.f32 %v4316, %v4373
    %v4397 = vadd.f32 %v4317, %v4377
    %v4398 = vadd.f32 %v4318, %v4381
    %v4399 = vmax.f32 %v4383, 0.0
    %v4400 = vmax.f32 %v4384, 0.0
    %v4401 = vmax.f32 %v4385, 0.0
    %v4402 = vmax.f32 %v4386, 0.0
    %v4403 = vmax.f32 %v4387, 0.0
    %v4404 = vmax.f32 %v4388, 0.0
    %v4405 = vmax.f32 %v4389, 0.0
    %v4406 = vmax.f32 %v4390, 0.0
    %v4407 = vmax.f32 %v4391, 0.0
    %v4408 = vmax.f32 %v4392, 0.0
    %v4409 = vmax.f32 %v4393, 0.0
    %v4410 = vmax.f32 %v4394, 0.0
    %v4411 = vmax.f32 %v4395, 0.0
    %v4412 = vmax.f32 %v4396, 0.0
    %v4413 = vmax.f32 %v4397, 0.0
    %v4414 = vmax.f32 %v4398, 0.0
    %v4415 = vpack.c.bf16 %v4400, %v4399
    %v4416 = vpack.c.bf16 %v4402, %v4401
    %v4417 = vpack.c.bf16 %v4404, %v4403
    %v4418 = vpack.c.bf16 %v4406, %v4405
    %v4419 = vpack.c.bf16 %v4408, %v4407
    %v4420 = vpack.c.bf16 %v4410, %v4409
    %v4421 = vpack.c.bf16 %v4412, %v4411
    %v4422 = vpack.c.bf16 %v4414, %v4413
    %v4423 = vld [vmem:[#allocation6 + $0x2a0] sm:$0xf]
    %v4424 = vld [vmem:[#allocation6 + $0x2a4] sm:$0xf]
    %v4425 = vld [vmem:[#allocation6 + $0x2a8] sm:$0xf]
    %v4429 = vunpack.c.l.b16 %v4423
    %v4430 = vunpack.c.l.b16 %v4424
    %v4431 = vunpack.c.l.b16 %v4425
    %v4432 = vpack.c.b16 %v4430, %v4429
    %v4433 = vpack.c.b16 %v4431, %v4431
    %vm4435 = vcmask 195584
    %v4437 = vsel %vm4435, %v4415, 0
    %v4440 = vsel %vm4435, %v4416, 0
    %v4443 = vsel %vm4435, %v4417, 0
    %v4446 = vsel %vm4435, %v4418, 0
    %v4449 = vsel %vm4435, %v4419, 0
    %v4452 = vsel %vm4435, %v4420, 0
    %v4455 = vsel %vm4435, %v4421, 0
    %v4458 = vsel %vm4435, %v4422, 0
    %vm4460 = vcmask 1043456
    %v4462 = vsel %vm4460, %v4433, 0
    %4464 = vmatprep.subr.bf16.mxu0 0
    %4465 = vmatpush1.bf16.msra.mxu0 0
    %4466 = vmatprep.subr.bf16.mxu0 0
    %4467 = vmatpush1.bf16.msra.mxu0 0
    %4468 = vmatprep.subr.bf16.mxu0 0
    %4469 = vmatpush1.bf16.msra.mxu0 0
    %4470 = vmatprep.subr.bf16.mxu0 0
    %4471 = vmatpush1.bf16.msra.mxu0 0
    %4472 = vmatprep.subr.bf16.mxu0 0
    %4473 = vmatpush1.bf16.msra.mxu0 0
    %4474 = vmatprep.subr.bf16.mxu0 0
    %4475 = vmatpush1.bf16.msra.mxu0 0
    %4476 = vmatprep.subr.bf16.mxu0 0
    %4477 = vmatpush1.bf16.msra.mxu0 %v4462
    %4478 = vmatprep.subr.bf16.mxu0 0
    %4479 = vmatpush1.bf16.msra.mxu0 %v4432
    %4480 = vmatprep.subr.bf16.mxu0 0
    %4481 = vmatpush2.bf16.msra.mxu0 0
    %4482 = vmatprep.subr.bf16.mxu0 0
    %4483 = vmatpush2.bf16.msra.mxu0 0
    %4484 = vmatprep.subr.bf16.mxu0 0
    %4485 = vmatpush2.bf16.msra.mxu0 0
    %4486 = vmatprep.subr.bf16.mxu0 0
    %4487 = vmatpush2.bf16.msra.mxu0 0
    %4488 = vmatprep.subr.bf16.mxu0 0
    %4489 = vmatpush2.bf16.msra.mxu0 0
    %4490 = vmatprep.subr.bf16.mxu0 0
    %4491 = vmatpush2.bf16.msra.mxu0 0
    %4492 = vmatprep.subr.bf16.mxu0 0
    %4493 = vmatpush2.bf16.msra.mxu0 0
    %4494 = vmatprep.subr.bf16.mxu0 0
    %4495 = vmatpush2.bf16.msra.mxu0 0
    %4496 = vmatprep.mubr.bf16.mxu0 0
    %4497 = vmatmul.mubr.bf16.gmra.mxu0 %v4437
    %v4498 = vpop.f32.mrf.mxu0
    %v4499 = vadd.f32 0.0, %v4498
    %v4500 = vpop.f32.mrf.mxu0
    %v4501 = vpop.f32.mrf.mxu0
    %v4502 = vadd.f32 0.0, %v4501
    %v4503 = vpop.f32.mrf.mxu0
    %4504 = vmatprep.mubr.bf16.mxu0 0
    %4505 = vmatmul.mubr.bf16.gmra.mxu0 %v4440
    %v4506 = vpop.f32.mrf.mxu0
    %v4507 = vadd.f32 0.0, %v4506
    %v4508 = vpop.f32.mrf.mxu0
    %v4509 = vpop.f32.mrf.mxu0
    %v4510 = vadd.f32 0.0, %v4509
    %v4511 = vpop.f32.mrf.mxu0
    %4512 = vmatprep.mubr.bf16.mxu0 0
    %4513 = vmatmul.mubr.bf16.gmra.mxu0 %v4443
    %v4514 = vpop.f32.mrf.mxu0
    %v4515 = vadd.f32 0.0, %v4514
    %v4516 = vpop.f32.mrf.mxu0
    %v4517 = vpop.f32.mrf.mxu0
    %v4518 = vadd.f32 0.0, %v4517
    %v4519 = vpop.f32.mrf.mxu0
    %4520 = vmatprep.mubr.bf16.mxu0 0
    %4521 = vmatmul.mubr.bf16.gmra.mxu0 %v4446
    %v4522 = vpop.f32.mrf.mxu0
    %v4523 = vadd.f32 0.0, %v4522
    %v4524 = vpop.f32.mrf.mxu0
    %v4525 = vpop.f32.mrf.mxu0
    %v4526 = vadd.f32 0.0, %v4525
    %v4527 = vpop.f32.mrf.mxu0
    %4528 = vmatprep.mubr.bf16.mxu0 0
    %4529 = vmatmul.mubr.bf16.gmra.mxu0 %v4449
    %v4530 = vpop.f32.mrf.mxu0
    %v4531 = vadd.f32 0.0, %v4530
    %v4532 = vpop.f32.mrf.mxu0
    %v4533 = vpop.f32.mrf.mxu0
    %v4534 = vadd.f32 0.0, %v4533
    %v4535 = vpop.f32.mrf.mxu0
    %4536 = vmatprep.mubr.bf16.mxu0 0
    %4537 = vmatmul.mubr.bf16.gmra.mxu0 %v4452
    %v4538 = vpop.f32.mrf.mxu0
    %v4539 = vadd.f32 0.0, %v4538
    %v4540 = vpop.f32.mrf.mxu0
    %v4541 = vpop.f32.mrf.mxu0
    %v4542 = vadd.f32 0.0, %v4541
    %v4543 = vpop.f32.mrf.mxu0
    %4544 = vmatprep.mubr.bf16.mxu0 0
    %4545 = vmatmul.mubr.bf16.gmra.mxu0 %v4455
    %v4546 = vpop.f32.mrf.mxu0
    %v4547 = vadd.f32 0.0, %v4546
    %v4548 = vpop.f32.mrf.mxu0
    %v4549 = vpop.f32.mrf.mxu0
    %v4550 = vadd.f32 0.0, %v4549
    %v4551 = vpop.f32.mrf.mxu0
    %4552 = vmatprep.mubr.bf16.mxu0 0
    %4553 = vmatmul.mubr.bf16.gmra.mxu0 %v4458
    %v4554 = vpop.f32.mrf.mxu0
    %v4555 = vadd.f32 0.0, %v4554
    %v4556 = vpop.f32.mrf.mxu0
    %v4557 = vpop.f32.mrf.mxu0
    %v4558 = vadd.f32 0.0, %v4557
    %v4559 = vpop.f32.mrf.mxu0
    %4560 = vdwg.mxu0
    %v4561 = vpack.c.bf16 %v4502, %v4499
    %v4562 = vpack.c.bf16 %v4510, %v4507
    %v4563 = vpack.c.bf16 %v4518, %v4515
    %v4564 = vpack.c.bf16 %v4526, %v4523
    %v4565 = vpack.c.bf16 %v4534, %v4531
    %v4566 = vpack.c.bf16 %v4542, %v4539
    %v4567 = vpack.c.bf16 %v4550, %v4547
    %v4568 = vpack.c.bf16 %v4558, %v4555
    %v4569 = vld [vmem:[#allocation4 + $0x300] sm:$0xf]
    %v4570 = vld [vmem:[#allocation4 + $0x310] sm:$0xf]
    %v4571 = vld [vmem:[#allocation4 + $0x320] sm:$0xf]
    %v4572 = vld [vmem:[#allocation4 + $0x330] sm:$0xf]
    %v4573 = vld [vmem:[#allocation4 + $0x340] sm:$0xf]
    %v4574 = vld [vmem:[#allocation4 + $0x350] sm:$0xf]
    %v4575 = vld [vmem:[#allocation4 + $0x360] sm:$0xf]
    %v4576 = vld [vmem:[#allocation4 + $0x370] sm:$0xf]
    %v4577 = vld [vmem:[#allocation4 + $0x380] sm:$0xf]
    %v4578 = vld [vmem:[#allocation4 + $0x390] sm:$0xf]
    %v4579 = vld [vmem:[#allocation4 + $0x3a0] sm:$0xf]
    %v4580 = vld [vmem:[#allocation4 + $0x3b0] sm:$0xf]
    %v4581 = vld [vmem:[#allocation4 + $0x3c0] sm:$0xf]
    %v4582 = vld [vmem:[#allocation4 + $0x3d0] sm:$0xf]
    %v4583 = vld [vmem:[#allocation4 + $0x3e0] sm:$0xf]
    %v4584 = vld [vmem:[#allocation4 + $0x3f0] sm:$0xf]
    %v4585 = vld [vmem:[#allocation6 + $0x2ac] sm:$0xf]
    %v4586 = vld [vmem:[#allocation6 + $0x2b0] sm:$0xf]
    %v4587 = vld [vmem:[#allocation6 + $0x2b4] sm:$0xf]
    %v4591 = vunpack.c.l.b16 %v4585
    %v4592 = vunpack.c.l.b16 %v4586
    %v4593 = vunpack.c.l.b16 %v4587
    %v4594 = vpack.c.b16 %v4592, %v4591
    %v4595 = vpack.c.b16 %v4593, %v4593
    %v4598 = vsel %vm4460, %v4595, 0
    %4600 = vmatprep.subr.bf16.mxu0 0
    %4601 = vmatpush1.bf16.msra.mxu0 0
    %4602 = vmatprep.subr.bf16.mxu0 0
    %4603 = vmatpush1.bf16.msra.mxu0 0
    %4604 = vmatprep.subr.bf16.mxu0 0
    %4605 = vmatpush1.bf16.msra.mxu0 0
    %4606 = vmatprep.subr.bf16.mxu0 0
    %4607 = vmatpush1.bf16.msra.mxu0 0
    %4608 = vmatprep.subr.bf16.mxu0 0
    %4609 = vmatpush1.bf16.msra.mxu0 0
    %4610 = vmatprep.subr.bf16.mxu0 0
    %4611 = vmatpush1.bf16.msra.mxu0 0
    %4612 = vmatprep.subr.bf16.mxu0 0
    %4613 = vmatpush1.bf16.msra.mxu0 %v4598
    %4614 = vmatprep.subr.bf16.mxu0 0
    %4615 = vmatpush1.bf16.msra.mxu0 %v4594
    %4616 = vmatprep.subr.bf16.mxu0 0
    %4617 = vmatpush2.bf16.msra.mxu0 0
    %4618 = vmatprep.subr.bf16.mxu0 0
    %4619 = vmatpush2.bf16.msra.mxu0 0
    %4620 = vmatprep.subr.bf16.mxu0 0
    %4621 = vmatpush2.bf16.msra.mxu0 0
    %4622 = vmatprep.subr.bf16.mxu0 0
    %4623 = vmatpush2.bf16.msra.mxu0 0
    %4624 = vmatprep.subr.bf16.mxu0 0
    %4625 = vmatpush2.bf16.msra.mxu0 0
    %4626 = vmatprep.subr.bf16.mxu0 0
    %4627 = vmatpush2.bf16.msra.mxu0 0
    %4628 = vmatprep.subr.bf16.mxu0 0
    %4629 = vmatpush2.bf16.msra.mxu0 0
    %4630 = vmatprep.subr.bf16.mxu0 0
    %4631 = vmatpush2.bf16.msra.mxu0 0
    %4632 = vmatprep.mubr.bf16.mxu0 0
    %4633 = vmatmul.mubr.bf16.gmra.mxu0 %v4437
    %v4634 = vpop.f32.mrf.mxu0
    %v4635 = vadd.f32 0.0, %v4634
    %v4636 = vpop.f32.mrf.mxu0
    %v4637 = vpop.f32.mrf.mxu0
    %v4638 = vadd.f32 0.0, %v4637
    %v4639 = vpop.f32.mrf.mxu0
    %4640 = vmatprep.mubr.bf16.mxu0 0
    %4641 = vmatmul.mubr.bf16.gmra.mxu0 %v4440
    %v4642 = vpop.f32.mrf.mxu0
    %v4643 = vadd.f32 0.0, %v4642
    %v4644 = vpop.f32.mrf.mxu0
    %v4645 = vpop.f32.mrf.mxu0
    %v4646 = vadd.f32 0.0, %v4645
    %v4647 = vpop.f32.mrf.mxu0
    %4648 = vmatprep.mubr.bf16.mxu0 0
    %4649 = vmatmul.mubr.bf16.gmra.mxu0 %v4443
    %v4650 = vpop.f32.mrf.mxu0
    %v4651 = vadd.f32 0.0, %v4650
    %v4652 = vpop.f32.mrf.mxu0
    %v4653 = vpop.f32.mrf.mxu0
    %v4654 = vadd.f32 0.0, %v4653
    %v4655 = vpop.f32.mrf.mxu0
    %4656 = vmatprep.mubr.bf16.mxu0 0
    %4657 = vmatmul.mubr.bf16.gmra.mxu0 %v4446
    %v4658 = vpop.f32.mrf.mxu0
    %v4659 = vadd.f32 0.0, %v4658
    %v4660 = vpop.f32.mrf.mxu0
    %v4661 = vpop.f32.mrf.mxu0
    %v4662 = vadd.f32 0.0, %v4661
    %v4663 = vpop.f32.mrf.mxu0
    %4664 = vmatprep.mubr.bf16.mxu0 0
    %4665 = vmatmul.mubr.bf16.gmra.mxu0 %v4449
    %v4666 = vpop.f32.mrf.mxu0
    %v4667 = vadd.f32 0.0, %v4666
    %v4668 = vpop.f32.mrf.mxu0
    %v4669 = vpop.f32.mrf.mxu0
    %v4670 = vadd.f32 0.0, %v4669
    %v4671 = vpop.f32.mrf.mxu0
    %4672 = vmatprep.mubr.bf16.mxu0 0
    %4673 = vmatmul.mubr.bf16.gmra.mxu0 %v4452
    %v4674 = vpop.f32.mrf.mxu0
    %v4675 = vadd.f32 0.0, %v4674
    %v4676 = vpop.f32.mrf.mxu0
    %v4677 = vpop.f32.mrf.mxu0
    %v4678 = vadd.f32 0.0, %v4677
    %v4679 = vpop.f32.mrf.mxu0
    %4680 = vmatprep.mubr.bf16.mxu0 0
    %4681 = vmatmul.mubr.bf16.gmra.mxu0 %v4455
    %v4682 = vpop.f32.mrf.mxu0
    %v4683 = vadd.f32 0.0, %v4682
    %v4684 = vpop.f32.mrf.mxu0
    %v4685 = vpop.f32.mrf.mxu0
    %v4686 = vadd.f32 0.0, %v4685
    %v4687 = vpop.f32.mrf.mxu0
    %4688 = vmatprep.mubr.bf16.mxu0 0
    %4689 = vmatmul.mubr.bf16.gmra.mxu0 %v4458
    %v4690 = vpop.f32.mrf.mxu0
    %v4691 = vadd.f32 0.0, %v4690
    %v4692 = vpop.f32.mrf.mxu0
    %v4693 = vpop.f32.mrf.mxu0
    %v4694 = vadd.f32 0.0, %v4693
    %v4695 = vpop.f32.mrf.mxu0
    %4696 = vdwg.mxu0
    %v4697 = vpack.c.bf16 %v4638, %v4635
    %v4698 = vpack.c.bf16 %v4646, %v4643
    %v4699 = vpack.c.bf16 %v4654, %v4651
    %v4700 = vpack.c.bf16 %v4662, %v4659
    %v4701 = vpack.c.bf16 %v4670, %v4667
    %v4702 = vpack.c.bf16 %v4678, %v4675
    %v4703 = vpack.c.bf16 %v4686, %v4683
    %v4704 = vpack.c.bf16 %v4694, %v4691
    %v4705 = vld [vmem:[#allocation4 + $0x304] sm:$0xf]
    %v4706 = vld [vmem:[#allocation4 + $0x314] sm:$0xf]
    %v4707 = vld [vmem:[#allocation4 + $0x324] sm:$0xf]
    %v4708 = vld [vmem:[#allocation4 + $0x334] sm:$0xf]
    %v4709 = vld [vmem:[#allocation4 + $0x344] sm:$0xf]
    %v4710 = vld [vmem:[#allocation4 + $0x354] sm:$0xf]
    %v4711 = vld [vmem:[#allocation4 + $0x364] sm:$0xf]
    %v4712 = vld [vmem:[#allocation4 + $0x374] sm:$0xf]
    %v4713 = vld [vmem:[#allocation4 + $0x384] sm:$0xf]
    %v4714 = vld [vmem:[#allocation4 + $0x394] sm:$0xf]
    %v4715 = vld [vmem:[#allocation4 + $0x3a4] sm:$0xf]
    %v4716 = vld [vmem:[#allocation4 + $0x3b4] sm:$0xf]
    %v4717 = vld [vmem:[#allocation4 + $0x3c4] sm:$0xf]
    %v4718 = vld [vmem:[#allocation4 + $0x3d4] sm:$0xf]
    %v4719 = vld [vmem:[#allocation4 + $0x3e4] sm:$0xf]
    %v4720 = vld [vmem:[#allocation4 + $0x3f4] sm:$0xf]
    %v4737 = vunpack.c.l.b16 %v4705
    %v4738 = vunpack.c.l.b16 %v4706
    %v4739 = vunpack.c.l.b16 %v4707
    %v4740 = vunpack.c.l.b16 %v4708
    %v4741 = vunpack.c.l.b16 %v4709
    %v4742 = vunpack.c.l.b16 %v4710
    %v4743 = vunpack.c.l.b16 %v4711
    %v4744 = vunpack.c.l.b16 %v4712
    %v4745 = vunpack.c.l.b16 %v4713
    %v4746 = vunpack.c.l.b16 %v4714
    %v4747 = vunpack.c.l.b16 %v4715
    %v4748 = vunpack.c.l.b16 %v4716
    %v4749 = vunpack.c.l.b16 %v4717
    %v4750 = vunpack.c.l.b16 %v4718
    %v4751 = vunpack.c.l.b16 %v4719
    %v4752 = vunpack.c.l.b16 %v4720
    %v4753 = vpack.c.b16 %v4738, %v4737
    %v4754 = vpack.c.b16 %v4740, %v4739
    %v4755 = vpack.c.b16 %v4742, %v4741
    %v4756 = vpack.c.b16 %v4744, %v4743
    %v4757 = vpack.c.b16 %v4746, %v4745
    %v4758 = vpack.c.b16 %v4748, %v4747
    %v4759 = vpack.c.b16 %v4750, %v4749
    %v4760 = vpack.c.b16 %v4752, %v4751
    %4769 = vmatprep.subr.bf16.mxu0 0
    %4770 = vmatpush1.bf16.msra.mxu0 %v4704
    %4771 = vmatprep.subr.bf16.mxu0 0
    %4772 = vmatpush1.bf16.msra.mxu0 %v4703
    %4773 = vmatprep.subr.bf16.mxu0 0
    %4774 = vmatpush1.bf16.msra.mxu0 %v4702
    %4775 = vmatprep.subr.bf16.mxu0 0
    %4776 = vmatpush1.bf16.msra.mxu0 %v4701
    %4777 = vmatprep.subr.bf16.mxu0 0
    %4778 = vmatpush1.bf16.msra.mxu0 %v4700
    %4779 = vmatprep.subr.bf16.mxu0 0
    %4780 = vmatpush1.bf16.msra.mxu0 %v4699
    %4781 = vmatprep.subr.bf16.mxu0 0
    %4782 = vmatpush1.bf16.msra.mxu0 %v4698
    %4783 = vmatprep.subr.bf16.mxu0 0
    %4784 = vmatpush1.bf16.msra.mxu0 %v4697
    %4785 = vmatprep.subr.bf16.mxu0 0
    %4786 = vmatpush2.bf16.msra.mxu0 0
    %4787 = vmatprep.subr.bf16.mxu0 0
    %4788 = vmatpush2.bf16.msra.mxu0 0
    %4789 = vmatprep.subr.bf16.mxu0 0
    %4790 = vmatpush2.bf16.msra.mxu0 0
    %4791 = vmatprep.subr.bf16.mxu0 0
    %4792 = vmatpush2.bf16.msra.mxu0 0
    %4793 = vmatprep.subr.bf16.mxu0 0
    %4794 = vmatpush2.bf16.msra.mxu0 0
    %4795 = vmatprep.subr.bf16.mxu0 0
    %4796 = vmatpush2.bf16.msra.mxu0 0
    %4797 = vmatprep.subr.bf16.mxu0 0
    %4798 = vmatpush2.bf16.msra.mxu0 0
    %4799 = vmatprep.subr.bf16.mxu0 0
    %4800 = vmatpush2.bf16.msra.mxu0 0
    %4801 = vmatprep.mubr.bf16.mxu0 0
    %4802 = vmatmul.mubr.bf16.gmra.mxu0 %v4753
    %v4803 = vpop.f32.mrf.mxu0
    %v4804 = vadd.f32 0.0, %v4803
    %v4805 = vpop.f32.mrf.mxu0
    %v4806 = vpop.f32.mrf.mxu0
    %v4807 = vadd.f32 0.0, %v4806
    %v4808 = vpop.f32.mrf.mxu0
    %4809 = vmatprep.mubr.bf16.mxu0 0
    %4810 = vmatmul.mubr.bf16.gmra.mxu0 %v4754
    %v4811 = vpop.f32.mrf.mxu0
    %v4812 = vadd.f32 0.0, %v4811
    %v4813 = vpop.f32.mrf.mxu0
    %v4814 = vpop.f32.mrf.mxu0
    %v4815 = vadd.f32 0.0, %v4814
    %v4816 = vpop.f32.mrf.mxu0
    %4817 = vmatprep.mubr.bf16.mxu0 0
    %4818 = vmatmul.mubr.bf16.gmra.mxu0 %v4755
    %v4819 = vpop.f32.mrf.mxu0
    %v4820 = vadd.f32 0.0, %v4819
    %v4821 = vpop.f32.mrf.mxu0
    %v4822 = vpop.f32.mrf.mxu0
    %v4823 = vadd.f32 0.0, %v4822
    %v4824 = vpop.f32.mrf.mxu0
    %4825 = vmatprep.mubr.bf16.mxu0 0
    %4826 = vmatmul.mubr.bf16.gmra.mxu0 %v4756
    %v4827 = vpop.f32.mrf.mxu0
    %v4828 = vadd.f32 0.0, %v4827
    %v4829 = vpop.f32.mrf.mxu0
    %v4830 = vpop.f32.mrf.mxu0
    %v4831 = vadd.f32 0.0, %v4830
    %v4832 = vpop.f32.mrf.mxu0
    %4833 = vmatprep.mubr.bf16.mxu0 0
    %4834 = vmatmul.mubr.bf16.gmra.mxu0 %v4757
    %v4835 = vpop.f32.mrf.mxu0
    %v4836 = vadd.f32 0.0, %v4835
    %v4837 = vpop.f32.mrf.mxu0
    %v4838 = vpop.f32.mrf.mxu0
    %v4839 = vadd.f32 0.0, %v4838
    %v4840 = vpop.f32.mrf.mxu0
    %4841 = vmatprep.mubr.bf16.mxu0 0
    %4842 = vmatmul.mubr.bf16.gmra.mxu0 %v4758
    %v4843 = vpop.f32.mrf.mxu0
    %v4844 = vadd.f32 0.0, %v4843
    %v4845 = vpop.f32.mrf.mxu0
    %v4846 = vpop.f32.mrf.mxu0
    %v4847 = vadd.f32 0.0, %v4846
    %v4848 = vpop.f32.mrf.mxu0
    %4849 = vmatprep.mubr.bf16.mxu0 0
    %4850 = vmatmul.mubr.bf16.gmra.mxu0 %v4759
    %v4851 = vpop.f32.mrf.mxu0
    %v4852 = vadd.f32 0.0, %v4851
    %v4853 = vpop.f32.mrf.mxu0
    %v4854 = vpop.f32.mrf.mxu0
    %v4855 = vadd.f32 0.0, %v4854
    %v4856 = vpop.f32.mrf.mxu0
    %4857 = vmatprep.mubr.bf16.mxu0 0
    %4858 = vmatmul.mubr.bf16.gmra.mxu0 %v4760
    %v4859 = vpop.f32.mrf.mxu0
    %v4860 = vadd.f32 0.0, %v4859
    %v4861 = vpop.f32.mrf.mxu0
    %v4862 = vpop.f32.mrf.mxu0
    %v4863 = vadd.f32 0.0, %v4862
    %v4864 = vpop.f32.mrf.mxu0
    %4865 = vdwg.mxu0
    %v4882 = vunpack.c.l.b16 %v4569
    %v4883 = vunpack.c.l.b16 %v4570
    %v4884 = vunpack.c.l.b16 %v4571
    %v4885 = vunpack.c.l.b16 %v4572
    %v4886 = vunpack.c.l.b16 %v4573
    %v4887 = vunpack.c.l.b16 %v4574
    %v4888 = vunpack.c.l.b16 %v4575
    %v4889 = vunpack.c.l.b16 %v4576
    %v4890 = vunpack.c.l.b16 %v4577
    %v4891 = vunpack.c.l.b16 %v4578
    %v4892 = vunpack.c.l.b16 %v4579
    %v4893 = vunpack.c.l.b16 %v4580
    %v4894 = vunpack.c.l.b16 %v4581
    %v4895 = vunpack.c.l.b16 %v4582
    %v4896 = vunpack.c.l.b16 %v4583
    %v4897 = vunpack.c.l.b16 %v4584
    %v4898 = vpack.c.b16 %v4883, %v4882
    %v4899 = vpack.c.b16 %v4885, %v4884
    %v4900 = vpack.c.b16 %v4887, %v4886
    %v4901 = vpack.c.b16 %v4889, %v4888
    %v4902 = vpack.c.b16 %v4891, %v4890
    %v4903 = vpack.c.b16 %v4893, %v4892
    %v4904 = vpack.c.b16 %v4895, %v4894
    %v4905 = vpack.c.b16 %v4897, %v4896
    %4914 = vmatprep.subr.bf16.mxu0 0
    %4915 = vmatpush1.bf16.msra.mxu0 %v4568
    %4916 = vmatprep.subr.bf16.mxu0 0
    %4917 = vmatpush1.bf16.msra.mxu0 %v4567
    %4918 = vmatprep.subr.bf16.mxu0 0
    %4919 = vmatpush1.bf16.msra.mxu0 %v4566
    %4920 = vmatprep.subr.bf16.mxu0 0
    %4921 = vmatpush1.bf16.msra.mxu0 %v4565
    %4922 = vmatprep.subr.bf16.mxu0 0
    %4923 = vmatpush1.bf16.msra.mxu0 %v4564
    %4924 = vmatprep.subr.bf16.mxu0 0
    %4925 = vmatpush1.bf16.msra.mxu0 %v4563
    %4926 = vmatprep.subr.bf16.mxu0 0
    %4927 = vmatpush1.bf16.msra.mxu0 %v4562
    %4928 = vmatprep.subr.bf16.mxu0 0
    %4929 = vmatpush1.bf16.msra.mxu0 %v4561
    %4930 = vmatprep.subr.bf16.mxu0 0
    %4931 = vmatpush2.bf16.msra.mxu0 0
    %4932 = vmatprep.subr.bf16.mxu0 0
    %4933 = vmatpush2.bf16.msra.mxu0 0
    %4934 = vmatprep.subr.bf16.mxu0 0
    %4935 = vmatpush2.bf16.msra.mxu0 0
    %4936 = vmatprep.subr.bf16.mxu0 0
    %4937 = vmatpush2.bf16.msra.mxu0 0
    %4938 = vmatprep.subr.bf16.mxu0 0
    %4939 = vmatpush2.bf16.msra.mxu0 0
    %4940 = vmatprep.subr.bf16.mxu0 0
    %4941 = vmatpush2.bf16.msra.mxu0 0
    %4942 = vmatprep.subr.bf16.mxu0 0
    %4943 = vmatpush2.bf16.msra.mxu0 0
    %4944 = vmatprep.subr.bf16.mxu0 0
    %4945 = vmatpush2.bf16.msra.mxu0 0
    %4946 = vmatprep.mubr.bf16.mxu0 0
    %4947 = vmatmul.mubr.bf16.gmra.mxu0 %v4898
    %v4948 = vpop.f32.mrf.mxu0
    %v4949 = vadd.f32 %v4804, %v4948
    %v4950 = vpop.f32.mrf.mxu0
    %v4951 = vpop.f32.mrf.mxu0
    %v4952 = vadd.f32 %v4807, %v4951
    %v4953 = vpop.f32.mrf.mxu0
    %4954 = vmatprep.mubr.bf16.mxu0 0
    %4955 = vmatmul.mubr.bf16.gmra.mxu0 %v4899
    %v4956 = vpop.f32.mrf.mxu0
    %v4957 = vadd.f32 %v4812, %v4956
    %v4958 = vpop.f32.mrf.mxu0
    %v4959 = vpop.f32.mrf.mxu0
    %v4960 = vadd.f32 %v4815, %v4959
    %v4961 = vpop.f32.mrf.mxu0
    %4962 = vmatprep.mubr.bf16.mxu0 0
    %4963 = vmatmul.mubr.bf16.gmra.mxu0 %v4900
    %v4964 = vpop.f32.mrf.mxu0
    %v4965 = vadd.f32 %v4820, %v4964
    %v4966 = vpop.f32.mrf.mxu0
    %v4967 = vpop.f32.mrf.mxu0
    %v4968 = vadd.f32 %v4823, %v4967
    %v4969 = vpop.f32.mrf.mxu0
    %4970 = vmatprep.mubr.bf16.mxu0 0
    %4971 = vmatmul.mubr.bf16.gmra.mxu0 %v4901
    %v4972 = vpop.f32.mrf.mxu0
    %v4973 = vadd.f32 %v4828, %v4972
    %v4974 = vpop.f32.mrf.mxu0
    %v4975 = vpop.f32.mrf.mxu0
    %v4976 = vadd.f32 %v4831, %v4975
    %v4977 = vpop.f32.mrf.mxu0
    %4978 = vmatprep.mubr.bf16.mxu0 0
    %4979 = vmatmul.mubr.bf16.gmra.mxu0 %v4902
    %v4980 = vpop.f32.mrf.mxu0
    %v4981 = vadd.f32 %v4836, %v4980
    %v4982 = vpop.f32.mrf.mxu0
    %v4983 = vpop.f32.mrf.mxu0
    %v4984 = vadd.f32 %v4839, %v4983
    %v4985 = vpop.f32.mrf.mxu0
    %4986 = vmatprep.mubr.bf16.mxu0 0
    %4987 = vmatmul.mubr.bf16.gmra.mxu0 %v4903
    %v4988 = vpop.f32.mrf.mxu0
    %v4989 = vadd.f32 %v4844, %v4988
    %v4990 = vpop.f32.mrf.mxu0
    %v4991 = vpop.f32.mrf.mxu0
    %v4992 = vadd.f32 %v4847, %v4991
    %v4993 = vpop.f32.mrf.mxu0
    %4994 = vmatprep.mubr.bf16.mxu0 0
    %4995 = vmatmul.mubr.bf16.gmra.mxu0 %v4904
    %v4996 = vpop.f32.mrf.mxu0
    %v4997 = vadd.f32 %v4852, %v4996
    %v4998 = vpop.f32.mrf.mxu0
    %v4999 = vpop.f32.mrf.mxu0
    %v5000 = vadd.f32 %v4855, %v4999
    %v5001 = vpop.f32.mrf.mxu0
    %5002 = vmatprep.mubr.bf16.mxu0 0
    %5003 = vmatmul.mubr.bf16.gmra.mxu0 %v4905
    %v5004 = vpop.f32.mrf.mxu0
    %v5005 = vadd.f32 %v4860, %v5004
    %v5006 = vpop.f32.mrf.mxu0
    %v5007 = vpop.f32.mrf.mxu0
    %v5008 = vadd.f32 %v4863, %v5007
    %v5009 = vpop.f32.mrf.mxu0
    %5010 = vdwg.mxu0
    %v5011 = vld [vmem:[#allocation6 + $0x2b8] sm:$0xf]
    %v5012 = vld [vmem:[#allocation6 + $0x2bc] sm:$0xf]
    %v5013 = vld [vmem:[#allocation6 + $0x2c0] sm:$0xf]
    %v5017 = vunpack.c.l.b16 %v5011
    %v5018 = vunpack.c.l.b16 %v5012
    %v5019 = vunpack.c.l.b16 %v5013
    %v5020 = vpack.c.b16 %v5018, %v5017
    %v5021 = vpack.c.b16 %v5019, %v5019
    %v5024 = vsel %vm4460, %v5021, 0
    %5026 = vmatprep.subr.bf16.mxu0 0
    %5027 = vmatpush1.bf16.msra.mxu0 0
    %5028 = vmatprep.subr.bf16.mxu0 0
    %5029 = vmatpush1.bf16.msra.mxu0 0
    %5030 = vmatprep.subr.bf16.mxu0 0
    %5031 = vmatpush1.bf16.msra.mxu0 0
    %5032 = vmatprep.subr.bf16.mxu0 0
    %5033 = vmatpush1.bf16.msra.mxu0 0
    %5034 = vmatprep.subr.bf16.mxu0 0
    %5035 = vmatpush1.bf16.msra.mxu0 0
    %5036 = vmatprep.subr.bf16.mxu0 0
    %5037 = vmatpush1.bf16.msra.mxu0 0
    %5038 = vmatprep.subr.bf16.mxu0 0
    %5039 = vmatpush1.bf16.msra.mxu0 %v5024
    %5040 = vmatprep.subr.bf16.mxu0 0
    %5041 = vmatpush1.bf16.msra.mxu0 %v5020
    %5042 = vmatprep.subr.bf16.mxu0 0
    %5043 = vmatpush2.bf16.msra.mxu0 0
    %5044 = vmatprep.subr.bf16.mxu0 0
    %5045 = vmatpush2.bf16.msra.mxu0 0
    %5046 = vmatprep.subr.bf16.mxu0 0
    %5047 = vmatpush2.bf16.msra.mxu0 0
    %5048 = vmatprep.subr.bf16.mxu0 0
    %5049 = vmatpush2.bf16.msra.mxu0 0
    %5050 = vmatprep.subr.bf16.mxu0 0
    %5051 = vmatpush2.bf16.msra.mxu0 0
    %5052 = vmatprep.subr.bf16.mxu0 0
    %5053 = vmatpush2.bf16.msra.mxu0 0
    %5054 = vmatprep.subr.bf16.mxu0 0
    %5055 = vmatpush2.bf16.msra.mxu0 0
    %5056 = vmatprep.subr.bf16.mxu0 0
    %5057 = vmatpush2.bf16.msra.mxu0 0
    %5058 = vmatprep.mubr.bf16.mxu0 0
    %5059 = vmatmul.mubr.bf16.gmra.mxu0 %v4437
    %v5060 = vpop.f32.mrf.mxu0
    %v5061 = vadd.f32 0.0, %v5060
    %v5062 = vpop.f32.mrf.mxu0
    %v5063 = vpop.f32.mrf.mxu0
    %v5064 = vadd.f32 0.0, %v5063
    %v5065 = vpop.f32.mrf.mxu0
    %5066 = vmatprep.mubr.bf16.mxu0 0
    %5067 = vmatmul.mubr.bf16.gmra.mxu0 %v4440
    %v5068 = vpop.f32.mrf.mxu0
    %v5069 = vadd.f32 0.0, %v5068
    %v5070 = vpop.f32.mrf.mxu0
    %v5071 = vpop.f32.mrf.mxu0
    %v5072 = vadd.f32 0.0, %v5071
    %v5073 = vpop.f32.mrf.mxu0
    %5074 = vmatprep.mubr.bf16.mxu0 0
    %5075 = vmatmul.mubr.bf16.gmra.mxu0 %v4443
    %v5076 = vpop.f32.mrf.mxu0
    %v5077 = vadd.f32 0.0, %v5076
    %v5078 = vpop.f32.mrf.mxu0
    %v5079 = vpop.f32.mrf.mxu0
    %v5080 = vadd.f32 0.0, %v5079
    %v5081 = vpop.f32.mrf.mxu0
    %5082 = vmatprep.mubr.bf16.mxu0 0
    %5083 = vmatmul.mubr.bf16.gmra.mxu0 %v4446
    %v5084 = vpop.f32.mrf.mxu0
    %v5085 = vadd.f32 0.0, %v5084
    %v5086 = vpop.f32.mrf.mxu0
    %v5087 = vpop.f32.mrf.mxu0
    %v5088 = vadd.f32 0.0, %v5087
    %v5089 = vpop.f32.mrf.mxu0
    %5090 = vmatprep.mubr.bf16.mxu0 0
    %5091 = vmatmul.mubr.bf16.gmra.mxu0 %v4449
    %v5092 = vpop.f32.mrf.mxu0
    %v5093 = vadd.f32 0.0, %v5092
    %v5094 = vpop.f32.mrf.mxu0
    %v5095 = vpop.f32.mrf.mxu0
    %v5096 = vadd.f32 0.0, %v5095
    %v5097 = vpop.f32.mrf.mxu0
    %5098 = vmatprep.mubr.bf16.mxu0 0
    %5099 = vmatmul.mubr.bf16.gmra.mxu0 %v4452
    %v5100 = vpop.f32.mrf.mxu0
    %v5101 = vadd.f32 0.0, %v5100
    %v5102 = vpop.f32.mrf.mxu0
    %v5103 = vpop.f32.mrf.mxu0
    %v5104 = vadd.f32 0.0, %v5103
    %v5105 = vpop.f32.mrf.mxu0
    %5106 = vmatprep.mubr.bf16.mxu0 0
    %5107 = vmatmul.mubr.bf16.gmra.mxu0 %v4455
    %v5108 = vpop.f32.mrf.mxu0
    %v5109 = vadd.f32 0.0, %v5108
    %v5110 = vpop.f32.mrf.mxu0
    %v5111 = vpop.f32.mrf.mxu0
    %v5112 = vadd.f32 0.0, %v5111
    %v5113 = vpop.f32.mrf.mxu0
    %5114 = vmatprep.mubr.bf16.mxu0 0
    %5115 = vmatmul.mubr.bf16.gmra.mxu0 %v4458
    %v5116 = vpop.f32.mrf.mxu0
    %v5117 = vadd.f32 0.0, %v5116
    %v5118 = vpop.f32.mrf.mxu0
    %v5119 = vpop.f32.mrf.mxu0
    %v5120 = vadd.f32 0.0, %v5119
    %v5121 = vpop.f32.mrf.mxu0
    %5122 = vdwg.mxu0
    %v5123 = vpack.c.bf16 %v5064, %v5061
    %v5124 = vpack.c.bf16 %v5072, %v5069
    %v5125 = vpack.c.bf16 %v5080, %v5077
    %v5126 = vpack.c.bf16 %v5088, %v5085
    %v5127 = vpack.c.bf16 %v5096, %v5093
    %v5128 = vpack.c.bf16 %v5104, %v5101
    %v5129 = vpack.c.bf16 %v5112, %v5109
    %v5130 = vpack.c.bf16 %v5120, %v5117
    %v5131 = vld [vmem:[#allocation4 + $0x308] sm:$0xf]
    %v5132 = vld [vmem:[#allocation4 + $0x318] sm:$0xf]
    %v5133 = vld [vmem:[#allocation4 + $0x328] sm:$0xf]
    %v5134 = vld [vmem:[#allocation4 + $0x338] sm:$0xf]
    %v5135 = vld [vmem:[#allocation4 + $0x348] sm:$0xf]
    %v5136 = vld [vmem:[#allocation4 + $0x358] sm:$0xf]
    %v5137 = vld [vmem:[#allocation4 + $0x368] sm:$0xf]
    %v5138 = vld [vmem:[#allocation4 + $0x378] sm:$0xf]
    %v5139 = vld [vmem:[#allocation4 + $0x388] sm:$0xf]
    %v5140 = vld [vmem:[#allocation4 + $0x398] sm:$0xf]
    %v5141 = vld [vmem:[#allocation4 + $0x3a8] sm:$0xf]
    %v5142 = vld [vmem:[#allocation4 + $0x3b8] sm:$0xf]
    %v5143 = vld [vmem:[#allocation4 + $0x3c8] sm:$0xf]
    %v5144 = vld [vmem:[#allocation4 + $0x3d8] sm:$0xf]
    %v5145 = vld [vmem:[#allocation4 + $0x3e8] sm:$0xf]
    %v5146 = vld [vmem:[#allocation4 + $0x3f8] sm:$0xf]
    %v5163 = vunpack.c.l.b16 %v5131
    %v5164 = vunpack.c.l.b16 %v5132
    %v5165 = vunpack.c.l.b16 %v5133
    %v5166 = vunpack.c.l.b16 %v5134
    %v5167 = vunpack.c.l.b16 %v5135
    %v5168 = vunpack.c.l.b16 %v5136
    %v5169 = vunpack.c.l.b16 %v5137
    %v5170 = vunpack.c.l.b16 %v5138
    %v5171 = vunpack.c.l.b16 %v5139
    %v5172 = vunpack.c.l.b16 %v5140
    %v5173 = vunpack.c.l.b16 %v5141
    %v5174 = vunpack.c.l.b16 %v5142
    %v5175 = vunpack.c.l.b16 %v5143
    %v5176 = vunpack.c.l.b16 %v5144
    %v5177 = vunpack.c.l.b16 %v5145
    %v5178 = vunpack.c.l.b16 %v5146
    %v5179 = vpack.c.b16 %v5164, %v5163
    %v5180 = vpack.c.b16 %v5166, %v5165
    %v5181 = vpack.c.b16 %v5168, %v5167
    %v5182 = vpack.c.b16 %v5170, %v5169
    %v5183 = vpack.c.b16 %v5172, %v5171
    %v5184 = vpack.c.b16 %v5174, %v5173
    %v5185 = vpack.c.b16 %v5176, %v5175
    %v5186 = vpack.c.b16 %v5178, %v5177
    %5195 = vmatprep.subr.bf16.mxu0 0
    %5196 = vmatpush1.bf16.msra.mxu0 %v5130
    %5197 = vmatprep.subr.bf16.mxu0 0
    %5198 = vmatpush1.bf16.msra.mxu0 %v5129
    %5199 = vmatprep.subr.bf16.mxu0 0
    %5200 = vmatpush1.bf16.msra.mxu0 %v5128
    %5201 = vmatprep.subr.bf16.mxu0 0
    %5202 = vmatpush1.bf16.msra.mxu0 %v5127
    %5203 = vmatprep.subr.bf16.mxu0 0
    %5204 = vmatpush1.bf16.msra.mxu0 %v5126
    %5205 = vmatprep.subr.bf16.mxu0 0
    %5206 = vmatpush1.bf16.msra.mxu0 %v5125
    %5207 = vmatprep.subr.bf16.mxu0 0
    %5208 = vmatpush1.bf16.msra.mxu0 %v5124
    %5209 = vmatprep.subr.bf16.mxu0 0
    %5210 = vmatpush1.bf16.msra.mxu0 %v5123
    %5211 = vmatprep.subr.bf16.mxu0 0
    %5212 = vmatpush2.bf16.msra.mxu0 0
    %5213 = vmatprep.subr.bf16.mxu0 0
    %5214 = vmatpush2.bf16.msra.mxu0 0
    %5215 = vmatprep.subr.bf16.mxu0 0
    %5216 = vmatpush2.bf16.msra.mxu0 0
    %5217 = vmatprep.subr.bf16.mxu0 0
    %5218 = vmatpush2.bf16.msra.mxu0 0
    %5219 = vmatprep.subr.bf16.mxu0 0
    %5220 = vmatpush2.bf16.msra.mxu0 0
    %5221 = vmatprep.subr.bf16.mxu0 0
    %5222 = vmatpush2.bf16.msra.mxu0 0
    %5223 = vmatprep.subr.bf16.mxu0 0
    %5224 = vmatpush2.bf16.msra.mxu0 0
    %5225 = vmatprep.subr.bf16.mxu0 0
    %5226 = vmatpush2.bf16.msra.mxu0 0
    %5227 = vmatprep.mubr.bf16.mxu0 0
    %5228 = vmatmul.mubr.bf16.gmra.mxu0 %v5179
    %v5229 = vpop.f32.mrf.mxu0
    %v5230 = vadd.f32 0.0, %v5229
    %v5231 = vpop.f32.mrf.mxu0
    %v5232 = vpop.f32.mrf.mxu0
    %v5233 = vadd.f32 0.0, %v5232
    %v5234 = vpop.f32.mrf.mxu0
    %5235 = vmatprep.mubr.bf16.mxu0 0
    %5236 = vmatmul.mubr.bf16.gmra.mxu0 %v5180
    %v5237 = vpop.f32.mrf.mxu0
    %v5238 = vadd.f32 0.0, %v5237
    %v5239 = vpop.f32.mrf.mxu0
    %v5240 = vpop.f32.mrf.mxu0
    %v5241 = vadd.f32 0.0, %v5240
    %v5242 = vpop.f32.mrf.mxu0
    %5243 = vmatprep.mubr.bf16.mxu0 0
    %5244 = vmatmul.mubr.bf16.gmra.mxu0 %v5181
    %v5245 = vpop.f32.mrf.mxu0
    %v5246 = vadd.f32 0.0, %v5245
    %v5247 = vpop.f32.mrf.mxu0
    %v5248 = vpop.f32.mrf.mxu0
    %v5249 = vadd.f32 0.0, %v5248
    %v5250 = vpop.f32.mrf.mxu0
    %5251 = vmatprep.mubr.bf16.mxu0 0
    %5252 = vmatmul.mubr.bf16.gmra.mxu0 %v5182
    %v5253 = vpop.f32.mrf.mxu0
    %v5254 = vadd.f32 0.0, %v5253
    %v5255 = vpop.f32.mrf.mxu0
    %v5256 = vpop.f32.mrf.mxu0
    %v5257 = vadd.f32 0.0, %v5256
    %v5258 = vpop.f32.mrf.mxu0
    %5259 = vmatprep.mubr.bf16.mxu0 0
    %5260 = vmatmul.mubr.bf16.gmra.mxu0 %v5183
    %v5261 = vpop.f32.mrf.mxu0
    %v5262 = vadd.f32 0.0, %v5261
    %v5263 = vpop.f32.mrf.mxu0
    %v5264 = vpop.f32.mrf.mxu0
    %v5265 = vadd.f32 0.0, %v5264
    %v5266 = vpop.f32.mrf.mxu0
    %5267 = vmatprep.mubr.bf16.mxu0 0
    %5268 = vmatmul.mubr.bf16.gmra.mxu0 %v5184
    %v5269 = vpop.f32.mrf.mxu0
    %v5270 = vadd.f32 0.0, %v5269
    %v5271 = vpop.f32.mrf.mxu0
    %v5272 = vpop.f32.mrf.mxu0
    %v5273 = vadd.f32 0.0, %v5272
    %v5274 = vpop.f32.mrf.mxu0
    %5275 = vmatprep.mubr.bf16.mxu0 0
    %5276 = vmatmul.mubr.bf16.gmra.mxu0 %v5185
    %v5277 = vpop.f32.mrf.mxu0
    %v5278 = vadd.f32 0.0, %v5277
    %v5279 = vpop.f32.mrf.mxu0
    %v5280 = vpop.f32.mrf.mxu0
    %v5281 = vadd.f32 0.0, %v5280
    %v5282 = vpop.f32.mrf.mxu0
    %5283 = vmatprep.mubr.bf16.mxu0 0
    %5284 = vmatmul.mubr.bf16.gmra.mxu0 %v5186
    %v5285 = vpop.f32.mrf.mxu0
    %v5286 = vadd.f32 0.0, %v5285
    %v5287 = vpop.f32.mrf.mxu0
    %v5288 = vpop.f32.mrf.mxu0
    %v5289 = vadd.f32 0.0, %v5288
    %v5290 = vpop.f32.mrf.mxu0
    %5291 = vdwg.mxu0
    %v5292 = vadd.f32 %v4949, %v5230
    %v5293 = vadd.f32 %v4952, %v5233
    %v5294 = vadd.f32 %v4957, %v5238
    %v5295 = vadd.f32 %v4960, %v5241
    %v5296 = vadd.f32 %v4965, %v5246
    %v5297 = vadd.f32 %v4968, %v5249
    %v5298 = vadd.f32 %v4973, %v5254
    %v5299 = vadd.f32 %v4976, %v5257
    %v5300 = vadd.f32 %v4981, %v5262
    %v5301 = vadd.f32 %v4984, %v5265
    %v5302 = vadd.f32 %v4989, %v5270
    %v5303 = vadd.f32 %v4992, %v5273
    %v5304 = vadd.f32 %v4997, %v5278
    %v5305 = vadd.f32 %v5000, %v5281
    %v5306 = vadd.f32 %v5005, %v5286
    %v5307 = vadd.f32 %v5008, %v5289
    %v5308 = vld [vmem:[#allocation6 + $0x2c4] sm:$0xf]
    %v5309 = vld [vmem:[#allocation6 + $0x2c8] sm:$0xf]
    %v5310 = vld [vmem:[#allocation6 + $0x2cc] sm:$0xf]
    %v5314 = vunpack.c.l.b16 %v5308
    %v5315 = vunpack.c.l.b16 %v5309
    %v5316 = vunpack.c.l.b16 %v5310
    %v5317 = vpack.c.b16 %v5315, %v5314
    %v5318 = vpack.c.b16 %v5316, %v5316
    %v5321 = vsel %vm4460, %v5318, 0
    %5323 = vmatprep.subr.bf16.mxu0 0
    %5324 = vmatpush1.bf16.msra.mxu0 0
    %5325 = vmatprep.subr.bf16.mxu0 0
    %5326 = vmatpush1.bf16.msra.mxu0 0
    %5327 = vmatprep.subr.bf16.mxu0 0
    %5328 = vmatpush1.bf16.msra.mxu0 0
    %5329 = vmatprep.subr.bf16.mxu0 0
    %5330 = vmatpush1.bf16.msra.mxu0 0
    %5331 = vmatprep.subr.bf16.mxu0 0
    %5332 = vmatpush1.bf16.msra.mxu0 0
    %5333 = vmatprep.subr.bf16.mxu0 0
    %5334 = vmatpush1.bf16.msra.mxu0 0
    %5335 = vmatprep.subr.bf16.mxu0 0
    %5336 = vmatpush1.bf16.msra.mxu0 %v5321
    %5337 = vmatprep.subr.bf16.mxu0 0
    %5338 = vmatpush1.bf16.msra.mxu0 %v5317
    %5339 = vmatprep.subr.bf16.mxu0 0
    %5340 = vmatpush2.bf16.msra.mxu0 0
    %5341 = vmatprep.subr.bf16.mxu0 0
    %5342 = vmatpush2.bf16.msra.mxu0 0
    %5343 = vmatprep.subr.bf16.mxu0 0
    %5344 = vmatpush2.bf16.msra.mxu0 0
    %5345 = vmatprep.subr.bf16.mxu0 0
    %5346 = vmatpush2.bf16.msra.mxu0 0
    %5347 = vmatprep.subr.bf16.mxu0 0
    %5348 = vmatpush2.bf16.msra.mxu0 0
    %5349 = vmatprep.subr.bf16.mxu0 0
    %5350 = vmatpush2.bf16.msra.mxu0 0
    %5351 = vmatprep.subr.bf16.mxu0 0
    %5352 = vmatpush2.bf16.msra.mxu0 0
    %5353 = vmatprep.subr.bf16.mxu0 0
    %5354 = vmatpush2.bf16.msra.mxu0 0
    %5355 = vmatprep.mubr.bf16.mxu0 0
    %5356 = vmatmul.mubr.bf16.gmra.mxu0 %v4437
    %v5357 = vpop.f32.mrf.mxu0
    %v5358 = vadd.f32 0.0, %v5357
    %v5359 = vpop.f32.mrf.mxu0
    %v5360 = vpop.f32.mrf.mxu0
    %v5361 = vadd.f32 0.0, %v5360
    %v5362 = vpop.f32.mrf.mxu0
    %5363 = vmatprep.mubr.bf16.mxu0 0
    %5364 = vmatmul.mubr.bf16.gmra.mxu0 %v4440
    %v5365 = vpop.f32.mrf.mxu0
    %v5366 = vadd.f32 0.0, %v5365
    %v5367 = vpop.f32.mrf.mxu0
    %v5368 = vpop.f32.mrf.mxu0
    %v5369 = vadd.f32 0.0, %v5368
    %v5370 = vpop.f32.mrf.mxu0
    %5371 = vmatprep.mubr.bf16.mxu0 0
    %5372 = vmatmul.mubr.bf16.gmra.mxu0 %v4443
    %v5373 = vpop.f32.mrf.mxu0
    %v5374 = vadd.f32 0.0, %v5373
    %v5375 = vpop.f32.mrf.mxu0
    %v5376 = vpop.f32.mrf.mxu0
    %v5377 = vadd.f32 0.0, %v5376
    %v5378 = vpop.f32.mrf.mxu0
    %5379 = vmatprep.mubr.bf16.mxu0 0
    %5380 = vmatmul.mubr.bf16.gmra.mxu0 %v4446
    %v5381 = vpop.f32.mrf.mxu0
    %v5382 = vadd.f32 0.0, %v5381
    %v5383 = vpop.f32.mrf.mxu0
    %v5384 = vpop.f32.mrf.mxu0
    %v5385 = vadd.f32 0.0, %v5384
    %v5386 = vpop.f32.mrf.mxu0
    %5387 = vmatprep.mubr.bf16.mxu0 0
    %5388 = vmatmul.mubr.bf16.gmra.mxu0 %v4449
    %v5389 = vpop.f32.mrf.mxu0
    %v5390 = vadd.f32 0.0, %v5389
    %v5391 = vpop.f32.mrf.mxu0
    %v5392 = vpop.f32.mrf.mxu0
    %v5393 = vadd.f32 0.0, %v5392
    %v5394 = vpop.f32.mrf.mxu0
    %5395 = vmatprep.mubr.bf16.mxu0 0
    %5396 = vmatmul.mubr.bf16.gmra.mxu0 %v4452
    %v5397 = vpop.f32.mrf.mxu0
    %v5398 = vadd.f32 0.0, %v5397
    %v5399 = vpop.f32.mrf.mxu0
    %v5400 = vpop.f32.mrf.mxu0
    %v5401 = vadd.f32 0.0, %v5400
    %v5402 = vpop.f32.mrf.mxu0
    %5403 = vmatprep.mubr.bf16.mxu0 0
    %5404 = vmatmul.mubr.bf16.gmra.mxu0 %v4455
    %v5405 = vpop.f32.mrf.mxu0
    %v5406 = vadd.f32 0.0, %v5405
    %v5407 = vpop.f32.mrf.mxu0
    %v5408 = vpop.f32.mrf.mxu0
    %v5409 = vadd.f32 0.0, %v5408
    %v5410 = vpop.f32.mrf.mxu0
    %5411 = vmatprep.mubr.bf16.mxu0 0
    %5412 = vmatmul.mubr.bf16.gmra.mxu0 %v4458
    %v5413 = vpop.f32.mrf.mxu0
    %v5414 = vadd.f32 0.0, %v5413
    %v5415 = vpop.f32.mrf.mxu0
    %v5416 = vpop.f32.mrf.mxu0
    %v5417 = vadd.f32 0.0, %v5416
    %v5418 = vpop.f32.mrf.mxu0
    %5419 = vdwg.mxu0
    %v5420 = vpack.c.bf16 %v5361, %v5358
    %v5421 = vpack.c.bf16 %v5369, %v5366
    %v5422 = vpack.c.bf16 %v5377, %v5374
    %v5423 = vpack.c.bf16 %v5385, %v5382
    %v5424 = vpack.c.bf16 %v5393, %v5390
    %v5425 = vpack.c.bf16 %v5401, %v5398
    %v5426 = vpack.c.bf16 %v5409, %v5406
    %v5427 = vpack.c.bf16 %v5417, %v5414
    %v5428 = vld [vmem:[#allocation4 + $0x30c] sm:$0xf]
    %v5429 = vld [vmem:[#allocation4 + $0x31c] sm:$0xf]
    %v5430 = vld [vmem:[#allocation4 + $0x32c] sm:$0xf]
    %v5431 = vld [vmem:[#allocation4 + $0x33c] sm:$0xf]
    %v5432 = vld [vmem:[#allocation4 + $0x34c] sm:$0xf]
    %v5433 = vld [vmem:[#allocation4 + $0x35c] sm:$0xf]
    %v5434 = vld [vmem:[#allocation4 + $0x36c] sm:$0xf]
    %v5435 = vld [vmem:[#allocation4 + $0x37c] sm:$0xf]
    %v5436 = vld [vmem:[#allocation4 + $0x38c] sm:$0xf]
    %v5437 = vld [vmem:[#allocation4 + $0x39c] sm:$0xf]
    %v5438 = vld [vmem:[#allocation4 + $0x3ac] sm:$0xf]
    %v5439 = vld [vmem:[#allocation4 + $0x3bc] sm:$0xf]
    %v5440 = vld [vmem:[#allocation4 + $0x3cc] sm:$0xf]
    %v5441 = vld [vmem:[#allocation4 + $0x3dc] sm:$0xf]
    %v5442 = vld [vmem:[#allocation4 + $0x3ec] sm:$0xf]
    %v5443 = vld [vmem:[#allocation4 + $0x3fc] sm:$0xf]
    %v5460 = vunpack.c.l.b16 %v5428
    %v5461 = vunpack.c.l.b16 %v5429
    %v5462 = vunpack.c.l.b16 %v5430
    %v5463 = vunpack.c.l.b16 %v5431
    %v5464 = vunpack.c.l.b16 %v5432
    %v5465 = vunpack.c.l.b16 %v5433
    %v5466 = vunpack.c.l.b16 %v5434
    %v5467 = vunpack.c.l.b16 %v5435
    %v5468 = vunpack.c.l.b16 %v5436
    %v5469 = vunpack.c.l.b16 %v5437
    %v5470 = vunpack.c.l.b16 %v5438
    %v5471 = vunpack.c.l.b16 %v5439
    %v5472 = vunpack.c.l.b16 %v5440
    %v5473 = vunpack.c.l.b16 %v5441
    %v5474 = vunpack.c.l.b16 %v5442
    %v5475 = vunpack.c.l.b16 %v5443
    %v5476 = vpack.c.b16 %v5461, %v5460
    %v5477 = vpack.c.b16 %v5463, %v5462
    %v5478 = vpack.c.b16 %v5465, %v5464
    %v5479 = vpack.c.b16 %v5467, %v5466
    %v5480 = vpack.c.b16 %v5469, %v5468
    %v5481 = vpack.c.b16 %v5471, %v5470
    %v5482 = vpack.c.b16 %v5473, %v5472
    %v5483 = vpack.c.b16 %v5475, %v5474
    %5492 = vmatprep.subr.bf16.mxu0 0
    %5493 = vmatpush1.bf16.msra.mxu0 %v5427
    %5494 = vmatprep.subr.bf16.mxu0 0
    %5495 = vmatpush1.bf16.msra.mxu0 %v5426
    %5496 = vmatprep.subr.bf16.mxu0 0
    %5497 = vmatpush1.bf16.msra.mxu0 %v5425
    %5498 = vmatprep.subr.bf16.mxu0 0
    %5499 = vmatpush1.bf16.msra.mxu0 %v5424
    %5500 = vmatprep.subr.bf16.mxu0 0
    %5501 = vmatpush1.bf16.msra.mxu0 %v5423
    %5502 = vmatprep.subr.bf16.mxu0 0
    %5503 = vmatpush1.bf16.msra.mxu0 %v5422
    %5504 = vmatprep.subr.bf16.mxu0 0
    %5505 = vmatpush1.bf16.msra.mxu0 %v5421
    %5506 = vmatprep.subr.bf16.mxu0 0
    %5507 = vmatpush1.bf16.msra.mxu0 %v5420
    %5508 = vmatprep.subr.bf16.mxu0 0
    %5509 = vmatpush2.bf16.msra.mxu0 0
    %5510 = vmatprep.subr.bf16.mxu0 0
    %5511 = vmatpush2.bf16.msra.mxu0 0
    %5512 = vmatprep.subr.bf16.mxu0 0
    %5513 = vmatpush2.bf16.msra.mxu0 0
    %5514 = vmatprep.subr.bf16.mxu0 0
    %5515 = vmatpush2.bf16.msra.mxu0 0
    %5516 = vmatprep.subr.bf16.mxu0 0
    %5517 = vmatpush2.bf16.msra.mxu0 0
    %5518 = vmatprep.subr.bf16.mxu0 0
    %5519 = vmatpush2.bf16.msra.mxu0 0
    %5520 = vmatprep.subr.bf16.mxu0 0
    %5521 = vmatpush2.bf16.msra.mxu0 0
    %5522 = vmatprep.subr.bf16.mxu0 0
    %5523 = vmatpush2.bf16.msra.mxu0 0
    %5524 = vmatprep.mubr.bf16.mxu0 0
    %5525 = vmatmul.mubr.bf16.gmra.mxu0 %v5476
    %v5526 = vpop.f32.mrf.mxu0
    %v5527 = vadd.f32 0.0, %v5526
    %v5528 = vpop.f32.mrf.mxu0
    %v5529 = vpop.f32.mrf.mxu0
    %v5530 = vadd.f32 0.0, %v5529
    %v5531 = vpop.f32.mrf.mxu0
    %5532 = vmatprep.mubr.bf16.mxu0 0
    %5533 = vmatmul.mubr.bf16.gmra.mxu0 %v5477
    %v5534 = vpop.f32.mrf.mxu0
    %v5535 = vadd.f32 0.0, %v5534
    %v5536 = vpop.f32.mrf.mxu0
    %v5537 = vpop.f32.mrf.mxu0
    %v5538 = vadd.f32 0.0, %v5537
    %v5539 = vpop.f32.mrf.mxu0
    %5540 = vmatprep.mubr.bf16.mxu0 0
    %5541 = vmatmul.mubr.bf16.gmra.mxu0 %v5478
    %v5542 = vpop.f32.mrf.mxu0
    %v5543 = vadd.f32 0.0, %v5542
    %v5544 = vpop.f32.mrf.mxu0
    %v5545 = vpop.f32.mrf.mxu0
    %v5546 = vadd.f32 0.0, %v5545
    %v5547 = vpop.f32.mrf.mxu0
    %5548 = vmatprep.mubr.bf16.mxu0 0
    %5549 = vmatmul.mubr.bf16.gmra.mxu0 %v5479
    %v5550 = vpop.f32.mrf.mxu0
    %v5551 = vadd.f32 0.0, %v5550
    %v5552 = vpop.f32.mrf.mxu0
    %v5553 = vpop.f32.mrf.mxu0
    %v5554 = vadd.f32 0.0, %v5553
    %v5555 = vpop.f32.mrf.mxu0
    %5556 = vmatprep.mubr.bf16.mxu0 0
    %5557 = vmatmul.mubr.bf16.gmra.mxu0 %v5480
    %v5558 = vpop.f32.mrf.mxu0
    %v5559 = vadd.f32 0.0, %v5558
    %v5560 = vpop.f32.mrf.mxu0
    %v5561 = vpop.f32.mrf.mxu0
    %v5562 = vadd.f32 0.0, %v5561
    %v5563 = vpop.f32.mrf.mxu0
    %5564 = vmatprep.mubr.bf16.mxu0 0
    %5565 = vmatmul.mubr.bf16.gmra.mxu0 %v5481
    %v5566 = vpop.f32.mrf.mxu0
    %v5567 = vadd.f32 0.0, %v5566
    %v5568 = vpop.f32.mrf.mxu0
    %v5569 = vpop.f32.mrf.mxu0
    %v5570 = vadd.f32 0.0, %v5569
    %v5571 = vpop.f32.mrf.mxu0
    %5572 = vmatprep.mubr.bf16.mxu0 0
    %5573 = vmatmul.mubr.bf16.gmra.mxu0 %v5482
    %v5574 = vpop.f32.mrf.mxu0
    %v5575 = vadd.f32 0.0, %v5574
    %v5576 = vpop.f32.mrf.mxu0
    %v5577 = vpop.f32.mrf.mxu0
    %v5578 = vadd.f32 0.0, %v5577
    %v5579 = vpop.f32.mrf.mxu0
    %5580 = vmatprep.mubr.bf16.mxu0 0
    %5581 = vmatmul.mubr.bf16.gmra.mxu0 %v5483
    %v5582 = vpop.f32.mrf.mxu0
    %v5583 = vadd.f32 0.0, %v5582
    %v5584 = vpop.f32.mrf.mxu0
    %v5585 = vpop.f32.mrf.mxu0
    %v5586 = vadd.f32 0.0, %v5585
    %v5587 = vpop.f32.mrf.mxu0
    %5588 = vdwg.mxu0
    %v5589 = vadd.f32 %v5292, %v5527
    %v5590 = vadd.f32 %v5293, %v5530
    %v5591 = vadd.f32 %v5294, %v5535
    %v5592 = vadd.f32 %v5295, %v5538
    %v5593 = vadd.f32 %v5296, %v5543
    %v5594 = vadd.f32 %v5297, %v5546
    %v5595 = vadd.f32 %v5298, %v5551
    %v5596 = vadd.f32 %v5299, %v5554
    %v5597 = vadd.f32 %v5300, %v5559
    %v5598 = vadd.f32 %v5301, %v5562
    %v5599 = vadd.f32 %v5302, %v5567
    %v5600 = vadd.f32 %v5303, %v5570
    %v5601 = vadd.f32 %v5304, %v5575
    %v5602 = vadd.f32 %v5305, %v5578
    %v5603 = vadd.f32 %v5306, %v5583
    %v5604 = vadd.f32 %v5307, %v5586
    %5605 = vset.pattern.permute.xlu0 11
    %5606 = vperm.xlu0 %5605, %v1549
    %v5607 = vpop.permute.xlu0 %5606
    %5609 = vset.pattern.permute.xlu0 11
    %5610 = vperm.xlu0 %5609, %v1550
    %v5611 = vpop.permute.xlu0 %5610
    %5613 = vset.pattern.permute.xlu0 11
    %5614 = vperm.xlu0 %5613, %v1551
    %v5615 = vpop.permute.xlu0 %5614
    %5617 = vset.pattern.permute.xlu0 11
    %5618 = vperm.xlu0 %5617, %v1552
    %v5619 = vpop.permute.xlu0 %5618
    %5621 = vset.pattern.permute.xlu0 11
    %5622 = vperm.xlu0 %5621, %v1553
    %v5623 = vpop.permute.xlu0 %5622
    %5625 = vset.pattern.permute.xlu0 11
    %5626 = vperm.xlu0 %5625, %v1554
    %v5627 = vpop.permute.xlu0 %5626
    %5629 = vset.pattern.permute.xlu0 11
    %5630 = vperm.xlu0 %5629, %v1555
    %v5631 = vpop.permute.xlu0 %5630
    %5633 = vset.pattern.permute.xlu0 11
    %5634 = vperm.xlu0 %5633, %v1556
    %v5635 = vpop.permute.xlu0 %5634
    %5637 = vset.pattern.permute.xlu0 11
    %5638 = vperm.xlu0 %5637, %v1557
    %v5639 = vpop.permute.xlu0 %5638
    %5641 = vset.pattern.permute.xlu0 11
    %5642 = vperm.xlu0 %5641, %v1558
    %v5643 = vpop.permute.xlu0 %5642
    %5645 = vset.pattern.permute.xlu0 11
    %5646 = vperm.xlu0 %5645, %v1559
    %v5647 = vpop.permute.xlu0 %5646
    %5649 = vset.pattern.permute.xlu0 11
    %5650 = vperm.xlu0 %5649, %v1560
    %v5651 = vpop.permute.xlu0 %5650
    %5653 = vset.pattern.permute.xlu0 11
    %5654 = vperm.xlu0 %5653, %v1561
    %v5655 = vpop.permute.xlu0 %5654
    %5657 = vset.pattern.permute.xlu0 11
    %5658 = vperm.xlu0 %5657, %v1562
    %v5659 = vpop.permute.xlu0 %5658
    %5661 = vset.pattern.permute.xlu0 11
    %5662 = vperm.xlu0 %5661, %v1563
    %v5663 = vpop.permute.xlu0 %5662
    %5665 = vset.pattern.permute.xlu0 11
    %5666 = vperm.xlu0 %5665, %v1564
    %v5667 = vpop.permute.xlu0 %5666
    %v5669 = vadd.f32 %v5589, %v5607
    %v5670 = vadd.f32 %v5590, %v5611
    %v5671 = vadd.f32 %v5591, %v5615
    %v5672 = vadd.f32 %v5592, %v5619
    %v5673 = vadd.f32 %v5593, %v5623
    %v5674 = vadd.f32 %v5594, %v5627
    %v5675 = vadd.f32 %v5595, %v5631
    %v5676 = vadd.f32 %v5596, %v5635
    %v5677 = vadd.f32 %v5597, %v5639
    %v5678 = vadd.f32 %v5598, %v5643
    %v5679 = vadd.f32 %v5599, %v5647
    %v5680 = vadd.f32 %v5600, %v5651
    %v5681 = vadd.f32 %v5601, %v5655
    %v5682 = vadd.f32 %v5602, %v5659
    %v5683 = vadd.f32 %v5603, %v5663
    %v5684 = vadd.f32 %v5604, %v5667
    %v5685 = vmax.f32 %v5669, 0.0
    %v5686 = vmax.f32 %v5670, 0.0
    %v5687 = vmax.f32 %v5671, 0.0
    %v5688 = vmax.f32 %v5672, 0.0
    %v5689 = vmax.f32 %v5673, 0.0
    %v5690 = vmax.f32 %v5674, 0.0
    %v5691 = vmax.f32 %v5675, 0.0
    %v5692 = vmax.f32 %v5676, 0.0
    %v5693 = vmax.f32 %v5677, 0.0
    %v5694 = vmax.f32 %v5678, 0.0
    %v5695 = vmax.f32 %v5679, 0.0
    %v5696 = vmax.f32 %v5680, 0.0
    %v5697 = vmax.f32 %v5681, 0.0
    %v5698 = vmax.f32 %v5682, 0.0
    %v5699 = vmax.f32 %v5683, 0.0
    %v5700 = vmax.f32 %v5684, 0.0
    %v5701 = vpack.c.bf16 %v5686, %v5685
    %v5702 = vpack.c.bf16 %v5688, %v5687
    %v5703 = vpack.c.bf16 %v5690, %v5689
    %v5704 = vpack.c.bf16 %v5692, %v5691
    %v5705 = vpack.c.bf16 %v5694, %v5693
    %v5706 = vpack.c.bf16 %v5696, %v5695
    %v5707 = vpack.c.bf16 %v5698, %v5697
    %v5708 = vpack.c.bf16 %v5700, %v5699
    %v5709 = vld [vmem:[#allocation6 + $0x2d0] sm:$0xf]
    %v5710 = vld [vmem:[#allocation6 + $0x2d4] sm:$0x3]
    %v5713 = vunpack.c.l.b16 %v5709
    %v5714 = vunpack.c.l.b16 %v5710
    %v5715 = vpack.c.b16 %v5714, %v5713
    %vm5716 = vcmask 97280
    %v5718 = vsel %vm5716, %v5701, 0
    %v5721 = vsel %vm5716, %v5702, 0
    %v5724 = vsel %vm5716, %v5703, 0
    %v5727 = vsel %vm5716, %v5704, 0
    %v5730 = vsel %vm5716, %v5705, 0
    %v5733 = vsel %vm5716, %v5706, 0
    %v5736 = vsel %vm5716, %v5707, 0
    %v5739 = vsel %vm5716, %v5708, 0
    %vm5741 = vcmask 1045504
    %v5743 = vsel %vm5741, %v5715, 0
    %5745 = vmatprep.subr.bf16.mxu0 0
    %5746 = vmatpush1.bf16.msra.mxu0 0
    %5747 = vmatprep.subr.bf16.mxu0 0
    %5748 = vmatpush1.bf16.msra.mxu0 0
    %5749 = vmatprep.subr.bf16.mxu0 0
    %5750 = vmatpush1.bf16.msra.mxu0 0
    %5751 = vmatprep.subr.bf16.mxu0 0
    %5752 = vmatpush1.bf16.msra.mxu0 0
    %5753 = vmatprep.subr.bf16.mxu0 0
    %5754 = vmatpush1.bf16.msra.mxu0 0
    %5755 = vmatprep.subr.bf16.mxu0 0
    %5756 = vmatpush1.bf16.msra.mxu0 0
    %5757 = vmatprep.subr.bf16.mxu0 0
    %5758 = vmatpush1.bf16.msra.mxu0 0
    %5759 = vmatprep.subr.bf16.mxu0 0
    %5760 = vmatpush1.bf16.msra.mxu0 %v5743
    %5761 = vmatprep.subr.bf16.mxu0 0
    %5762 = vmatpush2.bf16.msra.mxu0 0
    %5763 = vmatprep.subr.bf16.mxu0 0
    %5764 = vmatpush2.bf16.msra.mxu0 0
    %5765 = vmatprep.subr.bf16.mxu0 0
    %5766 = vmatpush2.bf16.msra.mxu0 0
    %5767 = vmatprep.subr.bf16.mxu0 0
    %5768 = vmatpush2.bf16.msra.mxu0 0
    %5769 = vmatprep.subr.bf16.mxu0 0
    %5770 = vmatpush2.bf16.msra.mxu0 0
    %5771 = vmatprep.subr.bf16.mxu0 0
    %5772 = vmatpush2.bf16.msra.mxu0 0
    %5773 = vmatprep.subr.bf16.mxu0 0
    %5774 = vmatpush2.bf16.msra.mxu0 0
    %5775 = vmatprep.subr.bf16.mxu0 0
    %5776 = vmatpush2.bf16.msra.mxu0 0
    %5777 = vmatprep.mubr.bf16.mxu0 0
    %5778 = vmatmul.mubr.bf16.gmra.mxu0 %v5718
    %v5779 = vpop.f32.mrf.mxu0
    %v5780 = vadd.f32 0.0, %v5779
    %v5781 = vpop.f32.mrf.mxu0
    %v5782 = vpop.f32.mrf.mxu0
    %v5783 = vadd.f32 0.0, %v5782
    %v5784 = vpop.f32.mrf.mxu0
    %5785 = vmatprep.mubr.bf16.mxu0 0
    %5786 = vmatmul.mubr.bf16.gmra.mxu0 %v5721
    %v5787 = vpop.f32.mrf.mxu0
    %v5788 = vadd.f32 0.0, %v5787
    %v5789 = vpop.f32.mrf.mxu0
    %v5790 = vpop.f32.mrf.mxu0
    %v5791 = vadd.f32 0.0, %v5790
    %v5792 = vpop.f32.mrf.mxu0
    %5793 = vmatprep.mubr.bf16.mxu0 0
    %5794 = vmatmul.mubr.bf16.gmra.mxu0 %v5724
    %v5795 = vpop.f32.mrf.mxu0
    %v5796 = vadd.f32 0.0, %v5795
    %v5797 = vpop.f32.mrf.mxu0
    %v5798 = vpop.f32.mrf.mxu0
    %v5799 = vadd.f32 0.0, %v5798
    %v5800 = vpop.f32.mrf.mxu0
    %5801 = vmatprep.mubr.bf16.mxu0 0
    %5802 = vmatmul.mubr.bf16.gmra.mxu0 %v5727
    %v5803 = vpop.f32.mrf.mxu0
    %v5804 = vadd.f32 0.0, %v5803
    %v5805 = vpop.f32.mrf.mxu0
    %v5806 = vpop.f32.mrf.mxu0
    %v5807 = vadd.f32 0.0, %v5806
    %v5808 = vpop.f32.mrf.mxu0
    %5809 = vmatprep.mubr.bf16.mxu0 0
    %5810 = vmatmul.mubr.bf16.gmra.mxu0 %v5730
    %v5811 = vpop.f32.mrf.mxu0
    %v5812 = vadd.f32 0.0, %v5811
    %v5813 = vpop.f32.mrf.mxu0
    %v5814 = vpop.f32.mrf.mxu0
    %v5815 = vadd.f32 0.0, %v5814
    %v5816 = vpop.f32.mrf.mxu0
    %5817 = vmatprep.mubr.bf16.mxu0 0
    %5818 = vmatmul.mubr.bf16.gmra.mxu0 %v5733
    %v5819 = vpop.f32.mrf.mxu0
    %v5820 = vadd.f32 0.0, %v5819
    %v5821 = vpop.f32.mrf.mxu0
    %v5822 = vpop.f32.mrf.mxu0
    %v5823 = vadd.f32 0.0, %v5822
    %v5824 = vpop.f32.mrf.mxu0
    %5825 = vmatprep.mubr.bf16.mxu0 0
    %5826 = vmatmul.mubr.bf16.gmra.mxu0 %v5736
    %v5827 = vpop.f32.mrf.mxu0
    %v5828 = vadd.f32 0.0, %v5827
    %v5829 = vpop.f32.mrf.mxu0
    %v5830 = vpop.f32.mrf.mxu0
    %v5831 = vadd.f32 0.0, %v5830
    %v5832 = vpop.f32.mrf.mxu0
    %5833 = vmatprep.mubr.bf16.mxu0 0
    %5834 = vmatmul.mubr.bf16.gmra.mxu0 %v5739
    %v5835 = vpop.f32.mrf.mxu0
    %v5836 = vadd.f32 0.0, %v5835
    %v5837 = vpop.f32.mrf.mxu0
    %v5838 = vpop.f32.mrf.mxu0
    %v5839 = vadd.f32 0.0, %v5838
    %v5840 = vpop.f32.mrf.mxu0
    %5841 = vdwg.mxu0
    %v5842 = vpack.c.bf16 %v5783, %v5780
    %v5843 = vpack.c.bf16 %v5791, %v5788
    %v5844 = vpack.c.bf16 %v5799, %v5796
    %v5845 = vpack.c.bf16 %v5807, %v5804
    %v5846 = vpack.c.bf16 %v5815, %v5812
    %v5847 = vpack.c.bf16 %v5823, %v5820
    %v5848 = vpack.c.bf16 %v5831, %v5828
    %v5849 = vpack.c.bf16 %v5839, %v5836
    %v5850 = vld [vmem:[#allocation4 + $0x400] sm:$0xf]
    %v5851 = vld [vmem:[#allocation4 + $0x410] sm:$0xf]
    %v5852 = vld [vmem:[#allocation4 + $0x420] sm:$0xf]
    %v5853 = vld [vmem:[#allocation4 + $0x430] sm:$0xf]
    %v5854 = vld [vmem:[#allocation4 + $0x440] sm:$0xf]
    %v5855 = vld [vmem:[#allocation4 + $0x450] sm:$0xf]
    %v5856 = vld [vmem:[#allocation4 + $0x460] sm:$0xf]
    %v5857 = vld [vmem:[#allocation4 + $0x470] sm:$0xf]
    %v5858 = vld [vmem:[#allocation6 + $0x2d8] sm:$0xf]
    %v5859 = vld [vmem:[#allocation6 + $0x2dc] sm:$0x3]
    %v5862 = vunpack.c.l.b16 %v5858
    %v5863 = vunpack.c.l.b16 %v5859
    %v5864 = vpack.c.b16 %v5863, %v5862
    %v5866 = vsel %vm5741, %v5864, 0
    %5868 = vmatprep.subr.bf16.mxu0 0
    %5869 = vmatpush1.bf16.msra.mxu0 0
    %5870 = vmatprep.subr.bf16.mxu0 0
    %5871 = vmatpush1.bf16.msra.mxu0 0
    %5872 = vmatprep.subr.bf16.mxu0 0
    %5873 = vmatpush1.bf16.msra.mxu0 0
    %5874 = vmatprep.subr.bf16.mxu0 0
    %5875 = vmatpush1.bf16.msra.mxu0 0
    %5876 = vmatprep.subr.bf16.mxu0 0
    %5877 = vmatpush1.bf16.msra.mxu0 0
    %5878 = vmatprep.subr.bf16.mxu0 0
    %5879 = vmatpush1.bf16.msra.mxu0 0
    %5880 = vmatprep.subr.bf16.mxu0 0
    %5881 = vmatpush1.bf16.msra.mxu0 0
    %5882 = vmatprep.subr.bf16.mxu0 0
    %5883 = vmatpush1.bf16.msra.mxu0 %v5866
    %5884 = vmatprep.subr.bf16.mxu0 0
    %5885 = vmatpush2.bf16.msra.mxu0 0
    %5886 = vmatprep.subr.bf16.mxu0 0
    %5887 = vmatpush2.bf16.msra.mxu0 0
    %5888 = vmatprep.subr.bf16.mxu0 0
    %5889 = vmatpush2.bf16.msra.mxu0 0
    %5890 = vmatprep.subr.bf16.mxu0 0
    %5891 = vmatpush2.bf16.msra.mxu0 0
    %5892 = vmatprep.subr.bf16.mxu0 0
    %5893 = vmatpush2.bf16.msra.mxu0 0
    %5894 = vmatprep.subr.bf16.mxu0 0
    %5895 = vmatpush2.bf16.msra.mxu0 0
    %5896 = vmatprep.subr.bf16.mxu0 0
    %5897 = vmatpush2.bf16.msra.mxu0 0
    %5898 = vmatprep.subr.bf16.mxu0 0
    %5899 = vmatpush2.bf16.msra.mxu0 0
    %5900 = vmatprep.mubr.bf16.mxu0 0
    %5901 = vmatmul.mubr.bf16.gmra.mxu0 %v5718
    %v5902 = vpop.f32.mrf.mxu0
    %v5903 = vadd.f32 0.0, %v5902
    %v5904 = vpop.f32.mrf.mxu0
    %v5905 = vpop.f32.mrf.mxu0
    %v5906 = vadd.f32 0.0, %v5905
    %v5907 = vpop.f32.mrf.mxu0
    %5908 = vmatprep.mubr.bf16.mxu0 0
    %5909 = vmatmul.mubr.bf16.gmra.mxu0 %v5721
    %v5910 = vpop.f32.mrf.mxu0
    %v5911 = vadd.f32 0.0, %v5910
    %v5912 = vpop.f32.mrf.mxu0
    %v5913 = vpop.f32.mrf.mxu0
    %v5914 = vadd.f32 0.0, %v5913
    %v5915 = vpop.f32.mrf.mxu0
    %5916 = vmatprep.mubr.bf16.mxu0 0
    %5917 = vmatmul.mubr.bf16.gmra.mxu0 %v5724
    %v5918 = vpop.f32.mrf.mxu0
    %v5919 = vadd.f32 0.0, %v5918
    %v5920 = vpop.f32.mrf.mxu0
    %v5921 = vpop.f32.mrf.mxu0
    %v5922 = vadd.f32 0.0, %v5921
    %v5923 = vpop.f32.mrf.mxu0
    %5924 = vmatprep.mubr.bf16.mxu0 0
    %5925 = vmatmul.mubr.bf16.gmra.mxu0 %v5727
    %v5926 = vpop.f32.mrf.mxu0
    %v5927 = vadd.f32 0.0, %v5926
    %v5928 = vpop.f32.mrf.mxu0
    %v5929 = vpop.f32.mrf.mxu0
    %v5930 = vadd.f32 0.0, %v5929
    %v5931 = vpop.f32.mrf.mxu0
    %5932 = vmatprep.mubr.bf16.mxu0 0
    %5933 = vmatmul.mubr.bf16.gmra.mxu0 %v5730
    %v5934 = vpop.f32.mrf.mxu0
    %v5935 = vadd.f32 0.0, %v5934
    %v5936 = vpop.f32.mrf.mxu0
    %v5937 = vpop.f32.mrf.mxu0
    %v5938 = vadd.f32 0.0, %v5937
    %v5939 = vpop.f32.mrf.mxu0
    %5940 = vmatprep.mubr.bf16.mxu0 0
    %5941 = vmatmul.mubr.bf16.gmra.mxu0 %v5733
    %v5942 = vpop.f32.mrf.mxu0
    %v5943 = vadd.f32 0.0, %v5942
    %v5944 = vpop.f32.mrf.mxu0
    %v5945 = vpop.f32.mrf.mxu0
    %v5946 = vadd.f32 0.0, %v5945
    %v5947 = vpop.f32.mrf.mxu0
    %5948 = vmatprep.mubr.bf16.mxu0 0
    %5949 = vmatmul.mubr.bf16.gmra.mxu0 %v5736
    %v5950 = vpop.f32.mrf.mxu0
    %v5951 = vadd.f32 0.0, %v5950
    %v5952 = vpop.f32.mrf.mxu0
    %v5953 = vpop.f32.mrf.mxu0
    %v5954 = vadd.f32 0.0, %v5953
    %v5955 = vpop.f32.mrf.mxu0
    %5956 = vmatprep.mubr.bf16.mxu0 0
    %5957 = vmatmul.mubr.bf16.gmra.mxu0 %v5739
    %v5958 = vpop.f32.mrf.mxu0
    %v5959 = vadd.f32 0.0, %v5958
    %v5960 = vpop.f32.mrf.mxu0
    %v5961 = vpop.f32.mrf.mxu0
    %v5962 = vadd.f32 0.0, %v5961
    %v5963 = vpop.f32.mrf.mxu0
    %5964 = vdwg.mxu0
    %v5965 = vpack.c.bf16 %v5906, %v5903
    %v5966 = vpack.c.bf16 %v5914, %v5911
    %v5967 = vpack.c.bf16 %v5922, %v5919
    %v5968 = vpack.c.bf16 %v5930, %v5927
    %v5969 = vpack.c.bf16 %v5938, %v5935
    %v5970 = vpack.c.bf16 %v5946, %v5943
    %v5971 = vpack.c.bf16 %v5954, %v5951
    %v5972 = vpack.c.bf16 %v5962, %v5959
    %v5973 = vld [vmem:[#allocation4 + $0x404] sm:$0xf]
    %v5974 = vld [vmem:[#allocation4 + $0x414] sm:$0xf]
    %v5975 = vld [vmem:[#allocation4 + $0x424] sm:$0xf]
    %v5976 = vld [vmem:[#allocation4 + $0x434] sm:$0xf]
    %v5977 = vld [vmem:[#allocation4 + $0x444] sm:$0xf]
    %v5978 = vld [vmem:[#allocation4 + $0x454] sm:$0xf]
    %v5979 = vld [vmem:[#allocation4 + $0x464] sm:$0xf]
    %v5980 = vld [vmem:[#allocation4 + $0x474] sm:$0xf]
    %v5989 = vunpack.c.l.b16 %v5973
    %v5990 = vunpack.c.l.b16 %v5974
    %v5991 = vunpack.c.l.b16 %v5975
    %v5992 = vunpack.c.l.b16 %v5976
    %v5993 = vunpack.c.l.b16 %v5977
    %v5994 = vunpack.c.l.b16 %v5978
    %v5995 = vunpack.c.l.b16 %v5979
    %v5996 = vunpack.c.l.b16 %v5980
    %v5997 = vpack.c.b16 %v5990, %v5989
    %v5998 = vpack.c.b16 %v5992, %v5991
    %v5999 = vpack.c.b16 %v5994, %v5993
    %v6000 = vpack.c.b16 %v5996, %v5995
    %6005 = vmatprep.subr.bf16.mxu0 0
    %6006 = vmatpush1.bf16.msra.mxu0 %v5972
    %6007 = vmatprep.subr.bf16.mxu0 0
    %6008 = vmatpush1.bf16.msra.mxu0 %v5971
    %6009 = vmatprep.subr.bf16.mxu0 0
    %6010 = vmatpush1.bf16.msra.mxu0 %v5970
    %6011 = vmatprep.subr.bf16.mxu0 0
    %6012 = vmatpush1.bf16.msra.mxu0 %v5969
    %6013 = vmatprep.subr.bf16.mxu0 0
    %6014 = vmatpush1.bf16.msra.mxu0 %v5968
    %6015 = vmatprep.subr.bf16.mxu0 0
    %6016 = vmatpush1.bf16.msra.mxu0 %v5967
    %6017 = vmatprep.subr.bf16.mxu0 0
    %6018 = vmatpush1.bf16.msra.mxu0 %v5966
    %6019 = vmatprep.subr.bf16.mxu0 0
    %6020 = vmatpush1.bf16.msra.mxu0 %v5965
    %6021 = vmatprep.subr.bf16.mxu0 0
    %6022 = vmatpush2.bf16.msra.mxu0 0
    %6023 = vmatprep.subr.bf16.mxu0 0
    %6024 = vmatpush2.bf16.msra.mxu0 0
    %6025 = vmatprep.subr.bf16.mxu0 0
    %6026 = vmatpush2.bf16.msra.mxu0 0
    %6027 = vmatprep.subr.bf16.mxu0 0
    %6028 = vmatpush2.bf16.msra.mxu0 0
    %6029 = vmatprep.subr.bf16.mxu0 0
    %6030 = vmatpush2.bf16.msra.mxu0 0
    %6031 = vmatprep.subr.bf16.mxu0 0
    %6032 = vmatpush2.bf16.msra.mxu0 0
    %6033 = vmatprep.subr.bf16.mxu0 0
    %6034 = vmatpush2.bf16.msra.mxu0 0
    %6035 = vmatprep.subr.bf16.mxu0 0
    %6036 = vmatpush2.bf16.msra.mxu0 0
    %6037 = vmatprep.mubr.bf16.mxu0 0
    %6038 = vmatmul.mubr.bf16.gmra.mxu0 %v5997
    %v6039 = vpop.f32.mrf.mxu0
    %v6040 = vadd.f32 0.0, %v6039
    %v6041 = vpop.f32.mrf.mxu0
    %v6042 = vpop.f32.mrf.mxu0
    %v6043 = vadd.f32 0.0, %v6042
    %v6044 = vpop.f32.mrf.mxu0
    %6045 = vmatprep.mubr.bf16.mxu0 0
    %6046 = vmatmul.mubr.bf16.gmra.mxu0 %v5998
    %v6047 = vpop.f32.mrf.mxu0
    %v6048 = vadd.f32 0.0, %v6047
    %v6049 = vpop.f32.mrf.mxu0
    %v6050 = vpop.f32.mrf.mxu0
    %v6051 = vadd.f32 0.0, %v6050
    %v6052 = vpop.f32.mrf.mxu0
    %6053 = vmatprep.mubr.bf16.mxu0 0
    %6054 = vmatmul.mubr.bf16.gmra.mxu0 %v5999
    %v6055 = vpop.f32.mrf.mxu0
    %v6056 = vadd.f32 0.0, %v6055
    %v6057 = vpop.f32.mrf.mxu0
    %v6058 = vpop.f32.mrf.mxu0
    %v6059 = vadd.f32 0.0, %v6058
    %v6060 = vpop.f32.mrf.mxu0
    %6061 = vmatprep.mubr.bf16.mxu0 0
    %6062 = vmatmul.mubr.bf16.gmra.mxu0 %v6000
    %v6063 = vpop.f32.mrf.mxu0
    %v6064 = vadd.f32 0.0, %v6063
    %v6065 = vpop.f32.mrf.mxu0
    %v6066 = vpop.f32.mrf.mxu0
    %v6067 = vadd.f32 0.0, %v6066
    %v6068 = vpop.f32.mrf.mxu0
    %6069 = vdwg.mxu0
    %v6078 = vunpack.c.l.b16 %v5850
    %v6079 = vunpack.c.l.b16 %v5851
    %v6080 = vunpack.c.l.b16 %v5852
    %v6081 = vunpack.c.l.b16 %v5853
    %v6082 = vunpack.c.l.b16 %v5854
    %v6083 = vunpack.c.l.b16 %v5855
    %v6084 = vunpack.c.l.b16 %v5856
    %v6085 = vunpack.c.l.b16 %v5857
    %v6086 = vpack.c.b16 %v6079, %v6078
    %v6087 = vpack.c.b16 %v6081, %v6080
    %v6088 = vpack.c.b16 %v6083, %v6082
    %v6089 = vpack.c.b16 %v6085, %v6084
    %6094 = vmatprep.subr.bf16.mxu0 0
    %6095 = vmatpush1.bf16.msra.mxu0 %v5849
    %6096 = vmatprep.subr.bf16.mxu0 0
    %6097 = vmatpush1.bf16.msra.mxu0 %v5848
    %6098 = vmatprep.subr.bf16.mxu0 0
    %6099 = vmatpush1.bf16.msra.mxu0 %v5847
    %6100 = vmatprep.subr.bf16.mxu0 0
    %6101 = vmatpush1.bf16.msra.mxu0 %v5846
    %6102 = vmatprep.subr.bf16.mxu0 0
    %6103 = vmatpush1.bf16.msra.mxu0 %v5845
    %6104 = vmatprep.subr.bf16.mxu0 0
    %6105 = vmatpush1.bf16.msra.mxu0 %v5844
    %6106 = vmatprep.subr.bf16.mxu0 0
    %6107 = vmatpush1.bf16.msra.mxu0 %v5843
    %6108 = vmatprep.subr.bf16.mxu0 0
    %6109 = vmatpush1.bf16.msra.mxu0 %v5842
    %6110 = vmatprep.subr.bf16.mxu0 0
    %6111 = vmatpush2.bf16.msra.mxu0 0
    %6112 = vmatprep.subr.bf16.mxu0 0
    %6113 = vmatpush2.bf16.msra.mxu0 0
    %6114 = vmatprep.subr.bf16.mxu0 0
    %6115 = vmatpush2.bf16.msra.mxu0 0
    %6116 = vmatprep.subr.bf16.mxu0 0
    %6117 = vmatpush2.bf16.msra.mxu0 0
    %6118 = vmatprep.subr.bf16.mxu0 0
    %6119 = vmatpush2.bf16.msra.mxu0 0
    %6120 = vmatprep.subr.bf16.mxu0 0
    %6121 = vmatpush2.bf16.msra.mxu0 0
    %6122 = vmatprep.subr.bf16.mxu0 0
    %6123 = vmatpush2.bf16.msra.mxu0 0
    %6124 = vmatprep.subr.bf16.mxu0 0
    %6125 = vmatpush2.bf16.msra.mxu0 0
    %6126 = vmatprep.mubr.bf16.mxu0 0
    %6127 = vmatmul.mubr.bf16.gmra.mxu0 %v6086
    %v6128 = vpop.f32.mrf.mxu0
    %v6129 = vadd.f32 %v6040, %v6128
    %v6130 = vpop.f32.mrf.mxu0
    %v6131 = vpop.f32.mrf.mxu0
    %v6132 = vadd.f32 %v6043, %v6131
    %v6133 = vpop.f32.mrf.mxu0
    %6134 = vmatprep.mubr.bf16.mxu0 0
    %6135 = vmatmul.mubr.bf16.gmra.mxu0 %v6087
    %v6136 = vpop.f32.mrf.mxu0
    %v6137 = vadd.f32 %v6048, %v6136
    %v6138 = vpop.f32.mrf.mxu0
    %v6139 = vpop.f32.mrf.mxu0
    %v6140 = vadd.f32 %v6051, %v6139
    %v6141 = vpop.f32.mrf.mxu0
    %6142 = vmatprep.mubr.bf16.mxu0 0
    %6143 = vmatmul.mubr.bf16.gmra.mxu0 %v6088
    %v6144 = vpop.f32.mrf.mxu0
    %v6145 = vadd.f32 %v6056, %v6144
    %v6146 = vpop.f32.mrf.mxu0
    %v6147 = vpop.f32.mrf.mxu0
    %v6148 = vadd.f32 %v6059, %v6147
    %v6149 = vpop.f32.mrf.mxu0
    %6150 = vmatprep.mubr.bf16.mxu0 0
    %6151 = vmatmul.mubr.bf16.gmra.mxu0 %v6089
    %v6152 = vpop.f32.mrf.mxu0
    %v6153 = vadd.f32 %v6064, %v6152
    %v6154 = vpop.f32.mrf.mxu0
    %v6155 = vpop.f32.mrf.mxu0
    %v6156 = vadd.f32 %v6067, %v6155
    %v6157 = vpop.f32.mrf.mxu0
    %6158 = vdwg.mxu0
    %v6159 = vld [vmem:[#allocation6 + $0x2e0] sm:$0xf]
    %v6160 = vld [vmem:[#allocation6 + $0x2e4] sm:$0x3]
    %v6163 = vunpack.c.l.b16 %v6159
    %v6164 = vunpack.c.l.b16 %v6160
    %v6165 = vpack.c.b16 %v6164, %v6163
    %v6167 = vsel %vm5741, %v6165, 0
    %6169 = vmatprep.subr.bf16.mxu0 0
    %6170 = vmatpush1.bf16.msra.mxu0 0
    %6171 = vmatprep.subr.bf16.mxu0 0
    %6172 = vmatpush1.bf16.msra.mxu0 0
    %6173 = vmatprep.subr.bf16.mxu0 0
    %6174 = vmatpush1.bf16.msra.mxu0 0
    %6175 = vmatprep.subr.bf16.mxu0 0
    %6176 = vmatpush1.bf16.msra.mxu0 0
    %6177 = vmatprep.subr.bf16.mxu0 0
    %6178 = vmatpush1.bf16.msra.mxu0 0
    %6179 = vmatprep.subr.bf16.mxu0 0
    %6180 = vmatpush1.bf16.msra.mxu0 0
    %6181 = vmatprep.subr.bf16.mxu0 0
    %6182 = vmatpush1.bf16.msra.mxu0 0
    %6183 = vmatprep.subr.bf16.mxu0 0
    %6184 = vmatpush1.bf16.msra.mxu0 %v6167
    %6185 = vmatprep.subr.bf16.mxu0 0
    %6186 = vmatpush2.bf16.msra.mxu0 0
    %6187 = vmatprep.subr.bf16.mxu0 0
    %6188 = vmatpush2.bf16.msra.mxu0 0
    %6189 = vmatprep.subr.bf16.mxu0 0
    %6190 = vmatpush2.bf16.msra.mxu0 0
    %6191 = vmatprep.subr.bf16.mxu0 0
    %6192 = vmatpush2.bf16.msra.mxu0 0
    %6193 = vmatprep.subr.bf16.mxu0 0
    %6194 = vmatpush2.bf16.msra.mxu0 0
    %6195 = vmatprep.subr.bf16.mxu0 0
    %6196 = vmatpush2.bf16.msra.mxu0 0
    %6197 = vmatprep.subr.bf16.mxu0 0
    %6198 = vmatpush2.bf16.msra.mxu0 0
    %6199 = vmatprep.subr.bf16.mxu0 0
    %6200 = vmatpush2.bf16.msra.mxu0 0
    %6201 = vmatprep.mubr.bf16.mxu0 0
    %6202 = vmatmul.mubr.bf16.gmra.mxu0 %v5718
    %v6203 = vpop.f32.mrf.mxu0
    %v6204 = vadd.f32 0.0, %v6203
    %v6205 = vpop.f32.mrf.mxu0
    %v6206 = vpop.f32.mrf.mxu0
    %v6207 = vadd.f32 0.0, %v6206
    %v6208 = vpop.f32.mrf.mxu0
    %6209 = vmatprep.mubr.bf16.mxu0 0
    %6210 = vmatmul.mubr.bf16.gmra.mxu0 %v5721
    %v6211 = vpop.f32.mrf.mxu0
    %v6212 = vadd.f32 0.0, %v6211
    %v6213 = vpop.f32.mrf.mxu0
    %v6214 = vpop.f32.mrf.mxu0
    %v6215 = vadd.f32 0.0, %v6214
    %v6216 = vpop.f32.mrf.mxu0
    %6217 = vmatprep.mubr.bf16.mxu0 0
    %6218 = vmatmul.mubr.bf16.gmra.mxu0 %v5724
    %v6219 = vpop.f32.mrf.mxu0
    %v6220 = vadd.f32 0.0, %v6219
    %v6221 = vpop.f32.mrf.mxu0
    %v6222 = vpop.f32.mrf.mxu0
    %v6223 = vadd.f32 0.0, %v6222
    %v6224 = vpop.f32.mrf.mxu0
    %6225 = vmatprep.mubr.bf16.mxu0 0
    %6226 = vmatmul.mubr.bf16.gmra.mxu0 %v5727
    %v6227 = vpop.f32.mrf.mxu0
    %v6228 = vadd.f32 0.0, %v6227
    %v6229 = vpop.f32.mrf.mxu0
    %v6230 = vpop.f32.mrf.mxu0
    %v6231 = vadd.f32 0.0, %v6230
    %v6232 = vpop.f32.mrf.mxu0
    %6233 = vmatprep.mubr.bf16.mxu0 0
    %6234 = vmatmul.mubr.bf16.gmra.mxu0 %v5730
    %v6235 = vpop.f32.mrf.mxu0
    %v6236 = vadd.f32 0.0, %v6235
    %v6237 = vpop.f32.mrf.mxu0
    %v6238 = vpop.f32.mrf.mxu0
    %v6239 = vadd.f32 0.0, %v6238
    %v6240 = vpop.f32.mrf.mxu0
    %6241 = vmatprep.mubr.bf16.mxu0 0
    %6242 = vmatmul.mubr.bf16.gmra.mxu0 %v5733
    %v6243 = vpop.f32.mrf.mxu0
    %v6244 = vadd.f32 0.0, %v6243
    %v6245 = vpop.f32.mrf.mxu0
    %v6246 = vpop.f32.mrf.mxu0
    %v6247 = vadd.f32 0.0, %v6246
    %v6248 = vpop.f32.mrf.mxu0
    %6249 = vmatprep.mubr.bf16.mxu0 0
    %6250 = vmatmul.mubr.bf16.gmra.mxu0 %v5736
    %v6251 = vpop.f32.mrf.mxu0
    %v6252 = vadd.f32 0.0, %v6251
    %v6253 = vpop.f32.mrf.mxu0
    %v6254 = vpop.f32.mrf.mxu0
    %v6255 = vadd.f32 0.0, %v6254
    %v6256 = vpop.f32.mrf.mxu0
    %6257 = vmatprep.mubr.bf16.mxu0 0
    %6258 = vmatmul.mubr.bf16.gmra.mxu0 %v5739
    %v6259 = vpop.f32.mrf.mxu0
    %v6260 = vadd.f32 0.0, %v6259
    %v6261 = vpop.f32.mrf.mxu0
    %v6262 = vpop.f32.mrf.mxu0
    %v6263 = vadd.f32 0.0, %v6262
    %v6264 = vpop.f32.mrf.mxu0
    %6265 = vdwg.mxu0
    %v6266 = vpack.c.bf16 %v6207, %v6204
    %v6267 = vpack.c.bf16 %v6215, %v6212
    %v6268 = vpack.c.bf16 %v6223, %v6220
    %v6269 = vpack.c.bf16 %v6231, %v6228
    %v6270 = vpack.c.bf16 %v6239, %v6236
    %v6271 = vpack.c.bf16 %v6247, %v6244
    %v6272 = vpack.c.bf16 %v6255, %v6252
    %v6273 = vpack.c.bf16 %v6263, %v6260
    %v6274 = vld [vmem:[#allocation4 + $0x408] sm:$0xf]
    %v6275 = vld [vmem:[#allocation4 + $0x418] sm:$0xf]
    %v6276 = vld [vmem:[#allocation4 + $0x428] sm:$0xf]
    %v6277 = vld [vmem:[#allocation4 + $0x438] sm:$0xf]
    %v6278 = vld [vmem:[#allocation4 + $0x448] sm:$0xf]
    %v6279 = vld [vmem:[#allocation4 + $0x458] sm:$0xf]
    %v6280 = vld [vmem:[#allocation4 + $0x468] sm:$0xf]
    %v6281 = vld [vmem:[#allocation4 + $0x478] sm:$0xf]
    %v6290 = vunpack.c.l.b16 %v6274
    %v6291 = vunpack.c.l.b16 %v6275
    %v6292 = vunpack.c.l.b16 %v6276
    %v6293 = vunpack.c.l.b16 %v6277
    %v6294 = vunpack.c.l.b16 %v6278
    %v6295 = vunpack.c.l.b16 %v6279
    %v6296 = vunpack.c.l.b16 %v6280
    %v6297 = vunpack.c.l.b16 %v6281
    %v6298 = vpack.c.b16 %v6291, %v6290
    %v6299 = vpack.c.b16 %v6293, %v6292
    %v6300 = vpack.c.b16 %v6295, %v6294
    %v6301 = vpack.c.b16 %v6297, %v6296
    %6306 = vmatprep.subr.bf16.mxu0 0
    %6307 = vmatpush1.bf16.msra.mxu0 %v6273
    %6308 = vmatprep.subr.bf16.mxu0 0
    %6309 = vmatpush1.bf16.msra.mxu0 %v6272
    %6310 = vmatprep.subr.bf16.mxu0 0
    %6311 = vmatpush1.bf16.msra.mxu0 %v6271
    %6312 = vmatprep.subr.bf16.mxu0 0
    %6313 = vmatpush1.bf16.msra.mxu0 %v6270
    %6314 = vmatprep.subr.bf16.mxu0 0
    %6315 = vmatpush1.bf16.msra.mxu0 %v6269
    %6316 = vmatprep.subr.bf16.mxu0 0
    %6317 = vmatpush1.bf16.msra.mxu0 %v6268
    %6318 = vmatprep.subr.bf16.mxu0 0
    %6319 = vmatpush1.bf16.msra.mxu0 %v6267
    %6320 = vmatprep.subr.bf16.mxu0 0
    %6321 = vmatpush1.bf16.msra.mxu0 %v6266
    %6322 = vmatprep.subr.bf16.mxu0 0
    %6323 = vmatpush2.bf16.msra.mxu0 0
    %6324 = vmatprep.subr.bf16.mxu0 0
    %6325 = vmatpush2.bf16.msra.mxu0 0
    %6326 = vmatprep.subr.bf16.mxu0 0
    %6327 = vmatpush2.bf16.msra.mxu0 0
    %6328 = vmatprep.subr.bf16.mxu0 0
    %6329 = vmatpush2.bf16.msra.mxu0 0
    %6330 = vmatprep.subr.bf16.mxu0 0
    %6331 = vmatpush2.bf16.msra.mxu0 0
    %6332 = vmatprep.subr.bf16.mxu0 0
    %6333 = vmatpush2.bf16.msra.mxu0 0
    %6334 = vmatprep.subr.bf16.mxu0 0
    %6335 = vmatpush2.bf16.msra.mxu0 0
    %6336 = vmatprep.subr.bf16.mxu0 0
    %6337 = vmatpush2.bf16.msra.mxu0 0
    %6338 = vmatprep.mubr.bf16.mxu0 0
    %6339 = vmatmul.mubr.bf16.gmra.mxu0 %v6298
    %v6340 = vpop.f32.mrf.mxu0
    %v6341 = vadd.f32 0.0, %v6340
    %v6342 = vpop.f32.mrf.mxu0
    %v6343 = vpop.f32.mrf.mxu0
    %v6344 = vadd.f32 0.0, %v6343
    %v6345 = vpop.f32.mrf.mxu0
    %6346 = vmatprep.mubr.bf16.mxu0 0
    %6347 = vmatmul.mubr.bf16.gmra.mxu0 %v6299
    %v6348 = vpop.f32.mrf.mxu0
    %v6349 = vadd.f32 0.0, %v6348
    %v6350 = vpop.f32.mrf.mxu0
    %v6351 = vpop.f32.mrf.mxu0
    %v6352 = vadd.f32 0.0, %v6351
    %v6353 = vpop.f32.mrf.mxu0
    %6354 = vmatprep.mubr.bf16.mxu0 0
    %6355 = vmatmul.mubr.bf16.gmra.mxu0 %v6300
    %v6356 = vpop.f32.mrf.mxu0
    %v6357 = vadd.f32 0.0, %v6356
    %v6358 = vpop.f32.mrf.mxu0
    %v6359 = vpop.f32.mrf.mxu0
    %v6360 = vadd.f32 0.0, %v6359
    %v6361 = vpop.f32.mrf.mxu0
    %6362 = vmatprep.mubr.bf16.mxu0 0
    %6363 = vmatmul.mubr.bf16.gmra.mxu0 %v6301
    %v6364 = vpop.f32.mrf.mxu0
    %v6365 = vadd.f32 0.0, %v6364
    %v6366 = vpop.f32.mrf.mxu0
    %v6367 = vpop.f32.mrf.mxu0
    %v6368 = vadd.f32 0.0, %v6367
    %v6369 = vpop.f32.mrf.mxu0
    %6370 = vdwg.mxu0
    %v6371 = vadd.f32 %v6129, %v6341
    %v6372 = vadd.f32 %v6132, %v6344
    %v6373 = vadd.f32 %v6137, %v6349
    %v6374 = vadd.f32 %v6140, %v6352
    %v6375 = vadd.f32 %v6145, %v6357
    %v6376 = vadd.f32 %v6148, %v6360
    %v6377 = vadd.f32 %v6153, %v6365
    %v6378 = vadd.f32 %v6156, %v6368
    %v6379 = vld [vmem:[#allocation6 + $0x2e8] sm:$0xf]
    %v6380 = vld [vmem:[#allocation6 + $0x2ec] sm:$0x3]
    %v6383 = vunpack.c.l.b16 %v6379
    %v6384 = vunpack.c.l.b16 %v6380
    %v6385 = vpack.c.b16 %v6384, %v6383
    %v6387 = vsel %vm5741, %v6385, 0
    %6389 = vmatprep.subr.bf16.mxu0 0
    %6390 = vmatpush1.bf16.msra.mxu0 0
    %6391 = vmatprep.subr.bf16.mxu0 0
    %6392 = vmatpush1.bf16.msra.mxu0 0
    %6393 = vmatprep.subr.bf16.mxu0 0
    %6394 = vmatpush1.bf16.msra.mxu0 0
    %6395 = vmatprep.subr.bf16.mxu0 0
    %6396 = vmatpush1.bf16.msra.mxu0 0
    %6397 = vmatprep.subr.bf16.mxu0 0
    %6398 = vmatpush1.bf16.msra.mxu0 0
    %6399 = vmatprep.subr.bf16.mxu0 0
    %6400 = vmatpush1.bf16.msra.mxu0 0
    %6401 = vmatprep.subr.bf16.mxu0 0
    %6402 = vmatpush1.bf16.msra.mxu0 0
    %6403 = vmatprep.subr.bf16.mxu0 0
    %6404 = vmatpush1.bf16.msra.mxu0 %v6387
    %6405 = vmatprep.subr.bf16.mxu0 0
    %6406 = vmatpush2.bf16.msra.mxu0 0
    %6407 = vmatprep.subr.bf16.mxu0 0
    %6408 = vmatpush2.bf16.msra.mxu0 0
    %6409 = vmatprep.subr.bf16.mxu0 0
    %6410 = vmatpush2.bf16.msra.mxu0 0
    %6411 = vmatprep.subr.bf16.mxu0 0
    %6412 = vmatpush2.bf16.msra.mxu0 0
    %6413 = vmatprep.subr.bf16.mxu0 0
    %6414 = vmatpush2.bf16.msra.mxu0 0
    %6415 = vmatprep.subr.bf16.mxu0 0
    %6416 = vmatpush2.bf16.msra.mxu0 0
    %6417 = vmatprep.subr.bf16.mxu0 0
    %6418 = vmatpush2.bf16.msra.mxu0 0
    %6419 = vmatprep.subr.bf16.mxu0 0
    %6420 = vmatpush2.bf16.msra.mxu0 0
    %6421 = vmatprep.mubr.bf16.mxu0 0
    %6422 = vmatmul.mubr.bf16.gmra.mxu0 %v5718
    %v6423 = vpop.f32.mrf.mxu0
    %v6424 = vadd.f32 0.0, %v6423
    %v6425 = vpop.f32.mrf.mxu0
    %v6426 = vpop.f32.mrf.mxu0
    %v6427 = vadd.f32 0.0, %v6426
    %v6428 = vpop.f32.mrf.mxu0
    %6429 = vmatprep.mubr.bf16.mxu0 0
    %6430 = vmatmul.mubr.bf16.gmra.mxu0 %v5721
    %v6431 = vpop.f32.mrf.mxu0
    %v6432 = vadd.f32 0.0, %v6431
    %v6433 = vpop.f32.mrf.mxu0
    %v6434 = vpop.f32.mrf.mxu0
    %v6435 = vadd.f32 0.0, %v6434
    %v6436 = vpop.f32.mrf.mxu0
    %6437 = vmatprep.mubr.bf16.mxu0 0
    %6438 = vmatmul.mubr.bf16.gmra.mxu0 %v5724
    %v6439 = vpop.f32.mrf.mxu0
    %v6440 = vadd.f32 0.0, %v6439
    %v6441 = vpop.f32.mrf.mxu0
    %v6442 = vpop.f32.mrf.mxu0
    %v6443 = vadd.f32 0.0, %v6442
    %v6444 = vpop.f32.mrf.mxu0
    %6445 = vmatprep.mubr.bf16.mxu0 0
    %6446 = vmatmul.mubr.bf16.gmra.mxu0 %v5727
    %v6447 = vpop.f32.mrf.mxu0
    %v6448 = vadd.f32 0.0, %v6447
    %v6449 = vpop.f32.mrf.mxu0
    %v6450 = vpop.f32.mrf.mxu0
    %v6451 = vadd.f32 0.0, %v6450
    %v6452 = vpop.f32.mrf.mxu0
    %6453 = vmatprep.mubr.bf16.mxu0 0
    %6454 = vmatmul.mubr.bf16.gmra.mxu0 %v5730
    %v6455 = vpop.f32.mrf.mxu0
    %v6456 = vadd.f32 0.0, %v6455
    %v6457 = vpop.f32.mrf.mxu0
    %v6458 = vpop.f32.mrf.mxu0
    %v6459 = vadd.f32 0.0, %v6458
    %v6460 = vpop.f32.mrf.mxu0
    %6461 = vmatprep.mubr.bf16.mxu0 0
    %6462 = vmatmul.mubr.bf16.gmra.mxu0 %v5733
    %v6463 = vpop.f32.mrf.mxu0
    %v6464 = vadd.f32 0.0, %v6463
    %v6465 = vpop.f32.mrf.mxu0
    %v6466 = vpop.f32.mrf.mxu0
    %v6467 = vadd.f32 0.0, %v6466
    %v6468 = vpop.f32.mrf.mxu0
    %6469 = vmatprep.mubr.bf16.mxu0 0
    %6470 = vmatmul.mubr.bf16.gmra.mxu0 %v5736
    %v6471 = vpop.f32.mrf.mxu0
    %v6472 = vadd.f32 0.0, %v6471
    %v6473 = vpop.f32.mrf.mxu0
    %v6474 = vpop.f32.mrf.mxu0
    %v6475 = vadd.f32 0.0, %v6474
    %v6476 = vpop.f32.mrf.mxu0
    %6477 = vmatprep.mubr.bf16.mxu0 0
    %6478 = vmatmul.mubr.bf16.gmra.mxu0 %v5739
    %v6479 = vpop.f32.mrf.mxu0
    %v6480 = vadd.f32 0.0, %v6479
    %v6481 = vpop.f32.mrf.mxu0
    %v6482 = vpop.f32.mrf.mxu0
    %v6483 = vadd.f32 0.0, %v6482
    %v6484 = vpop.f32.mrf.mxu0
    %6485 = vdwg.mxu0
    %v6486 = vpack.c.bf16 %v6427, %v6424
    %v6487 = vpack.c.bf16 %v6435, %v6432
    %v6488 = vpack.c.bf16 %v6443, %v6440
    %v6489 = vpack.c.bf16 %v6451, %v6448
    %v6490 = vpack.c.bf16 %v6459, %v6456
    %v6491 = vpack.c.bf16 %v6467, %v6464
    %v6492 = vpack.c.bf16 %v6475, %v6472
    %v6493 = vpack.c.bf16 %v6483, %v6480
    %v6494 = vld [vmem:[#allocation4 + $0x40c] sm:$0xf]
    %v6495 = vld [vmem:[#allocation4 + $0x41c] sm:$0xf]
    %v6496 = vld [vmem:[#allocation4 + $0x42c] sm:$0xf]
    %v6497 = vld [vmem:[#allocation4 + $0x43c] sm:$0xf]
    %v6498 = vld [vmem:[#allocation4 + $0x44c] sm:$0xf]
    %v6499 = vld [vmem:[#allocation4 + $0x45c] sm:$0xf]
    %v6500 = vld [vmem:[#allocation4 + $0x46c] sm:$0xf]
    %v6501 = vld [vmem:[#allocation4 + $0x47c] sm:$0xf]
    %v6510 = vunpack.c.l.b16 %v6494
    %v6511 = vunpack.c.l.b16 %v6495
    %v6512 = vunpack.c.l.b16 %v6496
    %v6513 = vunpack.c.l.b16 %v6497
    %v6514 = vunpack.c.l.b16 %v6498
    %v6515 = vunpack.c.l.b16 %v6499
    %v6516 = vunpack.c.l.b16 %v6500
    %v6517 = vunpack.c.l.b16 %v6501
    %v6518 = vpack.c.b16 %v6511, %v6510
    %v6519 = vpack.c.b16 %v6513, %v6512
    %v6520 = vpack.c.b16 %v6515, %v6514
    %v6521 = vpack.c.b16 %v6517, %v6516
    %6526 = vmatprep.subr.bf16.mxu0 0
    %6527 = vmatpush1.bf16.msra.mxu0 %v6493
    %6528 = vmatprep.subr.bf16.mxu0 0
    %6529 = vmatpush1.bf16.msra.mxu0 %v6492
    %6530 = vmatprep.subr.bf16.mxu0 0
    %6531 = vmatpush1.bf16.msra.mxu0 %v6491
    %6532 = vmatprep.subr.bf16.mxu0 0
    %6533 = vmatpush1.bf16.msra.mxu0 %v6490
    %6534 = vmatprep.subr.bf16.mxu0 0
    %6535 = vmatpush1.bf16.msra.mxu0 %v6489
    %6536 = vmatprep.subr.bf16.mxu0 0
    %6537 = vmatpush1.bf16.msra.mxu0 %v6488
    %6538 = vmatprep.subr.bf16.mxu0 0
    %6539 = vmatpush1.bf16.msra.mxu0 %v6487
    %6540 = vmatprep.subr.bf16.mxu0 0
    %6541 = vmatpush1.bf16.msra.mxu0 %v6486
    %6542 = vmatprep.subr.bf16.mxu0 0
    %6543 = vmatpush2.bf16.msra.mxu0 0
    %6544 = vmatprep.subr.bf16.mxu0 0
    %6545 = vmatpush2.bf16.msra.mxu0 0
    %6546 = vmatprep.subr.bf16.mxu0 0
    %6547 = vmatpush2.bf16.msra.mxu0 0
    %6548 = vmatprep.subr.bf16.mxu0 0
    %6549 = vmatpush2.bf16.msra.mxu0 0
    %6550 = vmatprep.subr.bf16.mxu0 0
    %6551 = vmatpush2.bf16.msra.mxu0 0
    %6552 = vmatprep.subr.bf16.mxu0 0
    %6553 = vmatpush2.bf16.msra.mxu0 0
    %6554 = vmatprep.subr.bf16.mxu0 0
    %6555 = vmatpush2.bf16.msra.mxu0 0
    %6556 = vmatprep.subr.bf16.mxu0 0
    %6557 = vmatpush2.bf16.msra.mxu0 0
    %6558 = vmatprep.mubr.bf16.mxu0 0
    %6559 = vmatmul.mubr.bf16.gmra.mxu0 %v6518
    %v6560 = vpop.f32.mrf.mxu0
    %v6561 = vadd.f32 0.0, %v6560
    %v6562 = vpop.f32.mrf.mxu0
    %v6563 = vpop.f32.mrf.mxu0
    %v6564 = vadd.f32 0.0, %v6563
    %v6565 = vpop.f32.mrf.mxu0
    %6566 = vmatprep.mubr.bf16.mxu0 0
    %6567 = vmatmul.mubr.bf16.gmra.mxu0 %v6519
    %v6568 = vpop.f32.mrf.mxu0
    %v6569 = vadd.f32 0.0, %v6568
    %v6570 = vpop.f32.mrf.mxu0
    %v6571 = vpop.f32.mrf.mxu0
    %v6572 = vadd.f32 0.0, %v6571
    %v6573 = vpop.f32.mrf.mxu0
    %6574 = vmatprep.mubr.bf16.mxu0 0
    %6575 = vmatmul.mubr.bf16.gmra.mxu0 %v6520
    %v6576 = vpop.f32.mrf.mxu0
    %v6577 = vadd.f32 0.0, %v6576
    %v6578 = vpop.f32.mrf.mxu0
    %v6579 = vpop.f32.mrf.mxu0
    %v6580 = vadd.f32 0.0, %v6579
    %v6581 = vpop.f32.mrf.mxu0
    %6582 = vmatprep.mubr.bf16.mxu0 0
    %6583 = vmatmul.mubr.bf16.gmra.mxu0 %v6521
    %v6584 = vpop.f32.mrf.mxu0
    %v6585 = vadd.f32 0.0, %v6584
    %v6586 = vpop.f32.mrf.mxu0
    %v6587 = vpop.f32.mrf.mxu0
    %v6588 = vadd.f32 0.0, %v6587
    %v6589 = vpop.f32.mrf.mxu0
    %6590 = vdwg.mxu0
    %v6591 = vadd.f32 %v6371, %v6561
    %v6592 = vadd.f32 %v6372, %v6564
    %v6593 = vadd.f32 %v6373, %v6569
    %v6594 = vadd.f32 %v6374, %v6572
    %v6595 = vadd.f32 %v6375, %v6577
    %v6596 = vadd.f32 %v6376, %v6580
    %v6597 = vadd.f32 %v6377, %v6585
    %v6598 = vadd.f32 %v6378, %v6588
    %v6599 = vld [vmem:[%s4] sm:$0xff]
    %v6600 = vld [vmem:[%s4 + $0x8] sm:$0xff]
    %v6601 = vld [vmem:[%s4 + $0x10] sm:$0xff]
    %v6602 = vld [vmem:[%s4 + $0x18] sm:$0xff]
    %v6603 = vld [vmem:[%s4 + $0x20] sm:$0xff]
    %v6604 = vld [vmem:[%s4 + $0x28] sm:$0xff]
    %v6605 = vld [vmem:[%s4 + $0x30] sm:$0xff]
    %v6606 = vld [vmem:[%s4 + $0x38] sm:$0xff]
    %6608 = vset.pattern.permute.xlu0 12
    %6609 = vperm.xlu0 %6608, %v6599
    %v6610 = vpop.permute.xlu0 %6609
    %6613 = vset.pattern.permute.xlu0 12
    %6614 = vperm.xlu0 %6613, %v6600
    %v6615 = vpop.permute.xlu0 %6614
    %6618 = vset.pattern.permute.xlu0 12
    %6619 = vperm.xlu0 %6618, %v6601
    %v6620 = vpop.permute.xlu0 %6619
    %6623 = vset.pattern.permute.xlu0 12
    %6624 = vperm.xlu0 %6623, %v6602
    %v6625 = vpop.permute.xlu0 %6624
    %6628 = vset.pattern.permute.xlu0 12
    %6629 = vperm.xlu0 %6628, %v6603
    %v6630 = vpop.permute.xlu0 %6629
    %6633 = vset.pattern.permute.xlu0 12
    %6634 = vperm.xlu0 %6633, %v6604
    %v6635 = vpop.permute.xlu0 %6634
    %6638 = vset.pattern.permute.xlu0 12
    %6639 = vperm.xlu0 %6638, %v6605
    %v6640 = vpop.permute.xlu0 %6639
    %6643 = vset.pattern.permute.xlu0 12
    %6644 = vperm.xlu0 %6643, %v6606
    %v6645 = vpop.permute.xlu0 %6644
    %v6647 = vadd.f32 %v6591, %v6610
    %v6648 = vadd.f32 %v6592, %v6615
    %v6649 = vadd.f32 %v6593, %v6620
    %v6650 = vadd.f32 %v6594, %v6625
    %v6651 = vadd.f32 %v6595, %v6630
    %v6652 = vadd.f32 %v6596, %v6635
    %v6653 = vadd.f32 %v6597, %v6640
    %v6654 = vadd.f32 %v6598, %v6645
    %v6655 = vmax.f32 %v6647, 0.0
    %v6656 = vmax.f32 %v6648, 0.0
    %v6657 = vmax.f32 %v6649, 0.0
    %v6658 = vmax.f32 %v6650, 0.0
    %v6659 = vmax.f32 %v6651, 0.0
    %v6660 = vmax.f32 %v6652, 0.0
    %v6661 = vmax.f32 %v6653, 0.0
    %v6662 = vmax.f32 %v6654, 0.0
    %v6663 = vld [vmem:[#allocation6 + $0x2f0] sm:$0x7]
    %v6664 = vpack.c.bf16 %v6656, %v6655
    %v6665 = vpack.c.bf16 %v6658, %v6657
    %v6666 = vpack.c.bf16 %v6660, %v6659
    %v6667 = vpack.c.bf16 %v6662, %v6661
    %v6668 = vld [vmem:[%s4] sm:$0x1f]
    %6670 = vset.pattern.permute.xlu0 0
    %6671 = vperm.xlu0 %6670, %v6668
    %v6672 = vpop.permute.xlu0 %6671
    %v6675 = vsel %vm120, %v6663, 0
    %6677 = vmatprep.subr.bf16.mxu0 0
    %6678 = vmatpush1.bf16.msra.mxu0 0
    %6679 = vmatprep.subr.bf16.mxu0 0
    %6680 = vmatpush1.bf16.msra.mxu0 0
    %6681 = vmatprep.subr.bf16.mxu0 0
    %6682 = vmatpush1.bf16.msra.mxu0 0
    %6683 = vmatprep.subr.bf16.mxu0 0
    %6684 = vmatpush1.bf16.msra.mxu0 0
    %6685 = vmatprep.subr.bf16.mxu0 0
    %6686 = vmatpush1.bf16.msra.mxu0 %v6667
    %6687 = vmatprep.subr.bf16.mxu0 0
    %6688 = vmatpush1.bf16.msra.mxu0 %v6666
    %6689 = vmatprep.subr.bf16.mxu0 0
    %6690 = vmatpush1.bf16.msra.mxu0 %v6665
    %6691 = vmatprep.subr.bf16.mxu0 0
    %6692 = vmatpush1.bf16.msra.mxu0 %v6664
    %6693 = vmatprep.subr.bf16.mxu0 0
    %6694 = vmatpush2.bf16.msra.mxu0 0
    %6695 = vmatprep.subr.bf16.mxu0 0
    %6696 = vmatpush2.bf16.msra.mxu0 0
    %6697 = vmatprep.subr.bf16.mxu0 0
    %6698 = vmatpush2.bf16.msra.mxu0 0
    %6699 = vmatprep.subr.bf16.mxu0 0
    %6700 = vmatpush2.bf16.msra.mxu0 0
    %6701 = vmatprep.subr.bf16.mxu0 0
    %6702 = vmatpush2.bf16.msra.mxu0 0
    %6703 = vmatprep.subr.bf16.mxu0 0
    %6704 = vmatpush2.bf16.msra.mxu0 0
    %6705 = vmatprep.subr.bf16.mxu0 0
    %6706 = vmatpush2.bf16.msra.mxu0 0
    %6707 = vmatprep.subr.bf16.mxu0 0
    %6708 = vmatpush2.bf16.msra.mxu0 0
    %6709 = vmatprep.mubr.bf16.mxu0 0
    %6710 = vmatmul.mubr.bf16.gmra.mxu0 %v6675
    %v6711 = vpop.f32.mrf.mxu0
    %v6712 = vadd.f32 %v6672, %v6711
    %v6713 = vpop.f32.mrf.mxu0
    %v6714 = vpop.f32.mrf.mxu0
    %v6715 = vpop.f32.mrf.mxu0
    %6716 = vdwg.mxu0
    %v6717 = vld [vmem:[#allocation6 + $0x2f4] sm:$0xf]
    %v6718 = vld [vmem:[#allocation6 + $0x2f8] sm:$0xf]
    %v6719 = vld [vmem:[#allocation6 + $0x2fc] sm:$0xf]
    %v6720 = vld [vmem:[#allocation6 + $0x300] sm:$0xf]
    %v6721 = vpack.c.bf16 %v6712, %v6712
    %v6722 = vld [vmem:[%s4] sm:$0xff]
    %v6723 = vld [vmem:[%s4 + $0x8] sm:$0xff]
    %v6724 = vld [vmem:[%s4 + $0x10] sm:$0xff]
    %v6725 = vld [vmem:[%s4 + $0x18] sm:$0xff]
    %v6730 = vunpack.c.l.b16 %v6717
    %v6731 = vunpack.c.l.b16 %v6718
    %v6732 = vunpack.c.l.b16 %v6719
    %v6733 = vunpack.c.l.b16 %v6720
    %v6734 = vpack.c.b16 %v6731, %v6730
    %v6735 = vpack.c.b16 %v6733, %v6732
    %vm6736 = vcmask 39936
    %v6738 = vsel %vm6736, %v6734, 0
    %v6741 = vsel %vm6736, %v6735, 0
    %vm6743 = vcmask 1041408
    %vm6744 = vcmask 1042432
    %v6745 = vsel %vm6743, 4294967295, 65535
    %v6746 = vsel %vm6744, %v6745, 0
    %v6748 = vand.u32 %v6721, %v6746
    %6750 = vmatprep.subr.bf16.mxu0 0
    %6751 = vmatpush1.bf16.msra.mxu0 0
    %6752 = vmatprep.subr.bf16.mxu0 0
    %6753 = vmatpush1.bf16.msra.mxu0 0
    %6754 = vmatprep.subr.bf16.mxu0 0
    %6755 = vmatpush1.bf16.msra.mxu0 0
    %6756 = vmatprep.subr.bf16.mxu0 0
    %6757 = vmatpush1.bf16.msra.mxu0 0
    %6758 = vmatprep.subr.bf16.mxu0 0
    %6759 = vmatpush1.bf16.msra.mxu0 0
    %6760 = vmatprep.subr.bf16.mxu0 0
    %6761 = vmatpush1.bf16.msra.mxu0 0
    %6762 = vmatprep.subr.bf16.mxu0 0
    %6763 = vmatpush1.bf16.msra.mxu0 0
    %6764 = vmatprep.subr.bf16.mxu0 0
    %6765 = vmatpush1.bf16.msra.mxu0 %v6748
    %6766 = vmatprep.subr.bf16.mxu0 0
    %6767 = vmatpush2.bf16.msra.mxu0 0
    %6768 = vmatprep.subr.bf16.mxu0 0
    %6769 = vmatpush2.bf16.msra.mxu0 0
    %6770 = vmatprep.subr.bf16.mxu0 0
    %6771 = vmatpush2.bf16.msra.mxu0 0
    %6772 = vmatprep.subr.bf16.mxu0 0
    %6773 = vmatpush2.bf16.msra.mxu0 0
    %6774 = vmatprep.subr.bf16.mxu0 0
    %6775 = vmatpush2.bf16.msra.mxu0 0
    %6776 = vmatprep.subr.bf16.mxu0 0
    %6777 = vmatpush2.bf16.msra.mxu0 0
    %6778 = vmatprep.subr.bf16.mxu0 0
    %6779 = vmatpush2.bf16.msra.mxu0 0
    %6780 = vmatprep.subr.bf16.mxu0 0
    %6781 = vmatpush2.bf16.msra.mxu0 0
    %6782 = vmatprep.mubr.bf16.mxu0 0
    %6783 = vmatmul.mubr.bf16.gmra.mxu0 %v6738
    %v6784 = vpop.f32.mrf.mxu0
    %v6785 = vadd.f32 0.0, %v6784
    %v6786 = vpop.f32.mrf.mxu0
    %v6787 = vpop.f32.mrf.mxu0
    %v6788 = vadd.f32 0.0, %v6787
    %v6789 = vpop.f32.mrf.mxu0
    %6790 = vmatprep.mubr.bf16.mxu0 0
    %6791 = vmatmul.mubr.bf16.gmra.mxu0 %v6741
    %v6792 = vpop.f32.mrf.mxu0
    %v6793 = vadd.f32 0.0, %v6792
    %v6794 = vpop.f32.mrf.mxu0
    %v6795 = vpop.f32.mrf.mxu0
    %v6796 = vadd.f32 0.0, %v6795
    %v6797 = vpop.f32.mrf.mxu0
    %6798 = vdwg.mxu0
    %6803 = vrot.lane.b32.xlu0 %v6785, 1
    %v6804 = vpop.permute.xlu0 %6803
    %6805 = vrot.lane.b32.xlu0 %v6788, 1
    %v6806 = vpop.permute.xlu0 %6805
    %6807 = vrot.lane.b32.xlu0 %v6793, 1
    %v6808 = vpop.permute.xlu0 %6807
    %6809 = vrot.lane.b32.xlu0 %v6796, 1
    %v6810 = vpop.permute.xlu0 %6809
    %v6815 = vadd.f32 %v6722, %v6804
    %v6816 = vadd.f32 %v6723, %v6806
    %v6817 = vadd.f32 %v6724, %v6808
    %v6818 = vadd.f32 %v6725, %v6810
    %6819 = vrot.lane.b32.xlu0 %v6734, 123
    %v6820 = vpop.permute.xlu0 %6819
    %6821 = vrot.lane.b32.xlu0 %v6735, 123
    %v6822 = vpop.permute.xlu0 %6821
    %6824 = vrot.lane.b32.xlu0 %v6721, 127
    %v6825 = vpop.permute.xlu0 %6824
    %v6827 = vsel %vm6736, %v6820, 0
    %v6830 = vsel %vm6736, %v6822, 0
    %v6833 = vand.u32 %v6825, %v6746
    %6835 = vmatprep.subr.bf16.mxu0 0
    %6836 = vmatpush1.bf16.msra.mxu0 0
    %6837 = vmatprep.subr.bf16.mxu0 0
    %6838 = vmatpush1.bf16.msra.mxu0 0
    %6839 = vmatprep.subr.bf16.mxu0 0
    %6840 = vmatpush1.bf16.msra.mxu0 0
    %6841 = vmatprep.subr.bf16.mxu0 0
    %6842 = vmatpush1.bf16.msra.mxu0 0
    %6843 = vmatprep.subr.bf16.mxu0 0
    %6844 = vmatpush1.bf16.msra.mxu0 0
    %6845 = vmatprep.subr.bf16.mxu0 0
    %6846 = vmatpush1.bf16.msra.mxu0 0
    %6847 = vmatprep.subr.bf16.mxu0 0
    %6848 = vmatpush1.bf16.msra.mxu0 0
    %6849 = vmatprep.subr.bf16.mxu0 0
    %6850 = vmatpush1.bf16.msra.mxu0 %v6833
    %6851 = vmatprep.subr.bf16.mxu0 0
    %6852 = vmatpush2.bf16.msra.mxu0 0
    %6853 = vmatprep.subr.bf16.mxu0 0
    %6854 = vmatpush2.bf16.msra.mxu0 0
    %6855 = vmatprep.subr.bf16.mxu0 0
    %6856 = vmatpush2.bf16.msra.mxu0 0
    %6857 = vmatprep.subr.bf16.mxu0 0
    %6858 = vmatpush2.bf16.msra.mxu0 0
    %6859 = vmatprep.subr.bf16.mxu0 0
    %6860 = vmatpush2.bf16.msra.mxu0 0
    %6861 = vmatprep.subr.bf16.mxu0 0
    %6862 = vmatpush2.bf16.msra.mxu0 0
    %6863 = vmatprep.subr.bf16.mxu0 0
    %6864 = vmatpush2.bf16.msra.mxu0 0
    %6865 = vmatprep.subr.bf16.mxu0 0
    %6866 = vmatpush2.bf16.msra.mxu0 0
    %6867 = vmatprep.mubr.bf16.mxu0 0
    %6868 = vmatmul.mubr.bf16.gmra.mxu0 %v6827
    %v6869 = vpop.f32.mrf.mxu0
    %v6870 = vadd.f32 0.0, %v6869
    %v6871 = vpop.f32.mrf.mxu0
    %v6872 = vpop.f32.mrf.mxu0
    %v6873 = vadd.f32 0.0, %v6872
    %v6874 = vpop.f32.mrf.mxu0
    %6875 = vmatprep.mubr.bf16.mxu0 0
    %6876 = vmatmul.mubr.bf16.gmra.mxu0 %v6830
    %v6877 = vpop.f32.mrf.mxu0
    %v6878 = vadd.f32 0.0, %v6877
    %v6879 = vpop.f32.mrf.mxu0
    %v6880 = vpop.f32.mrf.mxu0
    %v6881 = vadd.f32 0.0, %v6880
    %v6882 = vpop.f32.mrf.mxu0
    %6883 = vdwg.mxu0
    %6888 = vrot.lane.b32.xlu0 %v6870, 1
    %v6889 = vpop.permute.xlu0 %6888
    %6890 = vrot.lane.b32.xlu0 %v6873, 1
    %v6891 = vpop.permute.xlu0 %6890
    %6892 = vrot.lane.b32.xlu0 %v6878, 1
    %v6893 = vpop.permute.xlu0 %6892
    %6894 = vrot.lane.b32.xlu0 %v6881, 1
    %v6895 = vpop.permute.xlu0 %6894
    %v6900 = vadd.f32 %v6815, %v6889
    %v6901 = vadd.f32 %v6816, %v6891
    %v6902 = vadd.f32 %v6817, %v6893
    %v6903 = vadd.f32 %v6818, %v6895
    %6904 = vrot.lane.b32.xlu0 %v6734, 118
    %v6905 = vpop.permute.xlu0 %6904
    %6906 = vrot.lane.b32.xlu0 %v6735, 118
    %v6907 = vpop.permute.xlu0 %6906
    %6908 = vrot.lane.b32.xlu0 %v6721, 126
    %v6909 = vpop.permute.xlu0 %6908
    %v6911 = vsel %vm6736, %v6905, 0
    %v6914 = vsel %vm6736, %v6907, 0
    %v6917 = vand.u32 %v6909, %v6746
    %6919 = vmatprep.subr.bf16.mxu0 0
    %6920 = vmatpush1.bf16.msra.mxu0 0
    %6921 = vmatprep.subr.bf16.mxu0 0
    %6922 = vmatpush1.bf16.msra.mxu0 0
    %6923 = vmatprep.subr.bf16.mxu0 0
    %6924 = vmatpush1.bf16.msra.mxu0 0
    %6925 = vmatprep.subr.bf16.mxu0 0
    %6926 = vmatpush1.bf16.msra.mxu0 0
    %6927 = vmatprep.subr.bf16.mxu0 0
    %6928 = vmatpush1.bf16.msra.mxu0 0
    %6929 = vmatprep.subr.bf16.mxu0 0
    %6930 = vmatpush1.bf16.msra.mxu0 0
    %6931 = vmatprep.subr.bf16.mxu0 0
    %6932 = vmatpush1.bf16.msra.mxu0 0
    %6933 = vmatprep.subr.bf16.mxu0 0
    %6934 = vmatpush1.bf16.msra.mxu0 %v6917
    %6935 = vmatprep.subr.bf16.mxu0 0
    %6936 = vmatpush2.bf16.msra.mxu0 0
    %6937 = vmatprep.subr.bf16.mxu0 0
    %6938 = vmatpush2.bf16.msra.mxu0 0
    %6939 = vmatprep.subr.bf16.mxu0 0
    %6940 = vmatpush2.bf16.msra.mxu0 0
    %6941 = vmatprep.subr.bf16.mxu0 0
    %6942 = vmatpush2.bf16.msra.mxu0 0
    %6943 = vmatprep.subr.bf16.mxu0 0
    %6944 = vmatpush2.bf16.msra.mxu0 0
    %6945 = vmatprep.subr.bf16.mxu0 0
    %6946 = vmatpush2.bf16.msra.mxu0 0
    %6947 = vmatprep.subr.bf16.mxu0 0
    %6948 = vmatpush2.bf16.msra.mxu0 0
    %6949 = vmatprep.subr.bf16.mxu0 0
    %6950 = vmatpush2.bf16.msra.mxu0 0
    %6951 = vmatprep.mubr.bf16.mxu0 0
    %6952 = vmatmul.mubr.bf16.gmra.mxu0 %v6911
    %v6953 = vpop.f32.mrf.mxu0
    %v6954 = vadd.f32 0.0, %v6953
    %v6955 = vpop.f32.mrf.mxu0
    %v6956 = vpop.f32.mrf.mxu0
    %v6957 = vadd.f32 0.0, %v6956
    %v6958 = vpop.f32.mrf.mxu0
    %6959 = vmatprep.mubr.bf16.mxu0 0
    %6960 = vmatmul.mubr.bf16.gmra.mxu0 %v6914
    %v6961 = vpop.f32.mrf.mxu0
    %v6962 = vadd.f32 0.0, %v6961
    %v6963 = vpop.f32.mrf.mxu0
    %v6964 = vpop.f32.mrf.mxu0
    %v6965 = vadd.f32 0.0, %v6964
    %v6966 = vpop.f32.mrf.mxu0
    %6967 = vdwg.mxu0
    %6972 = vrot.lane.b32.xlu0 %v6954, 1
    %v6973 = vpop.permute.xlu0 %6972
    %6974 = vrot.lane.b32.xlu0 %v6957, 1
    %v6975 = vpop.permute.xlu0 %6974
    %6976 = vrot.lane.b32.xlu0 %v6962, 1
    %v6977 = vpop.permute.xlu0 %6976
    %6978 = vrot.lane.b32.xlu0 %v6965, 1
    %v6979 = vpop.permute.xlu0 %6978
    %v6984 = vadd.f32 %v6900, %v6973
    %v6985 = vadd.f32 %v6901, %v6975
    %v6986 = vadd.f32 %v6902, %v6977
    %v6987 = vadd.f32 %v6903, %v6979
    %v6988 = vmax.f32 %v6984, 0.0
    %v6989 = vmax.f32 %v6985, 0.0
    %v6990 = vmax.f32 %v6986, 0.0
    %v6991 = vmax.f32 %v6987, 0.0
    %v6992 = vld [vmem:[#allocation6 + $0x304] sm:$0xf]
    %v6993 = vld [vmem:[#allocation6 + $0x308] sm:$0xf]
    %v6994 = vld [vmem:[#allocation6 + $0x30c] sm:$0xf]
    %v6995 = vld [vmem:[#allocation6 + $0x310] sm:$0xf]
    %v6996 = vpack.c.bf16 %v6989, %v6988
    %v6997 = vpack.c.bf16 %v6991, %v6990
    %v7002 = vunpack.c.l.b16 %v6992
    %v7003 = vunpack.c.l.b16 %v6993
    %v7004 = vunpack.c.l.b16 %v6994
    %v7005 = vunpack.c.l.b16 %v6995
    %v7006 = vpack.c.b16 %v7003, %v7002
    %v7007 = vpack.c.b16 %v7005, %v7004
    %7010 = vrot.lane.b32.xlu0 %v6996, 127
    %v7011 = vpop.permute.xlu0 %7010
    %7012 = vrot.lane.b32.xlu0 %v6997, 127
    %v7013 = vpop.permute.xlu0 %7012
    %7020 = vrot.lane.b32.xlu0 %v6722, 126
    %v7021 = vpop.permute.xlu0 %7020
    %7022 = vrot.lane.b32.xlu0 %v6723, 126
    %v7023 = vpop.permute.xlu0 %7022
    %7024 = vrot.lane.b32.xlu0 %v6724, 126
    %v7025 = vpop.permute.xlu0 %7024
    %7026 = vrot.lane.b32.xlu0 %v6725, 126
    %v7027 = vpop.permute.xlu0 %7026
    %vm7032 = vcmask 261120
    %v7034 = vsel %vm7032, %v7006, 0
    %v7037 = vsel %vm7032, %v7007, 0
    %7039 = vmatprep.subr.bf16.mxu0 0
    %7040 = vmatpush1.bf16.msra.mxu0 0
    %7041 = vmatprep.subr.bf16.mxu0 0
    %7042 = vmatpush1.bf16.msra.mxu0 0
    %7043 = vmatprep.subr.bf16.mxu0 0
    %7044 = vmatpush1.bf16.msra.mxu0 0
    %7045 = vmatprep.subr.bf16.mxu0 0
    %7046 = vmatpush1.bf16.msra.mxu0 0
    %7047 = vmatprep.subr.bf16.mxu0 0
    %7048 = vmatpush1.bf16.msra.mxu0 0
    %7049 = vmatprep.subr.bf16.mxu0 0
    %7050 = vmatpush1.bf16.msra.mxu0 0
    %7051 = vmatprep.subr.bf16.mxu0 0
    %7052 = vmatpush1.bf16.msra.mxu0 %v7013
    %7053 = vmatprep.subr.bf16.mxu0 0
    %7054 = vmatpush1.bf16.msra.mxu0 %v7011
    %7055 = vmatprep.subr.bf16.mxu0 0
    %7056 = vmatpush2.bf16.msra.mxu0 0
    %7057 = vmatprep.subr.bf16.mxu0 0
    %7058 = vmatpush2.bf16.msra.mxu0 0
    %7059 = vmatprep.subr.bf16.mxu0 0
    %7060 = vmatpush2.bf16.msra.mxu0 0
    %7061 = vmatprep.subr.bf16.mxu0 0
    %7062 = vmatpush2.bf16.msra.mxu0 0
    %7063 = vmatprep.subr.bf16.mxu0 0
    %7064 = vmatpush2.bf16.msra.mxu0 0
    %7065 = vmatprep.subr.bf16.mxu0 0
    %7066 = vmatpush2.bf16.msra.mxu0 0
    %7067 = vmatprep.subr.bf16.mxu0 0
    %7068 = vmatpush2.bf16.msra.mxu0 0
    %7069 = vmatprep.subr.bf16.mxu0 0
    %7070 = vmatpush2.bf16.msra.mxu0 0
    %7071 = vmatprep.mubr.bf16.mxu0 0
    %7072 = vmatmul.mubr.bf16.gmra.mxu0 %v7034
    %v7073 = vpop.f32.mrf.mxu0
    %v7074 = vadd.f32 %v7021, %v7073
    %v7075 = vpop.f32.mrf.mxu0
    %v7076 = vpop.f32.mrf.mxu0
    %v7077 = vadd.f32 %v7023, %v7076
    %v7078 = vpop.f32.mrf.mxu0
    %7079 = vmatprep.mubr.bf16.mxu0 0
    %7080 = vmatmul.mubr.bf16.gmra.mxu0 %v7037
    %v7081 = vpop.f32.mrf.mxu0
    %v7082 = vadd.f32 %v7025, %v7081
    %v7083 = vpop.f32.mrf.mxu0
    %v7084 = vpop.f32.mrf.mxu0
    %v7085 = vadd.f32 %v7027, %v7084
    %v7086 = vpop.f32.mrf.mxu0
    %7087 = vdwg.mxu0
    %v7088 = vmax.f32 %v7074, 0.0
    %v7089 = vmax.f32 %v7077, 0.0
    %v7090 = vmax.f32 %v7082, 0.0
    %v7091 = vmax.f32 %v7085, 0.0
    %v7092 = vld [vmem:[#allocation6 + $0x314] sm:$0xf]
    %v7093 = vld [vmem:[#allocation6 + $0x318] sm:$0xf]
    %v7094 = vld [vmem:[#allocation6 + $0x31c] sm:$0xf]
    %v7095 = vld [vmem:[#allocation6 + $0x320] sm:$0xf]
    %v7096 = vpack.c.bf16 %v7089, %v7088
    %v7097 = vpack.c.bf16 %v7091, %v7090
    %v7102 = vunpack.c.l.b16 %v7092
    %v7103 = vunpack.c.l.b16 %v7093
    %v7104 = vunpack.c.l.b16 %v7094
    %v7105 = vunpack.c.l.b16 %v7095
    %v7106 = vpack.c.b16 %v7103, %v7102
    %v7107 = vpack.c.b16 %v7105, %v7104
    %7108 = vrot.lane.b32.xlu0 %v6722, 125
    %v7109 = vpop.permute.xlu0 %7108
    %7110 = vrot.lane.b32.xlu0 %v6723, 125
    %v7111 = vpop.permute.xlu0 %7110
    %7112 = vrot.lane.b32.xlu0 %v6724, 125
    %v7113 = vpop.permute.xlu0 %7112
    %7114 = vrot.lane.b32.xlu0 %v6725, 125
    %v7115 = vpop.permute.xlu0 %7114
    %v7121 = vsel %vm7032, %v7106, 0
    %v7124 = vsel %vm7032, %v7107, 0
    %7126 = vmatprep.subr.bf16.mxu0 0
    %7127 = vmatpush1.bf16.msra.mxu0 0
    %7128 = vmatprep.subr.bf16.mxu0 0
    %7129 = vmatpush1.bf16.msra.mxu0 0
    %7130 = vmatprep.subr.bf16.mxu0 0
    %7131 = vmatpush1.bf16.msra.mxu0 0
    %7132 = vmatprep.subr.bf16.mxu0 0
    %7133 = vmatpush1.bf16.msra.mxu0 0
    %7134 = vmatprep.subr.bf16.mxu0 0
    %7135 = vmatpush1.bf16.msra.mxu0 0
    %7136 = vmatprep.subr.bf16.mxu0 0
    %7137 = vmatpush1.bf16.msra.mxu0 0
    %7138 = vmatprep.subr.bf16.mxu0 0
    %7139 = vmatpush1.bf16.msra.mxu0 %v7097
    %7140 = vmatprep.subr.bf16.mxu0 0
    %7141 = vmatpush1.bf16.msra.mxu0 %v7096
    %7142 = vmatprep.subr.bf16.mxu0 0
    %7143 = vmatpush2.bf16.msra.mxu0 0
    %7144 = vmatprep.subr.bf16.mxu0 0
    %7145 = vmatpush2.bf16.msra.mxu0 0
    %7146 = vmatprep.subr.bf16.mxu0 0
    %7147 = vmatpush2.bf16.msra.mxu0 0
    %7148 = vmatprep.subr.bf16.mxu0 0
    %7149 = vmatpush2.bf16.msra.mxu0 0
    %7150 = vmatprep.subr.bf16.mxu0 0
    %7151 = vmatpush2.bf16.msra.mxu0 0
    %7152 = vmatprep.subr.bf16.mxu0 0
    %7153 = vmatpush2.bf16.msra.mxu0 0
    %7154 = vmatprep.subr.bf16.mxu0 0
    %7155 = vmatpush2.bf16.msra.mxu0 0
    %7156 = vmatprep.subr.bf16.mxu0 0
    %7157 = vmatpush2.bf16.msra.mxu0 0
    %7158 = vmatprep.mubr.bf16.mxu0 0
    %7159 = vmatmul.mubr.bf16.gmra.mxu0 %v7121
    %v7160 = vpop.f32.mrf.mxu0
    %v7161 = vadd.f32 %v7109, %v7160
    %v7162 = vpop.f32.mrf.mxu0
    %v7163 = vpop.f32.mrf.mxu0
    %v7164 = vadd.f32 %v7111, %v7163
    %v7165 = vpop.f32.mrf.mxu0
    %7166 = vmatprep.mubr.bf16.mxu0 0
    %7167 = vmatmul.mubr.bf16.gmra.mxu0 %v7124
    %v7168 = vpop.f32.mrf.mxu0
    %v7169 = vadd.f32 %v7113, %v7168
    %v7170 = vpop.f32.mrf.mxu0
    %v7171 = vpop.f32.mrf.mxu0
    %v7172 = vadd.f32 %v7115, %v7171
    %v7173 = vpop.f32.mrf.mxu0
    %7174 = vdwg.mxu0
    %v7175 = vld [vmem:[%s1] sm:$0xff]
    %v7176 = vld [vmem:[%s1 + $0x8] sm:$0xff]
    %v7177 = vld [vmem:[%s1 + $0x10] sm:$0xff]
    %v7178 = vld [vmem:[%s1 + $0x18] sm:$0xff]
    %7183 = vrot.lane.b32.xlu0 %v7175, 127
    %v7184 = vpop.permute.xlu0 %7183
    %7185 = vrot.lane.b32.xlu0 %v7176, 127
    %v7186 = vpop.permute.xlu0 %7185
    %7187 = vrot.lane.b32.xlu0 %v7177, 127
    %v7188 = vpop.permute.xlu0 %7187
    %7189 = vrot.lane.b32.xlu0 %v7178, 127
    %v7190 = vpop.permute.xlu0 %7189
    %7199 = vrot.lane.b32.xlu0 %v7161, 2
    %v7200 = vpop.permute.xlu0 %7199
    %7201 = vrot.lane.b32.xlu0 %v7164, 2
    %v7202 = vpop.permute.xlu0 %7201
    %7203 = vrot.lane.b32.xlu0 %v7169, 2
    %v7204 = vpop.permute.xlu0 %7203
    %7205 = vrot.lane.b32.xlu0 %v7172, 2
    %v7206 = vpop.permute.xlu0 %7205
    %vm7211 = vcmask 15360
    %v7212 = vsel %vm7211, %v7184, %v7200
    %v7213 = vsel %vm7211, %v7186, %v7202
    %v7214 = vsel %vm7211, %v7188, %v7204
    %v7215 = vsel %vm7211, %v7190, %v7206
    %v7216 = vld [vmem:[#allocation6 + $0x324] sm:$0xf]
    %v7217 = vld [vmem:[#allocation6 + $0x328] sm:$0xf]
    %v7218 = vld [vmem:[#allocation6 + $0x32c] sm:$0xf]
    %v7219 = vld [vmem:[#allocation6 + $0x330] sm:$0xf]
    %v7220 = vld [vmem:[#allocation6 + $0x334] sm:$0xf]
    %v7221 = vld [vmem:[#allocation6 + $0x338] sm:$0xf]
    %v7222 = vld [vmem:[#allocation6 + $0x33c] sm:$0xf]
    %v7223 = vld [vmem:[#allocation6 + $0x340] sm:$0xf]
    %v7224 = vld [vmem:[#allocation6 + $0x344] sm:$0xf]
    %v7225 = vld [vmem:[#allocation6 + $0x348] sm:$0xf]
    %v7226 = vld [vmem:[#allocation6 + $0x34c] sm:$0xf]
    %v7227 = vld [vmem:[#allocation6 + $0x350] sm:$0xf]
    %v7228 = vld [vmem:[#allocation6 + $0x354] sm:$0xf]
    %v7229 = vld [vmem:[#allocation6 + $0x358] sm:$0xf]
    %v7230 = vld [vmem:[#allocation6 + $0x35c] sm:$0xf]
    %v7231 = vld [vmem:[#allocation6 + $0x360] sm:$0xf]
    %v7232 = vld [vmem:[#allocation6 + $0x364] sm:$0xf]
    %v7233 = vld [vmem:[#allocation6 + $0x368] sm:$0xf]
    %v7234 = vld [vmem:[#allocation6 + $0x36c] sm:$0xf]
    %v7235 = vld [vmem:[#allocation6 + $0x370] sm:$0xf]
    %v7236 = vld [vmem:[#allocation6 + $0x374] sm:$0xf]
    %v7237 = vld [vmem:[#allocation6 + $0x378] sm:$0xf]
    %v7238 = vld [vmem:[#allocation6 + $0x37c] sm:$0xf]
    %v7239 = vld [vmem:[#allocation6 + $0x380] sm:$0xf]
    %v7240 = vld [vmem:[#allocation6 + $0x384] sm:$0xf]
    %v7241 = vld [vmem:[#allocation6 + $0x388] sm:$0xf]
    %v7242 = vld [vmem:[#allocation6 + $0x38c] sm:$0xf]
    %v7243 = vld [vmem:[#allocation6 + $0x390] sm:$0xf]
    %v7244 = vld [vmem:[#allocation6 + $0x394] sm:$0xf]
    %v7245 = vld [vmem:[#allocation6 + $0x398] sm:$0xf]
    %v7246 = vld [vmem:[#allocation6 + $0x39c] sm:$0xf]
    %v7247 = vld [vmem:[#allocation6 + $0x3a0] sm:$0xf]
    %v7248 = vpack.c.bf16 %v7213, %v7212
    %v7249 = vpack.c.bf16 %v7215, %v7214
    %7250 = vset.pattern.permute.xlu0 4
    %7251 = vperm.xlu0 %7250, %v1549
    %v7252 = vpop.permute.xlu0 %7251
    %7254 = vset.pattern.permute.xlu0 4
    %7255 = vperm.xlu0 %7254, %v1550
    %v7256 = vpop.permute.xlu0 %7255
    %7258 = vset.pattern.permute.xlu0 4
    %7259 = vperm.xlu0 %7258, %v1551
    %v7260 = vpop.permute.xlu0 %7259
    %7262 = vset.pattern.permute.xlu0 4
    %7263 = vperm.xlu0 %7262, %v1552
    %v7264 = vpop.permute.xlu0 %7263
    %7266 = vset.pattern.permute.xlu0 4
    %7267 = vperm.xlu0 %7266, %v1553
    %v7268 = vpop.permute.xlu0 %7267
    %7270 = vset.pattern.permute.xlu0 4
    %7271 = vperm.xlu0 %7270, %v1554
    %v7272 = vpop.permute.xlu0 %7271
    %7274 = vset.pattern.permute.xlu0 4
    %7275 = vperm.xlu0 %7274, %v1555
    %v7276 = vpop.permute.xlu0 %7275
    %7278 = vset.pattern.permute.xlu0 4
    %7279 = vperm.xlu0 %7278, %v1556
    %v7280 = vpop.permute.xlu0 %7279
    %7282 = vset.pattern.permute.xlu0 4
    %7283 = vperm.xlu0 %7282, %v1557
    %v7284 = vpop.permute.xlu0 %7283
    %7286 = vset.pattern.permute.xlu0 4
    %7287 = vperm.xlu0 %7286, %v1558
    %v7288 = vpop.permute.xlu0 %7287
    %7290 = vset.pattern.permute.xlu0 4
    %7291 = vperm.xlu0 %7290, %v1559
    %v7292 = vpop.permute.xlu0 %7291
    %7294 = vset.pattern.permute.xlu0 4
    %7295 = vperm.xlu0 %7294, %v1560
    %v7296 = vpop.permute.xlu0 %7295
    %7298 = vset.pattern.permute.xlu0 4
    %7299 = vperm.xlu0 %7298, %v1561
    %v7300 = vpop.permute.xlu0 %7299
    %7302 = vset.pattern.permute.xlu0 4
    %7303 = vperm.xlu0 %7302, %v1562
    %v7304 = vpop.permute.xlu0 %7303
    %7306 = vset.pattern.permute.xlu0 4
    %7307 = vperm.xlu0 %7306, %v1563
    %v7308 = vpop.permute.xlu0 %7307
    %7310 = vset.pattern.permute.xlu0 4
    %7311 = vperm.xlu0 %7310, %v1564
    %v7312 = vpop.permute.xlu0 %7311
    %v7330 = vunpack.c.l.b16 %v7216
    %v7331 = vunpack.c.l.b16 %v7217
    %v7332 = vunpack.c.l.b16 %v7218
    %v7333 = vunpack.c.l.b16 %v7219
    %v7334 = vunpack.c.l.b16 %v7220
    %v7335 = vunpack.c.l.b16 %v7221
    %v7336 = vunpack.c.l.b16 %v7222
    %v7337 = vunpack.c.l.b16 %v7223
    %v7338 = vunpack.c.l.b16 %v7224
    %v7339 = vunpack.c.l.b16 %v7225
    %v7340 = vunpack.c.l.b16 %v7226
    %v7341 = vunpack.c.l.b16 %v7227
    %v7342 = vunpack.c.l.b16 %v7228
    %v7343 = vunpack.c.l.b16 %v7229
    %v7344 = vunpack.c.l.b16 %v7230
    %v7345 = vunpack.c.l.b16 %v7231
    %v7346 = vpack.c.b16 %v7331, %v7330
    %v7347 = vpack.c.b16 %v7333, %v7332
    %v7348 = vpack.c.b16 %v7335, %v7334
    %v7349 = vpack.c.b16 %v7337, %v7336
    %v7350 = vpack.c.b16 %v7339, %v7338
    %v7351 = vpack.c.b16 %v7341, %v7340
    %v7352 = vpack.c.b16 %v7343, %v7342
    %v7353 = vpack.c.b16 %v7345, %v7344
    %v7355 = vsel %vm7032, %v7346, 0
    %v7358 = vsel %vm7032, %v7347, 0
    %v7361 = vsel %vm7032, %v7348, 0
    %v7364 = vsel %vm7032, %v7349, 0
    %v7367 = vsel %vm7032, %v7350, 0
    %v7370 = vsel %vm7032, %v7351, 0
    %v7373 = vsel %vm7032, %v7352, 0
    %v7376 = vsel %vm7032, %v7353, 0
    %7378 = vmatprep.subr.bf16.mxu0 0
    %7379 = vmatpush1.bf16.msra.mxu0 0
    %7380 = vmatprep.subr.bf16.mxu0 0
    %7381 = vmatpush1.bf16.msra.mxu0 0
    %7382 = vmatprep.subr.bf16.mxu0 0
    %7383 = vmatpush1.bf16.msra.mxu0 0
    %7384 = vmatprep.subr.bf16.mxu0 0
    %7385 = vmatpush1.bf16.msra.mxu0 0
    %7386 = vmatprep.subr.bf16.mxu0 0
    %7387 = vmatpush1.bf16.msra.mxu0 0
    %7388 = vmatprep.subr.bf16.mxu0 0
    %7389 = vmatpush1.bf16.msra.mxu0 0
    %7390 = vmatprep.subr.bf16.mxu0 0
    %7391 = vmatpush1.bf16.msra.mxu0 %v7249
    %7392 = vmatprep.subr.bf16.mxu0 0
    %7393 = vmatpush1.bf16.msra.mxu0 %v7248
    %7394 = vmatprep.subr.bf16.mxu0 0
    %7395 = vmatpush2.bf16.msra.mxu0 0
    %7396 = vmatprep.subr.bf16.mxu0 0
    %7397 = vmatpush2.bf16.msra.mxu0 0
    %7398 = vmatprep.subr.bf16.mxu0 0
    %7399 = vmatpush2.bf16.msra.mxu0 0
    %7400 = vmatprep.subr.bf16.mxu0 0
    %7401 = vmatpush2.bf16.msra.mxu0 0
    %7402 = vmatprep.subr.bf16.mxu0 0
    %7403 = vmatpush2.bf16.msra.mxu0 0
    %7404 = vmatprep.subr.bf16.mxu0 0
    %7405 = vmatpush2.bf16.msra.mxu0 0
    %7406 = vmatprep.subr.bf16.mxu0 0
    %7407 = vmatpush2.bf16.msra.mxu0 0
    %7408 = vmatprep.subr.bf16.mxu0 0
    %7409 = vmatpush2.bf16.msra.mxu0 0
    %7410 = vmatprep.mubr.bf16.mxu0 0
    %7411 = vmatmul.mubr.bf16.gmra.mxu0 %v7355
    %v7412 = vpop.f32.mrf.mxu0
    %v7413 = vadd.f32 %v7252, %v7412
    %v7414 = vpop.f32.mrf.mxu0
    %v7415 = vpop.f32.mrf.mxu0
    %v7416 = vadd.f32 %v7256, %v7415
    %v7417 = vpop.f32.mrf.mxu0
    %7418 = vmatprep.mubr.bf16.mxu0 0
    %7419 = vmatmul.mubr.bf16.gmra.mxu0 %v7358
    %v7420 = vpop.f32.mrf.mxu0
    %v7421 = vadd.f32 %v7260, %v7420
    %v7422 = vpop.f32.mrf.mxu0
    %v7423 = vpop.f32.mrf.mxu0
    %v7424 = vadd.f32 %v7264, %v7423
    %v7425 = vpop.f32.mrf.mxu0
    %7426 = vmatprep.mubr.bf16.mxu0 0
    %7427 = vmatmul.mubr.bf16.gmra.mxu0 %v7361
    %v7428 = vpop.f32.mrf.mxu0
    %v7429 = vadd.f32 %v7268, %v7428
    %v7430 = vpop.f32.mrf.mxu0
    %v7431 = vpop.f32.mrf.mxu0
    %v7432 = vadd.f32 %v7272, %v7431
    %v7433 = vpop.f32.mrf.mxu0
    %7434 = vmatprep.mubr.bf16.mxu0 0
    %7435 = vmatmul.mubr.bf16.gmra.mxu0 %v7364
    %v7436 = vpop.f32.mrf.mxu0
    %v7437 = vadd.f32 %v7276, %v7436
    %v7438 = vpop.f32.mrf.mxu0
    %v7439 = vpop.f32.mrf.mxu0
    %v7440 = vadd.f32 %v7280, %v7439
    %v7441 = vpop.f32.mrf.mxu0
    %7442 = vmatprep.mubr.bf16.mxu0 0
    %7443 = vmatmul.mubr.bf16.gmra.mxu0 %v7367
    %v7444 = vpop.f32.mrf.mxu0
    %v7445 = vadd.f32 %v7284, %v7444
    %v7446 = vpop.f32.mrf.mxu0
    %v7447 = vpop.f32.mrf.mxu0
    %v7448 = vadd.f32 %v7288, %v7447
    %v7449 = vpop.f32.mrf.mxu0
    %7450 = vmatprep.mubr.bf16.mxu0 0
    %7451 = vmatmul.mubr.bf16.gmra.mxu0 %v7370
    %v7452 = vpop.f32.mrf.mxu0
    %v7453 = vadd.f32 %v7292, %v7452
    %v7454 = vpop.f32.mrf.mxu0
    %v7455 = vpop.f32.mrf.mxu0
    %v7456 = vadd.f32 %v7296, %v7455
    %v7457 = vpop.f32.mrf.mxu0
    %7458 = vmatprep.mubr.bf16.mxu0 0
    %7459 = vmatmul.mubr.bf16.gmra.mxu0 %v7373
    %v7460 = vpop.f32.mrf.mxu0
    %v7461 = vadd.f32 %v7300, %v7460
    %v7462 = vpop.f32.mrf.mxu0
    %v7463 = vpop.f32.mrf.mxu0
    %v7464 = vadd.f32 %v7304, %v7463
    %v7465 = vpop.f32.mrf.mxu0
    %7466 = vmatprep.mubr.bf16.mxu0 0
    %7467 = vmatmul.mubr.bf16.gmra.mxu0 %v7376
    %v7468 = vpop.f32.mrf.mxu0
    %v7469 = vadd.f32 %v7308, %v7468
    %v7470 = vpop.f32.mrf.mxu0
    %v7471 = vpop.f32.mrf.mxu0
    %v7472 = vadd.f32 %v7312, %v7471
    %v7473 = vpop.f32.mrf.mxu0
    %7474 = vdwg.mxu0
    %v7491 = vunpack.c.l.b16 %v7232
    %v7492 = vunpack.c.l.b16 %v7233
    %v7493 = vunpack.c.l.b16 %v7234
    %v7494 = vunpack.c.l.b16 %v7235
    %v7495 = vunpack.c.l.b16 %v7236
    %v7496 = vunpack.c.l.b16 %v7237
    %v7497 = vunpack.c.l.b16 %v7238
    %v7498 = vunpack.c.l.b16 %v7239
    %v7499 = vunpack.c.l.b16 %v7240
    %v7500 = vunpack.c.l.b16 %v7241
    %v7501 = vunpack.c.l.b16 %v7242
    %v7502 = vunpack.c.l.b16 %v7243
    %v7503 = vunpack.c.l.b16 %v7244
    %v7504 = vunpack.c.l.b16 %v7245
    %v7505 = vunpack.c.l.b16 %v7246
    %v7506 = vunpack.c.l.b16 %v7247
    %v7507 = vpack.c.b16 %v7492, %v7491
    %v7508 = vpack.c.b16 %v7494, %v7493
    %v7509 = vpack.c.b16 %v7496, %v7495
    %v7510 = vpack.c.b16 %v7498, %v7497
    %v7511 = vpack.c.b16 %v7500, %v7499
    %v7512 = vpack.c.b16 %v7502, %v7501
    %v7513 = vpack.c.b16 %v7504, %v7503
    %v7514 = vpack.c.b16 %v7506, %v7505
    %v7516 = vsel %vm7032, %v7507, 0
    %v7519 = vsel %vm7032, %v7508, 0
    %v7522 = vsel %vm7032, %v7509, 0
    %v7525 = vsel %vm7032, %v7510, 0
    %v7528 = vsel %vm7032, %v7511, 0
    %v7531 = vsel %vm7032, %v7512, 0
    %v7534 = vsel %vm7032, %v7513, 0
    %v7537 = vsel %vm7032, %v7514, 0
    %7539 = vmatprep.subr.bf16.mxu0 0
    %7540 = vmatpush1.bf16.msra.mxu0 0
    %7541 = vmatprep.subr.bf16.mxu0 0
    %7542 = vmatpush1.bf16.msra.mxu0 0
    %7543 = vmatprep.subr.bf16.mxu0 0
    %7544 = vmatpush1.bf16.msra.mxu0 0
    %7545 = vmatprep.subr.bf16.mxu0 0
    %7546 = vmatpush1.bf16.msra.mxu0 0
    %7547 = vmatprep.subr.bf16.mxu0 0
    %7548 = vmatpush1.bf16.msra.mxu0 0
    %7549 = vmatprep.subr.bf16.mxu0 0
    %7550 = vmatpush1.bf16.msra.mxu0 0
    %7551 = vmatprep.subr.bf16.mxu0 0
    %7552 = vmatpush1.bf16.msra.mxu0 0
    %7553 = vmatprep.subr.bf16.mxu0 0
    %7554 = vmatpush1.bf16.msra.mxu0 0
    %7555 = vmatprep.subr.bf16.mxu0 0
    %7556 = vmatpush2.bf16.msra.mxu0 0
    %7557 = vmatprep.subr.bf16.mxu0 0
    %7558 = vmatpush2.bf16.msra.mxu0 0
    %7559 = vmatprep.subr.bf16.mxu0 0
    %7560 = vmatpush2.bf16.msra.mxu0 0
    %7561 = vmatprep.subr.bf16.mxu0 0
    %7562 = vmatpush2.bf16.msra.mxu0 0
    %7563 = vmatprep.subr.bf16.mxu0 0
    %7564 = vmatpush2.bf16.msra.mxu0 0
    %7565 = vmatprep.subr.bf16.mxu0 0
    %7566 = vmatpush2.bf16.msra.mxu0 0
    %7567 = vmatprep.subr.bf16.mxu0 0
    %7568 = vmatpush2.bf16.msra.mxu0 0
    %7569 = vmatprep.subr.bf16.mxu0 0
    %7570 = vmatpush2.bf16.msra.mxu0 0
    %7571 = vmatprep.mubr.bf16.mxu0 0
    %7572 = vmatmul.mubr.bf16.gmra.mxu0 %v7516
    %v7573 = vpop.f32.mrf.mxu0
    %v7574 = vadd.f32 0.0, %v7573
    %v7575 = vpop.f32.mrf.mxu0
    %v7576 = vpop.f32.mrf.mxu0
    %v7577 = vadd.f32 0.0, %v7576
    %v7578 = vpop.f32.mrf.mxu0
    %7579 = vmatprep.mubr.bf16.mxu0 0
    %7580 = vmatmul.mubr.bf16.gmra.mxu0 %v7519
    %v7581 = vpop.f32.mrf.mxu0
    %v7582 = vadd.f32 0.0, %v7581
    %v7583 = vpop.f32.mrf.mxu0
    %v7584 = vpop.f32.mrf.mxu0
    %v7585 = vadd.f32 0.0, %v7584
    %v7586 = vpop.f32.mrf.mxu0
    %7587 = vmatprep.mubr.bf16.mxu0 0
    %7588 = vmatmul.mubr.bf16.gmra.mxu0 %v7522
    %v7589 = vpop.f32.mrf.mxu0
    %v7590 = vadd.f32 0.0, %v7589
    %v7591 = vpop.f32.mrf.mxu0
    %v7592 = vpop.f32.mrf.mxu0
    %v7593 = vadd.f32 0.0, %v7592
    %v7594 = vpop.f32.mrf.mxu0
    %7595 = vmatprep.mubr.bf16.mxu0 0
    %7596 = vmatmul.mubr.bf16.gmra.mxu0 %v7525
    %v7597 = vpop.f32.mrf.mxu0
    %v7598 = vadd.f32 0.0, %v7597
    %v7599 = vpop.f32.mrf.mxu0
    %v7600 = vpop.f32.mrf.mxu0
    %v7601 = vadd.f32 0.0, %v7600
    %v7602 = vpop.f32.mrf.mxu0
    %7603 = vmatprep.mubr.bf16.mxu0 0
    %7604 = vmatmul.mubr.bf16.gmra.mxu0 %v7528
    %v7605 = vpop.f32.mrf.mxu0
    %v7606 = vadd.f32 0.0, %v7605
    %v7607 = vpop.f32.mrf.mxu0
    %v7608 = vpop.f32.mrf.mxu0
    %v7609 = vadd.f32 0.0, %v7608
    %v7610 = vpop.f32.mrf.mxu0
    %7611 = vmatprep.mubr.bf16.mxu0 0
    %7612 = vmatmul.mubr.bf16.gmra.mxu0 %v7531
    %v7613 = vpop.f32.mrf.mxu0
    %v7614 = vadd.f32 0.0, %v7613
    %v7615 = vpop.f32.mrf.mxu0
    %v7616 = vpop.f32.mrf.mxu0
    %v7617 = vadd.f32 0.0, %v7616
    %v7618 = vpop.f32.mrf.mxu0
    %7619 = vmatprep.mubr.bf16.mxu0 0
    %7620 = vmatmul.mubr.bf16.gmra.mxu0 %v7534
    %v7621 = vpop.f32.mrf.mxu0
    %v7622 = vadd.f32 0.0, %v7621
    %v7623 = vpop.f32.mrf.mxu0
    %v7624 = vpop.f32.mrf.mxu0
    %v7625 = vadd.f32 0.0, %v7624
    %v7626 = vpop.f32.mrf.mxu0
    %7627 = vmatprep.mubr.bf16.mxu0 0
    %7628 = vmatmul.mubr.bf16.gmra.mxu0 %v7537
    %v7629 = vpop.f32.mrf.mxu0
    %v7630 = vadd.f32 0.0, %v7629
    %v7631 = vpop.f32.mrf.mxu0
    %v7632 = vpop.f32.mrf.mxu0
    %v7633 = vadd.f32 0.0, %v7632
    %v7634 = vpop.f32.mrf.mxu0
    %7635 = vdwg.mxu0
    %v7636 = vadd.f32 %v7413, %v7574
    %v7637 = vadd.f32 %v7416, %v7577
    %v7638 = vadd.f32 %v7421, %v7582
    %v7639 = vadd.f32 %v7424, %v7585
    %v7640 = vadd.f32 %v7429, %v7590
    %v7641 = vadd.f32 %v7432, %v7593
    %v7642 = vadd.f32 %v7437, %v7598
    %v7643 = vadd.f32 %v7440, %v7601
    %v7644 = vadd.f32 %v7445, %v7606
    %v7645 = vadd.f32 %v7448, %v7609
    %v7646 = vadd.f32 %v7453, %v7614
    %v7647 = vadd.f32 %v7456, %v7617
    %v7648 = vadd.f32 %v7461, %v7622
    %v7649 = vadd.f32 %v7464, %v7625
    %v7650 = vadd.f32 %v7469, %v7630
    %v7651 = vadd.f32 %v7472, %v7633
    %v7652 = vsub.f32 0.0, %v7636
    %v7653 = vsub.f32 0.0, %v7637
    %v7654 = vsub.f32 0.0, %v7638
    %v7655 = vsub.f32 0.0, %v7639
    %v7656 = vmul.f32 %v7652, 1.442695
    %v7657 = vpow.pop %v7656
    %v7658 = vmul.f32 %v7653, 1.442695
    %v7659 = vpow.pop %v7658
    %v7660 = vmul.f32 %v7654, 1.442695
    %v7661 = vpow.pop %v7660
    %v7662 = vmul.f32 %v7655, 1.442695
    %v7663 = vpow.pop %v7662
    %v7664 = vadd.f32 %v7657, 1.0
    %v7665 = vadd.f32 %v7659, 1.0
    %v7666 = vadd.f32 %v7661, 1.0
    %v7667 = vadd.f32 %v7663, 1.0
    %v7668 = vrcp.pop %v7664
    %v7669 = vmul.f32 1.0, %v7668
    %v7670 = vrcp.pop %v7665
    %v7671 = vmul.f32 1.0, %v7670
    %v7672 = vrcp.pop %v7666
    %v7673 = vmul.f32 1.0, %v7672
    %v7674 = vrcp.pop %v7667
    %v7675 = vmul.f32 1.0, %v7674
    %v7676 = vsub.f32 0.0, %v7640
    %v7677 = vsub.f32 0.0, %v7641
    %v7678 = vsub.f32 0.0, %v7642
    %v7679 = vsub.f32 0.0, %v7643
    %v7680 = vmul.f32 %v7676, 1.442695
    %v7681 = vpow.pop %v7680
    %v7682 = vmul.f32 %v7677, 1.442695
    %v7683 = vpow.pop %v7682
    %v7684 = vmul.f32 %v7678, 1.442695
    %v7685 = vpow.pop %v7684
    %v7686 = vmul.f32 %v7679, 1.442695
    %v7687 = vpow.pop %v7686
    %v7688 = vadd.f32 %v7681, 1.0
    %v7689 = vadd.f32 %v7683, 1.0
    %v7690 = vadd.f32 %v7685, 1.0
    %v7691 = vadd.f32 %v7687, 1.0
    %v7692 = vrcp.pop %v7688
    %v7693 = vmul.f32 1.0, %v7692
    %v7694 = vrcp.pop %v7689
    %v7695 = vmul.f32 1.0, %v7694
    %v7696 = vrcp.pop %v7690
    %v7697 = vmul.f32 1.0, %v7696
    %v7698 = vrcp.pop %v7691
    %v7699 = vmul.f32 1.0, %v7698
    %v7700 = vtanh.pop %v7644
    %v7701 = vtanh.pop %v7645
    %v7702 = vtanh.pop %v7646
    %v7703 = vtanh.pop %v7647
    %v7704 = vsub.f32 0.0, %v7648
    %v7705 = vsub.f32 0.0, %v7649
    %v7706 = vsub.f32 0.0, %v7650
    %v7707 = vsub.f32 0.0, %v7651
    %v7708 = vmul.f32 %v7704, 1.442695
    %v7709 = vpow.pop %v7708
    %v7710 = vmul.f32 %v7705, 1.442695
    %v7711 = vpow.pop %v7710
    %v7712 = vmul.f32 %v7706, 1.442695
    %v7713 = vpow.pop %v7712
    %v7714 = vmul.f32 %v7707, 1.442695
    %v7715 = vpow.pop %v7714
    %v7716 = vadd.f32 %v7709, 1.0
    %v7717 = vadd.f32 %v7711, 1.0
    %v7718 = vadd.f32 %v7713, 1.0
    %v7719 = vadd.f32 %v7715, 1.0
    %v7720 = vrcp.pop %v7716
    %v7721 = vmul.f32 1.0, %v7720
    %v7722 = vrcp.pop %v7717
    %v7723 = vmul.f32 1.0, %v7722
    %v7724 = vrcp.pop %v7718
    %v7725 = vmul.f32 1.0, %v7724
    %v7726 = vrcp.pop %v7719
    %v7727 = vmul.f32 1.0, %v7726
    %v7728 = vmul.f32 %v7693, 0.0
    %v7729 = vmul.f32 %v7695, 0.0
    %v7730 = vmul.f32 %v7697, 0.0
    %v7731 = vmul.f32 %v7699, 0.0
    %v7732 = vmul.f32 %v7669, %v7700
    %v7733 = vmul.f32 %v7671, %v7701
    %v7734 = vmul.f32 %v7673, %v7702
    %v7735 = vmul.f32 %v7675, %v7703
    %v7736 = vadd.f32 %v7728, %v7732
    %v7737 = vadd.f32 %v7729, %v7733
    %v7738 = vadd.f32 %v7730, %v7734
    %v7739 = vadd.f32 %v7731, %v7735
    %v7740 = vtanh.pop %v7736
    %v7741 = vtanh.pop %v7737
    %v7742 = vtanh.pop %v7738
    %v7743 = vtanh.pop %v7739
    %v7744 = vmul.f32 %v7721, %v7740
    %v7745 = vmul.f32 %v7723, %v7741
    %v7746 = vmul.f32 %v7725, %v7742
    %v7747 = vmul.f32 %v7727, %v7743
    %v7748 = vpack.c.bf16 %v7745, %v7744
    %v7749 = vpack.c.bf16 %v7747, %v7746
    %7750 = vmatprep.subr.bf16.mxu0 0
    %7751 = vmatpush1.bf16.msra.mxu0 0
    %7752 = vmatprep.subr.bf16.mxu0 0
    %7753 = vmatpush1.bf16.msra.mxu0 0
    %7754 = vmatprep.subr.bf16.mxu0 0
    %7755 = vmatpush1.bf16.msra.mxu0 0
    %7756 = vmatprep.subr.bf16.mxu0 0
    %7757 = vmatpush1.bf16.msra.mxu0 0
    %7758 = vmatprep.subr.bf16.mxu0 0
    %7759 = vmatpush1.bf16.msra.mxu0 0
    %7760 = vmatprep.subr.bf16.mxu0 0
    %7761 = vmatpush1.bf16.msra.mxu0 0
    %7762 = vmatprep.subr.bf16.mxu0 0
    %7763 = vmatpush1.bf16.msra.mxu0 %v7749
    %7764 = vmatprep.subr.bf16.mxu0 0
    %7765 = vmatpush1.bf16.msra.mxu0 %v7748
    %7766 = vmatprep.subr.bf16.mxu0 0
    %7767 = vmatpush2.bf16.msra.mxu0 0
    %7768 = vmatprep.subr.bf16.mxu0 0
    %7769 = vmatpush2.bf16.msra.mxu0 0
    %7770 = vmatprep.subr.bf16.mxu0 0
    %7771 = vmatpush2.bf16.msra.mxu0 0
    %7772 = vmatprep.subr.bf16.mxu0 0
    %7773 = vmatpush2.bf16.msra.mxu0 0
    %7774 = vmatprep.subr.bf16.mxu0 0
    %7775 = vmatpush2.bf16.msra.mxu0 0
    %7776 = vmatprep.subr.bf16.mxu0 0
    %7777 = vmatpush2.bf16.msra.mxu0 0
    %7778 = vmatprep.subr.bf16.mxu0 0
    %7779 = vmatpush2.bf16.msra.mxu0 0
    %7780 = vmatprep.subr.bf16.mxu0 0
    %7781 = vmatpush2.bf16.msra.mxu0 0
    %7782 = vmatprep.mubr.bf16.mxu0 0
    %7783 = vmatmul.mubr.bf16.gmra.mxu0 %v7516
    %v7784 = vpop.f32.mrf.mxu0
    %v7785 = vadd.f32 0.0, %v7784
    %v7786 = vpop.f32.mrf.mxu0
    %v7787 = vpop.f32.mrf.mxu0
    %v7788 = vadd.f32 0.0, %v7787
    %v7789 = vpop.f32.mrf.mxu0
    %7790 = vmatprep.mubr.bf16.mxu0 0
    %7791 = vmatmul.mubr.bf16.gmra.mxu0 %v7519
    %v7792 = vpop.f32.mrf.mxu0
    %v7793 = vadd.f32 0.0, %v7792
    %v7794 = vpop.f32.mrf.mxu0
    %v7795 = vpop.f32.mrf.mxu0
    %v7796 = vadd.f32 0.0, %v7795
    %v7797 = vpop.f32.mrf.mxu0
    %7798 = vmatprep.mubr.bf16.mxu0 0
    %7799 = vmatmul.mubr.bf16.gmra.mxu0 %v7522
    %v7800 = vpop.f32.mrf.mxu0
    %v7801 = vadd.f32 0.0, %v7800
    %v7802 = vpop.f32.mrf.mxu0
    %v7803 = vpop.f32.mrf.mxu0
    %v7804 = vadd.f32 0.0, %v7803
    %v7805 = vpop.f32.mrf.mxu0
    %7806 = vmatprep.mubr.bf16.mxu0 0
    %7807 = vmatmul.mubr.bf16.gmra.mxu0 %v7525
    %v7808 = vpop.f32.mrf.mxu0
    %v7809 = vadd.f32 0.0, %v7808
    %v7810 = vpop.f32.mrf.mxu0
    %v7811 = vpop.f32.mrf.mxu0
    %v7812 = vadd.f32 0.0, %v7811
    %v7813 = vpop.f32.mrf.mxu0
    %7814 = vmatprep.mubr.bf16.mxu0 0
    %7815 = vmatmul.mubr.bf16.gmra.mxu0 %v7528
    %v7816 = vpop.f32.mrf.mxu0
    %v7817 = vadd.f32 0.0, %v7816
    %v7818 = vpop.f32.mrf.mxu0
    %v7819 = vpop.f32.mrf.mxu0
    %v7820 = vadd.f32 0.0, %v7819
    %v7821 = vpop.f32.mrf.mxu0
    %7822 = vmatprep.mubr.bf16.mxu0 0
    %7823 = vmatmul.mubr.bf16.gmra.mxu0 %v7531
    %v7824 = vpop.f32.mrf.mxu0
    %v7825 = vadd.f32 0.0, %v7824
    %v7826 = vpop.f32.mrf.mxu0
    %v7827 = vpop.f32.mrf.mxu0
    %v7828 = vadd.f32 0.0, %v7827
    %v7829 = vpop.f32.mrf.mxu0
    %7830 = vmatprep.mubr.bf16.mxu0 0
    %7831 = vmatmul.mubr.bf16.gmra.mxu0 %v7534
    %v7832 = vpop.f32.mrf.mxu0
    %v7833 = vadd.f32 0.0, %v7832
    %v7834 = vpop.f32.mrf.mxu0
    %v7835 = vpop.f32.mrf.mxu0
    %v7836 = vadd.f32 0.0, %v7835
    %v7837 = vpop.f32.mrf.mxu0
    %7838 = vmatprep.mubr.bf16.mxu0 0
    %7839 = vmatmul.mubr.bf16.gmra.mxu0 %v7537
    %v7840 = vpop.f32.mrf.mxu0
    %v7841 = vadd.f32 0.0, %v7840
    %v7842 = vpop.f32.mrf.mxu0
    %v7843 = vpop.f32.mrf.mxu0
    %v7844 = vadd.f32 0.0, %v7843
    %v7845 = vpop.f32.mrf.mxu0
    %7846 = vdwg.mxu0
    %7863 = vrot.lane.b32.xlu0 %v7785, 1
    %v7864 = vpop.permute.xlu0 %7863
    %7865 = vrot.lane.b32.xlu0 %v7788, 1
    %v7866 = vpop.permute.xlu0 %7865
    %7867 = vrot.lane.b32.xlu0 %v7793, 1
    %v7868 = vpop.permute.xlu0 %7867
    %7869 = vrot.lane.b32.xlu0 %v7796, 1
    %v7870 = vpop.permute.xlu0 %7869
    %7871 = vrot.lane.b32.xlu0 %v7801, 1
    %v7872 = vpop.permute.xlu0 %7871
    %7873 = vrot.lane.b32.xlu0 %v7804, 1
    %v7874 = vpop.permute.xlu0 %7873
    %7875 = vrot.lane.b32.xlu0 %v7809, 1
    %v7876 = vpop.permute.xlu0 %7875
    %7877 = vrot.lane.b32.xlu0 %v7812, 1
    %v7878 = vpop.permute.xlu0 %7877
    %7879 = vrot.lane.b32.xlu0 %v7817, 1
    %v7880 = vpop.permute.xlu0 %7879
    %7881 = vrot.lane.b32.xlu0 %v7820, 1
    %v7882 = vpop.permute.xlu0 %7881
    %7883 = vrot.lane.b32.xlu0 %v7825, 1
    %v7884 = vpop.permute.xlu0 %7883
    %7885 = vrot.lane.b32.xlu0 %v7828, 1
    %v7886 = vpop.permute.xlu0 %7885
    %7887 = vrot.lane.b32.xlu0 %v7833, 1
    %v7888 = vpop.permute.xlu0 %7887
    %7889 = vrot.lane.b32.xlu0 %v7836, 1
    %v7890 = vpop.permute.xlu0 %7889
    %7891 = vrot.lane.b32.xlu0 %v7841, 1
    %v7892 = vpop.permute.xlu0 %7891
    %7893 = vrot.lane.b32.xlu0 %v7844, 1
    %v7894 = vpop.permute.xlu0 %7893
    %v7911 = vadd.f32 %v7413, %v7864
    %v7912 = vadd.f32 %v7416, %v7866
    %v7913 = vadd.f32 %v7421, %v7868
    %v7914 = vadd.f32 %v7424, %v7870
    %v7915 = vadd.f32 %v7429, %v7872
    %v7916 = vadd.f32 %v7432, %v7874
    %v7917 = vadd.f32 %v7437, %v7876
    %v7918 = vadd.f32 %v7440, %v7878
    %v7919 = vadd.f32 %v7445, %v7880
    %v7920 = vadd.f32 %v7448, %v7882
    %v7921 = vadd.f32 %v7453, %v7884
    %v7922 = vadd.f32 %v7456, %v7886
    %v7923 = vadd.f32 %v7461, %v7888
    %v7924 = vadd.f32 %v7464, %v7890
    %v7925 = vadd.f32 %v7469, %v7892
    %v7926 = vadd.f32 %v7472, %v7894
    %v7927 = vsub.f32 0.0, %v7911
    %v7928 = vsub.f32 0.0, %v7912
    %v7929 = vsub.f32 0.0, %v7913
    %v7930 = vsub.f32 0.0, %v7914
    %v7931 = vmul.f32 %v7927, 1.442695
    %v7932 = vpow.pop %v7931
    %v7933 = vmul.f32 %v7928, 1.442695
    %v7934 = vpow.pop %v7933
    %v7935 = vmul.f32 %v7929, 1.442695
    %v7936 = vpow.pop %v7935
    %v7937 = vmul.f32 %v7930, 1.442695
    %v7938 = vpow.pop %v7937
    %v7939 = vadd.f32 %v7932, 1.0
    %v7940 = vadd.f32 %v7934, 1.0
    %v7941 = vadd.f32 %v7936, 1.0
    %v7942 = vadd.f32 %v7938, 1.0
    %v7943 = vrcp.pop %v7939
    %v7944 = vmul.f32 1.0, %v7943
    %v7945 = vrcp.pop %v7940
    %v7946 = vmul.f32 1.0, %v7945
    %v7947 = vrcp.pop %v7941
    %v7948 = vmul.f32 1.0, %v7947
    %v7949 = vrcp.pop %v7942
    %v7950 = vmul.f32 1.0, %v7949
    %v7951 = vsub.f32 0.0, %v7915
    %v7952 = vsub.f32 0.0, %v7916
    %v7953 = vsub.f32 0.0, %v7917
    %v7954 = vsub.f32 0.0, %v7918
    %v7955 = vmul.f32 %v7951, 1.442695
    %v7956 = vpow.pop %v7955
    %v7957 = vmul.f32 %v7952, 1.442695
    %v7958 = vpow.pop %v7957
    %v7959 = vmul.f32 %v7953, 1.442695
    %v7960 = vpow.pop %v7959
    %v7961 = vmul.f32 %v7954, 1.442695
    %v7962 = vpow.pop %v7961
    %v7963 = vadd.f32 %v7956, 1.0
    %v7964 = vadd.f32 %v7958, 1.0
    %v7965 = vadd.f32 %v7960, 1.0
    %v7966 = vadd.f32 %v7962, 1.0
    %v7967 = vrcp.pop %v7963
    %v7968 = vmul.f32 1.0, %v7967
    %v7969 = vrcp.pop %v7964
    %v7970 = vmul.f32 1.0, %v7969
    %v7971 = vrcp.pop %v7965
    %v7972 = vmul.f32 1.0, %v7971
    %v7973 = vrcp.pop %v7966
    %v7974 = vmul.f32 1.0, %v7973
    %v7975 = vtanh.pop %v7919
    %v7976 = vtanh.pop %v7920
    %v7977 = vtanh.pop %v7921
    %v7978 = vtanh.pop %v7922
    %v7979 = vsub.f32 0.0, %v7923
    %v7980 = vsub.f32 0.0, %v7924
    %v7981 = vsub.f32 0.0, %v7925
    %v7982 = vsub.f32 0.0, %v7926
    %v7983 = vmul.f32 %v7979, 1.442695
    %v7984 = vpow.pop %v7983
    %v7985 = vmul.f32 %v7980, 1.442695
    %v7986 = vpow.pop %v7985
    %v7987 = vmul.f32 %v7981, 1.442695
    %v7988 = vpow.pop %v7987
    %v7989 = vmul.f32 %v7982, 1.442695
    %v7990 = vpow.pop %v7989
    %v7991 = vadd.f32 %v7984, 1.0
    %v7992 = vadd.f32 %v7986, 1.0
    %v7993 = vadd.f32 %v7988, 1.0
    %v7994 = vadd.f32 %v7990, 1.0
    %v7995 = vrcp.pop %v7991
    %v7996 = vmul.f32 1.0, %v7995
    %v7997 = vrcp.pop %v7992
    %v7998 = vmul.f32 1.0, %v7997
    %v7999 = vrcp.pop %v7993
    %v8000 = vmul.f32 1.0, %v7999
    %v8001 = vrcp.pop %v7994
    %v8002 = vmul.f32 1.0, %v8001
    %8007 = vrot.lane.b32.xlu0 %v7736, 1
    %v8008 = vpop.permute.xlu0 %8007
    %8009 = vrot.lane.b32.xlu0 %v7737, 1
    %v8010 = vpop.permute.xlu0 %8009
    %8011 = vrot.lane.b32.xlu0 %v7738, 1
    %v8012 = vpop.permute.xlu0 %8011
    %8013 = vrot.lane.b32.xlu0 %v7739, 1
    %v8014 = vpop.permute.xlu0 %8013
    %v8019 = vmul.f32 %v7968, %v8008
    %v8020 = vmul.f32 %v7970, %v8010
    %v8021 = vmul.f32 %v7972, %v8012
    %v8022 = vmul.f32 %v7974, %v8014
    %v8023 = vmul.f32 %v7944, %v7975
    %v8024 = vmul.f32 %v7946, %v7976
    %v8025 = vmul.f32 %v7948, %v7977
    %v8026 = vmul.f32 %v7950, %v7978
    %v8027 = vadd.f32 %v8019, %v8023
    %v8028 = vadd.f32 %v8020, %v8024
    %v8029 = vadd.f32 %v8021, %v8025
    %v8030 = vadd.f32 %v8022, %v8026
    %v8031 = vtanh.pop %v8027
    %v8032 = vtanh.pop %v8028
    %v8033 = vtanh.pop %v8029
    %v8034 = vtanh.pop %v8030
    %v8035 = vmul.f32 %v7996, %v8031
    %v8036 = vmul.f32 %v7998, %v8032
    %v8037 = vmul.f32 %v8000, %v8033
    %v8038 = vmul.f32 %v8002, %v8034
    %v8039 = vpack.c.bf16 %v8036, %v8035
    %v8040 = vpack.c.bf16 %v8038, %v8037
    %8043 = vrot.lane.b32.xlu0 %v8039, 127
    %v8044 = vpop.permute.xlu0 %8043
    %8045 = vrot.lane.b32.xlu0 %v8040, 127
    %v8046 = vpop.permute.xlu0 %8045
    %8049 = vmatprep.subr.bf16.mxu0 0
    %8050 = vmatpush1.bf16.msra.mxu0 0
    %8051 = vmatprep.subr.bf16.mxu0 0
    %8052 = vmatpush1.bf16.msra.mxu0 0
    %8053 = vmatprep.subr.bf16.mxu0 0
    %8054 = vmatpush1.bf16.msra.mxu0 0
    %8055 = vmatprep.subr.bf16.mxu0 0
    %8056 = vmatpush1.bf16.msra.mxu0 0
    %8057 = vmatprep.subr.bf16.mxu0 0
    %8058 = vmatpush1.bf16.msra.mxu0 0
    %8059 = vmatprep.subr.bf16.mxu0 0
    %8060 = vmatpush1.bf16.msra.mxu0 0
    %8061 = vmatprep.subr.bf16.mxu0 0
    %8062 = vmatpush1.bf16.msra.mxu0 %v8046
    %8063 = vmatprep.subr.bf16.mxu0 0
    %8064 = vmatpush1.bf16.msra.mxu0 %v8044
    %8065 = vmatprep.subr.bf16.mxu0 0
    %8066 = vmatpush2.bf16.msra.mxu0 0
    %8067 = vmatprep.subr.bf16.mxu0 0
    %8068 = vmatpush2.bf16.msra.mxu0 0
    %8069 = vmatprep.subr.bf16.mxu0 0
    %8070 = vmatpush2.bf16.msra.mxu0 0
    %8071 = vmatprep.subr.bf16.mxu0 0
    %8072 = vmatpush2.bf16.msra.mxu0 0
    %8073 = vmatprep.subr.bf16.mxu0 0
    %8074 = vmatpush2.bf16.msra.mxu0 0
    %8075 = vmatprep.subr.bf16.mxu0 0
    %8076 = vmatpush2.bf16.msra.mxu0 0
    %8077 = vmatprep.subr.bf16.mxu0 0
    %8078 = vmatpush2.bf16.msra.mxu0 0
    %8079 = vmatprep.subr.bf16.mxu0 0
    %8080 = vmatpush2.bf16.msra.mxu0 0
    %8081 = vmatprep.mubr.bf16.mxu0 0
    %8082 = vmatmul.mubr.bf16.gmra.mxu0 %v7516
    %v8083 = vpop.f32.mrf.mxu0
    %v8084 = vadd.f32 0.0, %v8083
    %v8085 = vpop.f32.mrf.mxu0
    %v8086 = vpop.f32.mrf.mxu0
    %v8087 = vadd.f32 0.0, %v8086
    %v8088 = vpop.f32.mrf.mxu0
    %8089 = vmatprep.mubr.bf16.mxu0 0
    %8090 = vmatmul.mubr.bf16.gmra.mxu0 %v7519
    %v8091 = vpop.f32.mrf.mxu0
    %v8092 = vadd.f32 0.0, %v8091
    %v8093 = vpop.f32.mrf.mxu0
    %v8094 = vpop.f32.mrf.mxu0
    %v8095 = vadd.f32 0.0, %v8094
    %v8096 = vpop.f32.mrf.mxu0
    %8097 = vmatprep.mubr.bf16.mxu0 0
    %8098 = vmatmul.mubr.bf16.gmra.mxu0 %v7522
    %v8099 = vpop.f32.mrf.mxu0
    %v8100 = vadd.f32 0.0, %v8099
    %v8101 = vpop.f32.mrf.mxu0
    %v8102 = vpop.f32.mrf.mxu0
    %v8103 = vadd.f32 0.0, %v8102
    %v8104 = vpop.f32.mrf.mxu0
    %8105 = vmatprep.mubr.bf16.mxu0 0
    %8106 = vmatmul.mubr.bf16.gmra.mxu0 %v7525
    %v8107 = vpop.f32.mrf.mxu0
    %v8108 = vadd.f32 0.0, %v8107
    %v8109 = vpop.f32.mrf.mxu0
    %v8110 = vpop.f32.mrf.mxu0
    %v8111 = vadd.f32 0.0, %v8110
    %v8112 = vpop.f32.mrf.mxu0
    %8113 = vmatprep.mubr.bf16.mxu0 0
    %8114 = vmatmul.mubr.bf16.gmra.mxu0 %v7528
    %v8115 = vpop.f32.mrf.mxu0
    %v8116 = vadd.f32 0.0, %v8115
    %v8117 = vpop.f32.mrf.mxu0
    %v8118 = vpop.f32.mrf.mxu0
    %v8119 = vadd.f32 0.0, %v8118
    %v8120 = vpop.f32.mrf.mxu0
    %8121 = vmatprep.mubr.bf16.mxu0 0
    %8122 = vmatmul.mubr.bf16.gmra.mxu0 %v7531
    %v8123 = vpop.f32.mrf.mxu0
    %v8124 = vadd.f32 0.0, %v8123
    %v8125 = vpop.f32.mrf.mxu0
    %v8126 = vpop.f32.mrf.mxu0
    %v8127 = vadd.f32 0.0, %v8126
    %v8128 = vpop.f32.mrf.mxu0
    %8129 = vmatprep.mubr.bf16.mxu0 0
    %8130 = vmatmul.mubr.bf16.gmra.mxu0 %v7534
    %v8131 = vpop.f32.mrf.mxu0
    %v8132 = vadd.f32 0.0, %v8131
    %v8133 = vpop.f32.mrf.mxu0
    %v8134 = vpop.f32.mrf.mxu0
    %v8135 = vadd.f32 0.0, %v8134
    %v8136 = vpop.f32.mrf.mxu0
    %8137 = vmatprep.mubr.bf16.mxu0 0
    %8138 = vmatmul.mubr.bf16.gmra.mxu0 %v7537
    %v8139 = vpop.f32.mrf.mxu0
    %v8140 = vadd.f32 0.0, %v8139
    %v8141 = vpop.f32.mrf.mxu0
    %v8142 = vpop.f32.mrf.mxu0
    %v8143 = vadd.f32 0.0, %v8142
    %v8144 = vpop.f32.mrf.mxu0
    %8145 = vdwg.mxu0
    %8162 = vrot.lane.b32.xlu0 %v8084, 2
    %v8163 = vpop.permute.xlu0 %8162
    %8164 = vrot.lane.b32.xlu0 %v8087, 2
    %v8165 = vpop.permute.xlu0 %8164
    %8166 = vrot.lane.b32.xlu0 %v8092, 2
    %v8167 = vpop.permute.xlu0 %8166
    %8168 = vrot.lane.b32.xlu0 %v8095, 2
    %v8169 = vpop.permute.xlu0 %8168
    %8170 = vrot.lane.b32.xlu0 %v8100, 2
    %v8171 = vpop.permute.xlu0 %8170
    %8172 = vrot.lane.b32.xlu0 %v8103, 2
    %v8173 = vpop.permute.xlu0 %8172
    %8174 = vrot.lane.b32.xlu0 %v8108, 2
    %v8175 = vpop.permute.xlu0 %8174
    %8176 = vrot.lane.b32.xlu0 %v8111, 2
    %v8177 = vpop.permute.xlu0 %8176
    %8178 = vrot.lane.b32.xlu0 %v8116, 2
    %v8179 = vpop.permute.xlu0 %8178
    %8180 = vrot.lane.b32.xlu0 %v8119, 2
    %v8181 = vpop.permute.xlu0 %8180
    %8182 = vrot.lane.b32.xlu0 %v8124, 2
    %v8183 = vpop.permute.xlu0 %8182
    %8184 = vrot.lane.b32.xlu0 %v8127, 2
    %v8185 = vpop.permute.xlu0 %8184
    %8186 = vrot.lane.b32.xlu0 %v8132, 2
    %v8187 = vpop.permute.xlu0 %8186
    %8188 = vrot.lane.b32.xlu0 %v8135, 2
    %v8189 = vpop.permute.xlu0 %8188
    %8190 = vrot.lane.b32.xlu0 %v8140, 2
    %v8191 = vpop.permute.xlu0 %8190
    %8192 = vrot.lane.b32.xlu0 %v8143, 2
    %v8193 = vpop.permute.xlu0 %8192
    %v8210 = vadd.f32 %v7413, %v8163
    %v8211 = vadd.f32 %v7416, %v8165
    %v8212 = vadd.f32 %v7421, %v8167
    %v8213 = vadd.f32 %v7424, %v8169
    %v8214 = vadd.f32 %v7429, %v8171
    %v8215 = vadd.f32 %v7432, %v8173
    %v8216 = vadd.f32 %v7437, %v8175
    %v8217 = vadd.f32 %v7440, %v8177
    %v8218 = vadd.f32 %v7445, %v8179
    %v8219 = vadd.f32 %v7448, %v8181
    %v8220 = vadd.f32 %v7453, %v8183
    %v8221 = vadd.f32 %v7456, %v8185
    %v8222 = vadd.f32 %v7461, %v8187
    %v8223 = vadd.f32 %v7464, %v8189
    %v8224 = vadd.f32 %v7469, %v8191
    %v8225 = vadd.f32 %v7472, %v8193
    %v8226 = vsub.f32 0.0, %v8210
    %v8227 = vsub.f32 0.0, %v8211
    %v8228 = vsub.f32 0.0, %v8212
    %v8229 = vsub.f32 0.0, %v8213
    %v8230 = vmul.f32 %v8226, 1.442695
    %v8231 = vpow.pop %v8230
    %v8232 = vmul.f32 %v8227, 1.442695
    %v8233 = vpow.pop %v8232
    %v8234 = vmul.f32 %v8228, 1.442695
    %v8235 = vpow.pop %v8234
    %v8236 = vmul.f32 %v8229, 1.442695
    %v8237 = vpow.pop %v8236
    %v8238 = vadd.f32 %v8231, 1.0
    %v8239 = vadd.f32 %v8233, 1.0
    %v8240 = vadd.f32 %v8235, 1.0
    %v8241 = vadd.f32 %v8237, 1.0
    %v8242 = vrcp.pop %v8238
    %v8243 = vmul.f32 1.0, %v8242
    %v8244 = vrcp.pop %v8239
    %v8245 = vmul.f32 1.0, %v8244
    %v8246 = vrcp.pop %v8240
    %v8247 = vmul.f32 1.0, %v8246
    %v8248 = vrcp.pop %v8241
    %v8249 = vmul.f32 1.0, %v8248
    %v8250 = vsub.f32 0.0, %v8214
    %v8251 = vsub.f32 0.0, %v8215
    %v8252 = vsub.f32 0.0, %v8216
    %v8253 = vsub.f32 0.0, %v8217
    %v8254 = vmul.f32 %v8250, 1.442695
    %v8255 = vpow.pop %v8254
    %v8256 = vmul.f32 %v8251, 1.442695
    %v8257 = vpow.pop %v8256
    %v8258 = vmul.f32 %v8252, 1.442695
    %v8259 = vpow.pop %v8258
    %v8260 = vmul.f32 %v8253, 1.442695
    %v8261 = vpow.pop %v8260
    %v8262 = vadd.f32 %v8255, 1.0
    %v8263 = vadd.f32 %v8257, 1.0
    %v8264 = vadd.f32 %v8259, 1.0
    %v8265 = vadd.f32 %v8261, 1.0
    %v8266 = vrcp.pop %v8262
    %v8267 = vmul.f32 1.0, %v8266
    %v8268 = vrcp.pop %v8263
    %v8269 = vmul.f32 1.0, %v8268
    %v8270 = vrcp.pop %v8264
    %v8271 = vmul.f32 1.0, %v8270
    %v8272 = vrcp.pop %v8265
    %v8273 = vmul.f32 1.0, %v8272
    %v8274 = vtanh.pop %v8218
    %v8275 = vtanh.pop %v8219
    %v8276 = vtanh.pop %v8220
    %v8277 = vtanh.pop %v8221
    %v8278 = vsub.f32 0.0, %v8222
    %v8279 = vsub.f32 0.0, %v8223
    %v8280 = vsub.f32 0.0, %v8224
    %v8281 = vsub.f32 0.0, %v8225
    %v8282 = vmul.f32 %v8278, 1.442695
    %v8283 = vpow.pop %v8282
    %v8284 = vmul.f32 %v8279, 1.442695
    %v8285 = vpow.pop %v8284
    %v8286 = vmul.f32 %v8280, 1.442695
    %v8287 = vpow.pop %v8286
    %v8288 = vmul.f32 %v8281, 1.442695
    %v8289 = vpow.pop %v8288
    %v8290 = vadd.f32 %v8283, 1.0
    %v8291 = vadd.f32 %v8285, 1.0
    %v8292 = vadd.f32 %v8287, 1.0
    %v8293 = vadd.f32 %v8289, 1.0
    %v8294 = vrcp.pop %v8290
    %v8295 = vmul.f32 1.0, %v8294
    %v8296 = vrcp.pop %v8291
    %v8297 = vmul.f32 1.0, %v8296
    %v8298 = vrcp.pop %v8292
    %v8299 = vmul.f32 1.0, %v8298
    %v8300 = vrcp.pop %v8293
    %v8301 = vmul.f32 1.0, %v8300
    %8306 = vrot.lane.b32.xlu0 %v8027, 1
    %v8307 = vpop.permute.xlu0 %8306
    %8308 = vrot.lane.b32.xlu0 %v8028, 1
    %v8309 = vpop.permute.xlu0 %8308
    %8310 = vrot.lane.b32.xlu0 %v8029, 1
    %v8311 = vpop.permute.xlu0 %8310
    %8312 = vrot.lane.b32.xlu0 %v8030, 1
    %v8313 = vpop.permute.xlu0 %8312
    %v8318 = vmul.f32 %v8267, %v8307
    %v8319 = vmul.f32 %v8269, %v8309
    %v8320 = vmul.f32 %v8271, %v8311
    %v8321 = vmul.f32 %v8273, %v8313
    %v8322 = vmul.f32 %v8243, %v8274
    %v8323 = vmul.f32 %v8245, %v8275
    %v8324 = vmul.f32 %v8247, %v8276
    %v8325 = vmul.f32 %v8249, %v8277
    %v8326 = vadd.f32 %v8318, %v8322
    %v8327 = vadd.f32 %v8319, %v8323
    %v8328 = vadd.f32 %v8320, %v8324
    %v8329 = vadd.f32 %v8321, %v8325
    %v8330 = vtanh.pop %v8326
    %v8331 = vtanh.pop %v8327
    %v8332 = vtanh.pop %v8328
    %v8333 = vtanh.pop %v8329
    %v8334 = vmul.f32 %v8295, %v8330
    %v8335 = vmul.f32 %v8297, %v8331
    %v8336 = vmul.f32 %v8299, %v8332
    %v8337 = vmul.f32 %v8301, %v8333
    %vm8338 = vcmask 7168
    %v8339 = vsel %vm8338, %v7744, %v8035
    %v8340 = vsel %vm8338, %v7745, %v8036
    %v8341 = vsel %vm8338, %v7746, %v8037
    %v8342 = vsel %vm8338, %v7747, %v8038
    %v8343 = vsel %vm7211, %v8339, %v8334
    %v8344 = vsel %vm7211, %v8340, %v8335
    %v8345 = vsel %vm7211, %v8341, %v8336
    %v8346 = vsel %vm7211, %v8342, %v8337
    %v8347 = vld [vmem:[#allocation6 + $0x3a4] sm:$0xf]
    %v8348 = vld [vmem:[#allocation6 + $0x3a8] sm:$0xf]
    %v8349 = vld [vmem:[#allocation6 + $0x3ac] sm:$0xf]
    %v8350 = vld [vmem:[#allocation6 + $0x3b0] sm:$0xf]
    %v8351 = vpack.c.bf16 %v8344, %v8343
    %v8352 = vpack.c.bf16 %v8346, %v8345
    %8353 = vset.pattern.permute.xlu0 5
    %8354 = vperm.xlu0 %8353, %v6722
    %v8355 = vpop.permute.xlu0 %8354
    %8357 = vset.pattern.permute.xlu0 5
    %8358 = vperm.xlu0 %8357, %v6723
    %v8359 = vpop.permute.xlu0 %8358
    %8361 = vset.pattern.permute.xlu0 5
    %8362 = vperm.xlu0 %8361, %v6724
    %v8363 = vpop.permute.xlu0 %8362
    %8365 = vset.pattern.permute.xlu0 5
    %8366 = vperm.xlu0 %8365, %v6725
    %v8367 = vpop.permute.xlu0 %8366
    %v8373 = vunpack.c.l.b16 %v8347
    %v8374 = vunpack.c.l.b16 %v8348
    %v8375 = vunpack.c.l.b16 %v8349
    %v8376 = vunpack.c.l.b16 %v8350
    %v8377 = vpack.c.b16 %v8374, %v8373
    %v8378 = vpack.c.b16 %v8376, %v8375
    %v8380 = vsel %vm7032, %v8377, 0
    %v8383 = vsel %vm7032, %v8378, 0
    %8385 = vmatprep.subr.bf16.mxu0 0
    %8386 = vmatpush1.bf16.msra.mxu0 0
    %8387 = vmatprep.subr.bf16.mxu0 0
    %8388 = vmatpush1.bf16.msra.mxu0 0
    %8389 = vmatprep.subr.bf16.mxu0 0
    %8390 = vmatpush1.bf16.msra.mxu0 0
    %8391 = vmatprep.subr.bf16.mxu0 0
    %8392 = vmatpush1.bf16.msra.mxu0 0
    %8393 = vmatprep.subr.bf16.mxu0 0
    %8394 = vmatpush1.bf16.msra.mxu0 0
    %8395 = vmatprep.subr.bf16.mxu0 0
    %8396 = vmatpush1.bf16.msra.mxu0 0
    %8397 = vmatprep.subr.bf16.mxu0 0
    %8398 = vmatpush1.bf16.msra.mxu0 %v8352
    %8399 = vmatprep.subr.bf16.mxu0 0
    %8400 = vmatpush1.bf16.msra.mxu0 %v8351
    %8401 = vmatprep.subr.bf16.mxu0 0
    %8402 = vmatpush2.bf16.msra.mxu0 0
    %8403 = vmatprep.subr.bf16.mxu0 0
    %8404 = vmatpush2.bf16.msra.mxu0 0
    %8405 = vmatprep.subr.bf16.mxu0 0
    %8406 = vmatpush2.bf16.msra.mxu0 0
    %8407 = vmatprep.subr.bf16.mxu0 0
    %8408 = vmatpush2.bf16.msra.mxu0 0
    %8409 = vmatprep.subr.bf16.mxu0 0
    %8410 = vmatpush2.bf16.msra.mxu0 0
    %8411 = vmatprep.subr.bf16.mxu0 0
    %8412 = vmatpush2.bf16.msra.mxu0 0
    %8413 = vmatprep.subr.bf16.mxu0 0
    %8414 = vmatpush2.bf16.msra.mxu0 0
    %8415 = vmatprep.subr.bf16.mxu0 0
    %8416 = vmatpush2.bf16.msra.mxu0 0
    %8417 = vmatprep.mubr.bf16.mxu0 0
    %8418 = vmatmul.mubr.bf16.gmra.mxu0 %v8380
    %v8419 = vpop.f32.mrf.mxu0
    %v8420 = vadd.f32 %v8355, %v8419
    %v8421 = vpop.f32.mrf.mxu0
    %v8422 = vpop.f32.mrf.mxu0
    %v8423 = vadd.f32 %v8359, %v8422
    %v8424 = vpop.f32.mrf.mxu0
    %8425 = vmatprep.mubr.bf16.mxu0 0
    %8426 = vmatmul.mubr.bf16.gmra.mxu0 %v8383
    %v8427 = vpop.f32.mrf.mxu0
    %v8428 = vadd.f32 %v8363, %v8427
    %v8429 = vpop.f32.mrf.mxu0
    %v8430 = vpop.f32.mrf.mxu0
    %v8431 = vadd.f32 %v8367, %v8430
    %v8432 = vpop.f32.mrf.mxu0
    %8433 = vdwg.mxu0
    %v8434 = vmax.f32 %v8420, 0.0
    %v8435 = vmax.f32 %v8423, 0.0
    %v8436 = vmax.f32 %v8428, 0.0
    %v8437 = vmax.f32 %v8431, 0.0
    %v8438 = vld [vmem:[#allocation6 + $0x3b4] sm:$0xf]
    %v8439 = vld [vmem:[#allocation6 + $0x3b8] sm:$0xf]
    %v8440 = vld [vmem:[#allocation6 + $0x3bc] sm:$0xf]
    %v8441 = vld [vmem:[#allocation6 + $0x3c0] sm:$0xf]
    %v8442 = vpack.c.bf16 %v8435, %v8434
    %v8443 = vpack.c.bf16 %v8437, %v8436
    %8444 = vset.pattern.permute.xlu0 6
    %8445 = vperm.xlu0 %8444, %v6722
    %v8446 = vpop.permute.xlu0 %8445
    %8448 = vset.pattern.permute.xlu0 6
    %8449 = vperm.xlu0 %8448, %v6723
    %v8450 = vpop.permute.xlu0 %8449
    %8452 = vset.pattern.permute.xlu0 6
    %8453 = vperm.xlu0 %8452, %v6724
    %v8454 = vpop.permute.xlu0 %8453
    %8456 = vset.pattern.permute.xlu0 6
    %8457 = vperm.xlu0 %8456, %v6725
    %v8458 = vpop.permute.xlu0 %8457
    %v8464 = vunpack.c.l.b16 %v8438
    %v8465 = vunpack.c.l.b16 %v8439
    %v8466 = vunpack.c.l.b16 %v8440
    %v8467 = vunpack.c.l.b16 %v8441
    %v8468 = vpack.c.b16 %v8465, %v8464
    %v8469 = vpack.c.b16 %v8467, %v8466
    %v8471 = vsel %vm7032, %v8468, 0
    %v8474 = vsel %vm7032, %v8469, 0
    %8476 = vmatprep.subr.bf16.mxu0 0
    %8477 = vmatpush1.bf16.msra.mxu0 0
    %8478 = vmatprep.subr.bf16.mxu0 0
    %8479 = vmatpush1.bf16.msra.mxu0 0
    %8480 = vmatprep.subr.bf16.mxu0 0
    %8481 = vmatpush1.bf16.msra.mxu0 0
    %8482 = vmatprep.subr.bf16.mxu0 0
    %8483 = vmatpush1.bf16.msra.mxu0 0
    %8484 = vmatprep.subr.bf16.mxu0 0
    %8485 = vmatpush1.bf16.msra.mxu0 0
    %8486 = vmatprep.subr.bf16.mxu0 0
    %8487 = vmatpush1.bf16.msra.mxu0 0
    %8488 = vmatprep.subr.bf16.mxu0 0
    %8489 = vmatpush1.bf16.msra.mxu0 %v8443
    %8490 = vmatprep.subr.bf16.mxu0 0
    %8491 = vmatpush1.bf16.msra.mxu0 %v8442
    %8492 = vmatprep.subr.bf16.mxu0 0
    %8493 = vmatpush2.bf16.msra.mxu0 0
    %8494 = vmatprep.subr.bf16.mxu0 0
    %8495 = vmatpush2.bf16.msra.mxu0 0
    %8496 = vmatprep.subr.bf16.mxu0 0
    %8497 = vmatpush2.bf16.msra.mxu0 0
    %8498 = vmatprep.subr.bf16.mxu0 0
    %8499 = vmatpush2.bf16.msra.mxu0 0
    %8500 = vmatprep.subr.bf16.mxu0 0
    %8501 = vmatpush2.bf16.msra.mxu0 0
    %8502 = vmatprep.subr.bf16.mxu0 0
    %8503 = vmatpush2.bf16.msra.mxu0 0
    %8504 = vmatprep.subr.bf16.mxu0 0
    %8505 = vmatpush2.bf16.msra.mxu0 0
    %8506 = vmatprep.subr.bf16.mxu0 0
    %8507 = vmatpush2.bf16.msra.mxu0 0
    %8508 = vmatprep.mubr.bf16.mxu0 0
    %8509 = vmatmul.mubr.bf16.gmra.mxu0 %v8471
    %v8510 = vpop.f32.mrf.mxu0
    %v8511 = vadd.f32 %v8446, %v8510
    %v8512 = vpop.f32.mrf.mxu0
    %v8513 = vpop.f32.mrf.mxu0
    %v8514 = vadd.f32 %v8450, %v8513
    %v8515 = vpop.f32.mrf.mxu0
    %8516 = vmatprep.mubr.bf16.mxu0 0
    %8517 = vmatmul.mubr.bf16.gmra.mxu0 %v8474
    %v8518 = vpop.f32.mrf.mxu0
    %v8519 = vadd.f32 %v8454, %v8518
    %v8520 = vpop.f32.mrf.mxu0
    %v8521 = vpop.f32.mrf.mxu0
    %v8522 = vadd.f32 %v8458, %v8521
    %v8523 = vpop.f32.mrf.mxu0
    %8524 = vdwg.mxu0
    %v8525 = vmax.f32 %v8511, 0.0
    %v8526 = vmax.f32 %v8514, 0.0
    %v8527 = vmax.f32 %v8519, 0.0
    %v8528 = vmax.f32 %v8522, 0.0
    %v8529 = vld [vmem:[#allocation6 + $0x3c4] sm:$0x1]
    %v8530 = vpack.c.bf16 %v8526, %v8525
    %v8531 = vpack.c.bf16 %v8528, %v8527
    %v8532 = vld [vmem:[%s4] sm:$0x1]
    %8534 = vset.pattern.permute.xlu0 7
    %8535 = vperm.xlu0 %8534, %v8532
    %v8536 = vpop.permute.xlu0 %8535
    %v8539 = vsel %vm7032, %v8529, 0
    %8541 = vmatprep.subr.bf16.mxu0 0
    %8542 = vmatpush1.bf16.msra.mxu0 0
    %8543 = vmatprep.subr.bf16.mxu0 0
    %8544 = vmatpush1.bf16.msra.mxu0 0
    %8545 = vmatprep.subr.bf16.mxu0 0
    %8546 = vmatpush1.bf16.msra.mxu0 0
    %8547 = vmatprep.subr.bf16.mxu0 0
    %8548 = vmatpush1.bf16.msra.mxu0 0
    %8549 = vmatprep.subr.bf16.mxu0 0
    %8550 = vmatpush1.bf16.msra.mxu0 0
    %8551 = vmatprep.subr.bf16.mxu0 0
    %8552 = vmatpush1.bf16.msra.mxu0 0
    %8553 = vmatprep.subr.bf16.mxu0 0
    %8554 = vmatpush1.bf16.msra.mxu0 %v8531
    %8555 = vmatprep.subr.bf16.mxu0 0
    %8556 = vmatpush1.bf16.msra.mxu0 %v8530
    %8557 = vmatprep.subr.bf16.mxu0 0
    %8558 = vmatpush2.bf16.msra.mxu0 0
    %8559 = vmatprep.subr.bf16.mxu0 0
    %8560 = vmatpush2.bf16.msra.mxu0 0
    %8561 = vmatprep.subr.bf16.mxu0 0
    %8562 = vmatpush2.bf16.msra.mxu0 0
    %8563 = vmatprep.subr.bf16.mxu0 0
    %8564 = vmatpush2.bf16.msra.mxu0 0
    %8565 = vmatprep.subr.bf16.mxu0 0
    %8566 = vmatpush2.bf16.msra.mxu0 0
    %8567 = vmatprep.subr.bf16.mxu0 0
    %8568 = vmatpush2.bf16.msra.mxu0 0
    %8569 = vmatprep.subr.bf16.mxu0 0
    %8570 = vmatpush2.bf16.msra.mxu0 0
    %8571 = vmatprep.subr.bf16.mxu0 0
    %8572 = vmatpush2.bf16.msra.mxu0 0
    %8573 = vmatprep.mubr.bf16.mxu0 0
    %8574 = vmatmul.mubr.bf16.gmra.mxu0 %v8539
    %v8575 = vpop.f32.mrf.mxu0
    %v8576 = vadd.f32 %v8536, %v8575
    %v8577 = vpop.f32.mrf.mxu0
    %v8578 = vpop.f32.mrf.mxu0
    %v8579 = vpop.f32.mrf.mxu0
    %8580 = vdwg.mxu0
    %8581 = vst [vmem:[%s5] sm:$0xff] 0.0
    %8582 = vst [vmem:[%s5 + $0x8] sm:$0xff] 0.0
    %8583 = vst [vmem:[%s5 + $0x10] sm:$0xff] 0.0
    %8584 = vst [vmem:[%s5 + $0x18] sm:$0xff] 0.0
    %8585 = vst [vmem:[%s5 + $0x20] sm:$0xff] 0.0
    %vm8586 = vcmask 23552
    %8587 = vst.msk [vmem:[%s5] sm:$0xff] %vm8586, %v7212
    %8588 = vst.msk [vmem:[%s5 + $0x8] sm:$0xff] %vm8586, %v7213
    %8589 = vst.msk [vmem:[%s5 + $0x10] sm:$0xff] %vm8586, %v7214
    %8590 = vst.msk [vmem:[%s5 + $0x18] sm:$0xff] %vm8586, %v7215
    %vm8591 = vcmask 20480
    %8592 = vst.msk [vmem:[%s5 + $0x20] sm:$0x1f] %vm8591, %v6712
    %vm8593 = vcmask 16384
    %8594 = vst.msk [vmem:[%s5 + $0x25] sm:$0x1] %vm8593, %v8576
    // Predicated region
    $region34: #{_forward_impl.1} parent=1 // pred_check
      _
    $region35: #{_forward_impl.1} parent=1 // pred_check_branch
      %8596 = sbr.rel (0) target = $region37
    $region36: #{_forward_impl.1} parent=1 // pred_region
      _
    $region37: #{_forward_impl.1} parent=1 // pred_fallthru
      _
    // Predicated region
    $region38: #{_forward_impl.1} parent=1 // pred_check
      _
    $region39: #{_forward_impl.1} parent=1 // pred_check_branch
      %8598 = sbr.rel (0) target = $region41
    $region40: #{_forward_impl.1} parent=1 // pred_region
      _
    $region41: #{_forward_impl.1} parent=1 // pred_fallthru
      _
    %8599 = vsyncpa [#allocation3], 1
    %8600 = vsyncpa [#allocation5], 1

</llo_original>
